<compile_context>
chip_gen: v7x
topology: tpu7x:2x2x1
jax: 0.10.0
libtpu: 0.0.40
codegen_flags: <defaults>
</compile_context>

<pallas_src>
import math

import jax
import jax.numpy as jnp
import numpy as np
from jax.experimental import pallas as pl
from jax.experimental.pallas import tpu as pltpu

_BN_EPS = 1e-5


def _vmem():
    return pl.BlockSpec(memory_space=pltpu.MemorySpace.VMEM)


# ----------------------------------------------------------------------------
# The single fused kernel.  Param refs are consumed positionally in execution
# order: con1, down1, con3, down2, bott, up1, con6, up2, con7, up3, con8, out.
# Every activation has layout (N*H, C*W) with channel-major columns.
# ----------------------------------------------------------------------------
def _unet_kernel(*refs):
    x_ref = refs[0]
    out_ref = refs[-1]
    prm = refs[1:-1]
    pos = [0]

    def take(k):
        r = prm[pos[0]:pos[0] + k]
        pos[0] += k
        return r

    def conv_block(xs):
        # Conv3x3(reflect pad, stride folded into L/R) + bias + ReLU + BN.
        r_ref, l_ref, bgb_ref, bavg_ref = take(4)
        rows_out = l_ref.shape[1]
        cw = bavg_ref.shape[0]
        # Right matmul(s): K = Cin*W_in; skip-concat realized as K row-blocks.
        z = None
        off = 0
        for xi in xs:
            k = xi.shape[1]
            zi = jnp.dot(xi, r_ref[off:off + k, :],
                         preferred_element_type=jnp.float32)
            z = zi if z is None else z + zi
            off += k
        # Three independent row-select matmuls (reflect pad + dy + stride in h).
        acc = (jnp.dot(l_ref[0], z[:, 0:cw], preferred_element_type=jnp.float32)
               + jnp.dot(l_ref[1], z[:, cw:2 * cw],
                         preferred_element_type=jnp.float32)
               + jnp.dot(l_ref[2], z[:, 2 * cw:3 * cw],
                         preferred_element_type=jnp.float32))
        act = jnp.maximum(acc + bgb_ref[0:1, :], 0.0)      # bias + ReLU
        # Training-mode BatchNorm, two-pass variance, stats via MXU dots.
        ones_r = jnp.ones((1, rows_out), jnp.float32)
        bavg = bavg_ref[...]
        mean_b = jnp.dot(jnp.dot(ones_r, act, preferred_element_type=jnp.float32),
                         bavg, preferred_element_type=jnp.float32)
        cen = act - mean_b
        var_b = jnp.dot(jnp.dot(ones_r, cen * cen,
                                preferred_element_type=jnp.float32),
                        bavg, preferred_element_type=jnp.float32)
        inv = jax.lax.rsqrt(var_b + _BN_EPS)
        return cen * (inv * bgb_ref[1:2, :]) + bgb_ref[2:3, :]

    def up_block(y):
        # ConvTranspose2d(k=2,s=2) + pixel-shuffle + (optional) bilinear
        # resize, all pre-composed into (L_di, R_di) matrices + bias row.
        r_ref, l_ref, b_ref = take(3)
        cwt = b_ref.shape[1]
        z = jnp.dot(y, r_ref[...], preferred_element_type=jnp.float32)
        return (jnp.dot(l_ref[0], z[:, 0:cwt], preferred_element_type=jnp.float32)
                + jnp.dot(l_ref[1], z[:, cwt:2 * cwt],
                          preferred_element_type=jnp.float32)
                + b_ref[...])

    x = x_ref[...]
    e1 = conv_block((x,))                       # (32,  64)
    e2 = conv_block((e1,))                      # (16,  64)
    e3 = conv_block((e2,))                      # (16, 128)
    e4 = conv_block((e3,))                      # ( 8, 128)
    e5 = conv_block((e4,))                      # ( 8, 128)  bottleneck
    d1 = up_block(e5)                           # (16, 128)
    d1 = conv_block((e3, d1))                   # (16, 128)  con6 (split K)
    d2 = up_block(d1)                           # (16,  64)  incl. real resize
    d2 = conv_block((e2, d2))                   # (16,  64)  con7
    d3 = up_block(d2)                           # (32,  64)
    d3 = conv_block((e1, d3))                   # (32,  64)  con8
    r_ref, b_ref = take(2)                      # final 1x1 conv
    out_ref[...] = jnp.dot(d3, r_ref[...],
                           preferred_element_type=jnp.float32) + b_ref[...]


# ----------------------------------------------------------------------------
# One-time parameter packing (PyTorch layout -> kernel-ready matrices).
# ----------------------------------------------------------------------------
def _reflect_idx(i, n):
    if i < 0:
        return -i
    if i >= n:
        return 2 * n - 2 - i
    return i


def _resize_matrix(in_size, out_size):
    """Bilinear (align_corners=True) 1-D interpolation matrix (out, in)."""
    if out_size == 1:
        src = np.zeros((1,), np.float64)
    else:
        src = np.arange(out_size, dtype=np.float64) * (in_size - 1) / (out_size - 1)
    lo = np.clip(np.floor(src).astype(np.int64), 0, in_size - 1)
    hi = np.minimum(lo + 1, in_size - 1)
    frac = (src - lo).astype(np.float32)
    a = np.zeros((out_size, in_size), np.float32)
    a[np.arange(out_size), lo] += 1.0 - frac
    a[np.arange(out_size), hi] += frac
    return a


def _pack_conv_block(p, batch, h_in, w_in, stride):
    w = np.asarray(p["w"], np.float32)          # (cout, cin, 3, 3)
    b = np.asarray(p["b"], np.float32)
    g = np.asarray(p["gamma"], np.float32)
    bt = np.asarray(p["beta"], np.float32)
    cout, cin = w.shape[0], w.shape[1]
    h_out = (h_in + 2 - 3) // stride + 1
    w_out = (w_in + 2 - 3) // stride + 1
    cw = cout * w_out
    ci_idx, co_idx = np.arange(cin), np.arange(cout)
    # Per-dy column matrices: fold dx taps, reflect-in-w, stride-in-w, channel mix.
    r = np.zeros((3, cin * w_in, cw), np.float32)
    for ky in range(3):
        for kx in range(3):
            for wo in range(w_out):
                wi = _reflect_idx(stride * wo + kx - 1, w_in)
                r[ky][np.ix_(ci_idx * w_in + wi, co_idx * w_out + wo)] += w[:, :, ky, kx].T
    rcat = np.concatenate([r[0], r[1], r[2]], axis=1)
    # Per-dy row-select matrices: fold reflect-in-h, dy shift, stride-in-h.
    l = np.zeros((3, batch * h_out, batch * h_in), np.float32)
    for ky in range(3):
        for n in range(batch):
            for ho in range(h_out):
                hi = _reflect_idx(stride * ho + ky - 1, h_in)
                l[ky, n * h_out + ho, n * h_in + hi] = 1.0
    bgb = np.stack([np.repeat(b, w_out), np.repeat(g, w_out),
                    np.repeat(bt, w_out)]).astype(np.float32)
    bavg = np.kron(np.eye(cout, dtype=np.float32),
                   np.ones((w_out, w_out), np.float32)) / float(batch * h_out * w_out)
    arrs = [jnp.asarray(rcat), jnp.asarray(l), jnp.asarray(bgb), jnp.asarray(bavg)]
    return arrs, (h_out, w_out, cout)


def _pack_up(w, b, batch, h_in, w_in, h_t, w_t):
    """ConvTranspose2d(k2,s2) + pixel-shuffle + bilinear resize, pre-composed."""
    w = np.asarray(w, np.float32)               # (cin, cout, 2, 2)
    b = np.asarray(b, np.float32)
    cin, cout = w.shape[0], w.shape[1]
    h_mid, w_mid = 2 * h_in, 2 * w_in
    ah = np.eye(h_mid, dtype=np.float32) if h_t == h_mid else _resize_matrix(h_mid, h_t)
    aw = np.eye(w_mid, dtype=np.float32) if w_t == w_mid else _resize_matrix(w_mid, w_t)
    lres = np.kron(np.eye(batch, dtype=np.float32), ah)        # rows: resize in h
    rres = np.kron(np.eye(cout, dtype=np.float32), aw.T)       # cols: resize in w
    ci_idx, co_idx = np.arange(cin), np.arange(cout)
    r_list, l_list = [], []
    for di in range(2):
        rt = np.zeros((cin * w_in, cout * w_mid), np.float32)
        for dj in range(2):
            for wpos in range(w_in):
                rt[np.ix_(ci_idx * w_in + wpos,
                          co_idx * w_mid + 2 * wpos + dj)] += w[:, :, di, dj]
        r_list.append(rt @ rres)
        lt = np.zeros((batch * h_mid, batch * h_in), np.float32)
        for n in range(batch):
            for hpos in range(h_in):
                lt[n * h_mid + 2 * hpos + di, n * h_in + hpos] = 1.0
        l_list.append(lres @ lt)
    rcat = np.concatenate(r_list, axis=1)                       # (cin*w_in, 2*cout*w_t)
    l = np.stack(l_list)                                        # (2, N*h_t, N*h_in)
    brow = np.repeat(b, w_t)[None, :].astype(np.float32)
    return [jnp.asarray(rcat), jnp.asarray(l), jnp.asarray(brow)], (h_t, w_t, cout)


def _pack_out(w, b, width):
    w = np.asarray(w, np.float32)               # (nc, ch, 1, 1)
    b = np.asarray(b, np.float32)
    nc, ch = w.shape[0], w.shape[1]
    rout = np.kron(w.reshape(nc, ch).T, np.eye(width, dtype=np.float32))
    brow = np.repeat(b, width)[None, :].astype(np.float32)
    return [jnp.asarray(rout), jnp.asarray(brow)], nc


def prepare_params(params, batch, height, width):
    flat = []
    a, (h1, w1, _) = _pack_conv_block(params["con1"], batch, height, width, 1); flat += a
    a, (h2, w2, _) = _pack_conv_block(params["down1"], batch, h1, w1, 2);        flat += a
    a, (h3, w3, _) = _pack_conv_block(params["con3"], batch, h2, w2, 1);         flat += a
    a, (h4, w4, _) = _pack_conv_block(params["down2"], batch, h3, w3, 2);        flat += a
    a, (h5, w5, _) = _pack_conv_block(params["bott"], batch, h4, w4, 1);         flat += a
    a, _ = _pack_up(*params["up1"], batch, h5, w5, h3, w3);                      flat += a
    a, (h6, w6, _) = _pack_conv_block(params["con6"], batch, h3, w3, 1);         flat += a
    a, _ = _pack_up(*params["up2"], batch, h6, w6, h2, w2);                      flat += a
    a, (h7, w7, _) = _pack_conv_block(params["con7"], batch, h2, w2, 1);         flat += a
    a, _ = _pack_up(*params["up3"], batch, h7, w7, h1, w1);                      flat += a
    a, (h8, w8, _) = _pack_conv_block(params["con8"], batch, h1, w1, 1);         flat += a
    a, nc = _pack_out(*params["out"], w8);                                       flat += a
    return {"flat": flat, "num_class": nc}


# ----------------------------------------------------------------------------
# Wrapper: one input re-layout, ONE pallas_call, one output re-layout.
# ----------------------------------------------------------------------------
def unet_forward(x_nchw, kp):
    n, c, h, w = x_nchw.shape
    nc = kp["num_class"]
    x2 = x_nchw.transpose(0, 2, 1, 3).reshape(n * h, c * w)     # (N*H, C*W)
    inputs = [x2] + list(kp["flat"])
    out2 = pl.pallas_call(
        _unet_kernel,
        out_shape=jax.ShapeDtypeStruct((n * h, nc * w), jnp.float32),
        in_specs=[_vmem()] * len(inputs),
        out_specs=_vmem(),
    )(*inputs)
    return out2.reshape(n, h, nc, w).transpose(0, 2, 1, 3)      # NCHW


# ----------------------------------------------------------------------------
# PyTorch-shaped parameter init + pure-JAX reference (for the self-check).
# ----------------------------------------------------------------------------
def _init_conv(key, cout, cin, kh, kw):
    k1, k2 = jax.random.split(key)
    bound = 1.0 / math.sqrt(cin * kh * kw)
    w = jax.random.uniform(k1, (cout, cin, kh, kw), jnp.float32, -bound, bound)
    b = jax.random.uniform(k2, (cout,), jnp.float32, -bound, bound)
    return w, b


def _init_tconv(key, cin, cout):
    k1, k2 = jax.random.split(key)
    bound = 1.0 / math.sqrt(cin * 4)
    w = jax.random.uniform(k1, (cin, cout, 2, 2), jnp.float32, -bound, bound)
    b = jax.random.uniform(k2, (cout,), jnp.float32, -bound, bound)
    return w, b


def init_params(key, num_class, ch):
    def cb(k, cin, cout):
        w, b = _init_conv(k, cout, cin, 3, 3)
        return {"w": w, "b": b,
                "gamma": jnp.ones((cout,), jnp.float32),
                "beta": jnp.zeros((cout,), jnp.float32)}

    keys = jax.random.split(key, 12)
    return {
        "con1": cb(keys[0], 3, ch),
        "down1": cb(keys[1], ch, ch * 2),
        "con3": cb(keys[2], ch * 2, ch * 4),
        "down2": cb(keys[3], ch * 4, ch * 8),
        "bott": cb(keys[4], ch * 8, ch * 8),
        "up1": _init_tconv(keys[5], ch * 8, ch * 4),
        "con6": cb(keys[6], ch * 8, ch * 4),
        "up2": _init_tconv(keys[7], ch * 4, ch * 2),
        "con7": cb(keys[8], ch * 4, ch * 2),
        "up3": _init_tconv(keys[9], ch * 2, ch),
        "con8": cb(keys[10], ch * 2, ch),
        "out": _init_conv(keys[11], num_class, ch, 1, 1),
    }


def _reference_forward(x, params):
    """Straightforward XLA re-implementation of the PyTorch module (f32)."""
    prec = jax.lax.Precision.HIGHEST

    def conv_bn(x, p, stride=1):
        xp = jnp.pad(x, ((0, 0), (0, 0), (1, 1), (1, 1)), mode="reflect")
        y = jax.lax.conv_general_dilated(
            xp, p["w"], (stride, stride), "VALID",
            dimension_numbers=("NCHW", "OIHW", "NCHW"), precision=prec)
        y = jnp.maximum(y + p["b"][None, :, None, None], 0.0)
        mean = jnp.mean(y, axis=(0, 2, 3), keepdims=True)
        var = jnp.mean(jnp.square(y - mean), axis=(0, 2, 3), keepdims=True)
        yn = (y - mean) * jax.lax.rsqrt(var + _BN_EPS)
        return yn * p["gamma"][None, :, None, None] + p["beta"][None, :, None, None]

    def up(x, w, b):
        t = jnp.einsum("nchw,cdij->ndhiwj", x, w, precision=prec)
        n, co, h, _, ww, _ = t.shape
        return t.reshape(n, co, 2 * h, 2 * ww) + b[None, :, None, None]

    def resize(x, oh, ow):
        n, c, h, w = x.shape
        if (oh, ow) == (h, w):
            return x
        ah = jnp.asarray(_resize_matrix(h, oh))
        aw = jnp.asarray(_resize_matrix(w, ow))
        return jnp.einsum("oi,ncij,pj->ncop", ah, x, aw, precision=prec)

    e1 = conv_bn(x, params["con1"])
    e2 = conv_bn(e1, params["down1"], stride=2)
    e3 = conv_bn(e2, params["con3"])
    e4 = conv_bn(e3, params["down2"], stride=2)
    e5 = conv_bn(e4, params["bott"])
    d1 = resize(up(e5, *params["up1"]), e3.shape[2], e3.shape[3])
    d1 = conv_bn(jnp.concatenate([e3, d1], axis=1), params["con6"])
    d2 = resize(up(d1, *params["up2"]), e2.shape[2], e2.shape[3])
    d2 = conv_bn(jnp.concatenate([e2, d2], axis=1), params["con7"])
    d3 = resize(up(d2, *params["up3"]), e1.shape[2], e1.shape[3])
    d3 = conv_bn(jnp.concatenate([e1, d3], axis=1), params["con8"])
    wo, bo = params["out"]
    w2 = wo.reshape(wo.shape[0], wo.shape[1])
    return jnp.einsum("nchw,oc->nohw", d3, w2, precision=prec) + bo[None, :, None, None]


# ----------------------------------------------------------------------------
if __name__ == "__main__":
    key = jax.random.PRNGKey(0)
    num_class = 3
    ch = 4                                                      # base_channels

    kparam, kx = jax.random.split(key)
    params = init_params(kparam, num_class, ch)
    x = jax.random.normal(kx, (2, 3, 16, 16), dtype=jnp.float32)   # NCHW input
    kparams = prepare_params(params, batch=x.shape[0],
                             height=x.shape[2], width=x.shape[3])

    fwd = jax.jit(lambda inp: unet_forward(inp, kparams))
    out = jax.block_until_ready(fwd(x))

    assert out.shape == (2, num_class, 16, 16), out.shape
    assert out.dtype == jnp.float32
    assert bool(jnp.all(jnp.isfinite(out)))

    ref = _reference_forward(x, params)
    err = float(jnp.max(jnp.abs(out - ref)))
    assert err < 3e-2, f"max abs error vs reference: {err}"
    print("KERNEL_OK")
</pallas_src>

<mosaic_0001>
module attributes {stable_mosaic.version = 11 : i64} {
  func.func @_unet_kernel(%arg0: memref<32x48xf32, #tpu.memory_space<vmem>>, %arg1: memref<48x192xf32, #tpu.memory_space<vmem>>, %arg2: memref<3x32x32xf32, #tpu.memory_space<vmem>>, %arg3: memref<3x64xf32, #tpu.memory_space<vmem>>, %arg4: memref<64x64xf32, #tpu.memory_space<vmem>>, %arg5: memref<64x192xf32, #tpu.memory_space<vmem>>, %arg6: memref<3x16x32xf32, #tpu.memory_space<vmem>>, %arg7: memref<3x64xf32, #tpu.memory_space<vmem>>, %arg8: memref<64x64xf32, #tpu.memory_space<vmem>>, %arg9: memref<64x384xf32, #tpu.memory_space<vmem>>, %arg10: memref<3x16x16xf32, #tpu.memory_space<vmem>>, %arg11: memref<3x128xf32, #tpu.memory_space<vmem>>, %arg12: memref<128x128xf32, #tpu.memory_space<vmem>>, %arg13: memref<128x384xf32, #tpu.memory_space<vmem>>, %arg14: memref<3x8x16xf32, #tpu.memory_space<vmem>>, %arg15: memref<3x128xf32, #tpu.memory_space<vmem>>, %arg16: memref<128x128xf32, #tpu.memory_space<vmem>>, %arg17: memref<128x384xf32, #tpu.memory_space<vmem>>, %arg18: memref<3x8x8xf32, #tpu.memory_space<vmem>>, %arg19: memref<3x128xf32, #tpu.memory_space<vmem>>, %arg20: memref<128x128xf32, #tpu.memory_space<vmem>>, %arg21: memref<128x256xf32, #tpu.memory_space<vmem>>, %arg22: memref<2x16x8xf32, #tpu.memory_space<vmem>>, %arg23: memref<1x128xf32, #tpu.memory_space<vmem>>, %arg24: memref<256x384xf32, #tpu.memory_space<vmem>>, %arg25: memref<3x16x16xf32, #tpu.memory_space<vmem>>, %arg26: memref<3x128xf32, #tpu.memory_space<vmem>>, %arg27: memref<128x128xf32, #tpu.memory_space<vmem>>, %arg28: memref<128x128xf32, #tpu.memory_space<vmem>>, %arg29: memref<2x16x16xf32, #tpu.memory_space<vmem>>, %arg30: memref<1x64xf32, #tpu.memory_space<vmem>>, %arg31: memref<128x192xf32, #tpu.memory_space<vmem>>, %arg32: memref<3x16x16xf32, #tpu.memory_space<vmem>>, %arg33: memref<3x64xf32, #tpu.memory_space<vmem>>, %arg34: memref<64x64xf32, #tpu.memory_space<vmem>>, %arg35: memref<64x128xf32, #tpu.memory_space<vmem>>, %arg36: memref<2x32x16xf32, #tpu.memory_space<vmem>>, %arg37: memref<1x64xf32, #tpu.memory_space<vmem>>, %arg38: memref<128x192xf32, #tpu.memory_space<vmem>>, %arg39: memref<3x32x32xf32, #tpu.memory_space<vmem>>, %arg40: memref<3x64xf32, #tpu.memory_space<vmem>>, %arg41: memref<64x64xf32, #tpu.memory_space<vmem>>, %arg42: memref<64x48xf32, #tpu.memory_space<vmem>>, %arg43: memref<1x48xf32, #tpu.memory_space<vmem>>, %arg44: memref<32x48xf32, #tpu.memory_space<vmem>>) attributes {dimension_semantics = [], scalar_prefetch = 0 : i64, scratch_operands = 0 : i64, tpu.core_type = #tpu.core_type<tc>} {
    %c0 = arith.constant 0 : index
    %c0_0 = arith.constant 0 : index
    %0 = vector.load %arg0[%c0, %c0_0] : memref<32x48xf32, #tpu.memory_space<vmem>>, vector<32x48xf32>
    %c0_1 = arith.constant 0 : index
    %c0_2 = arith.constant 0 : index
    %1 = vector.load %arg1[%c0_1, %c0_2] : memref<48x192xf32, #tpu.memory_space<vmem>>, vector<48x192xf32>
    %cst = arith.constant dense<0.000000e+00> : vector<32x192xf32>
    %2 = tpu.matmul %0, %1, %cst {dimension_numbers = #tpu.dot_dimension_numbers<[1], [0], [0], [1], [0, 0, 1, 1], [], []>} : vector<32x48xf32>, vector<48x192xf32>, vector<32x192xf32> -> vector<32x192xf32>
    %c0_3 = arith.constant 0 : index
    %c0_4 = arith.constant 0 : index
    %c0_5 = arith.constant 0 : index
    %3 = vector.load %arg2[%c0_3, %c0_4, %c0_5] : memref<3x32x32xf32, #tpu.memory_space<vmem>>, vector<1x32x32xf32>
    %4 = vector.shape_cast %3 : vector<1x32x32xf32> to vector<32x32xf32>
    %5 = vector.extract_strided_slice %2 {offsets = [0, 0], sizes = [32, 64], strides = [1, 1]} : vector<32x192xf32> to vector<32x64xf32>
    %cst_6 = arith.constant dense<0.000000e+00> : vector<32x64xf32>
    %6 = tpu.matmul %4, %5, %cst_6 {dimension_numbers = #tpu.dot_dimension_numbers<[1], [0], [0], [1], [0, 0, 1, 1], [], []>} : vector<32x32xf32>, vector<32x64xf32>, vector<32x64xf32> -> vector<32x64xf32>
    %c1 = arith.constant 1 : index
    %c0_7 = arith.constant 0 : index
    %c0_8 = arith.constant 0 : index
    %7 = vector.load %arg2[%c1, %c0_7, %c0_8] : memref<3x32x32xf32, #tpu.memory_space<vmem>>, vector<1x32x32xf32>
    %8 = vector.shape_cast %7 : vector<1x32x32xf32> to vector<32x32xf32>
    %9 = vector.extract_strided_slice %2 {offsets = [0, 64], sizes = [32, 64], strides = [1, 1]} : vector<32x192xf32> to vector<32x64xf32>
    %cst_9 = arith.constant dense<0.000000e+00> : vector<32x64xf32>
    %10 = tpu.matmul %8, %9, %cst_9 {dimension_numbers = #tpu.dot_dimension_numbers<[1], [0], [0], [1], [0, 0, 1, 1], [], []>} : vector<32x32xf32>, vector<32x64xf32>, vector<32x64xf32> -> vector<32x64xf32>
    %11 = arith.addf %6, %10 : vector<32x64xf32>
    %c2 = arith.constant 2 : index
    %c0_10 = arith.constant 0 : index
    %c0_11 = arith.constant 0 : index
    %12 = vector.load %arg2[%c2, %c0_10, %c0_11] : memref<3x32x32xf32, #tpu.memory_space<vmem>>, vector<1x32x32xf32>
    %13 = vector.shape_cast %12 : vector<1x32x32xf32> to vector<32x32xf32>
    %14 = vector.extract_strided_slice %2 {offsets = [0, 128], sizes = [32, 64], strides = [1, 1]} : vector<32x192xf32> to vector<32x64xf32>
    %cst_12 = arith.constant dense<0.000000e+00> : vector<32x64xf32>
    %15 = tpu.matmul %13, %14, %cst_12 {dimension_numbers = #tpu.dot_dimension_numbers<[1], [0], [0], [1], [0, 0, 1, 1], [], []>} : vector<32x32xf32>, vector<32x64xf32>, vector<32x64xf32> -> vector<32x64xf32>
    %16 = arith.addf %11, %15 : vector<32x64xf32>
    %c0_13 = arith.constant 0 : index
    %c0_14 = arith.constant 0 : index
    %17 = vector.load %arg3[%c0_13, %c0_14] : memref<3x64xf32, #tpu.memory_space<vmem>>, vector<1x64xf32>
    %18 = vector.broadcast %17 : vector<1x64xf32> to vector<32x64xf32>
    %19 = arith.addf %16, %18 : vector<32x64xf32>
    %cst_15 = arith.constant 0.000000e+00 : f32
    %20 = vector.broadcast %cst_15 : f32 to vector<32x64xf32>
    %21 = arith.maximumf %19, %20 : vector<32x64xf32>
    %cst_16 = arith.constant 1.000000e+00 : f32
    %22 = vector.broadcast %cst_16 : f32 to vector<1x32xf32>
    %c0_17 = arith.constant 0 : index
    %c0_18 = arith.constant 0 : index
    %23 = vector.load %arg4[%c0_17, %c0_18] : memref<64x64xf32, #tpu.memory_space<vmem>>, vector<64x64xf32>
    %cst_19 = arith.constant dense<0.000000e+00> : vector<1x64xf32>
    %24 = tpu.matmul %22, %21, %cst_19 {dimension_numbers = #tpu.dot_dimension_numbers<[1], [0], [0], [1], [0, 0, 1, 1], [], []>} : vector<1x32xf32>, vector<32x64xf32>, vector<1x64xf32> -> vector<1x64xf32>
    %cst_20 = arith.constant dense<0.000000e+00> : vector<1x64xf32>
    %25 = tpu.matmul %24, %23, %cst_20 {dimension_numbers = #tpu.dot_dimension_numbers<[1], [0], [0], [1], [0, 0, 1, 1], [], []>} : vector<1x64xf32>, vector<64x64xf32>, vector<1x64xf32> -> vector<1x64xf32>
    %26 = vector.broadcast %25 : vector<1x64xf32> to vector<32x64xf32>
    %27 = arith.subf %21, %26 : vector<32x64xf32>
    %28 = arith.mulf %27, %27 : vector<32x64xf32>
    %cst_21 = arith.constant dense<0.000000e+00> : vector<1x64xf32>
    %29 = tpu.matmul %22, %28, %cst_21 {dimension_numbers = #tpu.dot_dimension_numbers<[1], [0], [0], [1], [0, 0, 1, 1], [], []>} : vector<1x32xf32>, vector<32x64xf32>, vector<1x64xf32> -> vector<1x64xf32>
    %cst_22 = arith.constant dense<0.000000e+00> : vector<1x64xf32>
    %30 = tpu.matmul %29, %23, %cst_22 {dimension_numbers = #tpu.dot_dimension_numbers<[1], [0], [0], [1], [0, 0, 1, 1], [], []>} : vector<1x64xf32>, vector<64x64xf32>, vector<1x64xf32> -> vector<1x64xf32>
    %cst_23 = arith.constant 9.99999974E-6 : f32
    %31 = vector.broadcast %cst_23 : f32 to vector<1x64xf32>
    %32 = arith.addf %30, %31 : vector<1x64xf32>
    %33 = math.rsqrt %32 : vector<1x64xf32>
    %c1_24 = arith.constant 1 : index
    %c0_25 = arith.constant 0 : index
    %34 = vector.load %arg3[%c1_24, %c0_25] : memref<3x64xf32, #tpu.memory_space<vmem>>, vector<1x64xf32>
    %35 = arith.mulf %33, %34 : vector<1x64xf32>
    %36 = vector.broadcast %35 : vector<1x64xf32> to vector<32x64xf32>
    %37 = arith.mulf %27, %36 : vector<32x64xf32>
    %c2_26 = arith.constant 2 : index
    %c0_27 = arith.constant 0 : index
    %38 = vector.load %arg3[%c2_26, %c0_27] : memref<3x64xf32, #tpu.memory_space<vmem>>, vector<1x64xf32>
    %39 = vector.broadcast %38 : vector<1x64xf32> to vector<32x64xf32>
    %40 = arith.addf %37, %39 : vector<32x64xf32>
    %c0_28 = arith.constant 0 : index
    %c0_29 = arith.constant 0 : index
    %41 = vector.load %arg5[%c0_28, %c0_29] : memref<64x192xf32, #tpu.memory_space<vmem>>, vector<64x192xf32>
    %cst_30 = arith.constant dense<0.000000e+00> : vector<32x192xf32>
    %42 = tpu.matmul %40, %41, %cst_30 {dimension_numbers = #tpu.dot_dimension_numbers<[1], [0], [0], [1], [0, 0, 1, 1], [], []>} : vector<32x64xf32>, vector<64x192xf32>, vector<32x192xf32> -> vector<32x192xf32>
    %c0_31 = arith.constant 0 : index
    %c0_32 = arith.constant 0 : index
    %c0_33 = arith.constant 0 : index
    %43 = vector.load %arg6[%c0_31, %c0_32, %c0_33] : memref<3x16x32xf32, #tpu.memory_space<vmem>>, vector<1x16x32xf32>
    %44 = vector.shape_cast %43 : vector<1x16x32xf32> to vector<16x32xf32>
    %45 = vector.extract_strided_slice %42 {offsets = [0, 0], sizes = [32, 64], strides = [1, 1]} : vector<32x192xf32> to vector<32x64xf32>
    %cst_34 = arith.constant dense<0.000000e+00> : vector<16x64xf32>
    %46 = tpu.matmul %44, %45, %cst_34 {dimension_numbers = #tpu.dot_dimension_numbers<[1], [0], [0], [1], [0, 0, 1, 1], [], []>} : vector<16x32xf32>, vector<32x64xf32>, vector<16x64xf32> -> vector<16x64xf32>
    %c1_35 = arith.constant 1 : index
    %c0_36 = arith.constant 0 : index
    %c0_37 = arith.constant 0 : index
    %47 = vector.load %arg6[%c1_35, %c0_36, %c0_37] : memref<3x16x32xf32, #tpu.memory_space<vmem>>, vector<1x16x32xf32>
    %48 = vector.shape_cast %47 : vector<1x16x32xf32> to vector<16x32xf32>
    %49 = vector.extract_strided_slice %42 {offsets = [0, 64], sizes = [32, 64], strides = [1, 1]} : vector<32x192xf32> to vector<32x64xf32>
    %cst_38 = arith.constant dense<0.000000e+00> : vector<16x64xf32>
    %50 = tpu.matmul %48, %49, %cst_38 {dimension_numbers = #tpu.dot_dimension_numbers<[1], [0], [0], [1], [0, 0, 1, 1], [], []>} : vector<16x32xf32>, vector<32x64xf32>, vector<16x64xf32> -> vector<16x64xf32>
    %51 = arith.addf %46, %50 : vector<16x64xf32>
    %c2_39 = arith.constant 2 : index
    %c0_40 = arith.constant 0 : index
    %c0_41 = arith.constant 0 : index
    %52 = vector.load %arg6[%c2_39, %c0_40, %c0_41] : memref<3x16x32xf32, #tpu.memory_space<vmem>>, vector<1x16x32xf32>
    %53 = vector.shape_cast %52 : vector<1x16x32xf32> to vector<16x32xf32>
    %54 = vector.extract_strided_slice %42 {offsets = [0, 128], sizes = [32, 64], strides = [1, 1]} : vector<32x192xf32> to vector<32x64xf32>
    %cst_42 = arith.constant dense<0.000000e+00> : vector<16x64xf32>
    %55 = tpu.matmul %53, %54, %cst_42 {dimension_numbers = #tpu.dot_dimension_numbers<[1], [0], [0], [1], [0, 0, 1, 1], [], []>} : vector<16x32xf32>, vector<32x64xf32>, vector<16x64xf32> -> vector<16x64xf32>
    %56 = arith.addf %51, %55 : vector<16x64xf32>
    %c0_43 = arith.constant 0 : index
    %c0_44 = arith.constant 0 : index
    %57 = vector.load %arg7[%c0_43, %c0_44] : memref<3x64xf32, #tpu.memory_space<vmem>>, vector<1x64xf32>
    %58 = vector.broadcast %57 : vector<1x64xf32> to vector<16x64xf32>
    %59 = arith.addf %56, %58 : vector<16x64xf32>
    %cst_45 = arith.constant 0.000000e+00 : f32
    %60 = vector.broadcast %cst_45 : f32 to vector<16x64xf32>
    %61 = arith.maximumf %59, %60 : vector<16x64xf32>
    %cst_46 = arith.constant 1.000000e+00 : f32
    %62 = vector.broadcast %cst_46 : f32 to vector<1x16xf32>
    %c0_47 = arith.constant 0 : index
    %c0_48 = arith.constant 0 : index
    %63 = vector.load %arg8[%c0_47, %c0_48] : memref<64x64xf32, #tpu.memory_space<vmem>>, vector<64x64xf32>
    %cst_49 = arith.constant dense<0.000000e+00> : vector<1x64xf32>
    %64 = tpu.matmul %62, %61, %cst_49 {dimension_numbers = #tpu.dot_dimension_numbers<[1], [0], [0], [1], [0, 0, 1, 1], [], []>} : vector<1x16xf32>, vector<16x64xf32>, vector<1x64xf32> -> vector<1x64xf32>
    %cst_50 = arith.constant dense<0.000000e+00> : vector<1x64xf32>
    %65 = tpu.matmul %64, %63, %cst_50 {dimension_numbers = #tpu.dot_dimension_numbers<[1], [0], [0], [1], [0, 0, 1, 1], [], []>} : vector<1x64xf32>, vector<64x64xf32>, vector<1x64xf32> -> vector<1x64xf32>
    %66 = vector.broadcast %65 : vector<1x64xf32> to vector<16x64xf32>
    %67 = arith.subf %61, %66 : vector<16x64xf32>
    %68 = arith.mulf %67, %67 : vector<16x64xf32>
    %cst_51 = arith.constant dense<0.000000e+00> : vector<1x64xf32>
    %69 = tpu.matmul %62, %68, %cst_51 {dimension_numbers = #tpu.dot_dimension_numbers<[1], [0], [0], [1], [0, 0, 1, 1], [], []>} : vector<1x16xf32>, vector<16x64xf32>, vector<1x64xf32> -> vector<1x64xf32>
    %cst_52 = arith.constant dense<0.000000e+00> : vector<1x64xf32>
    %70 = tpu.matmul %69, %63, %cst_52 {dimension_numbers = #tpu.dot_dimension_numbers<[1], [0], [0], [1], [0, 0, 1, 1], [], []>} : vector<1x64xf32>, vector<64x64xf32>, vector<1x64xf32> -> vector<1x64xf32>
    %cst_53 = arith.constant 9.99999974E-6 : f32
    %71 = vector.broadcast %cst_53 : f32 to vector<1x64xf32>
    %72 = arith.addf %70, %71 : vector<1x64xf32>
    %73 = math.rsqrt %72 : vector<1x64xf32>
    %c1_54 = arith.constant 1 : index
    %c0_55 = arith.constant 0 : index
    %74 = vector.load %arg7[%c1_54, %c0_55] : memref<3x64xf32, #tpu.memory_space<vmem>>, vector<1x64xf32>
    %75 = arith.mulf %73, %74 : vector<1x64xf32>
    %76 = vector.broadcast %75 : vector<1x64xf32> to vector<16x64xf32>
    %77 = arith.mulf %67, %76 : vector<16x64xf32>
    %c2_56 = arith.constant 2 : index
    %c0_57 = arith.constant 0 : index
    %78 = vector.load %arg7[%c2_56, %c0_57] : memref<3x64xf32, #tpu.memory_space<vmem>>, vector<1x64xf32>
    %79 = vector.broadcast %78 : vector<1x64xf32> to vector<16x64xf32>
    %80 = arith.addf %77, %79 : vector<16x64xf32>
    %c0_58 = arith.constant 0 : index
    %c0_59 = arith.constant 0 : index
    %81 = vector.load %arg9[%c0_58, %c0_59] : memref<64x384xf32, #tpu.memory_space<vmem>>, vector<64x384xf32>
    %cst_60 = arith.constant dense<0.000000e+00> : vector<16x384xf32>
    %82 = tpu.matmul %80, %81, %cst_60 {dimension_numbers = #tpu.dot_dimension_numbers<[1], [0], [0], [1], [0, 0, 1, 1], [], []>} : vector<16x64xf32>, vector<64x384xf32>, vector<16x384xf32> -> vector<16x384xf32>
    %c0_61 = arith.constant 0 : index
    %c0_62 = arith.constant 0 : index
    %c0_63 = arith.constant 0 : index
    %83 = vector.load %arg10[%c0_61, %c0_62, %c0_63] : memref<3x16x16xf32, #tpu.memory_space<vmem>>, vector<1x16x16xf32>
    %84 = vector.shape_cast %83 : vector<1x16x16xf32> to vector<16x16xf32>
    %85 = vector.extract_strided_slice %82 {offsets = [0, 0], sizes = [16, 128], strides = [1, 1]} : vector<16x384xf32> to vector<16x128xf32>
    %cst_64 = arith.constant dense<0.000000e+00> : vector<16x128xf32>
    %86 = tpu.matmul %84, %85, %cst_64 {dimension_numbers = #tpu.dot_dimension_numbers<[1], [0], [0], [1], [0, 0, 1, 1], [], []>} : vector<16x16xf32>, vector<16x128xf32>, vector<16x128xf32> -> vector<16x128xf32>
    %c1_65 = arith.constant 1 : index
    %c0_66 = arith.constant 0 : index
    %c0_67 = arith.constant 0 : index
    %87 = vector.load %arg10[%c1_65, %c0_66, %c0_67] : memref<3x16x16xf32, #tpu.memory_space<vmem>>, vector<1x16x16xf32>
    %88 = vector.shape_cast %87 : vector<1x16x16xf32> to vector<16x16xf32>
    %89 = vector.extract_strided_slice %82 {offsets = [0, 128], sizes = [16, 128], strides = [1, 1]} : vector<16x384xf32> to vector<16x128xf32>
    %cst_68 = arith.constant dense<0.000000e+00> : vector<16x128xf32>
    %90 = tpu.matmul %88, %89, %cst_68 {dimension_numbers = #tpu.dot_dimension_numbers<[1], [0], [0], [1], [0, 0, 1, 1], [], []>} : vector<16x16xf32>, vector<16x128xf32>, vector<16x128xf32> -> vector<16x128xf32>
    %91 = arith.addf %86, %90 : vector<16x128xf32>
    %c2_69 = arith.constant 2 : index
    %c0_70 = arith.constant 0 : index
    %c0_71 = arith.constant 0 : index
    %92 = vector.load %arg10[%c2_69, %c0_70, %c0_71] : memref<3x16x16xf32, #tpu.memory_space<vmem>>, vector<1x16x16xf32>
    %93 = vector.shape_cast %92 : vector<1x16x16xf32> to vector<16x16xf32>
    %94 = vector.extract_strided_slice %82 {offsets = [0, 256], sizes = [16, 128], strides = [1, 1]} : vector<16x384xf32> to vector<16x128xf32>
    %cst_72 = arith.constant dense<0.000000e+00> : vector<16x128xf32>
    %95 = tpu.matmul %93, %94, %cst_72 {dimension_numbers = #tpu.dot_dimension_numbers<[1], [0], [0], [1], [0, 0, 1, 1], [], []>} : vector<16x16xf32>, vector<16x128xf32>, vector<16x128xf32> -> vector<16x128xf32>
    %96 = arith.addf %91, %95 : vector<16x128xf32>
    %c0_73 = arith.constant 0 : index
    %c0_74 = arith.constant 0 : index
    %97 = vector.load %arg11[%c0_73, %c0_74] : memref<3x128xf32, #tpu.memory_space<vmem>>, vector<1x128xf32>
    %98 = vector.broadcast %97 : vector<1x128xf32> to vector<16x128xf32>
    %99 = arith.addf %96, %98 : vector<16x128xf32>
    %cst_75 = arith.constant 0.000000e+00 : f32
    %100 = vector.broadcast %cst_75 : f32 to vector<16x128xf32>
    %101 = arith.maximumf %99, %100 : vector<16x128xf32>
    %cst_76 = arith.constant 1.000000e+00 : f32
    %102 = vector.broadcast %cst_76 : f32 to vector<1x16xf32>
    %c0_77 = arith.constant 0 : index
    %c0_78 = arith.constant 0 : index
    %103 = vector.load %arg12[%c0_77, %c0_78] : memref<128x128xf32, #tpu.memory_space<vmem>>, vector<128x128xf32>
    %cst_79 = arith.constant dense<0.000000e+00> : vector<1x128xf32>
    %104 = tpu.matmul %102, %101, %cst_79 {dimension_numbers = #tpu.dot_dimension_numbers<[1], [0], [0], [1], [0, 0, 1, 1], [], []>} : vector<1x16xf32>, vector<16x128xf32>, vector<1x128xf32> -> vector<1x128xf32>
    %cst_80 = arith.constant dense<0.000000e+00> : vector<1x128xf32>
    %105 = tpu.matmul %104, %103, %cst_80 {dimension_numbers = #tpu.dot_dimension_numbers<[1], [0], [0], [1], [0, 0, 1, 1], [], []>} : vector<1x128xf32>, vector<128x128xf32>, vector<1x128xf32> -> vector<1x128xf32>
    %106 = vector.broadcast %105 : vector<1x128xf32> to vector<16x128xf32>
    %107 = arith.subf %101, %106 : vector<16x128xf32>
    %108 = arith.mulf %107, %107 : vector<16x128xf32>
    %cst_81 = arith.constant dense<0.000000e+00> : vector<1x128xf32>
    %109 = tpu.matmul %102, %108, %cst_81 {dimension_numbers = #tpu.dot_dimension_numbers<[1], [0], [0], [1], [0, 0, 1, 1], [], []>} : vector<1x16xf32>, vector<16x128xf32>, vector<1x128xf32> -> vector<1x128xf32>
    %cst_82 = arith.constant dense<0.000000e+00> : vector<1x128xf32>
    %110 = tpu.matmul %109, %103, %cst_82 {dimension_numbers = #tpu.dot_dimension_numbers<[1], [0], [0], [1], [0, 0, 1, 1], [], []>} : vector<1x128xf32>, vector<128x128xf32>, vector<1x128xf32> -> vector<1x128xf32>
    %cst_83 = arith.constant 9.99999974E-6 : f32
    %111 = vector.broadcast %cst_83 : f32 to vector<1x128xf32>
    %112 = arith.addf %110, %111 : vector<1x128xf32>
    %113 = math.rsqrt %112 : vector<1x128xf32>
    %c1_84 = arith.constant 1 : index
    %c0_85 = arith.constant 0 : index
    %114 = vector.load %arg11[%c1_84, %c0_85] : memref<3x128xf32, #tpu.memory_space<vmem>>, vector<1x128xf32>
    %115 = arith.mulf %113, %114 : vector<1x128xf32>
    %116 = vector.broadcast %115 : vector<1x128xf32> to vector<16x128xf32>
    %117 = arith.mulf %107, %116 : vector<16x128xf32>
    %c2_86 = arith.constant 2 : index
    %c0_87 = arith.constant 0 : index
    %118 = vector.load %arg11[%c2_86, %c0_87] : memref<3x128xf32, #tpu.memory_space<vmem>>, vector<1x128xf32>
    %119 = vector.broadcast %118 : vector<1x128xf32> to vector<16x128xf32>
    %120 = arith.addf %117, %119 : vector<16x128xf32>
    %c0_88 = arith.constant 0 : index
    %c0_89 = arith.constant 0 : index
    %121 = vector.load %arg13[%c0_88, %c0_89] : memref<128x384xf32, #tpu.memory_space<vmem>>, vector<128x384xf32>
    %cst_90 = arith.constant dense<0.000000e+00> : vector<16x384xf32>
    %122 = tpu.matmul %120, %121, %cst_90 {dimension_numbers = #tpu.dot_dimension_numbers<[1], [0], [0], [1], [0, 0, 1, 1], [], []>} : vector<16x128xf32>, vector<128x384xf32>, vector<16x384xf32> -> vector<16x384xf32>
    %c0_91 = arith.constant 0 : index
    %c0_92 = arith.constant 0 : index
    %c0_93 = arith.constant 0 : index
    %123 = vector.load %arg14[%c0_91, %c0_92, %c0_93] : memref<3x8x16xf32, #tpu.memory_space<vmem>>, vector<1x8x16xf32>
    %124 = vector.shape_cast %123 : vector<1x8x16xf32> to vector<8x16xf32>
    %125 = vector.extract_strided_slice %122 {offsets = [0, 0], sizes = [16, 128], strides = [1, 1]} : vector<16x384xf32> to vector<16x128xf32>
    %cst_94 = arith.constant dense<0.000000e+00> : vector<8x128xf32>
    %126 = tpu.matmul %124, %125, %cst_94 {dimension_numbers = #tpu.dot_dimension_numbers<[1], [0], [0], [1], [0, 0, 1, 1], [], []>} : vector<8x16xf32>, vector<16x128xf32>, vector<8x128xf32> -> vector<8x128xf32>
    %c1_95 = arith.constant 1 : index
    %c0_96 = arith.constant 0 : index
    %c0_97 = arith.constant 0 : index
    %127 = vector.load %arg14[%c1_95, %c0_96, %c0_97] : memref<3x8x16xf32, #tpu.memory_space<vmem>>, vector<1x8x16xf32>
    %128 = vector.shape_cast %127 : vector<1x8x16xf32> to vector<8x16xf32>
    %129 = vector.extract_strided_slice %122 {offsets = [0, 128], sizes = [16, 128], strides = [1, 1]} : vector<16x384xf32> to vector<16x128xf32>
    %cst_98 = arith.constant dense<0.000000e+00> : vector<8x128xf32>
    %130 = tpu.matmul %128, %129, %cst_98 {dimension_numbers = #tpu.dot_dimension_numbers<[1], [0], [0], [1], [0, 0, 1, 1], [], []>} : vector<8x16xf32>, vector<16x128xf32>, vector<8x128xf32> -> vector<8x128xf32>
    %131 = arith.addf %126, %130 : vector<8x128xf32>
    %c2_99 = arith.constant 2 : index
    %c0_100 = arith.constant 0 : index
    %c0_101 = arith.constant 0 : index
    %132 = vector.load %arg14[%c2_99, %c0_100, %c0_101] : memref<3x8x16xf32, #tpu.memory_space<vmem>>, vector<1x8x16xf32>
    %133 = vector.shape_cast %132 : vector<1x8x16xf32> to vector<8x16xf32>
    %134 = vector.extract_strided_slice %122 {offsets = [0, 256], sizes = [16, 128], strides = [1, 1]} : vector<16x384xf32> to vector<16x128xf32>
    %cst_102 = arith.constant dense<0.000000e+00> : vector<8x128xf32>
    %135 = tpu.matmul %133, %134, %cst_102 {dimension_numbers = #tpu.dot_dimension_numbers<[1], [0], [0], [1], [0, 0, 1, 1], [], []>} : vector<8x16xf32>, vector<16x128xf32>, vector<8x128xf32> -> vector<8x128xf32>
    %136 = arith.addf %131, %135 : vector<8x128xf32>
    %c0_103 = arith.constant 0 : index
    %c0_104 = arith.constant 0 : index
    %137 = vector.load %arg15[%c0_103, %c0_104] : memref<3x128xf32, #tpu.memory_space<vmem>>, vector<1x128xf32>
    %138 = vector.broadcast %137 : vector<1x128xf32> to vector<8x128xf32>
    %139 = arith.addf %136, %138 : vector<8x128xf32>
    %cst_105 = arith.constant 0.000000e+00 : f32
    %140 = vector.broadcast %cst_105 : f32 to vector<8x128xf32>
    %141 = arith.maximumf %139, %140 : vector<8x128xf32>
    %cst_106 = arith.constant 1.000000e+00 : f32
    %142 = vector.broadcast %cst_106 : f32 to vector<1x8xf32>
    %c0_107 = arith.constant 0 : index
    %c0_108 = arith.constant 0 : index
    %143 = vector.load %arg16[%c0_107, %c0_108] : memref<128x128xf32, #tpu.memory_space<vmem>>, vector<128x128xf32>
    %cst_109 = arith.constant dense<0.000000e+00> : vector<1x128xf32>
    %144 = tpu.matmul %142, %141, %cst_109 {dimension_numbers = #tpu.dot_dimension_numbers<[1], [0], [0], [1], [0, 0, 1, 1], [], []>} : vector<1x8xf32>, vector<8x128xf32>, vector<1x128xf32> -> vector<1x128xf32>
    %cst_110 = arith.constant dense<0.000000e+00> : vector<1x128xf32>
    %145 = tpu.matmul %144, %143, %cst_110 {dimension_numbers = #tpu.dot_dimension_numbers<[1], [0], [0], [1], [0, 0, 1, 1], [], []>} : vector<1x128xf32>, vector<128x128xf32>, vector<1x128xf32> -> vector<1x128xf32>
    %146 = vector.broadcast %145 : vector<1x128xf32> to vector<8x128xf32>
    %147 = arith.subf %141, %146 : vector<8x128xf32>
    %148 = arith.mulf %147, %147 : vector<8x128xf32>
    %cst_111 = arith.constant dense<0.000000e+00> : vector<1x128xf32>
    %149 = tpu.matmul %142, %148, %cst_111 {dimension_numbers = #tpu.dot_dimension_numbers<[1], [0], [0], [1], [0, 0, 1, 1], [], []>} : vector<1x8xf32>, vector<8x128xf32>, vector<1x128xf32> -> vector<1x128xf32>
    %cst_112 = arith.constant dense<0.000000e+00> : vector<1x128xf32>
    %150 = tpu.matmul %149, %143, %cst_112 {dimension_numbers = #tpu.dot_dimension_numbers<[1], [0], [0], [1], [0, 0, 1, 1], [], []>} : vector<1x128xf32>, vector<128x128xf32>, vector<1x128xf32> -> vector<1x128xf32>
    %cst_113 = arith.constant 9.99999974E-6 : f32
    %151 = vector.broadcast %cst_113 : f32 to vector<1x128xf32>
    %152 = arith.addf %150, %151 : vector<1x128xf32>
    %153 = math.rsqrt %152 : vector<1x128xf32>
    %c1_114 = arith.constant 1 : index
    %c0_115 = arith.constant 0 : index
    %154 = vector.load %arg15[%c1_114, %c0_115] : memref<3x128xf32, #tpu.memory_space<vmem>>, vector<1x128xf32>
    %155 = arith.mulf %153, %154 : vector<1x128xf32>
    %156 = vector.broadcast %155 : vector<1x128xf32> to vector<8x128xf32>
    %157 = arith.mulf %147, %156 : vector<8x128xf32>
    %c2_116 = arith.constant 2 : index
    %c0_117 = arith.constant 0 : index
    %158 = vector.load %arg15[%c2_116, %c0_117] : memref<3x128xf32, #tpu.memory_space<vmem>>, vector<1x128xf32>
    %159 = vector.broadcast %158 : vector<1x128xf32> to vector<8x128xf32>
    %160 = arith.addf %157, %159 : vector<8x128xf32>
    %c0_118 = arith.constant 0 : index
    %c0_119 = arith.constant 0 : index
    %161 = vector.load %arg17[%c0_118, %c0_119] : memref<128x384xf32, #tpu.memory_space<vmem>>, vector<128x384xf32>
    %cst_120 = arith.constant dense<0.000000e+00> : vector<8x384xf32>
    %162 = tpu.matmul %160, %161, %cst_120 {dimension_numbers = #tpu.dot_dimension_numbers<[1], [0], [0], [1], [0, 0, 1, 1], [], []>} : vector<8x128xf32>, vector<128x384xf32>, vector<8x384xf32> -> vector<8x384xf32>
    %c0_121 = arith.constant 0 : index
    %c0_122 = arith.constant 0 : index
    %c0_123 = arith.constant 0 : index
    %163 = vector.load %arg18[%c0_121, %c0_122, %c0_123] : memref<3x8x8xf32, #tpu.memory_space<vmem>>, vector<1x8x8xf32>
    %164 = vector.shape_cast %163 : vector<1x8x8xf32> to vector<8x8xf32>
    %165 = vector.extract_strided_slice %162 {offsets = [0, 0], sizes = [8, 128], strides = [1, 1]} : vector<8x384xf32> to vector<8x128xf32>
    %cst_124 = arith.constant dense<0.000000e+00> : vector<8x128xf32>
    %166 = tpu.matmul %164, %165, %cst_124 {dimension_numbers = #tpu.dot_dimension_numbers<[1], [0], [0], [1], [0, 0, 1, 1], [], []>} : vector<8x8xf32>, vector<8x128xf32>, vector<8x128xf32> -> vector<8x128xf32>
    %c1_125 = arith.constant 1 : index
    %c0_126 = arith.constant 0 : index
    %c0_127 = arith.constant 0 : index
    %167 = vector.load %arg18[%c1_125, %c0_126, %c0_127] : memref<3x8x8xf32, #tpu.memory_space<vmem>>, vector<1x8x8xf32>
    %168 = vector.shape_cast %167 : vector<1x8x8xf32> to vector<8x8xf32>
    %169 = vector.extract_strided_slice %162 {offsets = [0, 128], sizes = [8, 128], strides = [1, 1]} : vector<8x384xf32> to vector<8x128xf32>
    %cst_128 = arith.constant dense<0.000000e+00> : vector<8x128xf32>
    %170 = tpu.matmul %168, %169, %cst_128 {dimension_numbers = #tpu.dot_dimension_numbers<[1], [0], [0], [1], [0, 0, 1, 1], [], []>} : vector<8x8xf32>, vector<8x128xf32>, vector<8x128xf32> -> vector<8x128xf32>
    %171 = arith.addf %166, %170 : vector<8x128xf32>
    %c2_129 = arith.constant 2 : index
    %c0_130 = arith.constant 0 : index
    %c0_131 = arith.constant 0 : index
    %172 = vector.load %arg18[%c2_129, %c0_130, %c0_131] : memref<3x8x8xf32, #tpu.memory_space<vmem>>, vector<1x8x8xf32>
    %173 = vector.shape_cast %172 : vector<1x8x8xf32> to vector<8x8xf32>
    %174 = vector.extract_strided_slice %162 {offsets = [0, 256], sizes = [8, 128], strides = [1, 1]} : vector<8x384xf32> to vector<8x128xf32>
    %cst_132 = arith.constant dense<0.000000e+00> : vector<8x128xf32>
    %175 = tpu.matmul %173, %174, %cst_132 {dimension_numbers = #tpu.dot_dimension_numbers<[1], [0], [0], [1], [0, 0, 1, 1], [], []>} : vector<8x8xf32>, vector<8x128xf32>, vector<8x128xf32> -> vector<8x128xf32>
    %176 = arith.addf %171, %175 : vector<8x128xf32>
    %c0_133 = arith.constant 0 : index
    %c0_134 = arith.constant 0 : index
    %177 = vector.load %arg19[%c0_133, %c0_134] : memref<3x128xf32, #tpu.memory_space<vmem>>, vector<1x128xf32>
    %178 = vector.broadcast %177 : vector<1x128xf32> to vector<8x128xf32>
    %179 = arith.addf %176, %178 : vector<8x128xf32>
    %cst_135 = arith.constant 0.000000e+00 : f32
    %180 = vector.broadcast %cst_135 : f32 to vector<8x128xf32>
    %181 = arith.maximumf %179, %180 : vector<8x128xf32>
    %cst_136 = arith.constant 1.000000e+00 : f32
    %182 = vector.broadcast %cst_136 : f32 to vector<1x8xf32>
    %c0_137 = arith.constant 0 : index
    %c0_138 = arith.constant 0 : index
    %183 = vector.load %arg20[%c0_137, %c0_138] : memref<128x128xf32, #tpu.memory_space<vmem>>, vector<128x128xf32>
    %cst_139 = arith.constant dense<0.000000e+00> : vector<1x128xf32>
    %184 = tpu.matmul %182, %181, %cst_139 {dimension_numbers = #tpu.dot_dimension_numbers<[1], [0], [0], [1], [0, 0, 1, 1], [], []>} : vector<1x8xf32>, vector<8x128xf32>, vector<1x128xf32> -> vector<1x128xf32>
    %cst_140 = arith.constant dense<0.000000e+00> : vector<1x128xf32>
    %185 = tpu.matmul %184, %183, %cst_140 {dimension_numbers = #tpu.dot_dimension_numbers<[1], [0], [0], [1], [0, 0, 1, 1], [], []>} : vector<1x128xf32>, vector<128x128xf32>, vector<1x128xf32> -> vector<1x128xf32>
    %186 = vector.broadcast %185 : vector<1x128xf32> to vector<8x128xf32>
    %187 = arith.subf %181, %186 : vector<8x128xf32>
    %188 = arith.mulf %187, %187 : vector<8x128xf32>
    %cst_141 = arith.constant dense<0.000000e+00> : vector<1x128xf32>
    %189 = tpu.matmul %182, %188, %cst_141 {dimension_numbers = #tpu.dot_dimension_numbers<[1], [0], [0], [1], [0, 0, 1, 1], [], []>} : vector<1x8xf32>, vector<8x128xf32>, vector<1x128xf32> -> vector<1x128xf32>
    %cst_142 = arith.constant dense<0.000000e+00> : vector<1x128xf32>
    %190 = tpu.matmul %189, %183, %cst_142 {dimension_numbers = #tpu.dot_dimension_numbers<[1], [0], [0], [1], [0, 0, 1, 1], [], []>} : vector<1x128xf32>, vector<128x128xf32>, vector<1x128xf32> -> vector<1x128xf32>
    %cst_143 = arith.constant 9.99999974E-6 : f32
    %191 = vector.broadcast %cst_143 : f32 to vector<1x128xf32>
    %192 = arith.addf %190, %191 : vector<1x128xf32>
    %193 = math.rsqrt %192 : vector<1x128xf32>
    %c1_144 = arith.constant 1 : index
    %c0_145 = arith.constant 0 : index
    %194 = vector.load %arg19[%c1_144, %c0_145] : memref<3x128xf32, #tpu.memory_space<vmem>>, vector<1x128xf32>
    %195 = arith.mulf %193, %194 : vector<1x128xf32>
    %196 = vector.broadcast %195 : vector<1x128xf32> to vector<8x128xf32>
    %197 = arith.mulf %187, %196 : vector<8x128xf32>
    %c2_146 = arith.constant 2 : index
    %c0_147 = arith.constant 0 : index
    %198 = vector.load %arg19[%c2_146, %c0_147] : memref<3x128xf32, #tpu.memory_space<vmem>>, vector<1x128xf32>
    %199 = vector.broadcast %198 : vector<1x128xf32> to vector<8x128xf32>
    %200 = arith.addf %197, %199 : vector<8x128xf32>
    %c0_148 = arith.constant 0 : index
    %c0_149 = arith.constant 0 : index
    %201 = vector.load %arg21[%c0_148, %c0_149] : memref<128x256xf32, #tpu.memory_space<vmem>>, vector<128x256xf32>
    %cst_150 = arith.constant dense<0.000000e+00> : vector<8x256xf32>
    %202 = tpu.matmul %200, %201, %cst_150 {dimension_numbers = #tpu.dot_dimension_numbers<[1], [0], [0], [1], [0, 0, 1, 1], [], []>} : vector<8x128xf32>, vector<128x256xf32>, vector<8x256xf32> -> vector<8x256xf32>
    %c0_151 = arith.constant 0 : index
    %c0_152 = arith.constant 0 : index
    %c0_153 = arith.constant 0 : index
    %203 = vector.load %arg22[%c0_151, %c0_152, %c0_153] : memref<2x16x8xf32, #tpu.memory_space<vmem>>, vector<1x16x8xf32>
    %204 = vector.shape_cast %203 : vector<1x16x8xf32> to vector<16x8xf32>
    %205 = vector.extract_strided_slice %202 {offsets = [0, 0], sizes = [8, 128], strides = [1, 1]} : vector<8x256xf32> to vector<8x128xf32>
    %cst_154 = arith.constant dense<0.000000e+00> : vector<16x128xf32>
    %206 = tpu.matmul %204, %205, %cst_154 {dimension_numbers = #tpu.dot_dimension_numbers<[1], [0], [0], [1], [0, 0, 1, 1], [], []>} : vector<16x8xf32>, vector<8x128xf32>, vector<16x128xf32> -> vector<16x128xf32>
    %c1_155 = arith.constant 1 : index
    %c0_156 = arith.constant 0 : index
    %c0_157 = arith.constant 0 : index
    %207 = vector.load %arg22[%c1_155, %c0_156, %c0_157] : memref<2x16x8xf32, #tpu.memory_space<vmem>>, vector<1x16x8xf32>
    %208 = vector.shape_cast %207 : vector<1x16x8xf32> to vector<16x8xf32>
    %209 = vector.extract_strided_slice %202 {offsets = [0, 128], sizes = [8, 128], strides = [1, 1]} : vector<8x256xf32> to vector<8x128xf32>
    %cst_158 = arith.constant dense<0.000000e+00> : vector<16x128xf32>
    %210 = tpu.matmul %208, %209, %cst_158 {dimension_numbers = #tpu.dot_dimension_numbers<[1], [0], [0], [1], [0, 0, 1, 1], [], []>} : vector<16x8xf32>, vector<8x128xf32>, vector<16x128xf32> -> vector<16x128xf32>
    %211 = arith.addf %206, %210 : vector<16x128xf32>
    %c0_159 = arith.constant 0 : index
    %c0_160 = arith.constant 0 : index
    %212 = vector.load %arg23[%c0_159, %c0_160] : memref<1x128xf32, #tpu.memory_space<vmem>>, vector<1x128xf32>
    %213 = vector.broadcast %212 : vector<1x128xf32> to vector<16x128xf32>
    %214 = arith.addf %211, %213 : vector<16x128xf32>
    %c0_161 = arith.constant 0 : index
    %c0_162 = arith.constant 0 : index
    %215 = vector.load %arg24[%c0_161, %c0_162] : memref<256x384xf32, #tpu.memory_space<vmem>>, vector<128x384xf32>
    %cst_163 = arith.constant dense<0.000000e+00> : vector<16x384xf32>
    %216 = tpu.matmul %120, %215, %cst_163 {dimension_numbers = #tpu.dot_dimension_numbers<[1], [0], [0], [1], [0, 0, 1, 1], [], []>} : vector<16x128xf32>, vector<128x384xf32>, vector<16x384xf32> -> vector<16x384xf32>
    %c128 = arith.constant 128 : index
    %c0_164 = arith.constant 0 : index
    %217 = vector.load %arg24[%c128, %c0_164] : memref<256x384xf32, #tpu.memory_space<vmem>>, vector<128x384xf32>
    %cst_165 = arith.constant dense<0.000000e+00> : vector<16x384xf32>
    %218 = tpu.matmul %214, %217, %cst_165 {dimension_numbers = #tpu.dot_dimension_numbers<[1], [0], [0], [1], [0, 0, 1, 1], [], []>} : vector<16x128xf32>, vector<128x384xf32>, vector<16x384xf32> -> vector<16x384xf32>
    %219 = arith.addf %216, %218 : vector<16x384xf32>
    %c0_166 = arith.constant 0 : index
    %c0_167 = arith.constant 0 : index
    %c0_168 = arith.constant 0 : index
    %220 = vector.load %arg25[%c0_166, %c0_167, %c0_168] : memref<3x16x16xf32, #tpu.memory_space<vmem>>, vector<1x16x16xf32>
    %221 = vector.shape_cast %220 : vector<1x16x16xf32> to vector<16x16xf32>
    %222 = vector.extract_strided_slice %219 {offsets = [0, 0], sizes = [16, 128], strides = [1, 1]} : vector<16x384xf32> to vector<16x128xf32>
    %cst_169 = arith.constant dense<0.000000e+00> : vector<16x128xf32>
    %223 = tpu.matmul %221, %222, %cst_169 {dimension_numbers = #tpu.dot_dimension_numbers<[1], [0], [0], [1], [0, 0, 1, 1], [], []>} : vector<16x16xf32>, vector<16x128xf32>, vector<16x128xf32> -> vector<16x128xf32>
    %c1_170 = arith.constant 1 : index
    %c0_171 = arith.constant 0 : index
    %c0_172 = arith.constant 0 : index
    %224 = vector.load %arg25[%c1_170, %c0_171, %c0_172] : memref<3x16x16xf32, #tpu.memory_space<vmem>>, vector<1x16x16xf32>
    %225 = vector.shape_cast %224 : vector<1x16x16xf32> to vector<16x16xf32>
    %226 = vector.extract_strided_slice %219 {offsets = [0, 128], sizes = [16, 128], strides = [1, 1]} : vector<16x384xf32> to vector<16x128xf32>
    %cst_173 = arith.constant dense<0.000000e+00> : vector<16x128xf32>
    %227 = tpu.matmul %225, %226, %cst_173 {dimension_numbers = #tpu.dot_dimension_numbers<[1], [0], [0], [1], [0, 0, 1, 1], [], []>} : vector<16x16xf32>, vector<16x128xf32>, vector<16x128xf32> -> vector<16x128xf32>
    %228 = arith.addf %223, %227 : vector<16x128xf32>
    %c2_174 = arith.constant 2 : index
    %c0_175 = arith.constant 0 : index
    %c0_176 = arith.constant 0 : index
    %229 = vector.load %arg25[%c2_174, %c0_175, %c0_176] : memref<3x16x16xf32, #tpu.memory_space<vmem>>, vector<1x16x16xf32>
    %230 = vector.shape_cast %229 : vector<1x16x16xf32> to vector<16x16xf32>
    %231 = vector.extract_strided_slice %219 {offsets = [0, 256], sizes = [16, 128], strides = [1, 1]} : vector<16x384xf32> to vector<16x128xf32>
    %cst_177 = arith.constant dense<0.000000e+00> : vector<16x128xf32>
    %232 = tpu.matmul %230, %231, %cst_177 {dimension_numbers = #tpu.dot_dimension_numbers<[1], [0], [0], [1], [0, 0, 1, 1], [], []>} : vector<16x16xf32>, vector<16x128xf32>, vector<16x128xf32> -> vector<16x128xf32>
    %233 = arith.addf %228, %232 : vector<16x128xf32>
    %c0_178 = arith.constant 0 : index
    %c0_179 = arith.constant 0 : index
    %234 = vector.load %arg26[%c0_178, %c0_179] : memref<3x128xf32, #tpu.memory_space<vmem>>, vector<1x128xf32>
    %235 = vector.broadcast %234 : vector<1x128xf32> to vector<16x128xf32>
    %236 = arith.addf %233, %235 : vector<16x128xf32>
    %cst_180 = arith.constant 0.000000e+00 : f32
    %237 = vector.broadcast %cst_180 : f32 to vector<16x128xf32>
    %238 = arith.maximumf %236, %237 : vector<16x128xf32>
    %cst_181 = arith.constant 1.000000e+00 : f32
    %239 = vector.broadcast %cst_181 : f32 to vector<1x16xf32>
    %c0_182 = arith.constant 0 : index
    %c0_183 = arith.constant 0 : index
    %240 = vector.load %arg27[%c0_182, %c0_183] : memref<128x128xf32, #tpu.memory_space<vmem>>, vector<128x128xf32>
    %cst_184 = arith.constant dense<0.000000e+00> : vector<1x128xf32>
    %241 = tpu.matmul %239, %238, %cst_184 {dimension_numbers = #tpu.dot_dimension_numbers<[1], [0], [0], [1], [0, 0, 1, 1], [], []>} : vector<1x16xf32>, vector<16x128xf32>, vector<1x128xf32> -> vector<1x128xf32>
    %cst_185 = arith.constant dense<0.000000e+00> : vector<1x128xf32>
    %242 = tpu.matmul %241, %240, %cst_185 {dimension_numbers = #tpu.dot_dimension_numbers<[1], [0], [0], [1], [0, 0, 1, 1], [], []>} : vector<1x128xf32>, vector<128x128xf32>, vector<1x128xf32> -> vector<1x128xf32>
    %243 = vector.broadcast %242 : vector<1x128xf32> to vector<16x128xf32>
    %244 = arith.subf %238, %243 : vector<16x128xf32>
    %245 = arith.mulf %244, %244 : vector<16x128xf32>
    %cst_186 = arith.constant dense<0.000000e+00> : vector<1x128xf32>
    %246 = tpu.matmul %239, %245, %cst_186 {dimension_numbers = #tpu.dot_dimension_numbers<[1], [0], [0], [1], [0, 0, 1, 1], [], []>} : vector<1x16xf32>, vector<16x128xf32>, vector<1x128xf32> -> vector<1x128xf32>
    %cst_187 = arith.constant dense<0.000000e+00> : vector<1x128xf32>
    %247 = tpu.matmul %246, %240, %cst_187 {dimension_numbers = #tpu.dot_dimension_numbers<[1], [0], [0], [1], [0, 0, 1, 1], [], []>} : vector<1x128xf32>, vector<128x128xf32>, vector<1x128xf32> -> vector<1x128xf32>
    %cst_188 = arith.constant 9.99999974E-6 : f32
    %248 = vector.broadcast %cst_188 : f32 to vector<1x128xf32>
    %249 = arith.addf %247, %248 : vector<1x128xf32>
    %250 = math.rsqrt %249 : vector<1x128xf32>
    %c1_189 = arith.constant 1 : index
    %c0_190 = arith.constant 0 : index
    %251 = vector.load %arg26[%c1_189, %c0_190] : memref<3x128xf32, #tpu.memory_space<vmem>>, vector<1x128xf32>
    %252 = arith.mulf %250, %251 : vector<1x128xf32>
    %253 = vector.broadcast %252 : vector<1x128xf32> to vector<16x128xf32>
    %254 = arith.mulf %244, %253 : vector<16x128xf32>
    %c2_191 = arith.constant 2 : index
    %c0_192 = arith.constant 0 : index
    %255 = vector.load %arg26[%c2_191, %c0_192] : memref<3x128xf32, #tpu.memory_space<vmem>>, vector<1x128xf32>
    %256 = vector.broadcast %255 : vector<1x128xf32> to vector<16x128xf32>
    %257 = arith.addf %254, %256 : vector<16x128xf32>
    %c0_193 = arith.constant 0 : index
    %c0_194 = arith.constant 0 : index
    %258 = vector.load %arg28[%c0_193, %c0_194] : memref<128x128xf32, #tpu.memory_space<vmem>>, vector<128x128xf32>
    %cst_195 = arith.constant dense<0.000000e+00> : vector<16x128xf32>
    %259 = tpu.matmul %257, %258, %cst_195 {dimension_numbers = #tpu.dot_dimension_numbers<[1], [0], [0], [1], [0, 0, 1, 1], [], []>} : vector<16x128xf32>, vector<128x128xf32>, vector<16x128xf32> -> vector<16x128xf32>
    %c0_196 = arith.constant 0 : index
    %c0_197 = arith.constant 0 : index
    %c0_198 = arith.constant 0 : index
    %260 = vector.load %arg29[%c0_196, %c0_197, %c0_198] : memref<2x16x16xf32, #tpu.memory_space<vmem>>, vector<1x16x16xf32>
    %261 = vector.shape_cast %260 : vector<1x16x16xf32> to vector<16x16xf32>
    %262 = vector.extract_strided_slice %259 {offsets = [0, 0], sizes = [16, 64], strides = [1, 1]} : vector<16x128xf32> to vector<16x64xf32>
    %cst_199 = arith.constant dense<0.000000e+00> : vector<16x64xf32>
    %263 = tpu.matmul %261, %262, %cst_199 {dimension_numbers = #tpu.dot_dimension_numbers<[1], [0], [0], [1], [0, 0, 1, 1], [], []>} : vector<16x16xf32>, vector<16x64xf32>, vector<16x64xf32> -> vector<16x64xf32>
    %c1_200 = arith.constant 1 : index
    %c0_201 = arith.constant 0 : index
    %c0_202 = arith.constant 0 : index
    %264 = vector.load %arg29[%c1_200, %c0_201, %c0_202] : memref<2x16x16xf32, #tpu.memory_space<vmem>>, vector<1x16x16xf32>
    %265 = vector.shape_cast %264 : vector<1x16x16xf32> to vector<16x16xf32>
    %266 = vector.extract_strided_slice %259 {offsets = [0, 64], sizes = [16, 64], strides = [1, 1]} : vector<16x128xf32> to vector<16x64xf32>
    %cst_203 = arith.constant dense<0.000000e+00> : vector<16x64xf32>
    %267 = tpu.matmul %265, %266, %cst_203 {dimension_numbers = #tpu.dot_dimension_numbers<[1], [0], [0], [1], [0, 0, 1, 1], [], []>} : vector<16x16xf32>, vector<16x64xf32>, vector<16x64xf32> -> vector<16x64xf32>
    %268 = arith.addf %263, %267 : vector<16x64xf32>
    %c0_204 = arith.constant 0 : index
    %c0_205 = arith.constant 0 : index
    %269 = vector.load %arg30[%c0_204, %c0_205] : memref<1x64xf32, #tpu.memory_space<vmem>>, vector<1x64xf32>
    %270 = vector.broadcast %269 : vector<1x64xf32> to vector<16x64xf32>
    %271 = arith.addf %268, %270 : vector<16x64xf32>
    %c0_206 = arith.constant 0 : index
    %c0_207 = arith.constant 0 : index
    %272 = vector.load %arg31[%c0_206, %c0_207] : memref<128x192xf32, #tpu.memory_space<vmem>>, vector<64x192xf32>
    %cst_208 = arith.constant dense<0.000000e+00> : vector<16x192xf32>
    %273 = tpu.matmul %80, %272, %cst_208 {dimension_numbers = #tpu.dot_dimension_numbers<[1], [0], [0], [1], [0, 0, 1, 1], [], []>} : vector<16x64xf32>, vector<64x192xf32>, vector<16x192xf32> -> vector<16x192xf32>
    %c64 = arith.constant 64 : index
    %c0_209 = arith.constant 0 : index
    %274 = vector.load %arg31[%c64, %c0_209] : memref<128x192xf32, #tpu.memory_space<vmem>>, vector<64x192xf32>
    %cst_210 = arith.constant dense<0.000000e+00> : vector<16x192xf32>
    %275 = tpu.matmul %271, %274, %cst_210 {dimension_numbers = #tpu.dot_dimension_numbers<[1], [0], [0], [1], [0, 0, 1, 1], [], []>} : vector<16x64xf32>, vector<64x192xf32>, vector<16x192xf32> -> vector<16x192xf32>
    %276 = arith.addf %273, %275 : vector<16x192xf32>
    %c0_211 = arith.constant 0 : index
    %c0_212 = arith.constant 0 : index
    %c0_213 = arith.constant 0 : index
    %277 = vector.load %arg32[%c0_211, %c0_212, %c0_213] : memref<3x16x16xf32, #tpu.memory_space<vmem>>, vector<1x16x16xf32>
    %278 = vector.shape_cast %277 : vector<1x16x16xf32> to vector<16x16xf32>
    %279 = vector.extract_strided_slice %276 {offsets = [0, 0], sizes = [16, 64], strides = [1, 1]} : vector<16x192xf32> to vector<16x64xf32>
    %cst_214 = arith.constant dense<0.000000e+00> : vector<16x64xf32>
    %280 = tpu.matmul %278, %279, %cst_214 {dimension_numbers = #tpu.dot_dimension_numbers<[1], [0], [0], [1], [0, 0, 1, 1], [], []>} : vector<16x16xf32>, vector<16x64xf32>, vector<16x64xf32> -> vector<16x64xf32>
    %c1_215 = arith.constant 1 : index
    %c0_216 = arith.constant 0 : index
    %c0_217 = arith.constant 0 : index
    %281 = vector.load %arg32[%c1_215, %c0_216, %c0_217] : memref<3x16x16xf32, #tpu.memory_space<vmem>>, vector<1x16x16xf32>
    %282 = vector.shape_cast %281 : vector<1x16x16xf32> to vector<16x16xf32>
    %283 = vector.extract_strided_slice %276 {offsets = [0, 64], sizes = [16, 64], strides = [1, 1]} : vector<16x192xf32> to vector<16x64xf32>
    %cst_218 = arith.constant dense<0.000000e+00> : vector<16x64xf32>
    %284 = tpu.matmul %282, %283, %cst_218 {dimension_numbers = #tpu.dot_dimension_numbers<[1], [0], [0], [1], [0, 0, 1, 1], [], []>} : vector<16x16xf32>, vector<16x64xf32>, vector<16x64xf32> -> vector<16x64xf32>
    %285 = arith.addf %280, %284 : vector<16x64xf32>
    %c2_219 = arith.constant 2 : index
    %c0_220 = arith.constant 0 : index
    %c0_221 = arith.constant 0 : index
    %286 = vector.load %arg32[%c2_219, %c0_220, %c0_221] : memref<3x16x16xf32, #tpu.memory_space<vmem>>, vector<1x16x16xf32>
    %287 = vector.shape_cast %286 : vector<1x16x16xf32> to vector<16x16xf32>
    %288 = vector.extract_strided_slice %276 {offsets = [0, 128], sizes = [16, 64], strides = [1, 1]} : vector<16x192xf32> to vector<16x64xf32>
    %cst_222 = arith.constant dense<0.000000e+00> : vector<16x64xf32>
    %289 = tpu.matmul %287, %288, %cst_222 {dimension_numbers = #tpu.dot_dimension_numbers<[1], [0], [0], [1], [0, 0, 1, 1], [], []>} : vector<16x16xf32>, vector<16x64xf32>, vector<16x64xf32> -> vector<16x64xf32>
    %290 = arith.addf %285, %289 : vector<16x64xf32>
    %c0_223 = arith.constant 0 : index
    %c0_224 = arith.constant 0 : index
    %291 = vector.load %arg33[%c0_223, %c0_224] : memref<3x64xf32, #tpu.memory_space<vmem>>, vector<1x64xf32>
    %292 = vector.broadcast %291 : vector<1x64xf32> to vector<16x64xf32>
    %293 = arith.addf %290, %292 : vector<16x64xf32>
    %cst_225 = arith.constant 0.000000e+00 : f32
    %294 = vector.broadcast %cst_225 : f32 to vector<16x64xf32>
    %295 = arith.maximumf %293, %294 : vector<16x64xf32>
    %cst_226 = arith.constant 1.000000e+00 : f32
    %296 = vector.broadcast %cst_226 : f32 to vector<1x16xf32>
    %c0_227 = arith.constant 0 : index
    %c0_228 = arith.constant 0 : index
    %297 = vector.load %arg34[%c0_227, %c0_228] : memref<64x64xf32, #tpu.memory_space<vmem>>, vector<64x64xf32>
    %cst_229 = arith.constant dense<0.000000e+00> : vector<1x64xf32>
    %298 = tpu.matmul %296, %295, %cst_229 {dimension_numbers = #tpu.dot_dimension_numbers<[1], [0], [0], [1], [0, 0, 1, 1], [], []>} : vector<1x16xf32>, vector<16x64xf32>, vector<1x64xf32> -> vector<1x64xf32>
    %cst_230 = arith.constant dense<0.000000e+00> : vector<1x64xf32>
    %299 = tpu.matmul %298, %297, %cst_230 {dimension_numbers = #tpu.dot_dimension_numbers<[1], [0], [0], [1], [0, 0, 1, 1], [], []>} : vector<1x64xf32>, vector<64x64xf32>, vector<1x64xf32> -> vector<1x64xf32>
    %300 = vector.broadcast %299 : vector<1x64xf32> to vector<16x64xf32>
    %301 = arith.subf %295, %300 : vector<16x64xf32>
    %302 = arith.mulf %301, %301 : vector<16x64xf32>
    %cst_231 = arith.constant dense<0.000000e+00> : vector<1x64xf32>
    %303 = tpu.matmul %296, %302, %cst_231 {dimension_numbers = #tpu.dot_dimension_numbers<[1], [0], [0], [1], [0, 0, 1, 1], [], []>} : vector<1x16xf32>, vector<16x64xf32>, vector<1x64xf32> -> vector<1x64xf32>
    %cst_232 = arith.constant dense<0.000000e+00> : vector<1x64xf32>
    %304 = tpu.matmul %303, %297, %cst_232 {dimension_numbers = #tpu.dot_dimension_numbers<[1], [0], [0], [1], [0, 0, 1, 1], [], []>} : vector<1x64xf32>, vector<64x64xf32>, vector<1x64xf32> -> vector<1x64xf32>
    %cst_233 = arith.constant 9.99999974E-6 : f32
    %305 = vector.broadcast %cst_233 : f32 to vector<1x64xf32>
    %306 = arith.addf %304, %305 : vector<1x64xf32>
    %307 = math.rsqrt %306 : vector<1x64xf32>
    %c1_234 = arith.constant 1 : index
    %c0_235 = arith.constant 0 : index
    %308 = vector.load %arg33[%c1_234, %c0_235] : memref<3x64xf32, #tpu.memory_space<vmem>>, vector<1x64xf32>
    %309 = arith.mulf %307, %308 : vector<1x64xf32>
    %310 = vector.broadcast %309 : vector<1x64xf32> to vector<16x64xf32>
    %311 = arith.mulf %301, %310 : vector<16x64xf32>
    %c2_236 = arith.constant 2 : index
    %c0_237 = arith.constant 0 : index
    %312 = vector.load %arg33[%c2_236, %c0_237] : memref<3x64xf32, #tpu.memory_space<vmem>>, vector<1x64xf32>
    %313 = vector.broadcast %312 : vector<1x64xf32> to vector<16x64xf32>
    %314 = arith.addf %311, %313 : vector<16x64xf32>
    %c0_238 = arith.constant 0 : index
    %c0_239 = arith.constant 0 : index
    %315 = vector.load %arg35[%c0_238, %c0_239] : memref<64x128xf32, #tpu.memory_space<vmem>>, vector<64x128xf32>
    %cst_240 = arith.constant dense<0.000000e+00> : vector<16x128xf32>
    %316 = tpu.matmul %314, %315, %cst_240 {dimension_numbers = #tpu.dot_dimension_numbers<[1], [0], [0], [1], [0, 0, 1, 1], [], []>} : vector<16x64xf32>, vector<64x128xf32>, vector<16x128xf32> -> vector<16x128xf32>
    %c0_241 = arith.constant 0 : index
    %c0_242 = arith.constant 0 : index
    %c0_243 = arith.constant 0 : index
    %317 = vector.load %arg36[%c0_241, %c0_242, %c0_243] : memref<2x32x16xf32, #tpu.memory_space<vmem>>, vector<1x32x16xf32>
    %318 = vector.shape_cast %317 : vector<1x32x16xf32> to vector<32x16xf32>
    %319 = vector.extract_strided_slice %316 {offsets = [0, 0], sizes = [16, 64], strides = [1, 1]} : vector<16x128xf32> to vector<16x64xf32>
    %cst_244 = arith.constant dense<0.000000e+00> : vector<32x64xf32>
    %320 = tpu.matmul %318, %319, %cst_244 {dimension_numbers = #tpu.dot_dimension_numbers<[1], [0], [0], [1], [0, 0, 1, 1], [], []>} : vector<32x16xf32>, vector<16x64xf32>, vector<32x64xf32> -> vector<32x64xf32>
    %c1_245 = arith.constant 1 : index
    %c0_246 = arith.constant 0 : index
    %c0_247 = arith.constant 0 : index
    %321 = vector.load %arg36[%c1_245, %c0_246, %c0_247] : memref<2x32x16xf32, #tpu.memory_space<vmem>>, vector<1x32x16xf32>
    %322 = vector.shape_cast %321 : vector<1x32x16xf32> to vector<32x16xf32>
    %323 = vector.extract_strided_slice %316 {offsets = [0, 64], sizes = [16, 64], strides = [1, 1]} : vector<16x128xf32> to vector<16x64xf32>
    %cst_248 = arith.constant dense<0.000000e+00> : vector<32x64xf32>
    %324 = tpu.matmul %322, %323, %cst_248 {dimension_numbers = #tpu.dot_dimension_numbers<[1], [0], [0], [1], [0, 0, 1, 1], [], []>} : vector<32x16xf32>, vector<16x64xf32>, vector<32x64xf32> -> vector<32x64xf32>
    %325 = arith.addf %320, %324 : vector<32x64xf32>
    %c0_249 = arith.constant 0 : index
    %c0_250 = arith.constant 0 : index
    %326 = vector.load %arg37[%c0_249, %c0_250] : memref<1x64xf32, #tpu.memory_space<vmem>>, vector<1x64xf32>
    %327 = vector.broadcast %326 : vector<1x64xf32> to vector<32x64xf32>
    %328 = arith.addf %325, %327 : vector<32x64xf32>
    %c0_251 = arith.constant 0 : index
    %c0_252 = arith.constant 0 : index
    %329 = vector.load %arg38[%c0_251, %c0_252] : memref<128x192xf32, #tpu.memory_space<vmem>>, vector<64x192xf32>
    %cst_253 = arith.constant dense<0.000000e+00> : vector<32x192xf32>
    %330 = tpu.matmul %40, %329, %cst_253 {dimension_numbers = #tpu.dot_dimension_numbers<[1], [0], [0], [1], [0, 0, 1, 1], [], []>} : vector<32x64xf32>, vector<64x192xf32>, vector<32x192xf32> -> vector<32x192xf32>
    %c64_254 = arith.constant 64 : index
    %c0_255 = arith.constant 0 : index
    %331 = vector.load %arg38[%c64_254, %c0_255] : memref<128x192xf32, #tpu.memory_space<vmem>>, vector<64x192xf32>
    %cst_256 = arith.constant dense<0.000000e+00> : vector<32x192xf32>
    %332 = tpu.matmul %328, %331, %cst_256 {dimension_numbers = #tpu.dot_dimension_numbers<[1], [0], [0], [1], [0, 0, 1, 1], [], []>} : vector<32x64xf32>, vector<64x192xf32>, vector<32x192xf32> -> vector<32x192xf32>
    %333 = arith.addf %330, %332 : vector<32x192xf32>
    %c0_257 = arith.constant 0 : index
    %c0_258 = arith.constant 0 : index
    %c0_259 = arith.constant 0 : index
    %334 = vector.load %arg39[%c0_257, %c0_258, %c0_259] : memref<3x32x32xf32, #tpu.memory_space<vmem>>, vector<1x32x32xf32>
    %335 = vector.shape_cast %334 : vector<1x32x32xf32> to vector<32x32xf32>
    %336 = vector.extract_strided_slice %333 {offsets = [0, 0], sizes = [32, 64], strides = [1, 1]} : vector<32x192xf32> to vector<32x64xf32>
    %cst_260 = arith.constant dense<0.000000e+00> : vector<32x64xf32>
    %337 = tpu.matmul %335, %336, %cst_260 {dimension_numbers = #tpu.dot_dimension_numbers<[1], [0], [0], [1], [0, 0, 1, 1], [], []>} : vector<32x32xf32>, vector<32x64xf32>, vector<32x64xf32> -> vector<32x64xf32>
    %c1_261 = arith.constant 1 : index
    %c0_262 = arith.constant 0 : index
    %c0_263 = arith.constant 0 : index
    %338 = vector.load %arg39[%c1_261, %c0_262, %c0_263] : memref<3x32x32xf32, #tpu.memory_space<vmem>>, vector<1x32x32xf32>
    %339 = vector.shape_cast %338 : vector<1x32x32xf32> to vector<32x32xf32>
    %340 = vector.extract_strided_slice %333 {offsets = [0, 64], sizes = [32, 64], strides = [1, 1]} : vector<32x192xf32> to vector<32x64xf32>
    %cst_264 = arith.constant dense<0.000000e+00> : vector<32x64xf32>
    %341 = tpu.matmul %339, %340, %cst_264 {dimension_numbers = #tpu.dot_dimension_numbers<[1], [0], [0], [1], [0, 0, 1, 1], [], []>} : vector<32x32xf32>, vector<32x64xf32>, vector<32x64xf32> -> vector<32x64xf32>
    %342 = arith.addf %337, %341 : vector<32x64xf32>
    %c2_265 = arith.constant 2 : index
    %c0_266 = arith.constant 0 : index
    %c0_267 = arith.constant 0 : index
    %343 = vector.load %arg39[%c2_265, %c0_266, %c0_267] : memref<3x32x32xf32, #tpu.memory_space<vmem>>, vector<1x32x32xf32>
    %344 = vector.shape_cast %343 : vector<1x32x32xf32> to vector<32x32xf32>
    %345 = vector.extract_strided_slice %333 {offsets = [0, 128], sizes = [32, 64], strides = [1, 1]} : vector<32x192xf32> to vector<32x64xf32>
    %cst_268 = arith.constant dense<0.000000e+00> : vector<32x64xf32>
    %346 = tpu.matmul %344, %345, %cst_268 {dimension_numbers = #tpu.dot_dimension_numbers<[1], [0], [0], [1], [0, 0, 1, 1], [], []>} : vector<32x32xf32>, vector<32x64xf32>, vector<32x64xf32> -> vector<32x64xf32>
    %347 = arith.addf %342, %346 : vector<32x64xf32>
    %c0_269 = arith.constant 0 : index
    %c0_270 = arith.constant 0 : index
    %348 = vector.load %arg40[%c0_269, %c0_270] : memref<3x64xf32, #tpu.memory_space<vmem>>, vector<1x64xf32>
    %349 = vector.broadcast %348 : vector<1x64xf32> to vector<32x64xf32>
    %350 = arith.addf %347, %349 : vector<32x64xf32>
    %cst_271 = arith.constant 0.000000e+00 : f32
    %351 = vector.broadcast %cst_271 : f32 to vector<32x64xf32>
    %352 = arith.maximumf %350, %351 : vector<32x64xf32>
    %cst_272 = arith.constant 1.000000e+00 : f32
    %353 = vector.broadcast %cst_272 : f32 to vector<1x32xf32>
    %c0_273 = arith.constant 0 : index
    %c0_274 = arith.constant 0 : index
    %354 = vector.load %arg41[%c0_273, %c0_274] : memref<64x64xf32, #tpu.memory_space<vmem>>, vector<64x64xf32>
    %cst_275 = arith.constant dense<0.000000e+00> : vector<1x64xf32>
    %355 = tpu.matmul %353, %352, %cst_275 {dimension_numbers = #tpu.dot_dimension_numbers<[1], [0], [0], [1], [0, 0, 1, 1], [], []>} : vector<1x32xf32>, vector<32x64xf32>, vector<1x64xf32> -> vector<1x64xf32>
    %cst_276 = arith.constant dense<0.000000e+00> : vector<1x64xf32>
    %356 = tpu.matmul %355, %354, %cst_276 {dimension_numbers = #tpu.dot_dimension_numbers<[1], [0], [0], [1], [0, 0, 1, 1], [], []>} : vector<1x64xf32>, vector<64x64xf32>, vector<1x64xf32> -> vector<1x64xf32>
    %357 = vector.broadcast %356 : vector<1x64xf32> to vector<32x64xf32>
    %358 = arith.subf %352, %357 : vector<32x64xf32>
    %359 = arith.mulf %358, %358 : vector<32x64xf32>
    %cst_277 = arith.constant dense<0.000000e+00> : vector<1x64xf32>
    %360 = tpu.matmul %353, %359, %cst_277 {dimension_numbers = #tpu.dot_dimension_numbers<[1], [0], [0], [1], [0, 0, 1, 1], [], []>} : vector<1x32xf32>, vector<32x64xf32>, vector<1x64xf32> -> vector<1x64xf32>
    %cst_278 = arith.constant dense<0.000000e+00> : vector<1x64xf32>
    %361 = tpu.matmul %360, %354, %cst_278 {dimension_numbers = #tpu.dot_dimension_numbers<[1], [0], [0], [1], [0, 0, 1, 1], [], []>} : vector<1x64xf32>, vector<64x64xf32>, vector<1x64xf32> -> vector<1x64xf32>
    %cst_279 = arith.constant 9.99999974E-6 : f32
    %362 = vector.broadcast %cst_279 : f32 to vector<1x64xf32>
    %363 = arith.addf %361, %362 : vector<1x64xf32>
    %364 = math.rsqrt %363 : vector<1x64xf32>
    %c1_280 = arith.constant 1 : index
    %c0_281 = arith.constant 0 : index
    %365 = vector.load %arg40[%c1_280, %c0_281] : memref<3x64xf32, #tpu.memory_space<vmem>>, vector<1x64xf32>
    %366 = arith.mulf %364, %365 : vector<1x64xf32>
    %367 = vector.broadcast %366 : vector<1x64xf32> to vector<32x64xf32>
    %368 = arith.mulf %358, %367 : vector<32x64xf32>
    %c2_282 = arith.constant 2 : index
    %c0_283 = arith.constant 0 : index
    %369 = vector.load %arg40[%c2_282, %c0_283] : memref<3x64xf32, #tpu.memory_space<vmem>>, vector<1x64xf32>
    %370 = vector.broadcast %369 : vector<1x64xf32> to vector<32x64xf32>
    %371 = arith.addf %368, %370 : vector<32x64xf32>
    %c0_284 = arith.constant 0 : index
    %c0_285 = arith.constant 0 : index
    %372 = vector.load %arg42[%c0_284, %c0_285] : memref<64x48xf32, #tpu.memory_space<vmem>>, vector<64x48xf32>
    %cst_286 = arith.constant dense<0.000000e+00> : vector<32x48xf32>
    %373 = tpu.matmul %371, %372, %cst_286 {dimension_numbers = #tpu.dot_dimension_numbers<[1], [0], [0], [1], [0, 0, 1, 1], [], []>} : vector<32x64xf32>, vector<64x48xf32>, vector<32x48xf32> -> vector<32x48xf32>
    %c0_287 = arith.constant 0 : index
    %c0_288 = arith.constant 0 : index
    %374 = vector.load %arg43[%c0_287, %c0_288] : memref<1x48xf32, #tpu.memory_space<vmem>>, vector<1x48xf32>
    %375 = vector.broadcast %374 : vector<1x48xf32> to vector<32x48xf32>
    %376 = arith.addf %373, %375 : vector<32x48xf32>
    %c0_289 = arith.constant 0 : index
    %c0_290 = arith.constant 0 : index
    %377 = vector.load %arg44[%c0_289, %c0_290] : memref<32x48xf32, #tpu.memory_space<vmem>>, vector<32x48xf32>
    tpu.vector_store %arg44[%c0_289, %c0_290], %376 {strides = array<i32>} : memref<32x48xf32, #tpu.memory_space<vmem>>, vector<32x48xf32>,
    return
  }
}

</mosaic_0001>

<llo_original>
// kernel: _lambda_.1
$region0: #{_lambda_.1}
  #allocation0 [shape = 'u32[]', space=smem, size = 0x4, offset = 0x4, fixed_abs, tag = 'smem constant byte address 0x4 - core index']
  #allocation1 [shape = 'u32[144,128]{1,0:T(1,128)}', space=vmem, size = 0x12000, scoped, tag = 'internal scratch']
  %s0 = inlined_call_operand.smem [shape: u32[45], index: -1, kind: input, shape index: {}]
  %s1 = sld [smem:[%s0]]
  %s2 = scalar_lea.smem %s0, 1
  %s3 = sld [smem:[%s2]]
  %s4 = scalar_lea.smem %s0, 2
  %s5 = sld [smem:[%s4]]
  %s6 = scalar_lea.smem %s0, 3
  %s7 = sld [smem:[%s6]]
  %s8 = scalar_lea.smem %s0, 4
  %s9 = sld [smem:[%s8]]
  %s10 = scalar_lea.smem %s0, 5
  %s11 = sld [smem:[%s10]]
  %s12 = scalar_lea.smem %s0, 6
  %s13 = sld [smem:[%s12]]
  %s14 = scalar_lea.smem %s0, 7
  %s15 = sld [smem:[%s14]]
  %s16 = scalar_lea.smem %s0, 8
  %s17 = sld [smem:[%s16]]
  %s18 = scalar_lea.smem %s0, 9
  %s19 = sld [smem:[%s18]]
  %s20 = scalar_lea.smem %s0, 10
  %s21 = sld [smem:[%s20]]
  %s22 = scalar_lea.smem %s0, 11
  %s23 = sld [smem:[%s22]]
  %s24 = scalar_lea.smem %s0, 12
  %s25 = sld [smem:[%s24]]
  %s26 = scalar_lea.smem %s0, 13
  %s27 = sld [smem:[%s26]]
  %s28 = scalar_lea.smem %s0, 14
  %s29 = sld [smem:[%s28]]
  %s30 = scalar_lea.smem %s0, 15
  %s31 = sld [smem:[%s30]]
  %s32 = scalar_lea.smem %s0, 16
  %s33 = sld [smem:[%s32]]
  %s34 = scalar_lea.smem %s0, 17
  %s35 = sld [smem:[%s34]]
  %s36 = scalar_lea.smem %s0, 18
  %s37 = sld [smem:[%s36]]
  %s38 = scalar_lea.smem %s0, 19
  %s39 = sld [smem:[%s38]]
  %s40 = scalar_lea.smem %s0, 20
  %s41 = sld [smem:[%s40]]
  %s42 = scalar_lea.smem %s0, 21
  %s43 = sld [smem:[%s42]]
  %s44 = scalar_lea.smem %s0, 22
  %s45 = sld [smem:[%s44]]
  %s46 = scalar_lea.smem %s0, 23
  %s47 = sld [smem:[%s46]]
  %s48 = scalar_lea.smem %s0, 24
  %s49 = sld [smem:[%s48]]
  %s50 = scalar_lea.smem %s0, 25
  %s51 = sld [smem:[%s50]]
  %s52 = scalar_lea.smem %s0, 26
  %s53 = sld [smem:[%s52]]
  %s54 = scalar_lea.smem %s0, 27
  %s55 = sld [smem:[%s54]]
  %s56 = scalar_lea.smem %s0, 28
  %s57 = sld [smem:[%s56]]
  %s58 = scalar_lea.smem %s0, 29
  %s59 = sld [smem:[%s58]]
  %s60 = scalar_lea.smem %s0, 30
  %s61 = sld [smem:[%s60]]
  %s62 = scalar_lea.smem %s0, 31
  %s63 = sld [smem:[%s62]]
  %s64 = scalar_lea.smem %s0, 32
  %s65 = sld [smem:[%s64]]
  %s66 = scalar_lea.smem %s0, 33
  %s67 = sld [smem:[%s66]]
  %s68 = scalar_lea.smem %s0, 34
  %s69 = sld [smem:[%s68]]
  %s70 = scalar_lea.smem %s0, 35
  %s71 = sld [smem:[%s70]]
  %s72 = scalar_lea.smem %s0, 36
  %s73 = sld [smem:[%s72]]
  %s74 = scalar_lea.smem %s0, 37
  %s75 = sld [smem:[%s74]]
  %s76 = scalar_lea.smem %s0, 38
  %s77 = sld [smem:[%s76]]
  %s78 = scalar_lea.smem %s0, 39
  %s79 = sld [smem:[%s78]]
  %s80 = scalar_lea.smem %s0, 40
  %s81 = sld [smem:[%s80]]
  %s82 = scalar_lea.smem %s0, 41
  %s83 = sld [smem:[%s82]]
  %s84 = scalar_lea.smem %s0, 42
  %s85 = sld [smem:[%s84]]
  %s86 = scalar_lea.smem %s0, 43
  %s87 = sld [smem:[%s86]]
  %s88 = scalar_lea.smem %s0, 44
  %s89 = sld [smem:[%s88]]
  %s90 = sld [smem:[#allocation0]]
  $region302: #{_lambda_.1} parent=0
    _
  %s92 = ssub.s32 1, %s90
  %s93 = scalar_select 0, %s92, %s90
  $region1: #{_lambda_.1} parent=0
    #allocation2 [shape = 'u8[49152]{0}', space=vmem, size = 0xc000, scoped, tag = 'input window, operand 1, single buffered']
    #allocation3 [shape = 's32[1]{0}', space=sflag, size = 0x4, scoped, tag = 'scoped memory for _lambda_.1']
    #allocation4 [shape = 'u8[49152]{0}', space=vmem, size = 0xc000, scoped, tag = 'input window, operand 2, single buffered']
    #allocation5 [shape = 's32[1]{0}', space=sflag, size = 0x4, scoped, tag = 'scoped memory for _lambda_.1']
    #allocation6 [shape = 'u8[2048]{0}', space=vmem, size = 0x800, scoped, tag = 'input window, operand 3, single buffered']
    #allocation7 [shape = 'u8[32768]{0}', space=vmem, size = 0x8000, scoped, tag = 'input window, operand 4, single buffered']
    #allocation8 [shape = 's32[1]{0}', space=sflag, size = 0x4, scoped, tag = 'scoped memory for _lambda_.1']
    #allocation9 [shape = 'u8[65536]{0}', space=vmem, size = 0x10000, scoped, tag = 'input window, operand 5, single buffered']
    #allocation10 [shape = 'u8[24576]{0}', space=vmem, size = 0x6000, scoped, tag = 'input window, operand 6, single buffered']
    #allocation11 [shape = 's32[1]{0}', space=sflag, size = 0x4, scoped, tag = 'scoped memory for _lambda_.1']
    #allocation12 [shape = 'u8[2048]{0}', space=vmem, size = 0x800, scoped, tag = 'input window, operand 7, single buffered']
    #allocation13 [shape = 'u8[98304]{0}', space=vmem, size = 0x18000, scoped, tag = 'input window, operand 9, single buffered']
    #allocation14 [shape = 's32[1]{0}', space=sflag, size = 0x4, scoped, tag = 'scoped memory for _lambda_.1']
    #allocation15 [shape = 'u8[2048]{0}', space=vmem, size = 0x800, scoped, tag = 'input window, operand 11, single buffered']
    #allocation16 [shape = 'u8[196608]{0}', space=vmem, size = 0x30000, scoped, tag = 'input window, operand 13, single buffered']
    #allocation17 [shape = 's32[1]{0}', space=sflag, size = 0x4, scoped, tag = 'scoped memory for _lambda_.1']
    #allocation18 [shape = 'u8[12288]{0}', space=vmem, size = 0x3000, scoped, tag = 'input window, operand 14, single buffered']
    #allocation19 [shape = 'u8[2048]{0}', space=vmem, size = 0x800, scoped, tag = 'input window, operand 15, single buffered']
    #allocation20 [shape = 's32[1]{0}', space=sflag, size = 0x4, scoped, tag = 'scoped memory for _lambda_.1']
    #allocation21 [shape = 'u8[196608]{0}', space=vmem, size = 0x30000, scoped, tag = 'input window, operand 17, single buffered']
    #allocation22 [shape = 'u8[12288]{0}', space=vmem, size = 0x3000, scoped, tag = 'input window, operand 18, single buffered']
    #allocation23 [shape = 's32[1]{0}', space=sflag, size = 0x4, scoped, tag = 'scoped memory for _lambda_.1']
    #allocation24 [shape = 'u8[2048]{0}', space=vmem, size = 0x800, scoped, tag = 'input window, operand 19, single buffered']
    #allocation25 [shape = 'u8[131072]{0}', space=vmem, size = 0x20000, scoped, tag = 'input window, operand 21, single buffered']
    #allocation26 [shape = 's32[1]{0}', space=sflag, size = 0x4, scoped, tag = 'scoped memory for _lambda_.1']
    #allocation27 [shape = 'u8[16384]{0}', space=vmem, size = 0x4000, scoped, tag = 'input window, operand 22, single buffered']
    #allocation28 [shape = 'u8[512]{0}', space=vmem, size = 0x400, scoped, tag = 'input window, operand 23, single buffered']
    #allocation29 [shape = 's32[1]{0}', space=sflag, size = 0x4, scoped, tag = 'scoped memory for _lambda_.1']
    #allocation30 [shape = 'u8[393216]{0}', space=vmem, size = 0x60000, scoped, tag = 'input window, operand 24, single buffered']
    #allocation31 [shape = 'u8[2048]{0}', space=vmem, size = 0x800, scoped, tag = 'input window, operand 26, single buffered']
    #allocation32 [shape = 's32[1]{0}', space=sflag, size = 0x4, scoped, tag = 'scoped memory for _lambda_.1']
    #allocation33 [shape = 'u8[65536]{0}', space=vmem, size = 0x10000, scoped, tag = 'input window, operand 28, single buffered']
    #allocation34 [shape = 'u8[16384]{0}', space=vmem, size = 0x4000, scoped, tag = 'input window, operand 29, single buffered']
    #allocation35 [shape = 's32[1]{0}', space=sflag, size = 0x4, scoped, tag = 'scoped memory for _lambda_.1']
    #allocation36 [shape = 'u8[512]{0}', space=vmem, size = 0x400, scoped, tag = 'input window, operand 30, single buffered']
    #allocation37 [shape = 'u8[131072]{0}', space=vmem, size = 0x20000, scoped, tag = 'input window, operand 31, single buffered']
    #allocation38 [shape = 's32[1]{0}', space=sflag, size = 0x4, scoped, tag = 'scoped memory for _lambda_.1']
    #allocation39 [shape = 'u8[2048]{0}', space=vmem, size = 0x800, scoped, tag = 'input window, operand 33, single buffered']
    #allocation40 [shape = 'u8[32768]{0}', space=vmem, size = 0x8000, scoped, tag = 'input window, operand 35, single buffered']
    #allocation41 [shape = 's32[1]{0}', space=sflag, size = 0x4, scoped, tag = 'scoped memory for _lambda_.1']
    #allocation42 [shape = 'u8[131072]{0}', space=vmem, size = 0x20000, scoped, tag = 'input window, operand 38, single buffered']
    #allocation43 [shape = 'u8[49152]{0}', space=vmem, size = 0xc000, scoped, tag = 'input window, operand 39, single buffered']
    #allocation44 [shape = 's32[1]{0}', space=sflag, size = 0x4, scoped, tag = 'scoped memory for _lambda_.1']
    #allocation45 [shape = 'u8[32768]{0}', space=vmem, size = 0x8000, scoped, tag = 'input window, operand 41, single buffered']
    %94 = vsyncpa [#allocation3], 0
    %95 = vsyncpa [#allocation5], 0
    %96 = vsyncpa [#allocation8], 0
    %97 = vsyncpa [#allocation11], 0
    %98 = vsyncpa [#allocation14], 0
    %99 = vsyncpa [#allocation17], 0
    %100 = vsyncpa [#allocation20], 0
    %101 = vsyncpa [#allocation23], 0
    %102 = vsyncpa [#allocation26], 0
    %103 = vsyncpa [#allocation29], 0
    %104 = vsyncpa [#allocation32], 0
    %105 = vsyncpa [#allocation35], 0
    %106 = vsyncpa [#allocation38], 0
    %107 = vsyncpa [#allocation41], 0
    %108 = vsyncpa [#allocation44], 0
    // Predicated region
    $region2: #{_lambda_.1} parent=1 // pred_check
      _
    $region3: #{_lambda_.1} parent=1 // pred_check_branch
      %110 = sbr.rel (0) target = $region5
    $region4: #{_lambda_.1} parent=1 // pred_region
      _
    $region5: #{_lambda_.1} parent=1 // pred_fallthru
      _
    // Predicated region
    $region6: #{_lambda_.1} parent=1 // pred_check
      _
    $region7: #{_lambda_.1} parent=1 // pred_check_branch
      %112 = sbr.rel (0) target = $region9
    $region8: #{_lambda_.1} parent=1 // pred_region
      %s114 = ssub.s32 1536, 1536
      %115 = vsyncadd [#allocation3], %s114
      %s116 = sshll.u32 [#allocation2], 4
      %s117 = int_to_ptr.vmem [resolvable:$true] %s116
      %122 = dma.hbm_to_vmem [thread:$0]  %s3, 1536, %s117, [#allocation3], 256, 256, 16
    $region9: #{_lambda_.1} parent=1 // pred_fallthru
      _
    // Predicated region
    $region10: #{_lambda_.1} parent=1 // pred_check
      _
    $region11: #{_lambda_.1} parent=1 // pred_check_branch
      %124 = sbr.rel (0) target = $region13
    $region12: #{_lambda_.1} parent=1 // pred_region
      %s126 = ssub.s32 1536, 1536
      %127 = vsyncadd [#allocation5], %s126
      %s128 = sshll.u32 [#allocation4], 4
      %s129 = int_to_ptr.vmem [resolvable:$true] %s128
      %134 = dma.hbm_to_vmem [thread:$0]  %s5, 1536, %s129, [#allocation5], 128, 128, 8
    $region13: #{_lambda_.1} parent=1 // pred_fallthru
      _
    // Predicated region
    $region14: #{_lambda_.1} parent=1 // pred_check
      _
    $region15: #{_lambda_.1} parent=1 // pred_check_branch
      %136 = sbr.rel (0) target = $region17
    $region16: #{_lambda_.1} parent=1 // pred_region
      %s138 = ssub.s32 64, 64
      %139 = vsyncadd [#allocation5], %s138
      %s141 = sshll.u32 [#allocation6], 4
      %s142 = int_to_ptr.vmem [resolvable:$true] %s141
      %144 = dma.hbm_to_vmem [thread:$0]  %s7, 64, %s142, [#allocation5]
    $region17: #{_lambda_.1} parent=1 // pred_fallthru
      _
    // Predicated region
    $region18: #{_lambda_.1} parent=1 // pred_check
      _
    $region19: #{_lambda_.1} parent=1 // pred_check_branch
      %146 = sbr.rel (0) target = $region21
    $region20: #{_lambda_.1} parent=1 // pred_region
      %s148 = ssub.s32 1024, 1024
      %149 = vsyncadd [#allocation8], %s148
      %s150 = sshll.u32 [#allocation7], 4
      %s151 = int_to_ptr.vmem [resolvable:$true] %s150
      %156 = dma.hbm_to_vmem [thread:$0]  %s9, 1024, %s151, [#allocation8], 128, 128, 8
    $region21: #{_lambda_.1} parent=1 // pred_fallthru
      _
    // Predicated region
    $region22: #{_lambda_.1} parent=1 // pred_check
      _
    $region23: #{_lambda_.1} parent=1 // pred_check_branch
      %158 = sbr.rel (0) target = $region25
    $region24: #{_lambda_.1} parent=1 // pred_region
      %s160 = ssub.s32 2048, 2048
      %161 = vsyncadd [#allocation8], %s160
      %s162 = sshll.u32 [#allocation9], 4
      %s163 = int_to_ptr.vmem [resolvable:$true] %s162
      %168 = dma.hbm_to_vmem [thread:$0]  %s11, 2048, %s163, [#allocation8], 256, 256, 16
    $region25: #{_lambda_.1} parent=1 // pred_fallthru
      _
    // Predicated region
    $region26: #{_lambda_.1} parent=1 // pred_check
      _
    $region27: #{_lambda_.1} parent=1 // pred_check_branch
      %170 = sbr.rel (0) target = $region29
    $region28: #{_lambda_.1} parent=1 // pred_region
      %s172 = ssub.s32 768, 768
      %173 = vsyncadd [#allocation11], %s172
      %s174 = sshll.u32 [#allocation10], 4
      %s175 = int_to_ptr.vmem [resolvable:$true] %s174
      %180 = dma.hbm_to_vmem [thread:$0]  %s13, 768, %s175, [#allocation11], 128, 128, 8
    $region29: #{_lambda_.1} parent=1 // pred_fallthru
      _
    // Predicated region
    $region30: #{_lambda_.1} parent=1 // pred_check
      _
    $region31: #{_lambda_.1} parent=1 // pred_check_branch
      %182 = sbr.rel (0) target = $region33
    $region32: #{_lambda_.1} parent=1 // pred_region
      %s184 = ssub.s32 64, 64
      %185 = vsyncadd [#allocation11], %s184
      %s187 = sshll.u32 [#allocation12], 4
      %s188 = int_to_ptr.vmem [resolvable:$true] %s187
      %190 = dma.hbm_to_vmem [thread:$0]  %s15, 64, %s188, [#allocation11]
    $region33: #{_lambda_.1} parent=1 // pred_fallthru
      _
    // Predicated region
    $region34: #{_lambda_.1} parent=1 // pred_check
      _
    $region35: #{_lambda_.1} parent=1 // pred_check_branch
      %192 = sbr.rel (0) target = $region37
    $region36: #{_lambda_.1} parent=1 // pred_region
      _
    $region37: #{_lambda_.1} parent=1 // pred_fallthru
      _
    // Predicated region
    $region38: #{_lambda_.1} parent=1 // pred_check
      _
    $region39: #{_lambda_.1} parent=1 // pred_check_branch
      %194 = sbr.rel (0) target = $region41
    $region40: #{_lambda_.1} parent=1 // pred_region
      %s196 = ssub.s32 3072, 3072
      %197 = vsyncadd [#allocation14], %s196
      %s198 = sshll.u32 [#allocation13], 4
      %s199 = int_to_ptr.vmem [resolvable:$true] %s198
      %204 = dma.hbm_to_vmem [thread:$0]  %s19, 3072, %s199, [#allocation14], 384, 384, 24
    $region41: #{_lambda_.1} parent=1 // pred_fallthru
      _
    // Predicated region
    $region42: #{_lambda_.1} parent=1 // pred_check
      _
    $region43: #{_lambda_.1} parent=1 // pred_check_branch
      %206 = sbr.rel (0) target = $region45
    $region44: #{_lambda_.1} parent=1 // pred_region
      _
    $region45: #{_lambda_.1} parent=1 // pred_fallthru
      _
    // Predicated region
    $region46: #{_lambda_.1} parent=1 // pred_check
      _
    $region47: #{_lambda_.1} parent=1 // pred_check_branch
      %208 = sbr.rel (0) target = $region49
    $region48: #{_lambda_.1} parent=1 // pred_region
      %s210 = ssub.s32 64, 64
      %211 = vsyncadd [#allocation14], %s210
      %s213 = sshll.u32 [#allocation15], 4
      %s214 = int_to_ptr.vmem [resolvable:$true] %s213
      %216 = dma.hbm_to_vmem [thread:$0]  %s23, 64, %s214, [#allocation14]
    $region49: #{_lambda_.1} parent=1 // pred_fallthru
      _
    // Predicated region
    $region50: #{_lambda_.1} parent=1 // pred_check
      _
    $region51: #{_lambda_.1} parent=1 // pred_check_branch
      %218 = sbr.rel (0) target = $region53
    $region52: #{_lambda_.1} parent=1 // pred_region
      _
    $region53: #{_lambda_.1} parent=1 // pred_fallthru
      _
    // Predicated region
    $region54: #{_lambda_.1} parent=1 // pred_check
      _
    $region55: #{_lambda_.1} parent=1 // pred_check_branch
      %220 = sbr.rel (0) target = $region57
    $region56: #{_lambda_.1} parent=1 // pred_region
      %s222 = ssub.s32 6144, 6144
      %223 = vsyncadd [#allocation17], %s222
      %s224 = sshll.u32 [#allocation16], 4
      %s225 = int_to_ptr.vmem [resolvable:$true] %s224
      %230 = dma.hbm_to_vmem [thread:$0]  %s27, 6144, %s225, [#allocation17], 384, 384, 24
    $region57: #{_lambda_.1} parent=1 // pred_fallthru
      _
    // Predicated region
    $region58: #{_lambda_.1} parent=1 // pred_check
      _
    $region59: #{_lambda_.1} parent=1 // pred_check_branch
      %232 = sbr.rel (0) target = $region61
    $region60: #{_lambda_.1} parent=1 // pred_region
      %s234 = ssub.s32 384, 384
      %235 = vsyncadd [#allocation17], %s234
      %s236 = sshll.u32 [#allocation18], 4
      %s237 = int_to_ptr.vmem [resolvable:$true] %s236
      %242 = dma.hbm_to_vmem [thread:$0]  %s29, 384, %s237, [#allocation17], 128, 128, 8
    $region61: #{_lambda_.1} parent=1 // pred_fallthru
      _
    // Predicated region
    $region62: #{_lambda_.1} parent=1 // pred_check
      _
    $region63: #{_lambda_.1} parent=1 // pred_check_branch
      %244 = sbr.rel (0) target = $region65
    $region64: #{_lambda_.1} parent=1 // pred_region
      %s246 = ssub.s32 64, 64
      %247 = vsyncadd [#allocation20], %s246
      %s249 = sshll.u32 [#allocation19], 4
      %s250 = int_to_ptr.vmem [resolvable:$true] %s249
      %252 = dma.hbm_to_vmem [thread:$0]  %s31, 64, %s250, [#allocation20]
    $region65: #{_lambda_.1} parent=1 // pred_fallthru
      _
    // Predicated region
    $region66: #{_lambda_.1} parent=1 // pred_check
      _
    $region67: #{_lambda_.1} parent=1 // pred_check_branch
      %254 = sbr.rel (0) target = $region69
    $region68: #{_lambda_.1} parent=1 // pred_region
      _
    $region69: #{_lambda_.1} parent=1 // pred_fallthru
      _
    // Predicated region
    $region70: #{_lambda_.1} parent=1 // pred_check
      _
    $region71: #{_lambda_.1} parent=1 // pred_check_branch
      %256 = sbr.rel (0) target = $region73
    $region72: #{_lambda_.1} parent=1 // pred_region
      %s258 = ssub.s32 6144, 6144
      %259 = vsyncadd [#allocation20], %s258
      %s260 = sshll.u32 [#allocation21], 4
      %s261 = int_to_ptr.vmem [resolvable:$true] %s260
      %266 = dma.hbm_to_vmem [thread:$0]  %s35, 6144, %s261, [#allocation20], 384, 384, 24
    $region73: #{_lambda_.1} parent=1 // pred_fallthru
      _
    // Predicated region
    $region74: #{_lambda_.1} parent=1 // pred_check
      _
    $region75: #{_lambda_.1} parent=1 // pred_check_branch
      %268 = sbr.rel (0) target = $region77
    $region76: #{_lambda_.1} parent=1 // pred_region
      %s270 = ssub.s32 384, 384
      %271 = vsyncadd [#allocation23], %s270
      %s272 = sshll.u32 [#allocation22], 4
      %s273 = int_to_ptr.vmem [resolvable:$true] %s272
      %278 = dma.hbm_to_vmem [thread:$0]  %s37, 384, %s273, [#allocation23], 128, 128, 8
    $region77: #{_lambda_.1} parent=1 // pred_fallthru
      _
    // Predicated region
    $region78: #{_lambda_.1} parent=1 // pred_check
      _
    $region79: #{_lambda_.1} parent=1 // pred_check_branch
      %280 = sbr.rel (0) target = $region81
    $region80: #{_lambda_.1} parent=1 // pred_region
      %s282 = ssub.s32 64, 64
      %283 = vsyncadd [#allocation23], %s282
      %s285 = sshll.u32 [#allocation24], 4
      %s286 = int_to_ptr.vmem [resolvable:$true] %s285
      %288 = dma.hbm_to_vmem [thread:$0]  %s39, 64, %s286, [#allocation23]
    $region81: #{_lambda_.1} parent=1 // pred_fallthru
      _
    // Predicated region
    $region82: #{_lambda_.1} parent=1 // pred_check
      _
    $region83: #{_lambda_.1} parent=1 // pred_check_branch
      %290 = sbr.rel (0) target = $region85
    $region84: #{_lambda_.1} parent=1 // pred_region
      _
    $region85: #{_lambda_.1} parent=1 // pred_fallthru
      _
    // Predicated region
    $region86: #{_lambda_.1} parent=1 // pred_check
      _
    $region87: #{_lambda_.1} parent=1 // pred_check_branch
      %292 = sbr.rel (0) target = $region89
    $region88: #{_lambda_.1} parent=1 // pred_region
      %s294 = ssub.s32 4096, 4096
      %295 = vsyncadd [#allocation26], %s294
      %s296 = sshll.u32 [#allocation25], 4
      %s297 = int_to_ptr.vmem [resolvable:$true] %s296
      %302 = dma.hbm_to_vmem [thread:$0]  %s43, 4096, %s297, [#allocation26], 256, 256, 16
    $region89: #{_lambda_.1} parent=1 // pred_fallthru
      _
    // Predicated region
    $region90: #{_lambda_.1} parent=1 // pred_check
      _
    $region91: #{_lambda_.1} parent=1 // pred_check_branch
      %304 = sbr.rel (0) target = $region93
    $region92: #{_lambda_.1} parent=1 // pred_region
      %s306 = ssub.s32 512, 512
      %307 = vsyncadd [#allocation26], %s306
      %s308 = sshll.u32 [#allocation27], 4
      %s309 = int_to_ptr.vmem [resolvable:$true] %s308
      %314 = dma.hbm_to_vmem [thread:$0]  %s45, 512, %s309, [#allocation26], 128, 128, 8
    $region93: #{_lambda_.1} parent=1 // pred_fallthru
      _
    // Predicated region
    $region94: #{_lambda_.1} parent=1 // pred_check
      _
    $region95: #{_lambda_.1} parent=1 // pred_check_branch
      %316 = sbr.rel (0) target = $region97
    $region96: #{_lambda_.1} parent=1 // pred_region
      %s318 = ssub.s32 16, 16
      %319 = vsyncadd [#allocation29], %s318
      %s321 = sshll.u32 [#allocation28], 4
      %s322 = int_to_ptr.vmem [resolvable:$true] %s321
      %324 = dma.hbm_to_vmem [thread:$0]  %s47, 16, %s322, [#allocation29]
    $region97: #{_lambda_.1} parent=1 // pred_fallthru
      _
    // Predicated region
    $region98: #{_lambda_.1} parent=1 // pred_check
      _
    $region99: #{_lambda_.1} parent=1 // pred_check_branch
      %326 = sbr.rel (0) target = $region101
    $region100: #{_lambda_.1} parent=1 // pred_region
      %s328 = ssub.s32 12288, 12288
      %329 = vsyncadd [#allocation29], %s328
      %s330 = sshll.u32 [#allocation30], 4
      %s331 = int_to_ptr.vmem [resolvable:$true] %s330
      %336 = dma.hbm_to_vmem [thread:$0]  %s49, 12288, %s331, [#allocation29], 384, 384, 24
    $region101: #{_lambda_.1} parent=1 // pred_fallthru
      _
    // Predicated region
    $region102: #{_lambda_.1} parent=1 // pred_check
      _
    $region103: #{_lambda_.1} parent=1 // pred_check_branch
      %338 = sbr.rel (0) target = $region105
    $region104: #{_lambda_.1} parent=1 // pred_region
      _
    $region105: #{_lambda_.1} parent=1 // pred_fallthru
      _
    // Predicated region
    $region106: #{_lambda_.1} parent=1 // pred_check
      _
    $region107: #{_lambda_.1} parent=1 // pred_check_branch
      %340 = sbr.rel (0) target = $region109
    $region108: #{_lambda_.1} parent=1 // pred_region
      %s342 = ssub.s32 64, 64
      %343 = vsyncadd [#allocation32], %s342
      %s345 = sshll.u32 [#allocation31], 4
      %s346 = int_to_ptr.vmem [resolvable:$true] %s345
      %348 = dma.hbm_to_vmem [thread:$0]  %s53, 64, %s346, [#allocation32]
    $region109: #{_lambda_.1} parent=1 // pred_fallthru
      _
    // Predicated region
    $region110: #{_lambda_.1} parent=1 // pred_check
      _
    $region111: #{_lambda_.1} parent=1 // pred_check_branch
      %350 = sbr.rel (0) target = $region113
    $region112: #{_lambda_.1} parent=1 // pred_region
      _
    $region113: #{_lambda_.1} parent=1 // pred_fallthru
      _
    // Predicated region
    $region114: #{_lambda_.1} parent=1 // pred_check
      _
    $region115: #{_lambda_.1} parent=1 // pred_check_branch
      %352 = sbr.rel (0) target = $region117
    $region116: #{_lambda_.1} parent=1 // pred_region
      %s354 = ssub.s32 2048, 2048
      %355 = vsyncadd [#allocation32], %s354
      %s356 = sshll.u32 [#allocation33], 4
      %s357 = int_to_ptr.vmem [resolvable:$true] %s356
      %362 = dma.hbm_to_vmem [thread:$0]  %s57, 2048, %s357, [#allocation32], 128, 128, 8
    $region117: #{_lambda_.1} parent=1 // pred_fallthru
      _
    // Predicated region
    $region118: #{_lambda_.1} parent=1 // pred_check
      _
    $region119: #{_lambda_.1} parent=1 // pred_check_branch
      %364 = sbr.rel (0) target = $region121
    $region120: #{_lambda_.1} parent=1 // pred_region
      %s366 = ssub.s32 512, 512
      %367 = vsyncadd [#allocation35], %s366
      %s368 = sshll.u32 [#allocation34], 4
      %s369 = int_to_ptr.vmem [resolvable:$true] %s368
      %374 = dma.hbm_to_vmem [thread:$0]  %s59, 512, %s369, [#allocation35], 128, 128, 8
    $region121: #{_lambda_.1} parent=1 // pred_fallthru
      _
    // Predicated region
    $region122: #{_lambda_.1} parent=1 // pred_check
      _
    $region123: #{_lambda_.1} parent=1 // pred_check_branch
      %376 = sbr.rel (0) target = $region125
    $region124: #{_lambda_.1} parent=1 // pred_region
      %s378 = ssub.s32 16, 16
      %379 = vsyncadd [#allocation35], %s378
      %s381 = sshll.u32 [#allocation36], 4
      %s382 = int_to_ptr.vmem [resolvable:$true] %s381
      %384 = dma.hbm_to_vmem [thread:$0]  %s61, 16, %s382, [#allocation35]
    $region125: #{_lambda_.1} parent=1 // pred_fallthru
      _
    // Predicated region
    $region126: #{_lambda_.1} parent=1 // pred_check
      _
    $region127: #{_lambda_.1} parent=1 // pred_check_branch
      %386 = sbr.rel (0) target = $region129
    $region128: #{_lambda_.1} parent=1 // pred_region
      %s388 = ssub.s32 4096, 4096
      %389 = vsyncadd [#allocation38], %s388
      %s390 = sshll.u32 [#allocation37], 4
      %s391 = int_to_ptr.vmem [resolvable:$true] %s390
      %396 = dma.hbm_to_vmem [thread:$0]  %s63, 4096, %s391, [#allocation38], 256, 256, 16
    $region129: #{_lambda_.1} parent=1 // pred_fallthru
      _
    // Predicated region
    $region130: #{_lambda_.1} parent=1 // pred_check
      _
    $region131: #{_lambda_.1} parent=1 // pred_check_branch
      %398 = sbr.rel (0) target = $region133
    $region132: #{_lambda_.1} parent=1 // pred_region
      _
    $region133: #{_lambda_.1} parent=1 // pred_fallthru
      _
    // Predicated region
    $region134: #{_lambda_.1} parent=1 // pred_check
      _
    $region135: #{_lambda_.1} parent=1 // pred_check_branch
      %400 = sbr.rel (0) target = $region137
    $region136: #{_lambda_.1} parent=1 // pred_region
      %s402 = ssub.s32 64, 64
      %403 = vsyncadd [#allocation38], %s402
      %s405 = sshll.u32 [#allocation39], 4
      %s406 = int_to_ptr.vmem [resolvable:$true] %s405
      %408 = dma.hbm_to_vmem [thread:$0]  %s67, 64, %s406, [#allocation38]
    $region137: #{_lambda_.1} parent=1 // pred_fallthru
      _
    // Predicated region
    $region138: #{_lambda_.1} parent=1 // pred_check
      _
    $region139: #{_lambda_.1} parent=1 // pred_check_branch
      %410 = sbr.rel (0) target = $region141
    $region140: #{_lambda_.1} parent=1 // pred_region
      _
    $region141: #{_lambda_.1} parent=1 // pred_fallthru
      _
    // Predicated region
    $region142: #{_lambda_.1} parent=1 // pred_check
      _
    $region143: #{_lambda_.1} parent=1 // pred_check_branch
      %412 = sbr.rel (0) target = $region145
    $region144: #{_lambda_.1} parent=1 // pred_region
      %s414 = ssub.s32 1024, 1024
      %415 = vsyncadd [#allocation41], %s414
      %s416 = sshll.u32 [#allocation40], 4
      %s417 = int_to_ptr.vmem [resolvable:$true] %s416
      %422 = dma.hbm_to_vmem [thread:$0]  %s71, 1024, %s417, [#allocation41], 128, 128, 8
    $region145: #{_lambda_.1} parent=1 // pred_fallthru
      _
    // Predicated region
    $region146: #{_lambda_.1} parent=1 // pred_check
      _
    $region147: #{_lambda_.1} parent=1 // pred_check_branch
      %424 = sbr.rel (0) target = $region149
    $region148: #{_lambda_.1} parent=1 // pred_region
      _
    $region149: #{_lambda_.1} parent=1 // pred_fallthru
      _
    // Predicated region
    $region150: #{_lambda_.1} parent=1 // pred_check
      _
    $region151: #{_lambda_.1} parent=1 // pred_check_branch
      %426 = sbr.rel (0) target = $region153
    $region152: #{_lambda_.1} parent=1 // pred_region
      _
    $region153: #{_lambda_.1} parent=1 // pred_fallthru
      _
    // Predicated region
    $region154: #{_lambda_.1} parent=1 // pred_check
      _
    $region155: #{_lambda_.1} parent=1 // pred_check_branch
      %428 = sbr.rel (0) target = $region157
    $region156: #{_lambda_.1} parent=1 // pred_region
      %s430 = ssub.s32 4096, 4096
      %431 = vsyncadd [#allocation41], %s430
      %s432 = sshll.u32 [#allocation42], 4
      %s433 = int_to_ptr.vmem [resolvable:$true] %s432
      %438 = dma.hbm_to_vmem [thread:$0]  %s77, 4096, %s433, [#allocation41], 256, 256, 16
    $region157: #{_lambda_.1} parent=1 // pred_fallthru
      _
    // Predicated region
    $region158: #{_lambda_.1} parent=1 // pred_check
      _
    $region159: #{_lambda_.1} parent=1 // pred_check_branch
      %440 = sbr.rel (0) target = $region161
    $region160: #{_lambda_.1} parent=1 // pred_region
      %s442 = ssub.s32 1536, 1536
      %443 = vsyncadd [#allocation44], %s442
      %s444 = sshll.u32 [#allocation43], 4
      %s445 = int_to_ptr.vmem [resolvable:$true] %s444
      %450 = dma.hbm_to_vmem [thread:$0]  %s79, 1536, %s445, [#allocation44], 128, 128, 8
    $region161: #{_lambda_.1} parent=1 // pred_fallthru
      _
    // Predicated region
    $region162: #{_lambda_.1} parent=1 // pred_check
      _
    $region163: #{_lambda_.1} parent=1 // pred_check_branch
      %452 = sbr.rel (0) target = $region165
    $region164: #{_lambda_.1} parent=1 // pred_region
      _
    $region165: #{_lambda_.1} parent=1 // pred_fallthru
      _
    // Predicated region
    $region166: #{_lambda_.1} parent=1 // pred_check
      _
    $region167: #{_lambda_.1} parent=1 // pred_check_branch
      %454 = sbr.rel (0) target = $region169
    $region168: #{_lambda_.1} parent=1 // pred_region
      %s456 = ssub.s32 1024, 1024
      %457 = vsyncadd [#allocation44], %s456
      %s458 = sshll.u32 [#allocation45], 4
      %s459 = int_to_ptr.vmem [resolvable:$true] %s458
      %464 = dma.hbm_to_vmem [thread:$0]  %s83, 1024, %s459, [#allocation44], 128, 128, 8
    $region169: #{_lambda_.1} parent=1 // pred_fallthru
      _
    // Predicated region
    $region170: #{_lambda_.1} parent=1 // pred_check
      _
    $region171: #{_lambda_.1} parent=1 // pred_check_branch
      %466 = sbr.rel (0) target = $region173
    $region172: #{_lambda_.1} parent=1 // pred_region
      _
    $region173: #{_lambda_.1} parent=1 // pred_fallthru
      _
    // Predicated region
    $region174: #{_lambda_.1} parent=1 // pred_check
      _
    $region175: #{_lambda_.1} parent=1 // pred_check_branch
      %468 = sbr.rel (0) target = $region177
    $region176: #{_lambda_.1} parent=1 // pred_region
      _
    $region177: #{_lambda_.1} parent=1 // pred_fallthru
      _
    // Predicated region
    $region178: #{_lambda_.1} parent=1 // pred_check
      _
    $region179: #{_lambda_.1} parent=1 // pred_check_branch
      %470 = sbr.rel (0) target = $region181
    $region180: #{_lambda_.1} parent=1 // pred_region
      %471 = dma.done [#allocation3], 1536
    $region181: #{_lambda_.1} parent=1 // pred_fallthru
      _
    // Predicated region
    $region182: #{_lambda_.1} parent=1 // pred_check
      _
    $region183: #{_lambda_.1} parent=1 // pred_check_branch
      %473 = sbr.rel (0) target = $region185
    $region184: #{_lambda_.1} parent=1 // pred_region
      %474 = dma.done [#allocation5], 1536
    $region185: #{_lambda_.1} parent=1 // pred_fallthru
      _
    // Predicated region
    $region186: #{_lambda_.1} parent=1 // pred_check
      _
    $region187: #{_lambda_.1} parent=1 // pred_check_branch
      %476 = sbr.rel (0) target = $region189
    $region188: #{_lambda_.1} parent=1 // pred_region
      %477 = dma.done [#allocation5], 64
    $region189: #{_lambda_.1} parent=1 // pred_fallthru
      _
    // Predicated region
    $region190: #{_lambda_.1} parent=1 // pred_check
      _
    $region191: #{_lambda_.1} parent=1 // pred_check_branch
      %479 = sbr.rel (0) target = $region193
    $region192: #{_lambda_.1} parent=1 // pred_region
      %480 = dma.done [#allocation8], 1024
    $region193: #{_lambda_.1} parent=1 // pred_fallthru
      _
    // Predicated region
    $region194: #{_lambda_.1} parent=1 // pred_check
      _
    $region195: #{_lambda_.1} parent=1 // pred_check_branch
      %482 = sbr.rel (0) target = $region197
    $region196: #{_lambda_.1} parent=1 // pred_region
      %483 = dma.done [#allocation8], 2048
    $region197: #{_lambda_.1} parent=1 // pred_fallthru
      _
    // Predicated region
    $region198: #{_lambda_.1} parent=1 // pred_check
      _
    $region199: #{_lambda_.1} parent=1 // pred_check_branch
      %485 = sbr.rel (0) target = $region201
    $region200: #{_lambda_.1} parent=1 // pred_region
      %486 = dma.done [#allocation11], 768
    $region201: #{_lambda_.1} parent=1 // pred_fallthru
      _
    // Predicated region
    $region202: #{_lambda_.1} parent=1 // pred_check
      _
    $region203: #{_lambda_.1} parent=1 // pred_check_branch
      %488 = sbr.rel (0) target = $region205
    $region204: #{_lambda_.1} parent=1 // pred_region
      %489 = dma.done [#allocation11], 64
    $region205: #{_lambda_.1} parent=1 // pred_fallthru
      _
    // Predicated region
    $region206: #{_lambda_.1} parent=1 // pred_check
      _
    $region207: #{_lambda_.1} parent=1 // pred_check_branch
      %491 = sbr.rel (0) target = $region209
    $region208: #{_lambda_.1} parent=1 // pred_region
      %492 = dma.done [#allocation14], 3072
    $region209: #{_lambda_.1} parent=1 // pred_fallthru
      _
    // Predicated region
    $region210: #{_lambda_.1} parent=1 // pred_check
      _
    $region211: #{_lambda_.1} parent=1 // pred_check_branch
      %494 = sbr.rel (0) target = $region213
    $region212: #{_lambda_.1} parent=1 // pred_region
      %495 = dma.done [#allocation14], 64
    $region213: #{_lambda_.1} parent=1 // pred_fallthru
      _
    // Predicated region
    $region214: #{_lambda_.1} parent=1 // pred_check
      _
    $region215: #{_lambda_.1} parent=1 // pred_check_branch
      %497 = sbr.rel (0) target = $region217
    $region216: #{_lambda_.1} parent=1 // pred_region
      %498 = dma.done [#allocation17], 6144
    $region217: #{_lambda_.1} parent=1 // pred_fallthru
      _
    // Predicated region
    $region218: #{_lambda_.1} parent=1 // pred_check
      _
    $region219: #{_lambda_.1} parent=1 // pred_check_branch
      %500 = sbr.rel (0) target = $region221
    $region220: #{_lambda_.1} parent=1 // pred_region
      %501 = dma.done [#allocation17], 384
    $region221: #{_lambda_.1} parent=1 // pred_fallthru
      _
    // Predicated region
    $region222: #{_lambda_.1} parent=1 // pred_check
      _
    $region223: #{_lambda_.1} parent=1 // pred_check_branch
      %503 = sbr.rel (0) target = $region225
    $region224: #{_lambda_.1} parent=1 // pred_region
      %504 = dma.done [#allocation20], 64
    $region225: #{_lambda_.1} parent=1 // pred_fallthru
      _
    // Predicated region
    $region226: #{_lambda_.1} parent=1 // pred_check
      _
    $region227: #{_lambda_.1} parent=1 // pred_check_branch
      %506 = sbr.rel (0) target = $region229
    $region228: #{_lambda_.1} parent=1 // pred_region
      %507 = dma.done [#allocation20], 6144
    $region229: #{_lambda_.1} parent=1 // pred_fallthru
      _
    // Predicated region
    $region230: #{_lambda_.1} parent=1 // pred_check
      _
    $region231: #{_lambda_.1} parent=1 // pred_check_branch
      %509 = sbr.rel (0) target = $region233
    $region232: #{_lambda_.1} parent=1 // pred_region
      %510 = dma.done [#allocation23], 384
    $region233: #{_lambda_.1} parent=1 // pred_fallthru
      _
    // Predicated region
    $region234: #{_lambda_.1} parent=1 // pred_check
      _
    $region235: #{_lambda_.1} parent=1 // pred_check_branch
      %512 = sbr.rel (0) target = $region237
    $region236: #{_lambda_.1} parent=1 // pred_region
      %513 = dma.done [#allocation23], 64
    $region237: #{_lambda_.1} parent=1 // pred_fallthru
      _
    // Predicated region
    $region238: #{_lambda_.1} parent=1 // pred_check
      _
    $region239: #{_lambda_.1} parent=1 // pred_check_branch
      %515 = sbr.rel (0) target = $region241
    $region240: #{_lambda_.1} parent=1 // pred_region
      %516 = dma.done [#allocation26], 4096
    $region241: #{_lambda_.1} parent=1 // pred_fallthru
      _
    // Predicated region
    $region242: #{_lambda_.1} parent=1 // pred_check
      _
    $region243: #{_lambda_.1} parent=1 // pred_check_branch
      %518 = sbr.rel (0) target = $region245
    $region244: #{_lambda_.1} parent=1 // pred_region
      %519 = dma.done [#allocation26], 512
    $region245: #{_lambda_.1} parent=1 // pred_fallthru
      _
    // Predicated region
    $region246: #{_lambda_.1} parent=1 // pred_check
      _
    $region247: #{_lambda_.1} parent=1 // pred_check_branch
      %521 = sbr.rel (0) target = $region249
    $region248: #{_lambda_.1} parent=1 // pred_region
      %522 = dma.done [#allocation29], 16
    $region249: #{_lambda_.1} parent=1 // pred_fallthru
      _
    // Predicated region
    $region250: #{_lambda_.1} parent=1 // pred_check
      _
    $region251: #{_lambda_.1} parent=1 // pred_check_branch
      %524 = sbr.rel (0) target = $region253
    $region252: #{_lambda_.1} parent=1 // pred_region
      %525 = dma.done [#allocation29], 12288
    $region253: #{_lambda_.1} parent=1 // pred_fallthru
      _
    // Predicated region
    $region254: #{_lambda_.1} parent=1 // pred_check
      _
    $region255: #{_lambda_.1} parent=1 // pred_check_branch
      %527 = sbr.rel (0) target = $region257
    $region256: #{_lambda_.1} parent=1 // pred_region
      %528 = dma.done [#allocation32], 64
    $region257: #{_lambda_.1} parent=1 // pred_fallthru
      _
    // Predicated region
    $region258: #{_lambda_.1} parent=1 // pred_check
      _
    $region259: #{_lambda_.1} parent=1 // pred_check_branch
      %530 = sbr.rel (0) target = $region261
    $region260: #{_lambda_.1} parent=1 // pred_region
      %531 = dma.done [#allocation32], 2048
    $region261: #{_lambda_.1} parent=1 // pred_fallthru
      _
    // Predicated region
    $region262: #{_lambda_.1} parent=1 // pred_check
      _
    $region263: #{_lambda_.1} parent=1 // pred_check_branch
      %533 = sbr.rel (0) target = $region265
    $region264: #{_lambda_.1} parent=1 // pred_region
      %534 = dma.done [#allocation35], 512
    $region265: #{_lambda_.1} parent=1 // pred_fallthru
      _
    // Predicated region
    $region266: #{_lambda_.1} parent=1 // pred_check
      _
    $region267: #{_lambda_.1} parent=1 // pred_check_branch
      %536 = sbr.rel (0) target = $region269
    $region268: #{_lambda_.1} parent=1 // pred_region
      %537 = dma.done [#allocation35], 16
    $region269: #{_lambda_.1} parent=1 // pred_fallthru
      _
    // Predicated region
    $region270: #{_lambda_.1} parent=1 // pred_check
      _
    $region271: #{_lambda_.1} parent=1 // pred_check_branch
      %539 = sbr.rel (0) target = $region273
    $region272: #{_lambda_.1} parent=1 // pred_region
      %540 = dma.done [#allocation38], 4096
    $region273: #{_lambda_.1} parent=1 // pred_fallthru
      _
    // Predicated region
    $region274: #{_lambda_.1} parent=1 // pred_check
      _
    $region275: #{_lambda_.1} parent=1 // pred_check_branch
      %542 = sbr.rel (0) target = $region277
    $region276: #{_lambda_.1} parent=1 // pred_region
      %543 = dma.done [#allocation38], 64
    $region277: #{_lambda_.1} parent=1 // pred_fallthru
      _
    // Predicated region
    $region278: #{_lambda_.1} parent=1 // pred_check
      _
    $region279: #{_lambda_.1} parent=1 // pred_check_branch
      %545 = sbr.rel (0) target = $region281
    $region280: #{_lambda_.1} parent=1 // pred_region
      %546 = dma.done [#allocation41], 1024
    $region281: #{_lambda_.1} parent=1 // pred_fallthru
      _
    // Predicated region
    $region282: #{_lambda_.1} parent=1 // pred_check
      _
    $region283: #{_lambda_.1} parent=1 // pred_check_branch
      %548 = sbr.rel (0) target = $region285
    $region284: #{_lambda_.1} parent=1 // pred_region
      %549 = dma.done [#allocation41], 4096
    $region285: #{_lambda_.1} parent=1 // pred_fallthru
      _
    // Predicated region
    $region286: #{_lambda_.1} parent=1 // pred_check
      _
    $region287: #{_lambda_.1} parent=1 // pred_check_branch
      %551 = sbr.rel (0) target = $region289
    $region288: #{_lambda_.1} parent=1 // pred_region
      %552 = dma.done [#allocation44], 1536
    $region289: #{_lambda_.1} parent=1 // pred_fallthru
      _
    // Predicated region
    $region290: #{_lambda_.1} parent=1 // pred_check
      _
    $region291: #{_lambda_.1} parent=1 // pred_check_branch
      %554 = sbr.rel (0) target = $region293
    $region292: #{_lambda_.1} parent=1 // pred_region
      %555 = dma.done [#allocation44], 1024
    $region293: #{_lambda_.1} parent=1 // pred_fallthru
      _
    %v556 = vld [vmem:[%s1] sm:$0xff]
    %v557 = vld [vmem:[%s1 + $0x8] sm:$0xff]
    %v558 = vld [vmem:[%s1 + $0x10] sm:$0xff]
    %v559 = vld [vmem:[%s1 + $0x18] sm:$0xff]
    %v560 = vld [vmem:[#allocation2] sm:$0xff]
    %v561 = vld [vmem:[#allocation2 + $0x8] sm:$0xff]
    %v562 = vld [vmem:[#allocation2 + $0x10] sm:$0xff]
    %v563 = vld [vmem:[#allocation2 + $0x18] sm:$0xff]
    %v564 = vld [vmem:[#allocation2 + $0x20] sm:$0xff]
    %v565 = vld [vmem:[#allocation2 + $0x28] sm:$0xff]
    %v566 = vld [vmem:[#allocation2 + $0x30] sm:$0xff]
    %v567 = vld [vmem:[#allocation2 + $0x38] sm:$0xff]
    %v568 = vld [vmem:[#allocation2 + $0x40] sm:$0xff]
    %v569 = vld [vmem:[#allocation2 + $0x48] sm:$0xff]
    %v570 = vld [vmem:[#allocation2 + $0x50] sm:$0xff]
    %v571 = vld [vmem:[#allocation2 + $0x58] sm:$0xff]
    %vm572 = vcmask 392192
    %v574 = vsel %vm572, %v556, 0
    %v577 = vsel %vm572, %v557, 0
    %v580 = vsel %vm572, %v558, 0
    %v583 = vsel %vm572, %v559, 0
    %585 = vmatprep.subr.mxu0 %v561
    %586 = vmatpush1.msra.mxu0 %v560
    %587 = vmatprep.subr.mxu0 %v563
    %588 = vmatpush1.msra.mxu0 %v562
    %589 = vmatprep.subr.mxu0 %v565
    %590 = vmatpush1.msra.mxu0 %v564
    %591 = vmatprep.subr.mxu0 %v567
    %592 = vmatpush1.msra.mxu0 %v566
    %593 = vmatprep.subr.mxu0 %v569
    %594 = vmatpush1.msra.mxu0 %v568
    %595 = vmatprep.subr.mxu0 %v571
    %596 = vmatpush1.msra.mxu0 %v570
    %597 = vmatprep.subr.mxu0 0.0
    %598 = vmatpush1.msra.mxu0 0.0
    %599 = vmatprep.subr.mxu0 0.0
    %600 = vmatpush1.msra.mxu0 0.0
    %601 = vmatprep.subr.mxu0 0.0
    %602 = vmatpush1.msra.mxu0 0.0
    %603 = vmatprep.subr.mxu0 0.0
    %604 = vmatpush1.msra.mxu0 0.0
    %605 = vmatprep.subr.mxu0 0.0
    %606 = vmatpush1.msra.mxu0 0.0
    %607 = vmatprep.subr.mxu0 0.0
    %608 = vmatpush1.msra.mxu0 0.0
    %609 = vmatprep.subr.mxu0 0.0
    %610 = vmatpush1.msra.mxu0 0.0
    %611 = vmatprep.subr.mxu0 0.0
    %612 = vmatpush1.msra.mxu0 0.0
    %613 = vmatprep.subr.mxu0 0.0
    %614 = vmatpush1.msra.mxu0 0.0
    %615 = vmatprep.subr.mxu0 0.0
    %616 = vmatpush1.msra.mxu0 0.0
    %617 = vmatprep.subr.mxu0 0.0
    %618 = vmatpush1.msra.mxu0 0.0
    %619 = vmatprep.subr.mxu0 0.0
    %620 = vmatpush1.msra.mxu0 0.0
    %621 = vmatprep.subr.mxu0 0.0
    %622 = vmatpush1.msra.mxu0 0.0
    %623 = vmatprep.subr.mxu0 0.0
    %624 = vmatpush1.msra.mxu0 0.0
    %625 = vmatprep.subr.mxu0 0.0
    %626 = vmatpush1.msra.mxu0 0.0
    %627 = vmatprep.subr.mxu0 0.0
    %628 = vmatpush1.msra.mxu0 0.0
    %629 = vmatprep.subr.mxu0 0.0
    %630 = vmatpush1.msra.mxu0 0.0
    %631 = vmatprep.subr.mxu0 0.0
    %632 = vmatpush1.msra.mxu0 0.0
    %633 = vmatprep.subr.mxu0 0.0
    %634 = vmatpush1.msra.mxu0 0.0
    %635 = vmatprep.subr.mxu0 0.0
    %636 = vmatpush1.msra.mxu0 0.0
    %637 = vmatprep.subr.mxu0 0.0
    %638 = vmatpush1.msra.mxu0 0.0
    %639 = vmatprep.subr.mxu0 0.0
    %640 = vmatpush1.msra.mxu0 0.0
    %641 = vmatprep.subr.mxu0 0.0
    %642 = vmatpush1.msra.mxu0 0.0
    %643 = vmatprep.subr.mxu0 0.0
    %644 = vmatpush1.msra.mxu0 0.0
    %645 = vmatprep.subr.mxu0 0.0
    %646 = vmatpush1.msra.mxu0 0.0
    %647 = vmatprep.subr.mxu0 0.0
    %648 = vmatpush1.msra.mxu0 0.0
    %649 = vmatprep.mubr.f32.mxu0 0.0
    %650 = vmatmul.mubr.f32.gmra.mrb[0].mxu0 %v574
    %v651 = vpop.f32.mrb[0].mxu0
    %v652 = vadd.f32 0.0, %v651
    %v653 = vpop.f32.mrb[0].mxu0
    %v654 = vadd.f32 0.0, %v653
    %655 = vmatprep.mubr.f32.mxu0 0.0
    %656 = vmatmul.mubr.f32.gmra.mrb[0].mxu0 %v577
    %v657 = vpop.f32.mrb[0].mxu0
    %v658 = vadd.f32 0.0, %v657
    %v659 = vpop.f32.mrb[0].mxu0
    %v660 = vadd.f32 0.0, %v659
    %661 = vmatprep.mubr.f32.mxu0 0.0
    %662 = vmatmul.mubr.f32.gmra.mrb[0].mxu0 %v580
    %v663 = vpop.f32.mrb[0].mxu0
    %v664 = vadd.f32 0.0, %v663
    %v665 = vpop.f32.mrb[0].mxu0
    %v666 = vadd.f32 0.0, %v665
    %667 = vmatprep.mubr.f32.mxu0 0.0
    %668 = vmatmul.mubr.f32.gmra.mrb[0].mxu0 %v583
    %v669 = vpop.f32.mrb[0].mxu0
    %v670 = vadd.f32 0.0, %v669
    %v671 = vpop.f32.mrb[0].mxu0
    %v672 = vadd.f32 0.0, %v671
    %673 = vdwg.mxu0
    %v674 = vld [vmem:[#allocation4] sm:$0xff]
    %v675 = vld [vmem:[#allocation4 + $0x8] sm:$0xff]
    %v676 = vld [vmem:[#allocation4 + $0x10] sm:$0xff]
    %v677 = vld [vmem:[#allocation4 + $0x18] sm:$0xff]
    %s678 = scalar_lea.vmem [#allocation4], 32
    %v679 = vld [vmem:[%s678] sm:$0xff]
    %v680 = vld [vmem:[%s678 + $0x8] sm:$0xff]
    %v681 = vld [vmem:[%s678 + $0x10] sm:$0xff]
    %v682 = vld [vmem:[%s678 + $0x18] sm:$0xff]
    %687 = vrot.lane.b32.xlu0 %v652, 64
    %v688 = vpop.permute.xlu0 %687
    %689 = vrot.lane.b32.xlu0 %v658, 64
    %v690 = vpop.permute.xlu0 %689
    %691 = vrot.lane.b32.xlu0 %v664, 64
    %v692 = vpop.permute.xlu0 %691
    %693 = vrot.lane.b32.xlu0 %v670, 64
    %v694 = vpop.permute.xlu0 %693
    %vm699 = vcmask 261120
    %v701 = vsel %vm699, %v679, 0
    %v704 = vsel %vm699, %v680, 0
    %v707 = vsel %vm699, %v681, 0
    %v710 = vsel %vm699, %v682, 0
    %712 = vmatprep.subr.mxu0 0.0
    %713 = vmatpush1.msra.mxu0 %v688
    %714 = vmatprep.subr.mxu0 0.0
    %715 = vmatpush1.msra.mxu0 %v690
    %716 = vmatprep.subr.mxu0 0.0
    %717 = vmatpush1.msra.mxu0 %v692
    %718 = vmatprep.subr.mxu0 0.0
    %719 = vmatpush1.msra.mxu0 %v694
    %720 = vmatprep.subr.mxu0 0.0
    %721 = vmatpush1.msra.mxu0 0.0
    %722 = vmatprep.subr.mxu0 0.0
    %723 = vmatpush1.msra.mxu0 0.0
    %724 = vmatprep.subr.mxu0 0.0
    %725 = vmatpush1.msra.mxu0 0.0
    %726 = vmatprep.subr.mxu0 0.0
    %727 = vmatpush1.msra.mxu0 0.0
    %728 = vmatprep.subr.mxu0 0.0
    %729 = vmatpush1.msra.mxu0 0.0
    %730 = vmatprep.subr.mxu0 0.0
    %731 = vmatpush1.msra.mxu0 0.0
    %732 = vmatprep.subr.mxu0 0.0
    %733 = vmatpush1.msra.mxu0 0.0
    %734 = vmatprep.subr.mxu0 0.0
    %735 = vmatpush1.msra.mxu0 0.0
    %736 = vmatprep.subr.mxu0 0.0
    %737 = vmatpush1.msra.mxu0 0.0
    %738 = vmatprep.subr.mxu0 0.0
    %739 = vmatpush1.msra.mxu0 0.0
    %740 = vmatprep.subr.mxu0 0.0
    %741 = vmatpush1.msra.mxu0 0.0
    %742 = vmatprep.subr.mxu0 0.0
    %743 = vmatpush1.msra.mxu0 0.0
    %744 = vmatprep.subr.mxu0 0.0
    %745 = vmatpush1.msra.mxu0 0.0
    %746 = vmatprep.subr.mxu0 0.0
    %747 = vmatpush1.msra.mxu0 0.0
    %748 = vmatprep.subr.mxu0 0.0
    %749 = vmatpush1.msra.mxu0 0.0
    %750 = vmatprep.subr.mxu0 0.0
    %751 = vmatpush1.msra.mxu0 0.0
    %752 = vmatprep.subr.mxu0 0.0
    %753 = vmatpush1.msra.mxu0 0.0
    %754 = vmatprep.subr.mxu0 0.0
    %755 = vmatpush1.msra.mxu0 0.0
    %756 = vmatprep.subr.mxu0 0.0
    %757 = vmatpush1.msra.mxu0 0.0
    %758 = vmatprep.subr.mxu0 0.0
    %759 = vmatpush1.msra.mxu0 0.0
    %760 = vmatprep.subr.mxu0 0.0
    %761 = vmatpush1.msra.mxu0 0.0
    %762 = vmatprep.subr.mxu0 0.0
    %763 = vmatpush1.msra.mxu0 0.0
    %764 = vmatprep.subr.mxu0 0.0
    %765 = vmatpush1.msra.mxu0 0.0
    %766 = vmatprep.subr.mxu0 0.0
    %767 = vmatpush1.msra.mxu0 0.0
    %768 = vmatprep.subr.mxu0 0.0
    %769 = vmatpush1.msra.mxu0 0.0
    %770 = vmatprep.subr.mxu0 0.0
    %771 = vmatpush1.msra.mxu0 0.0
    %772 = vmatprep.subr.mxu0 0.0
    %773 = vmatpush1.msra.mxu0 0.0
    %774 = vmatprep.subr.mxu0 0.0
    %775 = vmatpush1.msra.mxu0 0.0
    %776 = vmatprep.mubr.f32.mxu0 0.0
    %777 = vmatmul.mubr.f32.gmra.mrb[0].mxu0 %v701
    %v778 = vpop.f32.mrb[0].mxu0
    %v779 = vadd.f32 0.0, %v778
    %v780 = vpop.f32.mrb[0].mxu0
    %781 = vmatprep.mubr.f32.mxu0 0.0
    %782 = vmatmul.mubr.f32.gmra.mrb[0].mxu0 %v704
    %v783 = vpop.f32.mrb[0].mxu0
    %v784 = vadd.f32 0.0, %v783
    %v785 = vpop.f32.mrb[0].mxu0
    %786 = vmatprep.mubr.f32.mxu0 0.0
    %787 = vmatmul.mubr.f32.gmra.mrb[0].mxu0 %v707
    %v788 = vpop.f32.mrb[0].mxu0
    %v789 = vadd.f32 0.0, %v788
    %v790 = vpop.f32.mrb[0].mxu0
    %791 = vmatprep.mubr.f32.mxu0 0.0
    %792 = vmatmul.mubr.f32.gmra.mrb[0].mxu0 %v710
    %v793 = vpop.f32.mrb[0].mxu0
    %v794 = vadd.f32 0.0, %v793
    %v795 = vpop.f32.mrb[0].mxu0
    %796 = vdwg.mxu0
    %v798 = vsel %vm699, %v674, 0
    %v801 = vsel %vm699, %v675, 0
    %v804 = vsel %vm699, %v676, 0
    %v807 = vsel %vm699, %v677, 0
    %809 = vmatprep.subr.mxu0 0.0
    %810 = vmatpush1.msra.mxu0 %v652
    %811 = vmatprep.subr.mxu0 0.0
    %812 = vmatpush1.msra.mxu0 %v658
    %813 = vmatprep.subr.mxu0 0.0
    %814 = vmatpush1.msra.mxu0 %v664
    %815 = vmatprep.subr.mxu0 0.0
    %816 = vmatpush1.msra.mxu0 %v670
    %817 = vmatprep.subr.mxu0 0.0
    %818 = vmatpush1.msra.mxu0 0.0
    %819 = vmatprep.subr.mxu0 0.0
    %820 = vmatpush1.msra.mxu0 0.0
    %821 = vmatprep.subr.mxu0 0.0
    %822 = vmatpush1.msra.mxu0 0.0
    %823 = vmatprep.subr.mxu0 0.0
    %824 = vmatpush1.msra.mxu0 0.0
    %825 = vmatprep.subr.mxu0 0.0
    %826 = vmatpush1.msra.mxu0 0.0
    %827 = vmatprep.subr.mxu0 0.0
    %828 = vmatpush1.msra.mxu0 0.0
    %829 = vmatprep.subr.mxu0 0.0
    %830 = vmatpush1.msra.mxu0 0.0
    %831 = vmatprep.subr.mxu0 0.0
    %832 = vmatpush1.msra.mxu0 0.0
    %833 = vmatprep.subr.mxu0 0.0
    %834 = vmatpush1.msra.mxu0 0.0
    %835 = vmatprep.subr.mxu0 0.0
    %836 = vmatpush1.msra.mxu0 0.0
    %837 = vmatprep.subr.mxu0 0.0
    %838 = vmatpush1.msra.mxu0 0.0
    %839 = vmatprep.subr.mxu0 0.0
    %840 = vmatpush1.msra.mxu0 0.0
    %841 = vmatprep.subr.mxu0 0.0
    %842 = vmatpush1.msra.mxu0 0.0
    %843 = vmatprep.subr.mxu0 0.0
    %844 = vmatpush1.msra.mxu0 0.0
    %845 = vmatprep.subr.mxu0 0.0
    %846 = vmatpush1.msra.mxu0 0.0
    %847 = vmatprep.subr.mxu0 0.0
    %848 = vmatpush1.msra.mxu0 0.0
    %849 = vmatprep.subr.mxu0 0.0
    %850 = vmatpush1.msra.mxu0 0.0
    %851 = vmatprep.subr.mxu0 0.0
    %852 = vmatpush1.msra.mxu0 0.0
    %853 = vmatprep.subr.mxu0 0.0
    %854 = vmatpush1.msra.mxu0 0.0
    %855 = vmatprep.subr.mxu0 0.0
    %856 = vmatpush1.msra.mxu0 0.0
    %857 = vmatprep.subr.mxu0 0.0
    %858 = vmatpush1.msra.mxu0 0.0
    %859 = vmatprep.subr.mxu0 0.0
    %860 = vmatpush1.msra.mxu0 0.0
    %861 = vmatprep.subr.mxu0 0.0
    %862 = vmatpush1.msra.mxu0 0.0
    %863 = vmatprep.subr.mxu0 0.0
    %864 = vmatpush1.msra.mxu0 0.0
    %865 = vmatprep.subr.mxu0 0.0
    %866 = vmatpush1.msra.mxu0 0.0
    %867 = vmatprep.subr.mxu0 0.0
    %868 = vmatpush1.msra.mxu0 0.0
    %869 = vmatprep.subr.mxu0 0.0
    %870 = vmatpush1.msra.mxu0 0.0
    %871 = vmatprep.subr.mxu0 0.0
    %872 = vmatpush1.msra.mxu0 0.0
    %873 = vmatprep.mubr.f32.mxu0 0.0
    %874 = vmatmul.mubr.f32.gmra.mrb[0].mxu0 %v798
    %v875 = vpop.f32.mrb[0].mxu0
    %v876 = vadd.f32 %v779, %v875
    %v877 = vpop.f32.mrb[0].mxu0
    %878 = vmatprep.mubr.f32.mxu0 0.0
    %879 = vmatmul.mubr.f32.gmra.mrb[0].mxu0 %v801
    %v880 = vpop.f32.mrb[0].mxu0
    %v881 = vadd.f32 %v784, %v880
    %v882 = vpop.f32.mrb[0].mxu0
    %883 = vmatprep.mubr.f32.mxu0 0.0
    %884 = vmatmul.mubr.f32.gmra.mrb[0].mxu0 %v804
    %v885 = vpop.f32.mrb[0].mxu0
    %v886 = vadd.f32 %v789, %v885
    %v887 = vpop.f32.mrb[0].mxu0
    %888 = vmatprep.mubr.f32.mxu0 0.0
    %889 = vmatmul.mubr.f32.gmra.mrb[0].mxu0 %v807
    %v890 = vpop.f32.mrb[0].mxu0
    %v891 = vadd.f32 %v794, %v890
    %v892 = vpop.f32.mrb[0].mxu0
    %893 = vdwg.mxu0
    %s894 = scalar_lea.vmem [#allocation4], 64
    %v895 = vld [vmem:[%s894] sm:$0xff]
    %v896 = vld [vmem:[%s894 + $0x8] sm:$0xff]
    %v897 = vld [vmem:[%s894 + $0x10] sm:$0xff]
    %v898 = vld [vmem:[%s894 + $0x18] sm:$0xff]
    %v900 = vsel %vm699, %v895, 0
    %v903 = vsel %vm699, %v896, 0
    %v906 = vsel %vm699, %v897, 0
    %v909 = vsel %vm699, %v898, 0
    %911 = vmatprep.subr.mxu0 0.0
    %912 = vmatpush1.msra.mxu0 %v654
    %913 = vmatprep.subr.mxu0 0.0
    %914 = vmatpush1.msra.mxu0 %v660
    %915 = vmatprep.subr.mxu0 0.0
    %916 = vmatpush1.msra.mxu0 %v666
    %917 = vmatprep.subr.mxu0 0.0
    %918 = vmatpush1.msra.mxu0 %v672
    %919 = vmatprep.subr.mxu0 0.0
    %920 = vmatpush1.msra.mxu0 0.0
    %921 = vmatprep.subr.mxu0 0.0
    %922 = vmatpush1.msra.mxu0 0.0
    %923 = vmatprep.subr.mxu0 0.0
    %924 = vmatpush1.msra.mxu0 0.0
    %925 = vmatprep.subr.mxu0 0.0
    %926 = vmatpush1.msra.mxu0 0.0
    %927 = vmatprep.subr.mxu0 0.0
    %928 = vmatpush1.msra.mxu0 0.0
    %929 = vmatprep.subr.mxu0 0.0
    %930 = vmatpush1.msra.mxu0 0.0
    %931 = vmatprep.subr.mxu0 0.0
    %932 = vmatpush1.msra.mxu0 0.0
    %933 = vmatprep.subr.mxu0 0.0
    %934 = vmatpush1.msra.mxu0 0.0
    %935 = vmatprep.subr.mxu0 0.0
    %936 = vmatpush1.msra.mxu0 0.0
    %937 = vmatprep.subr.mxu0 0.0
    %938 = vmatpush1.msra.mxu0 0.0
    %939 = vmatprep.subr.mxu0 0.0
    %940 = vmatpush1.msra.mxu0 0.0
    %941 = vmatprep.subr.mxu0 0.0
    %942 = vmatpush1.msra.mxu0 0.0
    %943 = vmatprep.subr.mxu0 0.0
    %944 = vmatpush1.msra.mxu0 0.0
    %945 = vmatprep.subr.mxu0 0.0
    %946 = vmatpush1.msra.mxu0 0.0
    %947 = vmatprep.subr.mxu0 0.0
    %948 = vmatpush1.msra.mxu0 0.0
    %949 = vmatprep.subr.mxu0 0.0
    %950 = vmatpush1.msra.mxu0 0.0
    %951 = vmatprep.subr.mxu0 0.0
    %952 = vmatpush1.msra.mxu0 0.0
    %953 = vmatprep.subr.mxu0 0.0
    %954 = vmatpush1.msra.mxu0 0.0
    %955 = vmatprep.subr.mxu0 0.0
    %956 = vmatpush1.msra.mxu0 0.0
    %957 = vmatprep.subr.mxu0 0.0
    %958 = vmatpush1.msra.mxu0 0.0
    %959 = vmatprep.subr.mxu0 0.0
    %960 = vmatpush1.msra.mxu0 0.0
    %961 = vmatprep.subr.mxu0 0.0
    %962 = vmatpush1.msra.mxu0 0.0
    %963 = vmatprep.subr.mxu0 0.0
    %964 = vmatpush1.msra.mxu0 0.0
    %965 = vmatprep.subr.mxu0 0.0
    %966 = vmatpush1.msra.mxu0 0.0
    %967 = vmatprep.subr.mxu0 0.0
    %968 = vmatpush1.msra.mxu0 0.0
    %969 = vmatprep.subr.mxu0 0.0
    %970 = vmatpush1.msra.mxu0 0.0
    %971 = vmatprep.subr.mxu0 0.0
    %972 = vmatpush1.msra.mxu0 0.0
    %973 = vmatprep.subr.mxu0 0.0
    %974 = vmatpush1.msra.mxu0 0.0
    %975 = vmatprep.mubr.f32.mxu0 0.0
    %976 = vmatmul.mubr.f32.gmra.mrb[0].mxu0 %v900
    %v977 = vpop.f32.mrb[0].mxu0
    %v978 = vadd.f32 0.0, %v977
    %v979 = vpop.f32.mrb[0].mxu0
    %980 = vmatprep.mubr.f32.mxu0 0.0
    %981 = vmatmul.mubr.f32.gmra.mrb[0].mxu0 %v903
    %v982 = vpop.f32.mrb[0].mxu0
    %v983 = vadd.f32 0.0, %v982
    %v984 = vpop.f32.mrb[0].mxu0
    %985 = vmatprep.mubr.f32.mxu0 0.0
    %986 = vmatmul.mubr.f32.gmra.mrb[0].mxu0 %v906
    %v987 = vpop.f32.mrb[0].mxu0
    %v988 = vadd.f32 0.0, %v987
    %v989 = vpop.f32.mrb[0].mxu0
    %990 = vmatprep.mubr.f32.mxu0 0.0
    %991 = vmatmul.mubr.f32.gmra.mrb[0].mxu0 %v909
    %v992 = vpop.f32.mrb[0].mxu0
    %v993 = vadd.f32 0.0, %v992
    %v994 = vpop.f32.mrb[0].mxu0
    %995 = vdwg.mxu0
    %v996 = vadd.f32 %v876, %v978
    %v997 = vadd.f32 %v881, %v983
    %v998 = vadd.f32 %v886, %v988
    %v999 = vadd.f32 %v891, %v993
    %v1000 = vld [vmem:[#allocation6] sm:$0x1]
    %v1001 = vlaneseq
    %v1002 = vshrl.u32 %v1001, 7
    %v1003 = vsub.s32 0, %v1002
    %v1004 = vrot.slane %v1000, %v1003
    %v1005 = vadd.f32 %v996, %v1004
    %v1006 = vadd.f32 %v997, %v1004
    %v1007 = vadd.f32 %v998, %v1004
    %v1008 = vadd.f32 %v999, %v1004
    %v1009 = vmax.f32 %v1005, 0.0
    %v1010 = vmax.f32 %v1006, 0.0
    %v1011 = vmax.f32 %v1007, 0.0
    %v1012 = vmax.f32 %v1008, 0.0
    %v1013 = vld [vmem:[#allocation7] sm:$0xff]
    %v1014 = vld [vmem:[#allocation7 + $0x8] sm:$0xff]
    %v1015 = vld [vmem:[#allocation7 + $0x10] sm:$0xff]
    %v1016 = vld [vmem:[#allocation7 + $0x18] sm:$0xff]
    %v1017 = vld [vmem:[#allocation7 + $0x20] sm:$0xff]
    %v1018 = vld [vmem:[#allocation7 + $0x28] sm:$0xff]
    %v1019 = vld [vmem:[#allocation7 + $0x30] sm:$0xff]
    %v1020 = vld [vmem:[#allocation7 + $0x38] sm:$0xff]
    %v1022 = vsel %vm699, 1.0, 0
    %1024 = vmatprep.subr.mxu0 0.0
    %1025 = vmatpush1.msra.mxu0 %v1009
    %1026 = vmatprep.subr.mxu0 0.0
    %1027 = vmatpush1.msra.mxu0 %v1010
    %1028 = vmatprep.subr.mxu0 0.0
    %1029 = vmatpush1.msra.mxu0 %v1011
    %1030 = vmatprep.subr.mxu0 0.0
    %1031 = vmatpush1.msra.mxu0 %v1012
    %1032 = vmatprep.subr.mxu0 0.0
    %1033 = vmatpush1.msra.mxu0 0.0
    %1034 = vmatprep.subr.mxu0 0.0
    %1035 = vmatpush1.msra.mxu0 0.0
    %1036 = vmatprep.subr.mxu0 0.0
    %1037 = vmatpush1.msra.mxu0 0.0
    %1038 = vmatprep.subr.mxu0 0.0
    %1039 = vmatpush1.msra.mxu0 0.0
    %1040 = vmatprep.subr.mxu0 0.0
    %1041 = vmatpush1.msra.mxu0 0.0
    %1042 = vmatprep.subr.mxu0 0.0
    %1043 = vmatpush1.msra.mxu0 0.0
    %1044 = vmatprep.subr.mxu0 0.0
    %1045 = vmatpush1.msra.mxu0 0.0
    %1046 = vmatprep.subr.mxu0 0.0
    %1047 = vmatpush1.msra.mxu0 0.0
    %1048 = vmatprep.subr.mxu0 0.0
    %1049 = vmatpush1.msra.mxu0 0.0
    %1050 = vmatprep.subr.mxu0 0.0
    %1051 = vmatpush1.msra.mxu0 0.0
    %1052 = vmatprep.subr.mxu0 0.0
    %1053 = vmatpush1.msra.mxu0 0.0
    %1054 = vmatprep.subr.mxu0 0.0
    %1055 = vmatpush1.msra.mxu0 0.0
    %1056 = vmatprep.subr.mxu0 0.0
    %1057 = vmatpush1.msra.mxu0 0.0
    %1058 = vmatprep.subr.mxu0 0.0
    %1059 = vmatpush1.msra.mxu0 0.0
    %1060 = vmatprep.subr.mxu0 0.0
    %1061 = vmatpush1.msra.mxu0 0.0
    %1062 = vmatprep.subr.mxu0 0.0
    %1063 = vmatpush1.msra.mxu0 0.0
    %1064 = vmatprep.subr.mxu0 0.0
    %1065 = vmatpush1.msra.mxu0 0.0
    %1066 = vmatprep.subr.mxu0 0.0
    %1067 = vmatpush1.msra.mxu0 0.0
    %1068 = vmatprep.subr.mxu0 0.0
    %1069 = vmatpush1.msra.mxu0 0.0
    %1070 = vmatprep.subr.mxu0 0.0
    %1071 = vmatpush1.msra.mxu0 0.0
    %1072 = vmatprep.subr.mxu0 0.0
    %1073 = vmatpush1.msra.mxu0 0.0
    %1074 = vmatprep.subr.mxu0 0.0
    %1075 = vmatpush1.msra.mxu0 0.0
    %1076 = vmatprep.subr.mxu0 0.0
    %1077 = vmatpush1.msra.mxu0 0.0
    %1078 = vmatprep.subr.mxu0 0.0
    %1079 = vmatpush1.msra.mxu0 0.0
    %1080 = vmatprep.subr.mxu0 0.0
    %1081 = vmatpush1.msra.mxu0 0.0
    %1082 = vmatprep.subr.mxu0 0.0
    %1083 = vmatpush1.msra.mxu0 0.0
    %1084 = vmatprep.subr.mxu0 0.0
    %1085 = vmatpush1.msra.mxu0 0.0
    %1086 = vmatprep.subr.mxu0 0.0
    %1087 = vmatpush1.msra.mxu0 0.0
    %1088 = vmatprep.mubr.f32.mxu0 0.0
    %1089 = vmatmul.mubr.f32.gmra.mrb[0].mxu0 %v1022
    %v1090 = vpop.f32.mrb[0].mxu0
    %v1091 = vadd.f32 0.0, %v1090
    %v1092 = vpop.f32.mrb[0].mxu0
    %1093 = vdwg.mxu0
    %vm1094 = vcmask 523264
    %v1096 = vsel %vm1094, %v1091, 0
    %1098 = vmatprep.subr.mxu0 0.0
    %1099 = vmatpush1.msra.mxu0 %v1013
    %1100 = vmatprep.subr.mxu0 0.0
    %1101 = vmatpush1.msra.mxu0 %v1014
    %1102 = vmatprep.subr.mxu0 0.0
    %1103 = vmatpush1.msra.mxu0 %v1015
    %1104 = vmatprep.subr.mxu0 0.0
    %1105 = vmatpush1.msra.mxu0 %v1016
    %1106 = vmatprep.subr.mxu0 0.0
    %1107 = vmatpush1.msra.mxu0 %v1017
    %1108 = vmatprep.subr.mxu0 0.0
    %1109 = vmatpush1.msra.mxu0 %v1018
    %1110 = vmatprep.subr.mxu0 0.0
    %1111 = vmatpush1.msra.mxu0 %v1019
    %1112 = vmatprep.subr.mxu0 0.0
    %1113 = vmatpush1.msra.mxu0 %v1020
    %1114 = vmatprep.subr.mxu0 0.0
    %1115 = vmatpush1.msra.mxu0 0.0
    %1116 = vmatprep.subr.mxu0 0.0
    %1117 = vmatpush1.msra.mxu0 0.0
    %1118 = vmatprep.subr.mxu0 0.0
    %1119 = vmatpush1.msra.mxu0 0.0
    %1120 = vmatprep.subr.mxu0 0.0
    %1121 = vmatpush1.msra.mxu0 0.0
    %1122 = vmatprep.subr.mxu0 0.0
    %1123 = vmatpush1.msra.mxu0 0.0
    %1124 = vmatprep.subr.mxu0 0.0
    %1125 = vmatpush1.msra.mxu0 0.0
    %1126 = vmatprep.subr.mxu0 0.0
    %1127 = vmatpush1.msra.mxu0 0.0
    %1128 = vmatprep.subr.mxu0 0.0
    %1129 = vmatpush1.msra.mxu0 0.0
    %1130 = vmatprep.subr.mxu0 0.0
    %1131 = vmatpush1.msra.mxu0 0.0
    %1132 = vmatprep.subr.mxu0 0.0
    %1133 = vmatpush1.msra.mxu0 0.0
    %1134 = vmatprep.subr.mxu0 0.0
    %1135 = vmatpush1.msra.mxu0 0.0
    %1136 = vmatprep.subr.mxu0 0.0
    %1137 = vmatpush1.msra.mxu0 0.0
    %1138 = vmatprep.subr.mxu0 0.0
    %1139 = vmatpush1.msra.mxu0 0.0
    %1140 = vmatprep.subr.mxu0 0.0
    %1141 = vmatpush1.msra.mxu0 0.0
    %1142 = vmatprep.subr.mxu0 0.0
    %1143 = vmatpush1.msra.mxu0 0.0
    %1144 = vmatprep.subr.mxu0 0.0
    %1145 = vmatpush1.msra.mxu0 0.0
    %1146 = vmatprep.subr.mxu0 0.0
    %1147 = vmatpush1.msra.mxu0 0.0
    %1148 = vmatprep.subr.mxu0 0.0
    %1149 = vmatpush1.msra.mxu0 0.0
    %1150 = vmatprep.subr.mxu0 0.0
    %1151 = vmatpush1.msra.mxu0 0.0
    %1152 = vmatprep.subr.mxu0 0.0
    %1153 = vmatpush1.msra.mxu0 0.0
    %1154 = vmatprep.subr.mxu0 0.0
    %1155 = vmatpush1.msra.mxu0 0.0
    %1156 = vmatprep.subr.mxu0 0.0
    %1157 = vmatpush1.msra.mxu0 0.0
    %1158 = vmatprep.subr.mxu0 0.0
    %1159 = vmatpush1.msra.mxu0 0.0
    %1160 = vmatprep.subr.mxu0 0.0
    %1161 = vmatpush1.msra.mxu0 0.0
    %1162 = vmatprep.mubr.f32.mxu0 0.0
    %1163 = vmatmul.mubr.f32.gmra.mrb[0].mxu0 %v1096
    %v1164 = vpop.f32.mrb[0].mxu0
    %v1165 = vadd.f32 0.0, %v1164
    %v1166 = vpop.f32.mrb[0].mxu0
    %1167 = vdwg.mxu0
    %v1168 = vlaneseq
    %v1169 = vshrl.u32 %v1168, 7
    %v1170 = vsub.s32 0, %v1169
    %v1171 = vrot.slane %v1165, %v1170
    %v1172 = vsub.f32 %v1009, %v1171
    %v1173 = vsub.f32 %v1010, %v1171
    %v1174 = vsub.f32 %v1011, %v1171
    %v1175 = vsub.f32 %v1012, %v1171
    %v1176 = vmul.f32 %v1172, %v1172
    %v1177 = vmul.f32 %v1173, %v1173
    %v1178 = vmul.f32 %v1174, %v1174
    %v1179 = vmul.f32 %v1175, %v1175
    %1180 = vmatprep.subr.mxu0 0.0
    %1181 = vmatpush1.msra.mxu0 %v1176
    %1182 = vmatprep.subr.mxu0 0.0
    %1183 = vmatpush1.msra.mxu0 %v1177
    %1184 = vmatprep.subr.mxu0 0.0
    %1185 = vmatpush1.msra.mxu0 %v1178
    %1186 = vmatprep.subr.mxu0 0.0
    %1187 = vmatpush1.msra.mxu0 %v1179
    %1188 = vmatprep.subr.mxu0 0.0
    %1189 = vmatpush1.msra.mxu0 0.0
    %1190 = vmatprep.subr.mxu0 0.0
    %1191 = vmatpush1.msra.mxu0 0.0
    %1192 = vmatprep.subr.mxu0 0.0
    %1193 = vmatpush1.msra.mxu0 0.0
    %1194 = vmatprep.subr.mxu0 0.0
    %1195 = vmatpush1.msra.mxu0 0.0
    %1196 = vmatprep.subr.mxu0 0.0
    %1197 = vmatpush1.msra.mxu0 0.0
    %1198 = vmatprep.subr.mxu0 0.0
    %1199 = vmatpush1.msra.mxu0 0.0
    %1200 = vmatprep.subr.mxu0 0.0
    %1201 = vmatpush1.msra.mxu0 0.0
    %1202 = vmatprep.subr.mxu0 0.0
    %1203 = vmatpush1.msra.mxu0 0.0
    %1204 = vmatprep.subr.mxu0 0.0
    %1205 = vmatpush1.msra.mxu0 0.0
    %1206 = vmatprep.subr.mxu0 0.0
    %1207 = vmatpush1.msra.mxu0 0.0
    %1208 = vmatprep.subr.mxu0 0.0
    %1209 = vmatpush1.msra.mxu0 0.0
    %1210 = vmatprep.subr.mxu0 0.0
    %1211 = vmatpush1.msra.mxu0 0.0
    %1212 = vmatprep.subr.mxu0 0.0
    %1213 = vmatpush1.msra.mxu0 0.0
    %1214 = vmatprep.subr.mxu0 0.0
    %1215 = vmatpush1.msra.mxu0 0.0
    %1216 = vmatprep.subr.mxu0 0.0
    %1217 = vmatpush1.msra.mxu0 0.0
    %1218 = vmatprep.subr.mxu0 0.0
    %1219 = vmatpush1.msra.mxu0 0.0
    %1220 = vmatprep.subr.mxu0 0.0
    %1221 = vmatpush1.msra.mxu0 0.0
    %1222 = vmatprep.subr.mxu0 0.0
    %1223 = vmatpush1.msra.mxu0 0.0
    %1224 = vmatprep.subr.mxu0 0.0
    %1225 = vmatpush1.msra.mxu0 0.0
    %1226 = vmatprep.subr.mxu0 0.0
    %1227 = vmatpush1.msra.mxu0 0.0
    %1228 = vmatprep.subr.mxu0 0.0
    %1229 = vmatpush1.msra.mxu0 0.0
    %1230 = vmatprep.subr.mxu0 0.0
    %1231 = vmatpush1.msra.mxu0 0.0
    %1232 = vmatprep.subr.mxu0 0.0
    %1233 = vmatpush1.msra.mxu0 0.0
    %1234 = vmatprep.subr.mxu0 0.0
    %1235 = vmatpush1.msra.mxu0 0.0
    %1236 = vmatprep.subr.mxu0 0.0
    %1237 = vmatpush1.msra.mxu0 0.0
    %1238 = vmatprep.subr.mxu0 0.0
    %1239 = vmatpush1.msra.mxu0 0.0
    %1240 = vmatprep.subr.mxu0 0.0
    %1241 = vmatpush1.msra.mxu0 0.0
    %1242 = vmatprep.subr.mxu0 0.0
    %1243 = vmatpush1.msra.mxu0 0.0
    %1244 = vmatprep.mubr.f32.mxu0 0.0
    %1245 = vmatmul.mubr.f32.gmra.mrb[0].mxu0 %v1022
    %v1246 = vpop.f32.mrb[0].mxu0
    %v1247 = vadd.f32 0.0, %v1246
    %v1248 = vpop.f32.mrb[0].mxu0
    %1249 = vdwg.mxu0
    %v1251 = vsel %vm1094, %v1247, 0
    %1253 = vmatprep.subr.mxu0 0.0
    %1254 = vmatpush1.msra.mxu0 %v1013
    %1255 = vmatprep.subr.mxu0 0.0
    %1256 = vmatpush1.msra.mxu0 %v1014
    %1257 = vmatprep.subr.mxu0 0.0
    %1258 = vmatpush1.msra.mxu0 %v1015
    %1259 = vmatprep.subr.mxu0 0.0
    %1260 = vmatpush1.msra.mxu0 %v1016
    %1261 = vmatprep.subr.mxu0 0.0
    %1262 = vmatpush1.msra.mxu0 %v1017
    %1263 = vmatprep.subr.mxu0 0.0
    %1264 = vmatpush1.msra.mxu0 %v1018
    %1265 = vmatprep.subr.mxu0 0.0
    %1266 = vmatpush1.msra.mxu0 %v1019
    %1267 = vmatprep.subr.mxu0 0.0
    %1268 = vmatpush1.msra.mxu0 %v1020
    %1269 = vmatprep.subr.mxu0 0.0
    %1270 = vmatpush1.msra.mxu0 0.0
    %1271 = vmatprep.subr.mxu0 0.0
    %1272 = vmatpush1.msra.mxu0 0.0
    %1273 = vmatprep.subr.mxu0 0.0
    %1274 = vmatpush1.msra.mxu0 0.0
    %1275 = vmatprep.subr.mxu0 0.0
    %1276 = vmatpush1.msra.mxu0 0.0
    %1277 = vmatprep.subr.mxu0 0.0
    %1278 = vmatpush1.msra.mxu0 0.0
    %1279 = vmatprep.subr.mxu0 0.0
    %1280 = vmatpush1.msra.mxu0 0.0
    %1281 = vmatprep.subr.mxu0 0.0
    %1282 = vmatpush1.msra.mxu0 0.0
    %1283 = vmatprep.subr.mxu0 0.0
    %1284 = vmatpush1.msra.mxu0 0.0
    %1285 = vmatprep.subr.mxu0 0.0
    %1286 = vmatpush1.msra.mxu0 0.0
    %1287 = vmatprep.subr.mxu0 0.0
    %1288 = vmatpush1.msra.mxu0 0.0
    %1289 = vmatprep.subr.mxu0 0.0
    %1290 = vmatpush1.msra.mxu0 0.0
    %1291 = vmatprep.subr.mxu0 0.0
    %1292 = vmatpush1.msra.mxu0 0.0
    %1293 = vmatprep.subr.mxu0 0.0
    %1294 = vmatpush1.msra.mxu0 0.0
    %1295 = vmatprep.subr.mxu0 0.0
    %1296 = vmatpush1.msra.mxu0 0.0
    %1297 = vmatprep.subr.mxu0 0.0
    %1298 = vmatpush1.msra.mxu0 0.0
    %1299 = vmatprep.subr.mxu0 0.0
    %1300 = vmatpush1.msra.mxu0 0.0
    %1301 = vmatprep.subr.mxu0 0.0
    %1302 = vmatpush1.msra.mxu0 0.0
    %1303 = vmatprep.subr.mxu0 0.0
    %1304 = vmatpush1.msra.mxu0 0.0
    %1305 = vmatprep.subr.mxu0 0.0
    %1306 = vmatpush1.msra.mxu0 0.0
    %1307 = vmatprep.subr.mxu0 0.0
    %1308 = vmatpush1.msra.mxu0 0.0
    %1309 = vmatprep.subr.mxu0 0.0
    %1310 = vmatpush1.msra.mxu0 0.0
    %1311 = vmatprep.subr.mxu0 0.0
    %1312 = vmatpush1.msra.mxu0 0.0
    %1313 = vmatprep.subr.mxu0 0.0
    %1314 = vmatpush1.msra.mxu0 0.0
    %1315 = vmatprep.subr.mxu0 0.0
    %1316 = vmatpush1.msra.mxu0 0.0
    %1317 = vmatprep.mubr.f32.mxu0 0.0
    %1318 = vmatmul.mubr.f32.gmra.mrb[0].mxu0 %v1251
    %v1319 = vpop.f32.mrb[0].mxu0
    %v1320 = vadd.f32 1e-05, %v1319
    %v1321 = vpop.f32.mrb[0].mxu0
    %1322 = vdwg.mxu0
    %v1323 = vrsqrt.pop %v1320
    %v1324 = vld [vmem:[#allocation6 + $0x1] sm:$0x1]
    %v1325 = vmul.f32 %v1323, %v1324
    %v1326 = vlaneseq
    %v1327 = vshrl.u32 %v1326, 7
    %v1328 = vsub.s32 0, %v1327
    %v1329 = vrot.slane %v1325, %v1328
    %v1330 = vmul.f32 %v1172, %v1329
    %v1331 = vmul.f32 %v1173, %v1329
    %v1332 = vmul.f32 %v1174, %v1329
    %v1333 = vmul.f32 %v1175, %v1329
    %v1334 = vld [vmem:[#allocation6 + $0x2] sm:$0x1]
    %v1335 = vlaneseq
    %v1336 = vshrl.u32 %v1335, 7
    %v1337 = vsub.s32 0, %v1336
    %v1338 = vrot.slane %v1334, %v1337
    %v1339 = vadd.f32 %v1330, %v1338
    %v1340 = vadd.f32 %v1331, %v1338
    %v1341 = vadd.f32 %v1332, %v1338
    %v1342 = vadd.f32 %v1333, %v1338
    %v1343 = vld [vmem:[#allocation9] sm:$0xff]
    %v1344 = vld [vmem:[#allocation9 + $0x8] sm:$0xff]
    %v1345 = vld [vmem:[#allocation9 + $0x10] sm:$0xff]
    %v1346 = vld [vmem:[#allocation9 + $0x18] sm:$0xff]
    %v1347 = vld [vmem:[#allocation9 + $0x20] sm:$0xff]
    %v1348 = vld [vmem:[#allocation9 + $0x28] sm:$0xff]
    %v1349 = vld [vmem:[#allocation9 + $0x30] sm:$0xff]
    %v1350 = vld [vmem:[#allocation9 + $0x38] sm:$0xff]
    %v1351 = vld [vmem:[#allocation9 + $0x40] sm:$0xff]
    %v1352 = vld [vmem:[#allocation9 + $0x48] sm:$0xff]
    %v1353 = vld [vmem:[#allocation9 + $0x50] sm:$0xff]
    %v1354 = vld [vmem:[#allocation9 + $0x58] sm:$0xff]
    %v1355 = vld [vmem:[#allocation9 + $0x60] sm:$0xff]
    %v1356 = vld [vmem:[#allocation9 + $0x68] sm:$0xff]
    %v1357 = vld [vmem:[#allocation9 + $0x70] sm:$0xff]
    %v1358 = vld [vmem:[#allocation9 + $0x78] sm:$0xff]
    %v1360 = vsel %vm1094, %v1339, 0
    %v1363 = vsel %vm1094, %v1340, 0
    %v1366 = vsel %vm1094, %v1341, 0
    %v1369 = vsel %vm1094, %v1342, 0
    %1371 = vmatprep.subr.mxu0 %v1344
    %1372 = vmatpush1.msra.mxu0 %v1343
    %1373 = vmatprep.subr.mxu0 %v1346
    %1374 = vmatpush1.msra.mxu0 %v1345
    %1375 = vmatprep.subr.mxu0 %v1348
    %1376 = vmatpush1.msra.mxu0 %v1347
    %1377 = vmatprep.subr.mxu0 %v1350
    %1378 = vmatpush1.msra.mxu0 %v1349
    %1379 = vmatprep.subr.mxu0 %v1352
    %1380 = vmatpush1.msra.mxu0 %v1351
    %1381 = vmatprep.subr.mxu0 %v1354
    %1382 = vmatpush1.msra.mxu0 %v1353
    %1383 = vmatprep.subr.mxu0 %v1356
    %1384 = vmatpush1.msra.mxu0 %v1355
    %1385 = vmatprep.subr.mxu0 %v1358
    %1386 = vmatpush1.msra.mxu0 %v1357
    %1387 = vmatprep.subr.mxu0 0.0
    %1388 = vmatpush1.msra.mxu0 0.0
    %1389 = vmatprep.subr.mxu0 0.0
    %1390 = vmatpush1.msra.mxu0 0.0
    %1391 = vmatprep.subr.mxu0 0.0
    %1392 = vmatpush1.msra.mxu0 0.0
    %1393 = vmatprep.subr.mxu0 0.0
    %1394 = vmatpush1.msra.mxu0 0.0
    %1395 = vmatprep.subr.mxu0 0.0
    %1396 = vmatpush1.msra.mxu0 0.0
    %1397 = vmatprep.subr.mxu0 0.0
    %1398 = vmatpush1.msra.mxu0 0.0
    %1399 = vmatprep.subr.mxu0 0.0
    %1400 = vmatpush1.msra.mxu0 0.0
    %1401 = vmatprep.subr.mxu0 0.0
    %1402 = vmatpush1.msra.mxu0 0.0
    %1403 = vmatprep.subr.mxu0 0.0
    %1404 = vmatpush1.msra.mxu0 0.0
    %1405 = vmatprep.subr.mxu0 0.0
    %1406 = vmatpush1.msra.mxu0 0.0
    %1407 = vmatprep.subr.mxu0 0.0
    %1408 = vmatpush1.msra.mxu0 0.0
    %1409 = vmatprep.subr.mxu0 0.0
    %1410 = vmatpush1.msra.mxu0 0.0
    %1411 = vmatprep.subr.mxu0 0.0
    %1412 = vmatpush1.msra.mxu0 0.0
    %1413 = vmatprep.subr.mxu0 0.0
    %1414 = vmatpush1.msra.mxu0 0.0
    %1415 = vmatprep.subr.mxu0 0.0
    %1416 = vmatpush1.msra.mxu0 0.0
    %1417 = vmatprep.subr.mxu0 0.0
    %1418 = vmatpush1.msra.mxu0 0.0
    %1419 = vmatprep.subr.mxu0 0.0
    %1420 = vmatpush1.msra.mxu0 0.0
    %1421 = vmatprep.subr.mxu0 0.0
    %1422 = vmatpush1.msra.mxu0 0.0
    %1423 = vmatprep.subr.mxu0 0.0
    %1424 = vmatpush1.msra.mxu0 0.0
    %1425 = vmatprep.subr.mxu0 0.0
    %1426 = vmatpush1.msra.mxu0 0.0
    %1427 = vmatprep.subr.mxu0 0.0
    %1428 = vmatpush1.msra.mxu0 0.0
    %1429 = vmatprep.subr.mxu0 0.0
    %1430 = vmatpush1.msra.mxu0 0.0
    %1431 = vmatprep.subr.mxu0 0.0
    %1432 = vmatpush1.msra.mxu0 0.0
    %1433 = vmatprep.subr.mxu0 0.0
    %1434 = vmatpush1.msra.mxu0 0.0
    %1435 = vmatprep.mubr.f32.mxu0 0.0
    %1436 = vmatmul.mubr.f32.gmra.mrb[0].mxu0 %v1360
    %v1437 = vpop.f32.mrb[0].mxu0
    %v1438 = vadd.f32 0.0, %v1437
    %v1439 = vpop.f32.mrb[0].mxu0
    %v1440 = vadd.f32 0.0, %v1439
    %1441 = vmatprep.mubr.f32.mxu0 0.0
    %1442 = vmatmul.mubr.f32.gmra.mrb[0].mxu0 %v1363
    %v1443 = vpop.f32.mrb[0].mxu0
    %v1444 = vadd.f32 0.0, %v1443
    %v1445 = vpop.f32.mrb[0].mxu0
    %v1446 = vadd.f32 0.0, %v1445
    %1447 = vmatprep.mubr.f32.mxu0 0.0
    %1448 = vmatmul.mubr.f32.gmra.mrb[0].mxu0 %v1366
    %v1449 = vpop.f32.mrb[0].mxu0
    %v1450 = vadd.f32 0.0, %v1449
    %v1451 = vpop.f32.mrb[0].mxu0
    %v1452 = vadd.f32 0.0, %v1451
    %1453 = vmatprep.mubr.f32.mxu0 0.0
    %1454 = vmatmul.mubr.f32.gmra.mrb[0].mxu0 %v1369
    %v1455 = vpop.f32.mrb[0].mxu0
    %v1456 = vadd.f32 0.0, %v1455
    %v1457 = vpop.f32.mrb[0].mxu0
    %v1458 = vadd.f32 0.0, %v1457
    %1459 = vdwg.mxu0
    %v1460 = vld [vmem:[#allocation10] sm:$0xff]
    %v1461 = vld [vmem:[#allocation10 + $0x8] sm:$0xff]
    %s1462 = scalar_lea.vmem [#allocation10], 16
    %v1463 = vld [vmem:[%s1462] sm:$0xff]
    %v1464 = vld [vmem:[%s1462 + $0x8] sm:$0xff]
    %1469 = vrot.lane.b32.xlu0 %v1438, 64
    %v1470 = vpop.permute.xlu0 %1469
    %1471 = vrot.lane.b32.xlu0 %v1444, 64
    %v1472 = vpop.permute.xlu0 %1471
    %1473 = vrot.lane.b32.xlu0 %v1450, 64
    %v1474 = vpop.permute.xlu0 %1473
    %1475 = vrot.lane.b32.xlu0 %v1456, 64
    %v1476 = vpop.permute.xlu0 %1475
    %v1482 = vsel %vm699, %v1463, 0
    %v1485 = vsel %vm699, %v1464, 0
    %1487 = vmatprep.subr.mxu0 0.0
    %1488 = vmatpush1.msra.mxu0 %v1470
    %1489 = vmatprep.subr.mxu0 0.0
    %1490 = vmatpush1.msra.mxu0 %v1472
    %1491 = vmatprep.subr.mxu0 0.0
    %1492 = vmatpush1.msra.mxu0 %v1474
    %1493 = vmatprep.subr.mxu0 0.0
    %1494 = vmatpush1.msra.mxu0 %v1476
    %1495 = vmatprep.subr.mxu0 0.0
    %1496 = vmatpush1.msra.mxu0 0.0
    %1497 = vmatprep.subr.mxu0 0.0
    %1498 = vmatpush1.msra.mxu0 0.0
    %1499 = vmatprep.subr.mxu0 0.0
    %1500 = vmatpush1.msra.mxu0 0.0
    %1501 = vmatprep.subr.mxu0 0.0
    %1502 = vmatpush1.msra.mxu0 0.0
    %1503 = vmatprep.subr.mxu0 0.0
    %1504 = vmatpush1.msra.mxu0 0.0
    %1505 = vmatprep.subr.mxu0 0.0
    %1506 = vmatpush1.msra.mxu0 0.0
    %1507 = vmatprep.subr.mxu0 0.0
    %1508 = vmatpush1.msra.mxu0 0.0
    %1509 = vmatprep.subr.mxu0 0.0
    %1510 = vmatpush1.msra.mxu0 0.0
    %1511 = vmatprep.subr.mxu0 0.0
    %1512 = vmatpush1.msra.mxu0 0.0
    %1513 = vmatprep.subr.mxu0 0.0
    %1514 = vmatpush1.msra.mxu0 0.0
    %1515 = vmatprep.subr.mxu0 0.0
    %1516 = vmatpush1.msra.mxu0 0.0
    %1517 = vmatprep.subr.mxu0 0.0
    %1518 = vmatpush1.msra.mxu0 0.0
    %1519 = vmatprep.subr.mxu0 0.0
    %1520 = vmatpush1.msra.mxu0 0.0
    %1521 = vmatprep.subr.mxu0 0.0
    %1522 = vmatpush1.msra.mxu0 0.0
    %1523 = vmatprep.subr.mxu0 0.0
    %1524 = vmatpush1.msra.mxu0 0.0
    %1525 = vmatprep.subr.mxu0 0.0
    %1526 = vmatpush1.msra.mxu0 0.0
    %1527 = vmatprep.subr.mxu0 0.0
    %1528 = vmatpush1.msra.mxu0 0.0
    %1529 = vmatprep.subr.mxu0 0.0
    %1530 = vmatpush1.msra.mxu0 0.0
    %1531 = vmatprep.subr.mxu0 0.0
    %1532 = vmatpush1.msra.mxu0 0.0
    %1533 = vmatprep.subr.mxu0 0.0
    %1534 = vmatpush1.msra.mxu0 0.0
    %1535 = vmatprep.subr.mxu0 0.0
    %1536 = vmatpush1.msra.mxu0 0.0
    %1537 = vmatprep.subr.mxu0 0.0
    %1538 = vmatpush1.msra.mxu0 0.0
    %1539 = vmatprep.subr.mxu0 0.0
    %1540 = vmatpush1.msra.mxu0 0.0
    %1541 = vmatprep.subr.mxu0 0.0
    %1542 = vmatpush1.msra.mxu0 0.0
    %1543 = vmatprep.subr.mxu0 0.0
    %1544 = vmatpush1.msra.mxu0 0.0
    %1545 = vmatprep.subr.mxu0 0.0
    %1546 = vmatpush1.msra.mxu0 0.0
    %1547 = vmatprep.subr.mxu0 0.0
    %1548 = vmatpush1.msra.mxu0 0.0
    %1549 = vmatprep.subr.mxu0 0.0
    %1550 = vmatpush1.msra.mxu0 0.0
    %1551 = vmatprep.mubr.f32.mxu0 0.0
    %1552 = vmatmul.mubr.f32.gmra.mrb[0].mxu0 %v1482
    %v1553 = vpop.f32.mrb[0].mxu0
    %v1554 = vadd.f32 0.0, %v1553
    %v1555 = vpop.f32.mrb[0].mxu0
    %1556 = vmatprep.mubr.f32.mxu0 0.0
    %1557 = vmatmul.mubr.f32.gmra.mrb[0].mxu0 %v1485
    %v1558 = vpop.f32.mrb[0].mxu0
    %v1559 = vadd.f32 0.0, %v1558
    %v1560 = vpop.f32.mrb[0].mxu0
    %1561 = vdwg.mxu0
    %v1563 = vsel %vm699, %v1460, 0
    %v1566 = vsel %vm699, %v1461, 0
    %1568 = vmatprep.subr.mxu0 0.0
    %1569 = vmatpush1.msra.mxu0 %v1438
    %1570 = vmatprep.subr.mxu0 0.0
    %1571 = vmatpush1.msra.mxu0 %v1444
    %1572 = vmatprep.subr.mxu0 0.0
    %1573 = vmatpush1.msra.mxu0 %v1450
    %1574 = vmatprep.subr.mxu0 0.0
    %1575 = vmatpush1.msra.mxu0 %v1456
    %1576 = vmatprep.subr.mxu0 0.0
    %1577 = vmatpush1.msra.mxu0 0.0
    %1578 = vmatprep.subr.mxu0 0.0
    %1579 = vmatpush1.msra.mxu0 0.0
    %1580 = vmatprep.subr.mxu0 0.0
    %1581 = vmatpush1.msra.mxu0 0.0
    %1582 = vmatprep.subr.mxu0 0.0
    %1583 = vmatpush1.msra.mxu0 0.0
    %1584 = vmatprep.subr.mxu0 0.0
    %1585 = vmatpush1.msra.mxu0 0.0
    %1586 = vmatprep.subr.mxu0 0.0
    %1587 = vmatpush1.msra.mxu0 0.0
    %1588 = vmatprep.subr.mxu0 0.0
    %1589 = vmatpush1.msra.mxu0 0.0
    %1590 = vmatprep.subr.mxu0 0.0
    %1591 = vmatpush1.msra.mxu0 0.0
    %1592 = vmatprep.subr.mxu0 0.0
    %1593 = vmatpush1.msra.mxu0 0.0
    %1594 = vmatprep.subr.mxu0 0.0
    %1595 = vmatpush1.msra.mxu0 0.0
    %1596 = vmatprep.subr.mxu0 0.0
    %1597 = vmatpush1.msra.mxu0 0.0
    %1598 = vmatprep.subr.mxu0 0.0
    %1599 = vmatpush1.msra.mxu0 0.0
    %1600 = vmatprep.subr.mxu0 0.0
    %1601 = vmatpush1.msra.mxu0 0.0
    %1602 = vmatprep.subr.mxu0 0.0
    %1603 = vmatpush1.msra.mxu0 0.0
    %1604 = vmatprep.subr.mxu0 0.0
    %1605 = vmatpush1.msra.mxu0 0.0
    %1606 = vmatprep.subr.mxu0 0.0
    %1607 = vmatpush1.msra.mxu0 0.0
    %1608 = vmatprep.subr.mxu0 0.0
    %1609 = vmatpush1.msra.mxu0 0.0
    %1610 = vmatprep.subr.mxu0 0.0
    %1611 = vmatpush1.msra.mxu0 0.0
    %1612 = vmatprep.subr.mxu0 0.0
    %1613 = vmatpush1.msra.mxu0 0.0
    %1614 = vmatprep.subr.mxu0 0.0
    %1615 = vmatpush1.msra.mxu0 0.0
    %1616 = vmatprep.subr.mxu0 0.0
    %1617 = vmatpush1.msra.mxu0 0.0
    %1618 = vmatprep.subr.mxu0 0.0
    %1619 = vmatpush1.msra.mxu0 0.0
    %1620 = vmatprep.subr.mxu0 0.0
    %1621 = vmatpush1.msra.mxu0 0.0
    %1622 = vmatprep.subr.mxu0 0.0
    %1623 = vmatpush1.msra.mxu0 0.0
    %1624 = vmatprep.subr.mxu0 0.0
    %1625 = vmatpush1.msra.mxu0 0.0
    %1626 = vmatprep.subr.mxu0 0.0
    %1627 = vmatpush1.msra.mxu0 0.0
    %1628 = vmatprep.subr.mxu0 0.0
    %1629 = vmatpush1.msra.mxu0 0.0
    %1630 = vmatprep.subr.mxu0 0.0
    %1631 = vmatpush1.msra.mxu0 0.0
    %1632 = vmatprep.mubr.f32.mxu0 0.0
    %1633 = vmatmul.mubr.f32.gmra.mrb[0].mxu0 %v1563
    %v1634 = vpop.f32.mrb[0].mxu0
    %v1635 = vadd.f32 %v1554, %v1634
    %v1636 = vpop.f32.mrb[0].mxu0
    %1637 = vmatprep.mubr.f32.mxu0 0.0
    %1638 = vmatmul.mubr.f32.gmra.mrb[0].mxu0 %v1566
    %v1639 = vpop.f32.mrb[0].mxu0
    %v1640 = vadd.f32 %v1559, %v1639
    %v1641 = vpop.f32.mrb[0].mxu0
    %1642 = vdwg.mxu0
    %s1643 = scalar_lea.vmem [#allocation10], 32
    %v1644 = vld [vmem:[%s1643] sm:$0xff]
    %v1645 = vld [vmem:[%s1643 + $0x8] sm:$0xff]
    %v1647 = vsel %vm699, %v1644, 0
    %v1650 = vsel %vm699, %v1645, 0
    %1652 = vmatprep.subr.mxu0 0.0
    %1653 = vmatpush1.msra.mxu0 %v1440
    %1654 = vmatprep.subr.mxu0 0.0
    %1655 = vmatpush1.msra.mxu0 %v1446
    %1656 = vmatprep.subr.mxu0 0.0
    %1657 = vmatpush1.msra.mxu0 %v1452
    %1658 = vmatprep.subr.mxu0 0.0
    %1659 = vmatpush1.msra.mxu0 %v1458
    %1660 = vmatprep.subr.mxu0 0.0
    %1661 = vmatpush1.msra.mxu0 0.0
    %1662 = vmatprep.subr.mxu0 0.0
    %1663 = vmatpush1.msra.mxu0 0.0
    %1664 = vmatprep.subr.mxu0 0.0
    %1665 = vmatpush1.msra.mxu0 0.0
    %1666 = vmatprep.subr.mxu0 0.0
    %1667 = vmatpush1.msra.mxu0 0.0
    %1668 = vmatprep.subr.mxu0 0.0
    %1669 = vmatpush1.msra.mxu0 0.0
    %1670 = vmatprep.subr.mxu0 0.0
    %1671 = vmatpush1.msra.mxu0 0.0
    %1672 = vmatprep.subr.mxu0 0.0
    %1673 = vmatpush1.msra.mxu0 0.0
    %1674 = vmatprep.subr.mxu0 0.0
    %1675 = vmatpush1.msra.mxu0 0.0
    %1676 = vmatprep.subr.mxu0 0.0
    %1677 = vmatpush1.msra.mxu0 0.0
    %1678 = vmatprep.subr.mxu0 0.0
    %1679 = vmatpush1.msra.mxu0 0.0
    %1680 = vmatprep.subr.mxu0 0.0
    %1681 = vmatpush1.msra.mxu0 0.0
    %1682 = vmatprep.subr.mxu0 0.0
    %1683 = vmatpush1.msra.mxu0 0.0
    %1684 = vmatprep.subr.mxu0 0.0
    %1685 = vmatpush1.msra.mxu0 0.0
    %1686 = vmatprep.subr.mxu0 0.0
    %1687 = vmatpush1.msra.mxu0 0.0
    %1688 = vmatprep.subr.mxu0 0.0
    %1689 = vmatpush1.msra.mxu0 0.0
    %1690 = vmatprep.subr.mxu0 0.0
    %1691 = vmatpush1.msra.mxu0 0.0
    %1692 = vmatprep.subr.mxu0 0.0
    %1693 = vmatpush1.msra.mxu0 0.0
    %1694 = vmatprep.subr.mxu0 0.0
    %1695 = vmatpush1.msra.mxu0 0.0
    %1696 = vmatprep.subr.mxu0 0.0
    %1697 = vmatpush1.msra.mxu0 0.0
    %1698 = vmatprep.subr.mxu0 0.0
    %1699 = vmatpush1.msra.mxu0 0.0
    %1700 = vmatprep.subr.mxu0 0.0
    %1701 = vmatpush1.msra.mxu0 0.0
    %1702 = vmatprep.subr.mxu0 0.0
    %1703 = vmatpush1.msra.mxu0 0.0
    %1704 = vmatprep.subr.mxu0 0.0
    %1705 = vmatpush1.msra.mxu0 0.0
    %1706 = vmatprep.subr.mxu0 0.0
    %1707 = vmatpush1.msra.mxu0 0.0
    %1708 = vmatprep.subr.mxu0 0.0
    %1709 = vmatpush1.msra.mxu0 0.0
    %1710 = vmatprep.subr.mxu0 0.0
    %1711 = vmatpush1.msra.mxu0 0.0
    %1712 = vmatprep.subr.mxu0 0.0
    %1713 = vmatpush1.msra.mxu0 0.0
    %1714 = vmatprep.subr.mxu0 0.0
    %1715 = vmatpush1.msra.mxu0 0.0
    %1716 = vmatprep.mubr.f32.mxu0 0.0
    %1717 = vmatmul.mubr.f32.gmra.mrb[0].mxu0 %v1647
    %v1718 = vpop.f32.mrb[0].mxu0
    %v1719 = vadd.f32 0.0, %v1718
    %v1720 = vpop.f32.mrb[0].mxu0
    %1721 = vmatprep.mubr.f32.mxu0 0.0
    %1722 = vmatmul.mubr.f32.gmra.mrb[0].mxu0 %v1650
    %v1723 = vpop.f32.mrb[0].mxu0
    %v1724 = vadd.f32 0.0, %v1723
    %v1725 = vpop.f32.mrb[0].mxu0
    %1726 = vdwg.mxu0
    %v1727 = vadd.f32 %v1635, %v1719
    %v1728 = vadd.f32 %v1640, %v1724
    %v1729 = vld [vmem:[#allocation12] sm:$0x1]
    %v1730 = vlaneseq
    %v1731 = vshrl.u32 %v1730, 7
    %v1732 = vsub.s32 0, %v1731
    %v1733 = vrot.slane %v1729, %v1732
    %v1734 = vadd.f32 %v1727, %v1733
    %v1735 = vadd.f32 %v1728, %v1733
    %v1736 = vmax.f32 %v1734, 0.0
    %v1737 = vmax.f32 %v1735, 0.0
    %v1738 = vld [vmem:[%s17] sm:$0xff]
    %v1739 = vld [vmem:[%s17 + $0x8] sm:$0xff]
    %v1740 = vld [vmem:[%s17 + $0x10] sm:$0xff]
    %v1741 = vld [vmem:[%s17 + $0x18] sm:$0xff]
    %v1742 = vld [vmem:[%s17 + $0x20] sm:$0xff]
    %v1743 = vld [vmem:[%s17 + $0x28] sm:$0xff]
    %v1744 = vld [vmem:[%s17 + $0x30] sm:$0xff]
    %v1745 = vld [vmem:[%s17 + $0x38] sm:$0xff]
    %vm1746 = vcmask 130048
    %v1747 = vsel %vm1746, 1.0, 0
    %1749 = vmatprep.subr.mxu0 0.0
    %1750 = vmatpush1.msra.mxu0 %v1736
    %1751 = vmatprep.subr.mxu0 0.0
    %1752 = vmatpush1.msra.mxu0 %v1737
    %1753 = vmatprep.subr.mxu0 0.0
    %1754 = vmatpush1.msra.mxu0 0.0
    %1755 = vmatprep.subr.mxu0 0.0
    %1756 = vmatpush1.msra.mxu0 0.0
    %1757 = vmatprep.subr.mxu0 0.0
    %1758 = vmatpush1.msra.mxu0 0.0
    %1759 = vmatprep.subr.mxu0 0.0
    %1760 = vmatpush1.msra.mxu0 0.0
    %1761 = vmatprep.subr.mxu0 0.0
    %1762 = vmatpush1.msra.mxu0 0.0
    %1763 = vmatprep.subr.mxu0 0.0
    %1764 = vmatpush1.msra.mxu0 0.0
    %1765 = vmatprep.subr.mxu0 0.0
    %1766 = vmatpush1.msra.mxu0 0.0
    %1767 = vmatprep.subr.mxu0 0.0
    %1768 = vmatpush1.msra.mxu0 0.0
    %1769 = vmatprep.subr.mxu0 0.0
    %1770 = vmatpush1.msra.mxu0 0.0
    %1771 = vmatprep.subr.mxu0 0.0
    %1772 = vmatpush1.msra.mxu0 0.0
    %1773 = vmatprep.subr.mxu0 0.0
    %1774 = vmatpush1.msra.mxu0 0.0
    %1775 = vmatprep.subr.mxu0 0.0
    %1776 = vmatpush1.msra.mxu0 0.0
    %1777 = vmatprep.subr.mxu0 0.0
    %1778 = vmatpush1.msra.mxu0 0.0
    %1779 = vmatprep.subr.mxu0 0.0
    %1780 = vmatpush1.msra.mxu0 0.0
    %1781 = vmatprep.subr.mxu0 0.0
    %1782 = vmatpush1.msra.mxu0 0.0
    %1783 = vmatprep.subr.mxu0 0.0
    %1784 = vmatpush1.msra.mxu0 0.0
    %1785 = vmatprep.subr.mxu0 0.0
    %1786 = vmatpush1.msra.mxu0 0.0
    %1787 = vmatprep.subr.mxu0 0.0
    %1788 = vmatpush1.msra.mxu0 0.0
    %1789 = vmatprep.subr.mxu0 0.0
    %1790 = vmatpush1.msra.mxu0 0.0
    %1791 = vmatprep.subr.mxu0 0.0
    %1792 = vmatpush1.msra.mxu0 0.0
    %1793 = vmatprep.subr.mxu0 0.0
    %1794 = vmatpush1.msra.mxu0 0.0
    %1795 = vmatprep.subr.mxu0 0.0
    %1796 = vmatpush1.msra.mxu0 0.0
    %1797 = vmatprep.subr.mxu0 0.0
    %1798 = vmatpush1.msra.mxu0 0.0
    %1799 = vmatprep.subr.mxu0 0.0
    %1800 = vmatpush1.msra.mxu0 0.0
    %1801 = vmatprep.subr.mxu0 0.0
    %1802 = vmatpush1.msra.mxu0 0.0
    %1803 = vmatprep.subr.mxu0 0.0
    %1804 = vmatpush1.msra.mxu0 0.0
    %1805 = vmatprep.subr.mxu0 0.0
    %1806 = vmatpush1.msra.mxu0 0.0
    %1807 = vmatprep.subr.mxu0 0.0
    %1808 = vmatpush1.msra.mxu0 0.0
    %1809 = vmatprep.subr.mxu0 0.0
    %1810 = vmatpush1.msra.mxu0 0.0
    %1811 = vmatprep.subr.mxu0 0.0
    %1812 = vmatpush1.msra.mxu0 0.0
    %1813 = vmatprep.mubr.f32.mxu0 0.0
    %1814 = vmatmul.mubr.f32.gmra.mrb[0].mxu0 %v1747
    %v1815 = vpop.f32.mrb[0].mxu0
    %v1816 = vadd.f32 0.0, %v1815
    %v1817 = vpop.f32.mrb[0].mxu0
    %1818 = vdwg.mxu0
    %v1820 = vsel %vm1094, %v1816, 0
    %1822 = vmatprep.subr.mxu0 0.0
    %1823 = vmatpush1.msra.mxu0 %v1738
    %1824 = vmatprep.subr.mxu0 0.0
    %1825 = vmatpush1.msra.mxu0 %v1739
    %1826 = vmatprep.subr.mxu0 0.0
    %1827 = vmatpush1.msra.mxu0 %v1740
    %1828 = vmatprep.subr.mxu0 0.0
    %1829 = vmatpush1.msra.mxu0 %v1741
    %1830 = vmatprep.subr.mxu0 0.0
    %1831 = vmatpush1.msra.mxu0 %v1742
    %1832 = vmatprep.subr.mxu0 0.0
    %1833 = vmatpush1.msra.mxu0 %v1743
    %1834 = vmatprep.subr.mxu0 0.0
    %1835 = vmatpush1.msra.mxu0 %v1744
    %1836 = vmatprep.subr.mxu0 0.0
    %1837 = vmatpush1.msra.mxu0 %v1745
    %1838 = vmatprep.subr.mxu0 0.0
    %1839 = vmatpush1.msra.mxu0 0.0
    %1840 = vmatprep.subr.mxu0 0.0
    %1841 = vmatpush1.msra.mxu0 0.0
    %1842 = vmatprep.subr.mxu0 0.0
    %1843 = vmatpush1.msra.mxu0 0.0
    %1844 = vmatprep.subr.mxu0 0.0
    %1845 = vmatpush1.msra.mxu0 0.0
    %1846 = vmatprep.subr.mxu0 0.0
    %1847 = vmatpush1.msra.mxu0 0.0
    %1848 = vmatprep.subr.mxu0 0.0
    %1849 = vmatpush1.msra.mxu0 0.0
    %1850 = vmatprep.subr.mxu0 0.0
    %1851 = vmatpush1.msra.mxu0 0.0
    %1852 = vmatprep.subr.mxu0 0.0
    %1853 = vmatpush1.msra.mxu0 0.0
    %1854 = vmatprep.subr.mxu0 0.0
    %1855 = vmatpush1.msra.mxu0 0.0
    %1856 = vmatprep.subr.mxu0 0.0
    %1857 = vmatpush1.msra.mxu0 0.0
    %1858 = vmatprep.subr.mxu0 0.0
    %1859 = vmatpush1.msra.mxu0 0.0
    %1860 = vmatprep.subr.mxu0 0.0
    %1861 = vmatpush1.msra.mxu0 0.0
    %1862 = vmatprep.subr.mxu0 0.0
    %1863 = vmatpush1.msra.mxu0 0.0
    %1864 = vmatprep.subr.mxu0 0.0
    %1865 = vmatpush1.msra.mxu0 0.0
    %1866 = vmatprep.subr.mxu0 0.0
    %1867 = vmatpush1.msra.mxu0 0.0
    %1868 = vmatprep.subr.mxu0 0.0
    %1869 = vmatpush1.msra.mxu0 0.0
    %1870 = vmatprep.subr.mxu0 0.0
    %1871 = vmatpush1.msra.mxu0 0.0
    %1872 = vmatprep.subr.mxu0 0.0
    %1873 = vmatpush1.msra.mxu0 0.0
    %1874 = vmatprep.subr.mxu0 0.0
    %1875 = vmatpush1.msra.mxu0 0.0
    %1876 = vmatprep.subr.mxu0 0.0
    %1877 = vmatpush1.msra.mxu0 0.0
    %1878 = vmatprep.subr.mxu0 0.0
    %1879 = vmatpush1.msra.mxu0 0.0
    %1880 = vmatprep.subr.mxu0 0.0
    %1881 = vmatpush1.msra.mxu0 0.0
    %1882 = vmatprep.subr.mxu0 0.0
    %1883 = vmatpush1.msra.mxu0 0.0
    %1884 = vmatprep.subr.mxu0 0.0
    %1885 = vmatpush1.msra.mxu0 0.0
    %1886 = vmatprep.mubr.f32.mxu0 0.0
    %1887 = vmatmul.mubr.f32.gmra.mrb[0].mxu0 %v1820
    %v1888 = vpop.f32.mrb[0].mxu0
    %v1889 = vadd.f32 0.0, %v1888
    %v1890 = vpop.f32.mrb[0].mxu0
    %1891 = vdwg.mxu0
    %v1892 = vlaneseq
    %v1893 = vshrl.u32 %v1892, 7
    %v1894 = vsub.s32 0, %v1893
    %v1895 = vrot.slane %v1889, %v1894
    %v1896 = vsub.f32 %v1736, %v1895
    %v1897 = vsub.f32 %v1737, %v1895
    %v1898 = vmul.f32 %v1896, %v1896
    %v1899 = vmul.f32 %v1897, %v1897
    %1900 = vmatprep.subr.mxu0 0.0
    %1901 = vmatpush1.msra.mxu0 %v1898
    %1902 = vmatprep.subr.mxu0 0.0
    %1903 = vmatpush1.msra.mxu0 %v1899
    %1904 = vmatprep.subr.mxu0 0.0
    %1905 = vmatpush1.msra.mxu0 0.0
    %1906 = vmatprep.subr.mxu0 0.0
    %1907 = vmatpush1.msra.mxu0 0.0
    %1908 = vmatprep.subr.mxu0 0.0
    %1909 = vmatpush1.msra.mxu0 0.0
    %1910 = vmatprep.subr.mxu0 0.0
    %1911 = vmatpush1.msra.mxu0 0.0
    %1912 = vmatprep.subr.mxu0 0.0
    %1913 = vmatpush1.msra.mxu0 0.0
    %1914 = vmatprep.subr.mxu0 0.0
    %1915 = vmatpush1.msra.mxu0 0.0
    %1916 = vmatprep.subr.mxu0 0.0
    %1917 = vmatpush1.msra.mxu0 0.0
    %1918 = vmatprep.subr.mxu0 0.0
    %1919 = vmatpush1.msra.mxu0 0.0
    %1920 = vmatprep.subr.mxu0 0.0
    %1921 = vmatpush1.msra.mxu0 0.0
    %1922 = vmatprep.subr.mxu0 0.0
    %1923 = vmatpush1.msra.mxu0 0.0
    %1924 = vmatprep.subr.mxu0 0.0
    %1925 = vmatpush1.msra.mxu0 0.0
    %1926 = vmatprep.subr.mxu0 0.0
    %1927 = vmatpush1.msra.mxu0 0.0
    %1928 = vmatprep.subr.mxu0 0.0
    %1929 = vmatpush1.msra.mxu0 0.0
    %1930 = vmatprep.subr.mxu0 0.0
    %1931 = vmatpush1.msra.mxu0 0.0
    %1932 = vmatprep.subr.mxu0 0.0
    %1933 = vmatpush1.msra.mxu0 0.0
    %1934 = vmatprep.subr.mxu0 0.0
    %1935 = vmatpush1.msra.mxu0 0.0
    %1936 = vmatprep.subr.mxu0 0.0
    %1937 = vmatpush1.msra.mxu0 0.0
    %1938 = vmatprep.subr.mxu0 0.0
    %1939 = vmatpush1.msra.mxu0 0.0
    %1940 = vmatprep.subr.mxu0 0.0
    %1941 = vmatpush1.msra.mxu0 0.0
    %1942 = vmatprep.subr.mxu0 0.0
    %1943 = vmatpush1.msra.mxu0 0.0
    %1944 = vmatprep.subr.mxu0 0.0
    %1945 = vmatpush1.msra.mxu0 0.0
    %1946 = vmatprep.subr.mxu0 0.0
    %1947 = vmatpush1.msra.mxu0 0.0
    %1948 = vmatprep.subr.mxu0 0.0
    %1949 = vmatpush1.msra.mxu0 0.0
    %1950 = vmatprep.subr.mxu0 0.0
    %1951 = vmatpush1.msra.mxu0 0.0
    %1952 = vmatprep.subr.mxu0 0.0
    %1953 = vmatpush1.msra.mxu0 0.0
    %1954 = vmatprep.subr.mxu0 0.0
    %1955 = vmatpush1.msra.mxu0 0.0
    %1956 = vmatprep.subr.mxu0 0.0
    %1957 = vmatpush1.msra.mxu0 0.0
    %1958 = vmatprep.subr.mxu0 0.0
    %1959 = vmatpush1.msra.mxu0 0.0
    %1960 = vmatprep.subr.mxu0 0.0
    %1961 = vmatpush1.msra.mxu0 0.0
    %1962 = vmatprep.subr.mxu0 0.0
    %1963 = vmatpush1.msra.mxu0 0.0
    %1964 = vmatprep.mubr.f32.mxu0 0.0
    %1965 = vmatmul.mubr.f32.gmra.mrb[0].mxu0 %v1747
    %v1966 = vpop.f32.mrb[0].mxu0
    %v1967 = vadd.f32 0.0, %v1966
    %v1968 = vpop.f32.mrb[0].mxu0
    %1969 = vdwg.mxu0
    %v1971 = vsel %vm1094, %v1967, 0
    %1973 = vmatprep.subr.mxu0 0.0
    %1974 = vmatpush1.msra.mxu0 %v1738
    %1975 = vmatprep.subr.mxu0 0.0
    %1976 = vmatpush1.msra.mxu0 %v1739
    %1977 = vmatprep.subr.mxu0 0.0
    %1978 = vmatpush1.msra.mxu0 %v1740
    %1979 = vmatprep.subr.mxu0 0.0
    %1980 = vmatpush1.msra.mxu0 %v1741
    %1981 = vmatprep.subr.mxu0 0.0
    %1982 = vmatpush1.msra.mxu0 %v1742
    %1983 = vmatprep.subr.mxu0 0.0
    %1984 = vmatpush1.msra.mxu0 %v1743
    %1985 = vmatprep.subr.mxu0 0.0
    %1986 = vmatpush1.msra.mxu0 %v1744
    %1987 = vmatprep.subr.mxu0 0.0
    %1988 = vmatpush1.msra.mxu0 %v1745
    %1989 = vmatprep.subr.mxu0 0.0
    %1990 = vmatpush1.msra.mxu0 0.0
    %1991 = vmatprep.subr.mxu0 0.0
    %1992 = vmatpush1.msra.mxu0 0.0
    %1993 = vmatprep.subr.mxu0 0.0
    %1994 = vmatpush1.msra.mxu0 0.0
    %1995 = vmatprep.subr.mxu0 0.0
    %1996 = vmatpush1.msra.mxu0 0.0
    %1997 = vmatprep.subr.mxu0 0.0
    %1998 = vmatpush1.msra.mxu0 0.0
    %1999 = vmatprep.subr.mxu0 0.0
    %2000 = vmatpush1.msra.mxu0 0.0
    %2001 = vmatprep.subr.mxu0 0.0
    %2002 = vmatpush1.msra.mxu0 0.0
    %2003 = vmatprep.subr.mxu0 0.0
    %2004 = vmatpush1.msra.mxu0 0.0
    %2005 = vmatprep.subr.mxu0 0.0
    %2006 = vmatpush1.msra.mxu0 0.0
    %2007 = vmatprep.subr.mxu0 0.0
    %2008 = vmatpush1.msra.mxu0 0.0
    %2009 = vmatprep.subr.mxu0 0.0
    %2010 = vmatpush1.msra.mxu0 0.0
    %2011 = vmatprep.subr.mxu0 0.0
    %2012 = vmatpush1.msra.mxu0 0.0
    %2013 = vmatprep.subr.mxu0 0.0
    %2014 = vmatpush1.msra.mxu0 0.0
    %2015 = vmatprep.subr.mxu0 0.0
    %2016 = vmatpush1.msra.mxu0 0.0
    %2017 = vmatprep.subr.mxu0 0.0
    %2018 = vmatpush1.msra.mxu0 0.0
    %2019 = vmatprep.subr.mxu0 0.0
    %2020 = vmatpush1.msra.mxu0 0.0
    %2021 = vmatprep.subr.mxu0 0.0
    %2022 = vmatpush1.msra.mxu0 0.0
    %2023 = vmatprep.subr.mxu0 0.0
    %2024 = vmatpush1.msra.mxu0 0.0
    %2025 = vmatprep.subr.mxu0 0.0
    %2026 = vmatpush1.msra.mxu0 0.0
    %2027 = vmatprep.subr.mxu0 0.0
    %2028 = vmatpush1.msra.mxu0 0.0
    %2029 = vmatprep.subr.mxu0 0.0
    %2030 = vmatpush1.msra.mxu0 0.0
    %2031 = vmatprep.subr.mxu0 0.0
    %2032 = vmatpush1.msra.mxu0 0.0
    %2033 = vmatprep.subr.mxu0 0.0
    %2034 = vmatpush1.msra.mxu0 0.0
    %2035 = vmatprep.subr.mxu0 0.0
    %2036 = vmatpush1.msra.mxu0 0.0
    %2037 = vmatprep.mubr.f32.mxu0 0.0
    %2038 = vmatmul.mubr.f32.gmra.mrb[0].mxu0 %v1971
    %v2039 = vpop.f32.mrb[0].mxu0
    %v2040 = vadd.f32 1e-05, %v2039
    %v2041 = vpop.f32.mrb[0].mxu0
    %2042 = vdwg.mxu0
    %v2043 = vrsqrt.pop %v2040
    %v2044 = vld [vmem:[#allocation12 + $0x1] sm:$0x1]
    %v2045 = vmul.f32 %v2043, %v2044
    %v2046 = vlaneseq
    %v2047 = vshrl.u32 %v2046, 7
    %v2048 = vsub.s32 0, %v2047
    %v2049 = vrot.slane %v2045, %v2048
    %v2050 = vmul.f32 %v1896, %v2049
    %v2051 = vmul.f32 %v1897, %v2049
    %v2052 = vld [vmem:[#allocation12 + $0x2] sm:$0x1]
    %v2053 = vlaneseq
    %v2054 = vshrl.u32 %v2053, 7
    %v2055 = vsub.s32 0, %v2054
    %v2056 = vrot.slane %v2052, %v2055
    %v2057 = vadd.f32 %v2050, %v2056
    %v2058 = vadd.f32 %v2051, %v2056
    %v2059 = vld [vmem:[#allocation13] sm:$0xff]
    %v2060 = vld [vmem:[#allocation13 + $0x8] sm:$0xff]
    %v2061 = vld [vmem:[#allocation13 + $0x10] sm:$0xff]
    %v2062 = vld [vmem:[#allocation13 + $0x18] sm:$0xff]
    %v2063 = vld [vmem:[#allocation13 + $0x20] sm:$0xff]
    %v2064 = vld [vmem:[#allocation13 + $0x28] sm:$0xff]
    %v2065 = vld [vmem:[#allocation13 + $0x30] sm:$0xff]
    %v2066 = vld [vmem:[#allocation13 + $0x38] sm:$0xff]
    %v2067 = vld [vmem:[#allocation13 + $0x40] sm:$0xff]
    %v2068 = vld [vmem:[#allocation13 + $0x48] sm:$0xff]
    %v2069 = vld [vmem:[#allocation13 + $0x50] sm:$0xff]
    %v2070 = vld [vmem:[#allocation13 + $0x58] sm:$0xff]
    %v2071 = vld [vmem:[#allocation13 + $0x60] sm:$0xff]
    %v2072 = vld [vmem:[#allocation13 + $0x68] sm:$0xff]
    %v2073 = vld [vmem:[#allocation13 + $0x70] sm:$0xff]
    %v2074 = vld [vmem:[#allocation13 + $0x78] sm:$0xff]
    %v2075 = vld [vmem:[#allocation13 + $0x80] sm:$0xff]
    %v2076 = vld [vmem:[#allocation13 + $0x88] sm:$0xff]
    %v2077 = vld [vmem:[#allocation13 + $0x90] sm:$0xff]
    %v2078 = vld [vmem:[#allocation13 + $0x98] sm:$0xff]
    %v2079 = vld [vmem:[#allocation13 + $0xa0] sm:$0xff]
    %v2080 = vld [vmem:[#allocation13 + $0xa8] sm:$0xff]
    %v2081 = vld [vmem:[#allocation13 + $0xb0] sm:$0xff]
    %v2082 = vld [vmem:[#allocation13 + $0xb8] sm:$0xff]
    %v2084 = vsel %vm1094, %v2057, 0
    %v2087 = vsel %vm1094, %v2058, 0
    %2089 = vmatprep.subr.mxu0 %v2060
    %2090 = vmatpush1.msra.mxu0 %v2059
    %2091 = vmatprep.subr.mxu0 %v2063
    %2092 = vmatpush1.msra.mxu0 %v2062
    %2093 = vmatprep.subr.mxu0 %v2066
    %2094 = vmatpush1.msra.mxu0 %v2065
    %2095 = vmatprep.subr.mxu0 %v2069
    %2096 = vmatpush1.msra.mxu0 %v2068
    %2097 = vmatprep.subr.mxu0 %v2072
    %2098 = vmatpush1.msra.mxu0 %v2071
    %2099 = vmatprep.subr.mxu0 %v2075
    %2100 = vmatpush1.msra.mxu0 %v2074
    %2101 = vmatprep.subr.mxu0 %v2078
    %2102 = vmatpush1.msra.mxu0 %v2077
    %2103 = vmatprep.subr.mxu0 %v2081
    %2104 = vmatpush1.msra.mxu0 %v2080
    %2105 = vmatprep.subr.mxu0 0.0
    %2106 = vmatpush1.msra.mxu0 0.0
    %2107 = vmatprep.subr.mxu0 0.0
    %2108 = vmatpush1.msra.mxu0 0.0
    %2109 = vmatprep.subr.mxu0 0.0
    %2110 = vmatpush1.msra.mxu0 0.0
    %2111 = vmatprep.subr.mxu0 0.0
    %2112 = vmatpush1.msra.mxu0 0.0
    %2113 = vmatprep.subr.mxu0 0.0
    %2114 = vmatpush1.msra.mxu0 0.0
    %2115 = vmatprep.subr.mxu0 0.0
    %2116 = vmatpush1.msra.mxu0 0.0
    %2117 = vmatprep.subr.mxu0 0.0
    %2118 = vmatpush1.msra.mxu0 0.0
    %2119 = vmatprep.subr.mxu0 0.0
    %2120 = vmatpush1.msra.mxu0 0.0
    %2121 = vmatprep.subr.mxu0 0.0
    %2122 = vmatpush1.msra.mxu0 0.0
    %2123 = vmatprep.subr.mxu0 0.0
    %2124 = vmatpush1.msra.mxu0 0.0
    %2125 = vmatprep.subr.mxu0 0.0
    %2126 = vmatpush1.msra.mxu0 0.0
    %2127 = vmatprep.subr.mxu0 0.0
    %2128 = vmatpush1.msra.mxu0 0.0
    %2129 = vmatprep.subr.mxu0 0.0
    %2130 = vmatpush1.msra.mxu0 0.0
    %2131 = vmatprep.subr.mxu0 0.0
    %2132 = vmatpush1.msra.mxu0 0.0
    %2133 = vmatprep.subr.mxu0 0.0
    %2134 = vmatpush1.msra.mxu0 0.0
    %2135 = vmatprep.subr.mxu0 0.0
    %2136 = vmatpush1.msra.mxu0 0.0
    %2137 = vmatprep.subr.mxu0 0.0
    %2138 = vmatpush1.msra.mxu0 0.0
    %2139 = vmatprep.subr.mxu0 0.0
    %2140 = vmatpush1.msra.mxu0 0.0
    %2141 = vmatprep.subr.mxu0 0.0
    %2142 = vmatpush1.msra.mxu0 0.0
    %2143 = vmatprep.subr.mxu0 0.0
    %2144 = vmatpush1.msra.mxu0 0.0
    %2145 = vmatprep.subr.mxu0 0.0
    %2146 = vmatpush1.msra.mxu0 0.0
    %2147 = vmatprep.subr.mxu0 0.0
    %2148 = vmatpush1.msra.mxu0 0.0
    %2149 = vmatprep.subr.mxu0 0.0
    %2150 = vmatpush1.msra.mxu0 0.0
    %2151 = vmatprep.subr.mxu0 0.0
    %2152 = vmatpush1.msra.mxu0 0.0
    %2153 = vmatprep.mubr.f32.mxu0 0.0
    %2154 = vmatmul.mubr.f32.gmra.mrb[0].mxu0 %v2084
    %v2155 = vpop.f32.mrb[0].mxu0
    %v2156 = vadd.f32 0.0, %v2155
    %v2157 = vpop.f32.mrb[0].mxu0
    %v2158 = vadd.f32 0.0, %v2157
    %2159 = vmatprep.mubr.f32.mxu0 0.0
    %2160 = vmatmul.mubr.f32.gmra.mrb[0].mxu0 %v2087
    %v2161 = vpop.f32.mrb[0].mxu0
    %v2162 = vadd.f32 0.0, %v2161
    %v2163 = vpop.f32.mrb[0].mxu0
    %v2164 = vadd.f32 0.0, %v2163
    %2165 = vdwg.mxu0
    %2166 = vmatprep.subr.mxu0 0.0
    %2167 = vmatpush1.msra.mxu0 %v2061
    %2168 = vmatprep.subr.mxu0 0.0
    %2169 = vmatpush1.msra.mxu0 %v2064
    %2170 = vmatprep.subr.mxu0 0.0
    %2171 = vmatpush1.msra.mxu0 %v2067
    %2172 = vmatprep.subr.mxu0 0.0
    %2173 = vmatpush1.msra.mxu0 %v2070
    %2174 = vmatprep.subr.mxu0 0.0
    %2175 = vmatpush1.msra.mxu0 %v2073
    %2176 = vmatprep.subr.mxu0 0.0
    %2177 = vmatpush1.msra.mxu0 %v2076
    %2178 = vmatprep.subr.mxu0 0.0
    %2179 = vmatpush1.msra.mxu0 %v2079
    %2180 = vmatprep.subr.mxu0 0.0
    %2181 = vmatpush1.msra.mxu0 %v2082
    %2182 = vmatprep.subr.mxu0 0.0
    %2183 = vmatpush1.msra.mxu0 0.0
    %2184 = vmatprep.subr.mxu0 0.0
    %2185 = vmatpush1.msra.mxu0 0.0
    %2186 = vmatprep.subr.mxu0 0.0
    %2187 = vmatpush1.msra.mxu0 0.0
    %2188 = vmatprep.subr.mxu0 0.0
    %2189 = vmatpush1.msra.mxu0 0.0
    %2190 = vmatprep.subr.mxu0 0.0
    %2191 = vmatpush1.msra.mxu0 0.0
    %2192 = vmatprep.subr.mxu0 0.0
    %2193 = vmatpush1.msra.mxu0 0.0
    %2194 = vmatprep.subr.mxu0 0.0
    %2195 = vmatpush1.msra.mxu0 0.0
    %2196 = vmatprep.subr.mxu0 0.0
    %2197 = vmatpush1.msra.mxu0 0.0
    %2198 = vmatprep.subr.mxu0 0.0
    %2199 = vmatpush1.msra.mxu0 0.0
    %2200 = vmatprep.subr.mxu0 0.0
    %2201 = vmatpush1.msra.mxu0 0.0
    %2202 = vmatprep.subr.mxu0 0.0
    %2203 = vmatpush1.msra.mxu0 0.0
    %2204 = vmatprep.subr.mxu0 0.0
    %2205 = vmatpush1.msra.mxu0 0.0
    %2206 = vmatprep.subr.mxu0 0.0
    %2207 = vmatpush1.msra.mxu0 0.0
    %2208 = vmatprep.subr.mxu0 0.0
    %2209 = vmatpush1.msra.mxu0 0.0
    %2210 = vmatprep.subr.mxu0 0.0
    %2211 = vmatpush1.msra.mxu0 0.0
    %2212 = vmatprep.subr.mxu0 0.0
    %2213 = vmatpush1.msra.mxu0 0.0
    %2214 = vmatprep.subr.mxu0 0.0
    %2215 = vmatpush1.msra.mxu0 0.0
    %2216 = vmatprep.subr.mxu0 0.0
    %2217 = vmatpush1.msra.mxu0 0.0
    %2218 = vmatprep.subr.mxu0 0.0
    %2219 = vmatpush1.msra.mxu0 0.0
    %2220 = vmatprep.subr.mxu0 0.0
    %2221 = vmatpush1.msra.mxu0 0.0
    %2222 = vmatprep.subr.mxu0 0.0
    %2223 = vmatpush1.msra.mxu0 0.0
    %2224 = vmatprep.subr.mxu0 0.0
    %2225 = vmatpush1.msra.mxu0 0.0
    %2226 = vmatprep.subr.mxu0 0.0
    %2227 = vmatpush1.msra.mxu0 0.0
    %2228 = vmatprep.subr.mxu0 0.0
    %2229 = vmatpush1.msra.mxu0 0.0
    %2230 = vmatprep.mubr.f32.mxu0 0.0
    %2231 = vmatmul.mubr.f32.gmra.mrb[0].mxu0 %v2084
    %v2232 = vpop.f32.mrb[0].mxu0
    %v2233 = vadd.f32 0.0, %v2232
    %v2234 = vpop.f32.mrb[0].mxu0
    %2235 = vmatprep.mubr.f32.mxu0 0.0
    %2236 = vmatmul.mubr.f32.gmra.mrb[0].mxu0 %v2087
    %v2237 = vpop.f32.mrb[0].mxu0
    %v2238 = vadd.f32 0.0, %v2237
    %v2239 = vpop.f32.mrb[0].mxu0
    %2240 = vdwg.mxu0
    %v2241 = vld [vmem:[%s21] sm:$0xff]
    %v2242 = vld [vmem:[%s21 + $0x8] sm:$0xff]
    %s2243 = scalar_lea.vmem %s21, 16
    %v2244 = vld [vmem:[%s2243] sm:$0xff]
    %v2245 = vld [vmem:[%s2243 + $0x8] sm:$0xff]
    %v2247 = vsel %vm1746, %v2244, 0
    %v2250 = vsel %vm1746, %v2245, 0
    %2252 = vmatprep.subr.mxu0 0.0
    %2253 = vmatpush1.msra.mxu0 %v2158
    %2254 = vmatprep.subr.mxu0 0.0
    %2255 = vmatpush1.msra.mxu0 %v2164
    %2256 = vmatprep.subr.mxu0 0.0
    %2257 = vmatpush1.msra.mxu0 0.0
    %2258 = vmatprep.subr.mxu0 0.0
    %2259 = vmatpush1.msra.mxu0 0.0
    %2260 = vmatprep.subr.mxu0 0.0
    %2261 = vmatpush1.msra.mxu0 0.0
    %2262 = vmatprep.subr.mxu0 0.0
    %2263 = vmatpush1.msra.mxu0 0.0
    %2264 = vmatprep.subr.mxu0 0.0
    %2265 = vmatpush1.msra.mxu0 0.0
    %2266 = vmatprep.subr.mxu0 0.0
    %2267 = vmatpush1.msra.mxu0 0.0
    %2268 = vmatprep.subr.mxu0 0.0
    %2269 = vmatpush1.msra.mxu0 0.0
    %2270 = vmatprep.subr.mxu0 0.0
    %2271 = vmatpush1.msra.mxu0 0.0
    %2272 = vmatprep.subr.mxu0 0.0
    %2273 = vmatpush1.msra.mxu0 0.0
    %2274 = vmatprep.subr.mxu0 0.0
    %2275 = vmatpush1.msra.mxu0 0.0
    %2276 = vmatprep.subr.mxu0 0.0
    %2277 = vmatpush1.msra.mxu0 0.0
    %2278 = vmatprep.subr.mxu0 0.0
    %2279 = vmatpush1.msra.mxu0 0.0
    %2280 = vmatprep.subr.mxu0 0.0
    %2281 = vmatpush1.msra.mxu0 0.0
    %2282 = vmatprep.subr.mxu0 0.0
    %2283 = vmatpush1.msra.mxu0 0.0
    %2284 = vmatprep.subr.mxu0 0.0
    %2285 = vmatpush1.msra.mxu0 0.0
    %2286 = vmatprep.subr.mxu0 0.0
    %2287 = vmatpush1.msra.mxu0 0.0
    %2288 = vmatprep.subr.mxu0 0.0
    %2289 = vmatpush1.msra.mxu0 0.0
    %2290 = vmatprep.subr.mxu0 0.0
    %2291 = vmatpush1.msra.mxu0 0.0
    %2292 = vmatprep.subr.mxu0 0.0
    %2293 = vmatpush1.msra.mxu0 0.0
    %2294 = vmatprep.subr.mxu0 0.0
    %2295 = vmatpush1.msra.mxu0 0.0
    %2296 = vmatprep.subr.mxu0 0.0
    %2297 = vmatpush1.msra.mxu0 0.0
    %2298 = vmatprep.subr.mxu0 0.0
    %2299 = vmatpush1.msra.mxu0 0.0
    %2300 = vmatprep.subr.mxu0 0.0
    %2301 = vmatpush1.msra.mxu0 0.0
    %2302 = vmatprep.subr.mxu0 0.0
    %2303 = vmatpush1.msra.mxu0 0.0
    %2304 = vmatprep.subr.mxu0 0.0
    %2305 = vmatpush1.msra.mxu0 0.0
    %2306 = vmatprep.subr.mxu0 0.0
    %2307 = vmatpush1.msra.mxu0 0.0
    %2308 = vmatprep.subr.mxu0 0.0
    %2309 = vmatpush1.msra.mxu0 0.0
    %2310 = vmatprep.subr.mxu0 0.0
    %2311 = vmatpush1.msra.mxu0 0.0
    %2312 = vmatprep.subr.mxu0 0.0
    %2313 = vmatpush1.msra.mxu0 0.0
    %2314 = vmatprep.subr.mxu0 0.0
    %2315 = vmatpush1.msra.mxu0 0.0
    %2316 = vmatprep.mubr.f32.mxu0 0.0
    %2317 = vmatmul.mubr.f32.gmra.mrb[0].mxu0 %v2247
    %v2318 = vpop.f32.mrb[0].mxu0
    %v2319 = vadd.f32 0.0, %v2318
    %v2320 = vpop.f32.mrb[0].mxu0
    %2321 = vmatprep.mubr.f32.mxu0 0.0
    %2322 = vmatmul.mubr.f32.gmra.mrb[0].mxu0 %v2250
    %v2323 = vpop.f32.mrb[0].mxu0
    %v2324 = vadd.f32 0.0, %v2323
    %v2325 = vpop.f32.mrb[0].mxu0
    %2326 = vdwg.mxu0
    %v2328 = vsel %vm1746, %v2241, 0
    %v2331 = vsel %vm1746, %v2242, 0
    %2333 = vmatprep.subr.mxu0 0.0
    %2334 = vmatpush1.msra.mxu0 %v2156
    %2335 = vmatprep.subr.mxu0 0.0
    %2336 = vmatpush1.msra.mxu0 %v2162
    %2337 = vmatprep.subr.mxu0 0.0
    %2338 = vmatpush1.msra.mxu0 0.0
    %2339 = vmatprep.subr.mxu0 0.0
    %2340 = vmatpush1.msra.mxu0 0.0
    %2341 = vmatprep.subr.mxu0 0.0
    %2342 = vmatpush1.msra.mxu0 0.0
    %2343 = vmatprep.subr.mxu0 0.0
    %2344 = vmatpush1.msra.mxu0 0.0
    %2345 = vmatprep.subr.mxu0 0.0
    %2346 = vmatpush1.msra.mxu0 0.0
    %2347 = vmatprep.subr.mxu0 0.0
    %2348 = vmatpush1.msra.mxu0 0.0
    %2349 = vmatprep.subr.mxu0 0.0
    %2350 = vmatpush1.msra.mxu0 0.0
    %2351 = vmatprep.subr.mxu0 0.0
    %2352 = vmatpush1.msra.mxu0 0.0
    %2353 = vmatprep.subr.mxu0 0.0
    %2354 = vmatpush1.msra.mxu0 0.0
    %2355 = vmatprep.subr.mxu0 0.0
    %2356 = vmatpush1.msra.mxu0 0.0
    %2357 = vmatprep.subr.mxu0 0.0
    %2358 = vmatpush1.msra.mxu0 0.0
    %2359 = vmatprep.subr.mxu0 0.0
    %2360 = vmatpush1.msra.mxu0 0.0
    %2361 = vmatprep.subr.mxu0 0.0
    %2362 = vmatpush1.msra.mxu0 0.0
    %2363 = vmatprep.subr.mxu0 0.0
    %2364 = vmatpush1.msra.mxu0 0.0
    %2365 = vmatprep.subr.mxu0 0.0
    %2366 = vmatpush1.msra.mxu0 0.0
    %2367 = vmatprep.subr.mxu0 0.0
    %2368 = vmatpush1.msra.mxu0 0.0
    %2369 = vmatprep.subr.mxu0 0.0
    %2370 = vmatpush1.msra.mxu0 0.0
    %2371 = vmatprep.subr.mxu0 0.0
    %2372 = vmatpush1.msra.mxu0 0.0
    %2373 = vmatprep.subr.mxu0 0.0
    %2374 = vmatpush1.msra.mxu0 0.0
    %2375 = vmatprep.subr.mxu0 0.0
    %2376 = vmatpush1.msra.mxu0 0.0
    %2377 = vmatprep.subr.mxu0 0.0
    %2378 = vmatpush1.msra.mxu0 0.0
    %2379 = vmatprep.subr.mxu0 0.0
    %2380 = vmatpush1.msra.mxu0 0.0
    %2381 = vmatprep.subr.mxu0 0.0
    %2382 = vmatpush1.msra.mxu0 0.0
    %2383 = vmatprep.subr.mxu0 0.0
    %2384 = vmatpush1.msra.mxu0 0.0
    %2385 = vmatprep.subr.mxu0 0.0
    %2386 = vmatpush1.msra.mxu0 0.0
    %2387 = vmatprep.subr.mxu0 0.0
    %2388 = vmatpush1.msra.mxu0 0.0
    %2389 = vmatprep.subr.mxu0 0.0
    %2390 = vmatpush1.msra.mxu0 0.0
    %2391 = vmatprep.subr.mxu0 0.0
    %2392 = vmatpush1.msra.mxu0 0.0
    %2393 = vmatprep.subr.mxu0 0.0
    %2394 = vmatpush1.msra.mxu0 0.0
    %2395 = vmatprep.subr.mxu0 0.0
    %2396 = vmatpush1.msra.mxu0 0.0
    %2397 = vmatprep.mubr.f32.mxu0 0.0
    %2398 = vmatmul.mubr.f32.gmra.mrb[0].mxu0 %v2328
    %v2399 = vpop.f32.mrb[0].mxu0
    %v2400 = vadd.f32 %v2319, %v2399
    %v2401 = vpop.f32.mrb[0].mxu0
    %2402 = vmatprep.mubr.f32.mxu0 0.0
    %2403 = vmatmul.mubr.f32.gmra.mrb[0].mxu0 %v2331
    %v2404 = vpop.f32.mrb[0].mxu0
    %v2405 = vadd.f32 %v2324, %v2404
    %v2406 = vpop.f32.mrb[0].mxu0
    %2407 = vdwg.mxu0
    %s2408 = scalar_lea.vmem %s21, 32
    %v2409 = vld [vmem:[%s2408] sm:$0xff]
    %v2410 = vld [vmem:[%s2408 + $0x8] sm:$0xff]
    %v2412 = vsel %vm1746, %v2409, 0
    %v2415 = vsel %vm1746, %v2410, 0
    %2417 = vmatprep.subr.mxu0 0.0
    %2418 = vmatpush1.msra.mxu0 %v2233
    %2419 = vmatprep.subr.mxu0 0.0
    %2420 = vmatpush1.msra.mxu0 %v2238
    %2421 = vmatprep.subr.mxu0 0.0
    %2422 = vmatpush1.msra.mxu0 0.0
    %2423 = vmatprep.subr.mxu0 0.0
    %2424 = vmatpush1.msra.mxu0 0.0
    %2425 = vmatprep.subr.mxu0 0.0
    %2426 = vmatpush1.msra.mxu0 0.0
    %2427 = vmatprep.subr.mxu0 0.0
    %2428 = vmatpush1.msra.mxu0 0.0
    %2429 = vmatprep.subr.mxu0 0.0
    %2430 = vmatpush1.msra.mxu0 0.0
    %2431 = vmatprep.subr.mxu0 0.0
    %2432 = vmatpush1.msra.mxu0 0.0
    %2433 = vmatprep.subr.mxu0 0.0
    %2434 = vmatpush1.msra.mxu0 0.0
    %2435 = vmatprep.subr.mxu0 0.0
    %2436 = vmatpush1.msra.mxu0 0.0
    %2437 = vmatprep.subr.mxu0 0.0
    %2438 = vmatpush1.msra.mxu0 0.0
    %2439 = vmatprep.subr.mxu0 0.0
    %2440 = vmatpush1.msra.mxu0 0.0
    %2441 = vmatprep.subr.mxu0 0.0
    %2442 = vmatpush1.msra.mxu0 0.0
    %2443 = vmatprep.subr.mxu0 0.0
    %2444 = vmatpush1.msra.mxu0 0.0
    %2445 = vmatprep.subr.mxu0 0.0
    %2446 = vmatpush1.msra.mxu0 0.0
    %2447 = vmatprep.subr.mxu0 0.0
    %2448 = vmatpush1.msra.mxu0 0.0
    %2449 = vmatprep.subr.mxu0 0.0
    %2450 = vmatpush1.msra.mxu0 0.0
    %2451 = vmatprep.subr.mxu0 0.0
    %2452 = vmatpush1.msra.mxu0 0.0
    %2453 = vmatprep.subr.mxu0 0.0
    %2454 = vmatpush1.msra.mxu0 0.0
    %2455 = vmatprep.subr.mxu0 0.0
    %2456 = vmatpush1.msra.mxu0 0.0
    %2457 = vmatprep.subr.mxu0 0.0
    %2458 = vmatpush1.msra.mxu0 0.0
    %2459 = vmatprep.subr.mxu0 0.0
    %2460 = vmatpush1.msra.mxu0 0.0
    %2461 = vmatprep.subr.mxu0 0.0
    %2462 = vmatpush1.msra.mxu0 0.0
    %2463 = vmatprep.subr.mxu0 0.0
    %2464 = vmatpush1.msra.mxu0 0.0
    %2465 = vmatprep.subr.mxu0 0.0
    %2466 = vmatpush1.msra.mxu0 0.0
    %2467 = vmatprep.subr.mxu0 0.0
    %2468 = vmatpush1.msra.mxu0 0.0
    %2469 = vmatprep.subr.mxu0 0.0
    %2470 = vmatpush1.msra.mxu0 0.0
    %2471 = vmatprep.subr.mxu0 0.0
    %2472 = vmatpush1.msra.mxu0 0.0
    %2473 = vmatprep.subr.mxu0 0.0
    %2474 = vmatpush1.msra.mxu0 0.0
    %2475 = vmatprep.subr.mxu0 0.0
    %2476 = vmatpush1.msra.mxu0 0.0
    %2477 = vmatprep.subr.mxu0 0.0
    %2478 = vmatpush1.msra.mxu0 0.0
    %2479 = vmatprep.subr.mxu0 0.0
    %2480 = vmatpush1.msra.mxu0 0.0
    %2481 = vmatprep.mubr.f32.mxu0 0.0
    %2482 = vmatmul.mubr.f32.gmra.mrb[0].mxu0 %v2412
    %v2483 = vpop.f32.mrb[0].mxu0
    %v2484 = vadd.f32 0.0, %v2483
    %v2485 = vpop.f32.mrb[0].mxu0
    %2486 = vmatprep.mubr.f32.mxu0 0.0
    %2487 = vmatmul.mubr.f32.gmra.mrb[0].mxu0 %v2415
    %v2488 = vpop.f32.mrb[0].mxu0
    %v2489 = vadd.f32 0.0, %v2488
    %v2490 = vpop.f32.mrb[0].mxu0
    %2491 = vdwg.mxu0
    %v2492 = vadd.f32 %v2400, %v2484
    %v2493 = vadd.f32 %v2405, %v2489
    %v2494 = vld [vmem:[#allocation15] sm:$0x1]
    %v2495 = vlaneseq
    %v2496 = vshrl.u32 %v2495, 7
    %v2497 = vsub.s32 0, %v2496
    %v2498 = vrot.slane %v2494, %v2497
    %v2499 = vadd.f32 %v2492, %v2498
    %v2500 = vadd.f32 %v2493, %v2498
    %v2501 = vmax.f32 %v2499, 0.0
    %v2502 = vmax.f32 %v2500, 0.0
    %v2503 = vld [vmem:[%s25] sm:$0xff]
    %v2504 = vld [vmem:[%s25 + $0x8] sm:$0xff]
    %v2505 = vld [vmem:[%s25 + $0x10] sm:$0xff]
    %v2506 = vld [vmem:[%s25 + $0x18] sm:$0xff]
    %v2507 = vld [vmem:[%s25 + $0x20] sm:$0xff]
    %v2508 = vld [vmem:[%s25 + $0x28] sm:$0xff]
    %v2509 = vld [vmem:[%s25 + $0x30] sm:$0xff]
    %v2510 = vld [vmem:[%s25 + $0x38] sm:$0xff]
    %v2511 = vld [vmem:[%s25 + $0x40] sm:$0xff]
    %v2512 = vld [vmem:[%s25 + $0x48] sm:$0xff]
    %v2513 = vld [vmem:[%s25 + $0x50] sm:$0xff]
    %v2514 = vld [vmem:[%s25 + $0x58] sm:$0xff]
    %v2515 = vld [vmem:[%s25 + $0x60] sm:$0xff]
    %v2516 = vld [vmem:[%s25 + $0x68] sm:$0xff]
    %v2517 = vld [vmem:[%s25 + $0x70] sm:$0xff]
    %v2518 = vld [vmem:[%s25 + $0x78] sm:$0xff]
    %2519 = vmatprep.subr.mxu0 0.0
    %2520 = vmatpush1.msra.mxu0 %v2501
    %2521 = vmatprep.subr.mxu0 0.0
    %2522 = vmatpush1.msra.mxu0 %v2502
    %2523 = vmatprep.subr.mxu0 0.0
    %2524 = vmatpush1.msra.mxu0 0.0
    %2525 = vmatprep.subr.mxu0 0.0
    %2526 = vmatpush1.msra.mxu0 0.0
    %2527 = vmatprep.subr.mxu0 0.0
    %2528 = vmatpush1.msra.mxu0 0.0
    %2529 = vmatprep.subr.mxu0 0.0
    %2530 = vmatpush1.msra.mxu0 0.0
    %2531 = vmatprep.subr.mxu0 0.0
    %2532 = vmatpush1.msra.mxu0 0.0
    %2533 = vmatprep.subr.mxu0 0.0
    %2534 = vmatpush1.msra.mxu0 0.0
    %2535 = vmatprep.subr.mxu0 0.0
    %2536 = vmatpush1.msra.mxu0 0.0
    %2537 = vmatprep.subr.mxu0 0.0
    %2538 = vmatpush1.msra.mxu0 0.0
    %2539 = vmatprep.subr.mxu0 0.0
    %2540 = vmatpush1.msra.mxu0 0.0
    %2541 = vmatprep.subr.mxu0 0.0
    %2542 = vmatpush1.msra.mxu0 0.0
    %2543 = vmatprep.subr.mxu0 0.0
    %2544 = vmatpush1.msra.mxu0 0.0
    %2545 = vmatprep.subr.mxu0 0.0
    %2546 = vmatpush1.msra.mxu0 0.0
    %2547 = vmatprep.subr.mxu0 0.0
    %2548 = vmatpush1.msra.mxu0 0.0
    %2549 = vmatprep.subr.mxu0 0.0
    %2550 = vmatpush1.msra.mxu0 0.0
    %2551 = vmatprep.subr.mxu0 0.0
    %2552 = vmatpush1.msra.mxu0 0.0
    %2553 = vmatprep.subr.mxu0 0.0
    %2554 = vmatpush1.msra.mxu0 0.0
    %2555 = vmatprep.subr.mxu0 0.0
    %2556 = vmatpush1.msra.mxu0 0.0
    %2557 = vmatprep.subr.mxu0 0.0
    %2558 = vmatpush1.msra.mxu0 0.0
    %2559 = vmatprep.subr.mxu0 0.0
    %2560 = vmatpush1.msra.mxu0 0.0
    %2561 = vmatprep.subr.mxu0 0.0
    %2562 = vmatpush1.msra.mxu0 0.0
    %2563 = vmatprep.subr.mxu0 0.0
    %2564 = vmatpush1.msra.mxu0 0.0
    %2565 = vmatprep.subr.mxu0 0.0
    %2566 = vmatpush1.msra.mxu0 0.0
    %2567 = vmatprep.subr.mxu0 0.0
    %2568 = vmatpush1.msra.mxu0 0.0
    %2569 = vmatprep.subr.mxu0 0.0
    %2570 = vmatpush1.msra.mxu0 0.0
    %2571 = vmatprep.subr.mxu0 0.0
    %2572 = vmatpush1.msra.mxu0 0.0
    %2573 = vmatprep.subr.mxu0 0.0
    %2574 = vmatpush1.msra.mxu0 0.0
    %2575 = vmatprep.subr.mxu0 0.0
    %2576 = vmatpush1.msra.mxu0 0.0
    %2577 = vmatprep.subr.mxu0 0.0
    %2578 = vmatpush1.msra.mxu0 0.0
    %2579 = vmatprep.subr.mxu0 0.0
    %2580 = vmatpush1.msra.mxu0 0.0
    %2581 = vmatprep.subr.mxu0 0.0
    %2582 = vmatpush1.msra.mxu0 0.0
    %2583 = vmatprep.mubr.f32.mxu0 0.0
    %2584 = vmatmul.mubr.f32.gmra.mrb[0].mxu0 %v1747
    %v2585 = vpop.f32.mrb[0].mxu0
    %v2586 = vadd.f32 0.0, %v2585
    %v2587 = vpop.f32.mrb[0].mxu0
    %2588 = vdwg.mxu0
    %2589 = vmatprep.subr.mxu0 0.0
    %2590 = vmatpush1.msra.mxu0 %v2503
    %2591 = vmatprep.subr.mxu0 0.0
    %2592 = vmatpush1.msra.mxu0 %v2504
    %2593 = vmatprep.subr.mxu0 0.0
    %2594 = vmatpush1.msra.mxu0 %v2505
    %2595 = vmatprep.subr.mxu0 0.0
    %2596 = vmatpush1.msra.mxu0 %v2506
    %2597 = vmatprep.subr.mxu0 0.0
    %2598 = vmatpush1.msra.mxu0 %v2507
    %2599 = vmatprep.subr.mxu0 0.0
    %2600 = vmatpush1.msra.mxu0 %v2508
    %2601 = vmatprep.subr.mxu0 0.0
    %2602 = vmatpush1.msra.mxu0 %v2509
    %2603 = vmatprep.subr.mxu0 0.0
    %2604 = vmatpush1.msra.mxu0 %v2510
    %2605 = vmatprep.subr.mxu0 0.0
    %2606 = vmatpush1.msra.mxu0 %v2511
    %2607 = vmatprep.subr.mxu0 0.0
    %2608 = vmatpush1.msra.mxu0 %v2512
    %2609 = vmatprep.subr.mxu0 0.0
    %2610 = vmatpush1.msra.mxu0 %v2513
    %2611 = vmatprep.subr.mxu0 0.0
    %2612 = vmatpush1.msra.mxu0 %v2514
    %2613 = vmatprep.subr.mxu0 0.0
    %2614 = vmatpush1.msra.mxu0 %v2515
    %2615 = vmatprep.subr.mxu0 0.0
    %2616 = vmatpush1.msra.mxu0 %v2516
    %2617 = vmatprep.subr.mxu0 0.0
    %2618 = vmatpush1.msra.mxu0 %v2517
    %2619 = vmatprep.subr.mxu0 0.0
    %2620 = vmatpush1.msra.mxu0 %v2518
    %2621 = vmatprep.subr.mxu0 0.0
    %2622 = vmatpush1.msra.mxu0 0.0
    %2623 = vmatprep.subr.mxu0 0.0
    %2624 = vmatpush1.msra.mxu0 0.0
    %2625 = vmatprep.subr.mxu0 0.0
    %2626 = vmatpush1.msra.mxu0 0.0
    %2627 = vmatprep.subr.mxu0 0.0
    %2628 = vmatpush1.msra.mxu0 0.0
    %2629 = vmatprep.subr.mxu0 0.0
    %2630 = vmatpush1.msra.mxu0 0.0
    %2631 = vmatprep.subr.mxu0 0.0
    %2632 = vmatpush1.msra.mxu0 0.0
    %2633 = vmatprep.subr.mxu0 0.0
    %2634 = vmatpush1.msra.mxu0 0.0
    %2635 = vmatprep.subr.mxu0 0.0
    %2636 = vmatpush1.msra.mxu0 0.0
    %2637 = vmatprep.subr.mxu0 0.0
    %2638 = vmatpush1.msra.mxu0 0.0
    %2639 = vmatprep.subr.mxu0 0.0
    %2640 = vmatpush1.msra.mxu0 0.0
    %2641 = vmatprep.subr.mxu0 0.0
    %2642 = vmatpush1.msra.mxu0 0.0
    %2643 = vmatprep.subr.mxu0 0.0
    %2644 = vmatpush1.msra.mxu0 0.0
    %2645 = vmatprep.subr.mxu0 0.0
    %2646 = vmatpush1.msra.mxu0 0.0
    %2647 = vmatprep.subr.mxu0 0.0
    %2648 = vmatpush1.msra.mxu0 0.0
    %2649 = vmatprep.subr.mxu0 0.0
    %2650 = vmatpush1.msra.mxu0 0.0
    %2651 = vmatprep.subr.mxu0 0.0
    %2652 = vmatpush1.msra.mxu0 0.0
    %2653 = vmatprep.mubr.f32.mxu0 0.0
    %2654 = vmatmul.mubr.f32.gmra.mrb[0].mxu0 %v2586
    %v2655 = vpop.f32.mrb[0].mxu0
    %v2656 = vadd.f32 0.0, %v2655
    %v2657 = vpop.f32.mrb[0].mxu0
    %2658 = vdwg.mxu0
    %v2659 = vlaneseq
    %v2660 = vshrl.u32 %v2659, 7
    %v2661 = vsub.s32 0, %v2660
    %v2662 = vrot.slane %v2656, %v2661
    %v2663 = vsub.f32 %v2501, %v2662
    %v2664 = vsub.f32 %v2502, %v2662
    %v2665 = vmul.f32 %v2663, %v2663
    %v2666 = vmul.f32 %v2664, %v2664
    %2667 = vmatprep.subr.mxu0 0.0
    %2668 = vmatpush1.msra.mxu0 %v2665
    %2669 = vmatprep.subr.mxu0 0.0
    %2670 = vmatpush1.msra.mxu0 %v2666
    %2671 = vmatprep.subr.mxu0 0.0
    %2672 = vmatpush1.msra.mxu0 0.0
    %2673 = vmatprep.subr.mxu0 0.0
    %2674 = vmatpush1.msra.mxu0 0.0
    %2675 = vmatprep.subr.mxu0 0.0
    %2676 = vmatpush1.msra.mxu0 0.0
    %2677 = vmatprep.subr.mxu0 0.0
    %2678 = vmatpush1.msra.mxu0 0.0
    %2679 = vmatprep.subr.mxu0 0.0
    %2680 = vmatpush1.msra.mxu0 0.0
    %2681 = vmatprep.subr.mxu0 0.0
    %2682 = vmatpush1.msra.mxu0 0.0
    %2683 = vmatprep.subr.mxu0 0.0
    %2684 = vmatpush1.msra.mxu0 0.0
    %2685 = vmatprep.subr.mxu0 0.0
    %2686 = vmatpush1.msra.mxu0 0.0
    %2687 = vmatprep.subr.mxu0 0.0
    %2688 = vmatpush1.msra.mxu0 0.0
    %2689 = vmatprep.subr.mxu0 0.0
    %2690 = vmatpush1.msra.mxu0 0.0
    %2691 = vmatprep.subr.mxu0 0.0
    %2692 = vmatpush1.msra.mxu0 0.0
    %2693 = vmatprep.subr.mxu0 0.0
    %2694 = vmatpush1.msra.mxu0 0.0
    %2695 = vmatprep.subr.mxu0 0.0
    %2696 = vmatpush1.msra.mxu0 0.0
    %2697 = vmatprep.subr.mxu0 0.0
    %2698 = vmatpush1.msra.mxu0 0.0
    %2699 = vmatprep.subr.mxu0 0.0
    %2700 = vmatpush1.msra.mxu0 0.0
    %2701 = vmatprep.subr.mxu0 0.0
    %2702 = vmatpush1.msra.mxu0 0.0
    %2703 = vmatprep.subr.mxu0 0.0
    %2704 = vmatpush1.msra.mxu0 0.0
    %2705 = vmatprep.subr.mxu0 0.0
    %2706 = vmatpush1.msra.mxu0 0.0
    %2707 = vmatprep.subr.mxu0 0.0
    %2708 = vmatpush1.msra.mxu0 0.0
    %2709 = vmatprep.subr.mxu0 0.0
    %2710 = vmatpush1.msra.mxu0 0.0
    %2711 = vmatprep.subr.mxu0 0.0
    %2712 = vmatpush1.msra.mxu0 0.0
    %2713 = vmatprep.subr.mxu0 0.0
    %2714 = vmatpush1.msra.mxu0 0.0
    %2715 = vmatprep.subr.mxu0 0.0
    %2716 = vmatpush1.msra.mxu0 0.0
    %2717 = vmatprep.subr.mxu0 0.0
    %2718 = vmatpush1.msra.mxu0 0.0
    %2719 = vmatprep.subr.mxu0 0.0
    %2720 = vmatpush1.msra.mxu0 0.0
    %2721 = vmatprep.subr.mxu0 0.0
    %2722 = vmatpush1.msra.mxu0 0.0
    %2723 = vmatprep.subr.mxu0 0.0
    %2724 = vmatpush1.msra.mxu0 0.0
    %2725 = vmatprep.subr.mxu0 0.0
    %2726 = vmatpush1.msra.mxu0 0.0
    %2727 = vmatprep.subr.mxu0 0.0
    %2728 = vmatpush1.msra.mxu0 0.0
    %2729 = vmatprep.subr.mxu0 0.0
    %2730 = vmatpush1.msra.mxu0 0.0
    %2731 = vmatprep.mubr.f32.mxu0 0.0
    %2732 = vmatmul.mubr.f32.gmra.mrb[0].mxu0 %v1747
    %v2733 = vpop.f32.mrb[0].mxu0
    %v2734 = vadd.f32 0.0, %v2733
    %v2735 = vpop.f32.mrb[0].mxu0
    %2736 = vdwg.mxu0
    %2737 = vmatprep.subr.mxu0 0.0
    %2738 = vmatpush1.msra.mxu0 %v2503
    %2739 = vmatprep.subr.mxu0 0.0
    %2740 = vmatpush1.msra.mxu0 %v2504
    %2741 = vmatprep.subr.mxu0 0.0
    %2742 = vmatpush1.msra.mxu0 %v2505
    %2743 = vmatprep.subr.mxu0 0.0
    %2744 = vmatpush1.msra.mxu0 %v2506
    %2745 = vmatprep.subr.mxu0 0.0
    %2746 = vmatpush1.msra.mxu0 %v2507
    %2747 = vmatprep.subr.mxu0 0.0
    %2748 = vmatpush1.msra.mxu0 %v2508
    %2749 = vmatprep.subr.mxu0 0.0
    %2750 = vmatpush1.msra.mxu0 %v2509
    %2751 = vmatprep.subr.mxu0 0.0
    %2752 = vmatpush1.msra.mxu0 %v2510
    %2753 = vmatprep.subr.mxu0 0.0
    %2754 = vmatpush1.msra.mxu0 %v2511
    %2755 = vmatprep.subr.mxu0 0.0
    %2756 = vmatpush1.msra.mxu0 %v2512
    %2757 = vmatprep.subr.mxu0 0.0
    %2758 = vmatpush1.msra.mxu0 %v2513
    %2759 = vmatprep.subr.mxu0 0.0
    %2760 = vmatpush1.msra.mxu0 %v2514
    %2761 = vmatprep.subr.mxu0 0.0
    %2762 = vmatpush1.msra.mxu0 %v2515
    %2763 = vmatprep.subr.mxu0 0.0
    %2764 = vmatpush1.msra.mxu0 %v2516
    %2765 = vmatprep.subr.mxu0 0.0
    %2766 = vmatpush1.msra.mxu0 %v2517
    %2767 = vmatprep.subr.mxu0 0.0
    %2768 = vmatpush1.msra.mxu0 %v2518
    %2769 = vmatprep.subr.mxu0 0.0
    %2770 = vmatpush1.msra.mxu0 0.0
    %2771 = vmatprep.subr.mxu0 0.0
    %2772 = vmatpush1.msra.mxu0 0.0
    %2773 = vmatprep.subr.mxu0 0.0
    %2774 = vmatpush1.msra.mxu0 0.0
    %2775 = vmatprep.subr.mxu0 0.0
    %2776 = vmatpush1.msra.mxu0 0.0
    %2777 = vmatprep.subr.mxu0 0.0
    %2778 = vmatpush1.msra.mxu0 0.0
    %2779 = vmatprep.subr.mxu0 0.0
    %2780 = vmatpush1.msra.mxu0 0.0
    %2781 = vmatprep.subr.mxu0 0.0
    %2782 = vmatpush1.msra.mxu0 0.0
    %2783 = vmatprep.subr.mxu0 0.0
    %2784 = vmatpush1.msra.mxu0 0.0
    %2785 = vmatprep.subr.mxu0 0.0
    %2786 = vmatpush1.msra.mxu0 0.0
    %2787 = vmatprep.subr.mxu0 0.0
    %2788 = vmatpush1.msra.mxu0 0.0
    %2789 = vmatprep.subr.mxu0 0.0
    %2790 = vmatpush1.msra.mxu0 0.0
    %2791 = vmatprep.subr.mxu0 0.0
    %2792 = vmatpush1.msra.mxu0 0.0
    %2793 = vmatprep.subr.mxu0 0.0
    %2794 = vmatpush1.msra.mxu0 0.0
    %2795 = vmatprep.subr.mxu0 0.0
    %2796 = vmatpush1.msra.mxu0 0.0
    %2797 = vmatprep.subr.mxu0 0.0
    %2798 = vmatpush1.msra.mxu0 0.0
    %2799 = vmatprep.subr.mxu0 0.0
    %2800 = vmatpush1.msra.mxu0 0.0
    %2801 = vmatprep.mubr.f32.mxu0 0.0
    %2802 = vmatmul.mubr.f32.gmra.mrb[0].mxu0 %v2734
    %v2803 = vpop.f32.mrb[0].mxu0
    %v2804 = vadd.f32 1e-05, %v2803
    %v2805 = vpop.f32.mrb[0].mxu0
    %2806 = vdwg.mxu0
    %v2807 = vrsqrt.pop %v2804
    %v2808 = vld [vmem:[#allocation15 + $0x1] sm:$0x1]
    %v2809 = vmul.f32 %v2807, %v2808
    %v2810 = vlaneseq
    %v2811 = vshrl.u32 %v2810, 7
    %v2812 = vsub.s32 0, %v2811
    %v2813 = vrot.slane %v2809, %v2812
    %v2814 = vmul.f32 %v2663, %v2813
    %v2815 = vmul.f32 %v2664, %v2813
    %v2816 = vld [vmem:[#allocation15 + $0x2] sm:$0x1]
    %v2817 = vlaneseq
    %v2818 = vshrl.u32 %v2817, 7
    %v2819 = vsub.s32 0, %v2818
    %v2820 = vrot.slane %v2816, %v2819
    %v2821 = vadd.f32 %v2814, %v2820
    %v2822 = vadd.f32 %v2815, %v2820
    %v2823 = vld [vmem:[#allocation16] sm:$0xff]
    %v2824 = vld [vmem:[#allocation16 + $0x8] sm:$0xff]
    %v2825 = vld [vmem:[#allocation16 + $0x10] sm:$0xff]
    %v2826 = vld [vmem:[#allocation16 + $0x18] sm:$0xff]
    %v2827 = vld [vmem:[#allocation16 + $0x20] sm:$0xff]
    %v2828 = vld [vmem:[#allocation16 + $0x28] sm:$0xff]
    %v2829 = vld [vmem:[#allocation16 + $0x30] sm:$0xff]
    %v2830 = vld [vmem:[#allocation16 + $0x38] sm:$0xff]
    %v2831 = vld [vmem:[#allocation16 + $0x40] sm:$0xff]
    %v2832 = vld [vmem:[#allocation16 + $0x48] sm:$0xff]
    %v2833 = vld [vmem:[#allocation16 + $0x50] sm:$0xff]
    %v2834 = vld [vmem:[#allocation16 + $0x58] sm:$0xff]
    %v2835 = vld [vmem:[#allocation16 + $0x60] sm:$0xff]
    %v2836 = vld [vmem:[#allocation16 + $0x68] sm:$0xff]
    %v2837 = vld [vmem:[#allocation16 + $0x70] sm:$0xff]
    %v2838 = vld [vmem:[#allocation16 + $0x78] sm:$0xff]
    %v2839 = vld [vmem:[#allocation16 + $0x80] sm:$0xff]
    %v2840 = vld [vmem:[#allocation16 + $0x88] sm:$0xff]
    %v2841 = vld [vmem:[#allocation16 + $0x90] sm:$0xff]
    %v2842 = vld [vmem:[#allocation16 + $0x98] sm:$0xff]
    %v2843 = vld [vmem:[#allocation16 + $0xa0] sm:$0xff]
    %v2844 = vld [vmem:[#allocation16 + $0xa8] sm:$0xff]
    %v2845 = vld [vmem:[#allocation16 + $0xb0] sm:$0xff]
    %v2846 = vld [vmem:[#allocation16 + $0xb8] sm:$0xff]
    %v2847 = vld [vmem:[#allocation16 + $0xc0] sm:$0xff]
    %v2848 = vld [vmem:[#allocation16 + $0xc8] sm:$0xff]
    %v2849 = vld [vmem:[#allocation16 + $0xd0] sm:$0xff]
    %v2850 = vld [vmem:[#allocation16 + $0xd8] sm:$0xff]
    %v2851 = vld [vmem:[#allocation16 + $0xe0] sm:$0xff]
    %v2852 = vld [vmem:[#allocation16 + $0xe8] sm:$0xff]
    %v2853 = vld [vmem:[#allocation16 + $0xf0] sm:$0xff]
    %v2854 = vld [vmem:[#allocation16 + $0xf8] sm:$0xff]
    %v2855 = vld [vmem:[#allocation16 + $0x100] sm:$0xff]
    %v2856 = vld [vmem:[#allocation16 + $0x108] sm:$0xff]
    %v2857 = vld [vmem:[#allocation16 + $0x110] sm:$0xff]
    %v2858 = vld [vmem:[#allocation16 + $0x118] sm:$0xff]
    %v2859 = vld [vmem:[#allocation16 + $0x120] sm:$0xff]
    %v2860 = vld [vmem:[#allocation16 + $0x128] sm:$0xff]
    %v2861 = vld [vmem:[#allocation16 + $0x130] sm:$0xff]
    %v2862 = vld [vmem:[#allocation16 + $0x138] sm:$0xff]
    %v2863 = vld [vmem:[#allocation16 + $0x140] sm:$0xff]
    %v2864 = vld [vmem:[#allocation16 + $0x148] sm:$0xff]
    %v2865 = vld [vmem:[#allocation16 + $0x150] sm:$0xff]
    %v2866 = vld [vmem:[#allocation16 + $0x158] sm:$0xff]
    %v2867 = vld [vmem:[#allocation16 + $0x160] sm:$0xff]
    %v2868 = vld [vmem:[#allocation16 + $0x168] sm:$0xff]
    %v2869 = vld [vmem:[#allocation16 + $0x170] sm:$0xff]
    %v2870 = vld [vmem:[#allocation16 + $0x178] sm:$0xff]
    %2871 = vmatprep.subr.mxu0 %v2824
    %2872 = vmatpush1.msra.mxu0 %v2823
    %2873 = vmatprep.subr.mxu0 %v2827
    %2874 = vmatpush1.msra.mxu0 %v2826
    %2875 = vmatprep.subr.mxu0 %v2830
    %2876 = vmatpush1.msra.mxu0 %v2829
    %2877 = vmatprep.subr.mxu0 %v2833
    %2878 = vmatpush1.msra.mxu0 %v2832
    %2879 = vmatprep.subr.mxu0 %v2836
    %2880 = vmatpush1.msra.mxu0 %v2835
    %2881 = vmatprep.subr.mxu0 %v2839
    %2882 = vmatpush1.msra.mxu0 %v2838
    %2883 = vmatprep.subr.mxu0 %v2842
    %2884 = vmatpush1.msra.mxu0 %v2841
    %2885 = vmatprep.subr.mxu0 %v2845
    %2886 = vmatpush1.msra.mxu0 %v2844
    %2887 = vmatprep.subr.mxu0 %v2848
    %2888 = vmatpush1.msra.mxu0 %v2847
    %2889 = vmatprep.subr.mxu0 %v2851
    %2890 = vmatpush1.msra.mxu0 %v2850
    %2891 = vmatprep.subr.mxu0 %v2854
    %2892 = vmatpush1.msra.mxu0 %v2853
    %2893 = vmatprep.subr.mxu0 %v2857
    %2894 = vmatpush1.msra.mxu0 %v2856
    %2895 = vmatprep.subr.mxu0 %v2860
    %2896 = vmatpush1.msra.mxu0 %v2859
    %2897 = vmatprep.subr.mxu0 %v2863
    %2898 = vmatpush1.msra.mxu0 %v2862
    %2899 = vmatprep.subr.mxu0 %v2866
    %2900 = vmatpush1.msra.mxu0 %v2865
    %2901 = vmatprep.subr.mxu0 %v2869
    %2902 = vmatpush1.msra.mxu0 %v2868
    %2903 = vmatprep.subr.mxu0 0.0
    %2904 = vmatpush1.msra.mxu0 0.0
    %2905 = vmatprep.subr.mxu0 0.0
    %2906 = vmatpush1.msra.mxu0 0.0
    %2907 = vmatprep.subr.mxu0 0.0
    %2908 = vmatpush1.msra.mxu0 0.0
    %2909 = vmatprep.subr.mxu0 0.0
    %2910 = vmatpush1.msra.mxu0 0.0
    %2911 = vmatprep.subr.mxu0 0.0
    %2912 = vmatpush1.msra.mxu0 0.0
    %2913 = vmatprep.subr.mxu0 0.0
    %2914 = vmatpush1.msra.mxu0 0.0
    %2915 = vmatprep.subr.mxu0 0.0
    %2916 = vmatpush1.msra.mxu0 0.0
    %2917 = vmatprep.subr.mxu0 0.0
    %2918 = vmatpush1.msra.mxu0 0.0
    %2919 = vmatprep.subr.mxu0 0.0
    %2920 = vmatpush1.msra.mxu0 0.0
    %2921 = vmatprep.subr.mxu0 0.0
    %2922 = vmatpush1.msra.mxu0 0.0
    %2923 = vmatprep.subr.mxu0 0.0
    %2924 = vmatpush1.msra.mxu0 0.0
    %2925 = vmatprep.subr.mxu0 0.0
    %2926 = vmatpush1.msra.mxu0 0.0
    %2927 = vmatprep.subr.mxu0 0.0
    %2928 = vmatpush1.msra.mxu0 0.0
    %2929 = vmatprep.subr.mxu0 0.0
    %2930 = vmatpush1.msra.mxu0 0.0
    %2931 = vmatprep.subr.mxu0 0.0
    %2932 = vmatpush1.msra.mxu0 0.0
    %2933 = vmatprep.subr.mxu0 0.0
    %2934 = vmatpush1.msra.mxu0 0.0
    %2935 = vmatprep.mubr.f32.mxu0 0.0
    %2936 = vmatmul.mubr.f32.gmra.mrb[0].mxu0 %v2821
    %v2937 = vpop.f32.mrb[0].mxu0
    %v2938 = vadd.f32 0.0, %v2937
    %v2939 = vpop.f32.mrb[0].mxu0
    %v2940 = vadd.f32 0.0, %v2939
    %2941 = vmatprep.mubr.f32.mxu0 0.0
    %2942 = vmatmul.mubr.f32.gmra.mrb[0].mxu0 %v2822
    %v2943 = vpop.f32.mrb[0].mxu0
    %v2944 = vadd.f32 0.0, %v2943
    %v2945 = vpop.f32.mrb[0].mxu0
    %v2946 = vadd.f32 0.0, %v2945
    %2947 = vdwg.mxu0
    %2948 = vmatprep.subr.mxu0 0.0
    %2949 = vmatpush1.msra.mxu0 %v2825
    %2950 = vmatprep.subr.mxu0 0.0
    %2951 = vmatpush1.msra.mxu0 %v2828
    %2952 = vmatprep.subr.mxu0 0.0
    %2953 = vmatpush1.msra.mxu0 %v2831
    %2954 = vmatprep.subr.mxu0 0.0
    %2955 = vmatpush1.msra.mxu0 %v2834
    %2956 = vmatprep.subr.mxu0 0.0
    %2957 = vmatpush1.msra.mxu0 %v2837
    %2958 = vmatprep.subr.mxu0 0.0
    %2959 = vmatpush1.msra.mxu0 %v2840
    %2960 = vmatprep.subr.mxu0 0.0
    %2961 = vmatpush1.msra.mxu0 %v2843
    %2962 = vmatprep.subr.mxu0 0.0
    %2963 = vmatpush1.msra.mxu0 %v2846
    %2964 = vmatprep.subr.mxu0 0.0
    %2965 = vmatpush1.msra.mxu0 %v2849
    %2966 = vmatprep.subr.mxu0 0.0
    %2967 = vmatpush1.msra.mxu0 %v2852
    %2968 = vmatprep.subr.mxu0 0.0
    %2969 = vmatpush1.msra.mxu0 %v2855
    %2970 = vmatprep.subr.mxu0 0.0
    %2971 = vmatpush1.msra.mxu0 %v2858
    %2972 = vmatprep.subr.mxu0 0.0
    %2973 = vmatpush1.msra.mxu0 %v2861
    %2974 = vmatprep.subr.mxu0 0.0
    %2975 = vmatpush1.msra.mxu0 %v2864
    %2976 = vmatprep.subr.mxu0 0.0
    %2977 = vmatpush1.msra.mxu0 %v2867
    %2978 = vmatprep.subr.mxu0 0.0
    %2979 = vmatpush1.msra.mxu0 %v2870
    %2980 = vmatprep.subr.mxu0 0.0
    %2981 = vmatpush1.msra.mxu0 0.0
    %2982 = vmatprep.subr.mxu0 0.0
    %2983 = vmatpush1.msra.mxu0 0.0
    %2984 = vmatprep.subr.mxu0 0.0
    %2985 = vmatpush1.msra.mxu0 0.0
    %2986 = vmatprep.subr.mxu0 0.0
    %2987 = vmatpush1.msra.mxu0 0.0
    %2988 = vmatprep.subr.mxu0 0.0
    %2989 = vmatpush1.msra.mxu0 0.0
    %2990 = vmatprep.subr.mxu0 0.0
    %2991 = vmatpush1.msra.mxu0 0.0
    %2992 = vmatprep.subr.mxu0 0.0
    %2993 = vmatpush1.msra.mxu0 0.0
    %2994 = vmatprep.subr.mxu0 0.0
    %2995 = vmatpush1.msra.mxu0 0.0
    %2996 = vmatprep.subr.mxu0 0.0
    %2997 = vmatpush1.msra.mxu0 0.0
    %2998 = vmatprep.subr.mxu0 0.0
    %2999 = vmatpush1.msra.mxu0 0.0
    %3000 = vmatprep.subr.mxu0 0.0
    %3001 = vmatpush1.msra.mxu0 0.0
    %3002 = vmatprep.subr.mxu0 0.0
    %3003 = vmatpush1.msra.mxu0 0.0
    %3004 = vmatprep.subr.mxu0 0.0
    %3005 = vmatpush1.msra.mxu0 0.0
    %3006 = vmatprep.subr.mxu0 0.0
    %3007 = vmatpush1.msra.mxu0 0.0
    %3008 = vmatprep.subr.mxu0 0.0
    %3009 = vmatpush1.msra.mxu0 0.0
    %3010 = vmatprep.subr.mxu0 0.0
    %3011 = vmatpush1.msra.mxu0 0.0
    %3012 = vmatprep.mubr.f32.mxu0 0.0
    %3013 = vmatmul.mubr.f32.gmra.mrb[0].mxu0 %v2821
    %v3014 = vpop.f32.mrb[0].mxu0
    %v3015 = vadd.f32 0.0, %v3014
    %v3016 = vpop.f32.mrb[0].mxu0
    %3017 = vmatprep.mubr.f32.mxu0 0.0
    %3018 = vmatmul.mubr.f32.gmra.mrb[0].mxu0 %v2822
    %v3019 = vpop.f32.mrb[0].mxu0
    %v3020 = vadd.f32 0.0, %v3019
    %v3021 = vpop.f32.mrb[0].mxu0
    %3022 = vdwg.mxu0
    %v3023 = vld [vmem:[#allocation18] sm:$0xff]
    %s3024 = scalar_lea.vmem [#allocation18], 8
    %v3025 = vld [vmem:[%s3024] sm:$0xff]
    %v3027 = vsel %vm1746, %v3025, 0
    %3029 = vmatprep.subr.mxu0 0.0
    %3030 = vmatpush1.msra.mxu0 %v2940
    %3031 = vmatprep.subr.mxu0 0.0
    %3032 = vmatpush1.msra.mxu0 %v2946
    %3033 = vmatprep.subr.mxu0 0.0
    %3034 = vmatpush1.msra.mxu0 0.0
    %3035 = vmatprep.subr.mxu0 0.0
    %3036 = vmatpush1.msra.mxu0 0.0
    %3037 = vmatprep.subr.mxu0 0.0
    %3038 = vmatpush1.msra.mxu0 0.0
    %3039 = vmatprep.subr.mxu0 0.0
    %3040 = vmatpush1.msra.mxu0 0.0
    %3041 = vmatprep.subr.mxu0 0.0
    %3042 = vmatpush1.msra.mxu0 0.0
    %3043 = vmatprep.subr.mxu0 0.0
    %3044 = vmatpush1.msra.mxu0 0.0
    %3045 = vmatprep.subr.mxu0 0.0
    %3046 = vmatpush1.msra.mxu0 0.0
    %3047 = vmatprep.subr.mxu0 0.0
    %3048 = vmatpush1.msra.mxu0 0.0
    %3049 = vmatprep.subr.mxu0 0.0
    %3050 = vmatpush1.msra.mxu0 0.0
    %3051 = vmatprep.subr.mxu0 0.0
    %3052 = vmatpush1.msra.mxu0 0.0
    %3053 = vmatprep.subr.mxu0 0.0
    %3054 = vmatpush1.msra.mxu0 0.0
    %3055 = vmatprep.subr.mxu0 0.0
    %3056 = vmatpush1.msra.mxu0 0.0
    %3057 = vmatprep.subr.mxu0 0.0
    %3058 = vmatpush1.msra.mxu0 0.0
    %3059 = vmatprep.subr.mxu0 0.0
    %3060 = vmatpush1.msra.mxu0 0.0
    %3061 = vmatprep.subr.mxu0 0.0
    %3062 = vmatpush1.msra.mxu0 0.0
    %3063 = vmatprep.subr.mxu0 0.0
    %3064 = vmatpush1.msra.mxu0 0.0
    %3065 = vmatprep.subr.mxu0 0.0
    %3066 = vmatpush1.msra.mxu0 0.0
    %3067 = vmatprep.subr.mxu0 0.0
    %3068 = vmatpush1.msra.mxu0 0.0
    %3069 = vmatprep.subr.mxu0 0.0
    %3070 = vmatpush1.msra.mxu0 0.0
    %3071 = vmatprep.subr.mxu0 0.0
    %3072 = vmatpush1.msra.mxu0 0.0
    %3073 = vmatprep.subr.mxu0 0.0
    %3074 = vmatpush1.msra.mxu0 0.0
    %3075 = vmatprep.subr.mxu0 0.0
    %3076 = vmatpush1.msra.mxu0 0.0
    %3077 = vmatprep.subr.mxu0 0.0
    %3078 = vmatpush1.msra.mxu0 0.0
    %3079 = vmatprep.subr.mxu0 0.0
    %3080 = vmatpush1.msra.mxu0 0.0
    %3081 = vmatprep.subr.mxu0 0.0
    %3082 = vmatpush1.msra.mxu0 0.0
    %3083 = vmatprep.subr.mxu0 0.0
    %3084 = vmatpush1.msra.mxu0 0.0
    %3085 = vmatprep.subr.mxu0 0.0
    %3086 = vmatpush1.msra.mxu0 0.0
    %3087 = vmatprep.subr.mxu0 0.0
    %3088 = vmatpush1.msra.mxu0 0.0
    %3089 = vmatprep.subr.mxu0 0.0
    %3090 = vmatpush1.msra.mxu0 0.0
    %3091 = vmatprep.subr.mxu0 0.0
    %3092 = vmatpush1.msra.mxu0 0.0
    %3093 = vmatprep.mubr.f32.mxu0 0.0
    %3094 = vmatmul.mubr.f32.gmra.mrb[0].mxu0 %v3027
    %v3095 = vpop.f32.mrb[0].mxu0
    %v3096 = vadd.f32 0.0, %v3095
    %v3097 = vpop.f32.mrb[0].mxu0
    %3098 = vdwg.mxu0
    %v3100 = vsel %vm1746, %v3023, 0
    %3102 = vmatprep.subr.mxu0 0.0
    %3103 = vmatpush1.msra.mxu0 %v2938
    %3104 = vmatprep.subr.mxu0 0.0
    %3105 = vmatpush1.msra.mxu0 %v2944
    %3106 = vmatprep.subr.mxu0 0.0
    %3107 = vmatpush1.msra.mxu0 0.0
    %3108 = vmatprep.subr.mxu0 0.0
    %3109 = vmatpush1.msra.mxu0 0.0
    %3110 = vmatprep.subr.mxu0 0.0
    %3111 = vmatpush1.msra.mxu0 0.0
    %3112 = vmatprep.subr.mxu0 0.0
    %3113 = vmatpush1.msra.mxu0 0.0
    %3114 = vmatprep.subr.mxu0 0.0
    %3115 = vmatpush1.msra.mxu0 0.0
    %3116 = vmatprep.subr.mxu0 0.0
    %3117 = vmatpush1.msra.mxu0 0.0
    %3118 = vmatprep.subr.mxu0 0.0
    %3119 = vmatpush1.msra.mxu0 0.0
    %3120 = vmatprep.subr.mxu0 0.0
    %3121 = vmatpush1.msra.mxu0 0.0
    %3122 = vmatprep.subr.mxu0 0.0
    %3123 = vmatpush1.msra.mxu0 0.0
    %3124 = vmatprep.subr.mxu0 0.0
    %3125 = vmatpush1.msra.mxu0 0.0
    %3126 = vmatprep.subr.mxu0 0.0
    %3127 = vmatpush1.msra.mxu0 0.0
    %3128 = vmatprep.subr.mxu0 0.0
    %3129 = vmatpush1.msra.mxu0 0.0
    %3130 = vmatprep.subr.mxu0 0.0
    %3131 = vmatpush1.msra.mxu0 0.0
    %3132 = vmatprep.subr.mxu0 0.0
    %3133 = vmatpush1.msra.mxu0 0.0
    %3134 = vmatprep.subr.mxu0 0.0
    %3135 = vmatpush1.msra.mxu0 0.0
    %3136 = vmatprep.subr.mxu0 0.0
    %3137 = vmatpush1.msra.mxu0 0.0
    %3138 = vmatprep.subr.mxu0 0.0
    %3139 = vmatpush1.msra.mxu0 0.0
    %3140 = vmatprep.subr.mxu0 0.0
    %3141 = vmatpush1.msra.mxu0 0.0
    %3142 = vmatprep.subr.mxu0 0.0
    %3143 = vmatpush1.msra.mxu0 0.0
    %3144 = vmatprep.subr.mxu0 0.0
    %3145 = vmatpush1.msra.mxu0 0.0
    %3146 = vmatprep.subr.mxu0 0.0
    %3147 = vmatpush1.msra.mxu0 0.0
    %3148 = vmatprep.subr.mxu0 0.0
    %3149 = vmatpush1.msra.mxu0 0.0
    %3150 = vmatprep.subr.mxu0 0.0
    %3151 = vmatpush1.msra.mxu0 0.0
    %3152 = vmatprep.subr.mxu0 0.0
    %3153 = vmatpush1.msra.mxu0 0.0
    %3154 = vmatprep.subr.mxu0 0.0
    %3155 = vmatpush1.msra.mxu0 0.0
    %3156 = vmatprep.subr.mxu0 0.0
    %3157 = vmatpush1.msra.mxu0 0.0
    %3158 = vmatprep.subr.mxu0 0.0
    %3159 = vmatpush1.msra.mxu0 0.0
    %3160 = vmatprep.subr.mxu0 0.0
    %3161 = vmatpush1.msra.mxu0 0.0
    %3162 = vmatprep.subr.mxu0 0.0
    %3163 = vmatpush1.msra.mxu0 0.0
    %3164 = vmatprep.subr.mxu0 0.0
    %3165 = vmatpush1.msra.mxu0 0.0
    %3166 = vmatprep.mubr.f32.mxu0 0.0
    %3167 = vmatmul.mubr.f32.gmra.mrb[0].mxu0 %v3100
    %v3168 = vpop.f32.mrb[0].mxu0
    %v3169 = vadd.f32 %v3096, %v3168
    %v3170 = vpop.f32.mrb[0].mxu0
    %3171 = vdwg.mxu0
    %s3172 = scalar_lea.vmem [#allocation18], 16
    %v3173 = vld [vmem:[%s3172] sm:$0xff]
    %v3175 = vsel %vm1746, %v3173, 0
    %3177 = vmatprep.subr.mxu0 0.0
    %3178 = vmatpush1.msra.mxu0 %v3015
    %3179 = vmatprep.subr.mxu0 0.0
    %3180 = vmatpush1.msra.mxu0 %v3020
    %3181 = vmatprep.subr.mxu0 0.0
    %3182 = vmatpush1.msra.mxu0 0.0
    %3183 = vmatprep.subr.mxu0 0.0
    %3184 = vmatpush1.msra.mxu0 0.0
    %3185 = vmatprep.subr.mxu0 0.0
    %3186 = vmatpush1.msra.mxu0 0.0
    %3187 = vmatprep.subr.mxu0 0.0
    %3188 = vmatpush1.msra.mxu0 0.0
    %3189 = vmatprep.subr.mxu0 0.0
    %3190 = vmatpush1.msra.mxu0 0.0
    %3191 = vmatprep.subr.mxu0 0.0
    %3192 = vmatpush1.msra.mxu0 0.0
    %3193 = vmatprep.subr.mxu0 0.0
    %3194 = vmatpush1.msra.mxu0 0.0
    %3195 = vmatprep.subr.mxu0 0.0
    %3196 = vmatpush1.msra.mxu0 0.0
    %3197 = vmatprep.subr.mxu0 0.0
    %3198 = vmatpush1.msra.mxu0 0.0
    %3199 = vmatprep.subr.mxu0 0.0
    %3200 = vmatpush1.msra.mxu0 0.0
    %3201 = vmatprep.subr.mxu0 0.0
    %3202 = vmatpush1.msra.mxu0 0.0
    %3203 = vmatprep.subr.mxu0 0.0
    %3204 = vmatpush1.msra.mxu0 0.0
    %3205 = vmatprep.subr.mxu0 0.0
    %3206 = vmatpush1.msra.mxu0 0.0
    %3207 = vmatprep.subr.mxu0 0.0
    %3208 = vmatpush1.msra.mxu0 0.0
    %3209 = vmatprep.subr.mxu0 0.0
    %3210 = vmatpush1.msra.mxu0 0.0
    %3211 = vmatprep.subr.mxu0 0.0
    %3212 = vmatpush1.msra.mxu0 0.0
    %3213 = vmatprep.subr.mxu0 0.0
    %3214 = vmatpush1.msra.mxu0 0.0
    %3215 = vmatprep.subr.mxu0 0.0
    %3216 = vmatpush1.msra.mxu0 0.0
    %3217 = vmatprep.subr.mxu0 0.0
    %3218 = vmatpush1.msra.mxu0 0.0
    %3219 = vmatprep.subr.mxu0 0.0
    %3220 = vmatpush1.msra.mxu0 0.0
    %3221 = vmatprep.subr.mxu0 0.0
    %3222 = vmatpush1.msra.mxu0 0.0
    %3223 = vmatprep.subr.mxu0 0.0
    %3224 = vmatpush1.msra.mxu0 0.0
    %3225 = vmatprep.subr.mxu0 0.0
    %3226 = vmatpush1.msra.mxu0 0.0
    %3227 = vmatprep.subr.mxu0 0.0
    %3228 = vmatpush1.msra.mxu0 0.0
    %3229 = vmatprep.subr.mxu0 0.0
    %3230 = vmatpush1.msra.mxu0 0.0
    %3231 = vmatprep.subr.mxu0 0.0
    %3232 = vmatpush1.msra.mxu0 0.0
    %3233 = vmatprep.subr.mxu0 0.0
    %3234 = vmatpush1.msra.mxu0 0.0
    %3235 = vmatprep.subr.mxu0 0.0
    %3236 = vmatpush1.msra.mxu0 0.0
    %3237 = vmatprep.subr.mxu0 0.0
    %3238 = vmatpush1.msra.mxu0 0.0
    %3239 = vmatprep.subr.mxu0 0.0
    %3240 = vmatpush1.msra.mxu0 0.0
    %3241 = vmatprep.mubr.f32.mxu0 0.0
    %3242 = vmatmul.mubr.f32.gmra.mrb[0].mxu0 %v3175
    %v3243 = vpop.f32.mrb[0].mxu0
    %v3244 = vadd.f32 0.0, %v3243
    %v3245 = vpop.f32.mrb[0].mxu0
    %3246 = vdwg.mxu0
    %v3247 = vadd.f32 %v3169, %v3244
    %v3248 = vld [vmem:[#allocation19] sm:$0x1]
    %v3249 = vlaneseq
    %v3250 = vshrl.u32 %v3249, 7
    %v3251 = vsub.s32 0, %v3250
    %v3252 = vrot.slane %v3248, %v3251
    %v3253 = vadd.f32 %v3247, %v3252
    %v3254 = vmax.f32 %v3253, 0.0
    %v3255 = vld [vmem:[%s33] sm:$0xff]
    %v3256 = vld [vmem:[%s33 + $0x8] sm:$0xff]
    %v3257 = vld [vmem:[%s33 + $0x10] sm:$0xff]
    %v3258 = vld [vmem:[%s33 + $0x18] sm:$0xff]
    %v3259 = vld [vmem:[%s33 + $0x20] sm:$0xff]
    %v3260 = vld [vmem:[%s33 + $0x28] sm:$0xff]
    %v3261 = vld [vmem:[%s33 + $0x30] sm:$0xff]
    %v3262 = vld [vmem:[%s33 + $0x38] sm:$0xff]
    %v3263 = vld [vmem:[%s33 + $0x40] sm:$0xff]
    %v3264 = vld [vmem:[%s33 + $0x48] sm:$0xff]
    %v3265 = vld [vmem:[%s33 + $0x50] sm:$0xff]
    %v3266 = vld [vmem:[%s33 + $0x58] sm:$0xff]
    %v3267 = vld [vmem:[%s33 + $0x60] sm:$0xff]
    %v3268 = vld [vmem:[%s33 + $0x68] sm:$0xff]
    %v3269 = vld [vmem:[%s33 + $0x70] sm:$0xff]
    %v3270 = vld [vmem:[%s33 + $0x78] sm:$0xff]
    %vm3271 = vcmask 64512
    %v3272 = vsel %vm3271, 1.0, 0
    %3274 = vmatprep.subr.mxu0 0.0
    %3275 = vmatpush1.msra.mxu0 %v3254
    %3276 = vmatprep.subr.mxu0 0.0
    %3277 = vmatpush1.msra.mxu0 0.0
    %3278 = vmatprep.subr.mxu0 0.0
    %3279 = vmatpush1.msra.mxu0 0.0
    %3280 = vmatprep.subr.mxu0 0.0
    %3281 = vmatpush1.msra.mxu0 0.0
    %3282 = vmatprep.subr.mxu0 0.0
    %3283 = vmatpush1.msra.mxu0 0.0
    %3284 = vmatprep.subr.mxu0 0.0
    %3285 = vmatpush1.msra.mxu0 0.0
    %3286 = vmatprep.subr.mxu0 0.0
    %3287 = vmatpush1.msra.mxu0 0.0
    %3288 = vmatprep.subr.mxu0 0.0
    %3289 = vmatpush1.msra.mxu0 0.0
    %3290 = vmatprep.subr.mxu0 0.0
    %3291 = vmatpush1.msra.mxu0 0.0
    %3292 = vmatprep.subr.mxu0 0.0
    %3293 = vmatpush1.msra.mxu0 0.0
    %3294 = vmatprep.subr.mxu0 0.0
    %3295 = vmatpush1.msra.mxu0 0.0
    %3296 = vmatprep.subr.mxu0 0.0
    %3297 = vmatpush1.msra.mxu0 0.0
    %3298 = vmatprep.subr.mxu0 0.0
    %3299 = vmatpush1.msra.mxu0 0.0
    %3300 = vmatprep.subr.mxu0 0.0
    %3301 = vmatpush1.msra.mxu0 0.0
    %3302 = vmatprep.subr.mxu0 0.0
    %3303 = vmatpush1.msra.mxu0 0.0
    %3304 = vmatprep.subr.mxu0 0.0
    %3305 = vmatpush1.msra.mxu0 0.0
    %3306 = vmatprep.subr.mxu0 0.0
    %3307 = vmatpush1.msra.mxu0 0.0
    %3308 = vmatprep.subr.mxu0 0.0
    %3309 = vmatpush1.msra.mxu0 0.0
    %3310 = vmatprep.subr.mxu0 0.0
    %3311 = vmatpush1.msra.mxu0 0.0
    %3312 = vmatprep.subr.mxu0 0.0
    %3313 = vmatpush1.msra.mxu0 0.0
    %3314 = vmatprep.subr.mxu0 0.0
    %3315 = vmatpush1.msra.mxu0 0.0
    %3316 = vmatprep.subr.mxu0 0.0
    %3317 = vmatpush1.msra.mxu0 0.0
    %3318 = vmatprep.subr.mxu0 0.0
    %3319 = vmatpush1.msra.mxu0 0.0
    %3320 = vmatprep.subr.mxu0 0.0
    %3321 = vmatpush1.msra.mxu0 0.0
    %3322 = vmatprep.subr.mxu0 0.0
    %3323 = vmatpush1.msra.mxu0 0.0
    %3324 = vmatprep.subr.mxu0 0.0
    %3325 = vmatpush1.msra.mxu0 0.0
    %3326 = vmatprep.subr.mxu0 0.0
    %3327 = vmatpush1.msra.mxu0 0.0
    %3328 = vmatprep.subr.mxu0 0.0
    %3329 = vmatpush1.msra.mxu0 0.0
    %3330 = vmatprep.subr.mxu0 0.0
    %3331 = vmatpush1.msra.mxu0 0.0
    %3332 = vmatprep.subr.mxu0 0.0
    %3333 = vmatpush1.msra.mxu0 0.0
    %3334 = vmatprep.subr.mxu0 0.0
    %3335 = vmatpush1.msra.mxu0 0.0
    %3336 = vmatprep.subr.mxu0 0.0
    %3337 = vmatpush1.msra.mxu0 0.0
    %3338 = vmatprep.mubr.f32.mxu0 0.0
    %3339 = vmatmul.mubr.f32.gmra.mrb[0].mxu0 %v3272
    %v3340 = vpop.f32.mrb[0].mxu0
    %v3341 = vadd.f32 0.0, %v3340
    %v3342 = vpop.f32.mrb[0].mxu0
    %3343 = vdwg.mxu0
    %3344 = vmatprep.subr.mxu0 0.0
    %3345 = vmatpush1.msra.mxu0 %v3255
    %3346 = vmatprep.subr.mxu0 0.0
    %3347 = vmatpush1.msra.mxu0 %v3256
    %3348 = vmatprep.subr.mxu0 0.0
    %3349 = vmatpush1.msra.mxu0 %v3257
    %3350 = vmatprep.subr.mxu0 0.0
    %3351 = vmatpush1.msra.mxu0 %v3258
    %3352 = vmatprep.subr.mxu0 0.0
    %3353 = vmatpush1.msra.mxu0 %v3259
    %3354 = vmatprep.subr.mxu0 0.0
    %3355 = vmatpush1.msra.mxu0 %v3260
    %3356 = vmatprep.subr.mxu0 0.0
    %3357 = vmatpush1.msra.mxu0 %v3261
    %3358 = vmatprep.subr.mxu0 0.0
    %3359 = vmatpush1.msra.mxu0 %v3262
    %3360 = vmatprep.subr.mxu0 0.0
    %3361 = vmatpush1.msra.mxu0 %v3263
    %3362 = vmatprep.subr.mxu0 0.0
    %3363 = vmatpush1.msra.mxu0 %v3264
    %3364 = vmatprep.subr.mxu0 0.0
    %3365 = vmatpush1.msra.mxu0 %v3265
    %3366 = vmatprep.subr.mxu0 0.0
    %3367 = vmatpush1.msra.mxu0 %v3266
    %3368 = vmatprep.subr.mxu0 0.0
    %3369 = vmatpush1.msra.mxu0 %v3267
    %3370 = vmatprep.subr.mxu0 0.0
    %3371 = vmatpush1.msra.mxu0 %v3268
    %3372 = vmatprep.subr.mxu0 0.0
    %3373 = vmatpush1.msra.mxu0 %v3269
    %3374 = vmatprep.subr.mxu0 0.0
    %3375 = vmatpush1.msra.mxu0 %v3270
    %3376 = vmatprep.subr.mxu0 0.0
    %3377 = vmatpush1.msra.mxu0 0.0
    %3378 = vmatprep.subr.mxu0 0.0
    %3379 = vmatpush1.msra.mxu0 0.0
    %3380 = vmatprep.subr.mxu0 0.0
    %3381 = vmatpush1.msra.mxu0 0.0
    %3382 = vmatprep.subr.mxu0 0.0
    %3383 = vmatpush1.msra.mxu0 0.0
    %3384 = vmatprep.subr.mxu0 0.0
    %3385 = vmatpush1.msra.mxu0 0.0
    %3386 = vmatprep.subr.mxu0 0.0
    %3387 = vmatpush1.msra.mxu0 0.0
    %3388 = vmatprep.subr.mxu0 0.0
    %3389 = vmatpush1.msra.mxu0 0.0
    %3390 = vmatprep.subr.mxu0 0.0
    %3391 = vmatpush1.msra.mxu0 0.0
    %3392 = vmatprep.subr.mxu0 0.0
    %3393 = vmatpush1.msra.mxu0 0.0
    %3394 = vmatprep.subr.mxu0 0.0
    %3395 = vmatpush1.msra.mxu0 0.0
    %3396 = vmatprep.subr.mxu0 0.0
    %3397 = vmatpush1.msra.mxu0 0.0
    %3398 = vmatprep.subr.mxu0 0.0
    %3399 = vmatpush1.msra.mxu0 0.0
    %3400 = vmatprep.subr.mxu0 0.0
    %3401 = vmatpush1.msra.mxu0 0.0
    %3402 = vmatprep.subr.mxu0 0.0
    %3403 = vmatpush1.msra.mxu0 0.0
    %3404 = vmatprep.subr.mxu0 0.0
    %3405 = vmatpush1.msra.mxu0 0.0
    %3406 = vmatprep.subr.mxu0 0.0
    %3407 = vmatpush1.msra.mxu0 0.0
    %3408 = vmatprep.mubr.f32.mxu0 0.0
    %3409 = vmatmul.mubr.f32.gmra.mrb[0].mxu0 %v3341
    %v3410 = vpop.f32.mrb[0].mxu0
    %v3411 = vadd.f32 0.0, %v3410
    %v3412 = vpop.f32.mrb[0].mxu0
    %3413 = vdwg.mxu0
    %v3414 = vlaneseq
    %v3415 = vshrl.u32 %v3414, 7
    %v3416 = vsub.s32 0, %v3415
    %v3417 = vrot.slane %v3411, %v3416
    %v3418 = vsub.f32 %v3254, %v3417
    %v3419 = vmul.f32 %v3418, %v3418
    %3420 = vmatprep.subr.mxu0 0.0
    %3421 = vmatpush1.msra.mxu0 %v3419
    %3422 = vmatprep.subr.mxu0 0.0
    %3423 = vmatpush1.msra.mxu0 0.0
    %3424 = vmatprep.subr.mxu0 0.0
    %3425 = vmatpush1.msra.mxu0 0.0
    %3426 = vmatprep.subr.mxu0 0.0
    %3427 = vmatpush1.msra.mxu0 0.0
    %3428 = vmatprep.subr.mxu0 0.0
    %3429 = vmatpush1.msra.mxu0 0.0
    %3430 = vmatprep.subr.mxu0 0.0
    %3431 = vmatpush1.msra.mxu0 0.0
    %3432 = vmatprep.subr.mxu0 0.0
    %3433 = vmatpush1.msra.mxu0 0.0
    %3434 = vmatprep.subr.mxu0 0.0
    %3435 = vmatpush1.msra.mxu0 0.0
    %3436 = vmatprep.subr.mxu0 0.0
    %3437 = vmatpush1.msra.mxu0 0.0
    %3438 = vmatprep.subr.mxu0 0.0
    %3439 = vmatpush1.msra.mxu0 0.0
    %3440 = vmatprep.subr.mxu0 0.0
    %3441 = vmatpush1.msra.mxu0 0.0
    %3442 = vmatprep.subr.mxu0 0.0
    %3443 = vmatpush1.msra.mxu0 0.0
    %3444 = vmatprep.subr.mxu0 0.0
    %3445 = vmatpush1.msra.mxu0 0.0
    %3446 = vmatprep.subr.mxu0 0.0
    %3447 = vmatpush1.msra.mxu0 0.0
    %3448 = vmatprep.subr.mxu0 0.0
    %3449 = vmatpush1.msra.mxu0 0.0
    %3450 = vmatprep.subr.mxu0 0.0
    %3451 = vmatpush1.msra.mxu0 0.0
    %3452 = vmatprep.subr.mxu0 0.0
    %3453 = vmatpush1.msra.mxu0 0.0
    %3454 = vmatprep.subr.mxu0 0.0
    %3455 = vmatpush1.msra.mxu0 0.0
    %3456 = vmatprep.subr.mxu0 0.0
    %3457 = vmatpush1.msra.mxu0 0.0
    %3458 = vmatprep.subr.mxu0 0.0
    %3459 = vmatpush1.msra.mxu0 0.0
    %3460 = vmatprep.subr.mxu0 0.0
    %3461 = vmatpush1.msra.mxu0 0.0
    %3462 = vmatprep.subr.mxu0 0.0
    %3463 = vmatpush1.msra.mxu0 0.0
    %3464 = vmatprep.subr.mxu0 0.0
    %3465 = vmatpush1.msra.mxu0 0.0
    %3466 = vmatprep.subr.mxu0 0.0
    %3467 = vmatpush1.msra.mxu0 0.0
    %3468 = vmatprep.subr.mxu0 0.0
    %3469 = vmatpush1.msra.mxu0 0.0
    %3470 = vmatprep.subr.mxu0 0.0
    %3471 = vmatpush1.msra.mxu0 0.0
    %3472 = vmatprep.subr.mxu0 0.0
    %3473 = vmatpush1.msra.mxu0 0.0
    %3474 = vmatprep.subr.mxu0 0.0
    %3475 = vmatpush1.msra.mxu0 0.0
    %3476 = vmatprep.subr.mxu0 0.0
    %3477 = vmatpush1.msra.mxu0 0.0
    %3478 = vmatprep.subr.mxu0 0.0
    %3479 = vmatpush1.msra.mxu0 0.0
    %3480 = vmatprep.subr.mxu0 0.0
    %3481 = vmatpush1.msra.mxu0 0.0
    %3482 = vmatprep.subr.mxu0 0.0
    %3483 = vmatpush1.msra.mxu0 0.0
    %3484 = vmatprep.mubr.f32.mxu0 0.0
    %3485 = vmatmul.mubr.f32.gmra.mrb[0].mxu0 %v3272
    %v3486 = vpop.f32.mrb[0].mxu0
    %v3487 = vadd.f32 0.0, %v3486
    %v3488 = vpop.f32.mrb[0].mxu0
    %3489 = vdwg.mxu0
    %3490 = vmatprep.subr.mxu0 0.0
    %3491 = vmatpush1.msra.mxu0 %v3255
    %3492 = vmatprep.subr.mxu0 0.0
    %3493 = vmatpush1.msra.mxu0 %v3256
    %3494 = vmatprep.subr.mxu0 0.0
    %3495 = vmatpush1.msra.mxu0 %v3257
    %3496 = vmatprep.subr.mxu0 0.0
    %3497 = vmatpush1.msra.mxu0 %v3258
    %3498 = vmatprep.subr.mxu0 0.0
    %3499 = vmatpush1.msra.mxu0 %v3259
    %3500 = vmatprep.subr.mxu0 0.0
    %3501 = vmatpush1.msra.mxu0 %v3260
    %3502 = vmatprep.subr.mxu0 0.0
    %3503 = vmatpush1.msra.mxu0 %v3261
    %3504 = vmatprep.subr.mxu0 0.0
    %3505 = vmatpush1.msra.mxu0 %v3262
    %3506 = vmatprep.subr.mxu0 0.0
    %3507 = vmatpush1.msra.mxu0 %v3263
    %3508 = vmatprep.subr.mxu0 0.0
    %3509 = vmatpush1.msra.mxu0 %v3264
    %3510 = vmatprep.subr.mxu0 0.0
    %3511 = vmatpush1.msra.mxu0 %v3265
    %3512 = vmatprep.subr.mxu0 0.0
    %3513 = vmatpush1.msra.mxu0 %v3266
    %3514 = vmatprep.subr.mxu0 0.0
    %3515 = vmatpush1.msra.mxu0 %v3267
    %3516 = vmatprep.subr.mxu0 0.0
    %3517 = vmatpush1.msra.mxu0 %v3268
    %3518 = vmatprep.subr.mxu0 0.0
    %3519 = vmatpush1.msra.mxu0 %v3269
    %3520 = vmatprep.subr.mxu0 0.0
    %3521 = vmatpush1.msra.mxu0 %v3270
    %3522 = vmatprep.subr.mxu0 0.0
    %3523 = vmatpush1.msra.mxu0 0.0
    %3524 = vmatprep.subr.mxu0 0.0
    %3525 = vmatpush1.msra.mxu0 0.0
    %3526 = vmatprep.subr.mxu0 0.0
    %3527 = vmatpush1.msra.mxu0 0.0
    %3528 = vmatprep.subr.mxu0 0.0
    %3529 = vmatpush1.msra.mxu0 0.0
    %3530 = vmatprep.subr.mxu0 0.0
    %3531 = vmatpush1.msra.mxu0 0.0
    %3532 = vmatprep.subr.mxu0 0.0
    %3533 = vmatpush1.msra.mxu0 0.0
    %3534 = vmatprep.subr.mxu0 0.0
    %3535 = vmatpush1.msra.mxu0 0.0
    %3536 = vmatprep.subr.mxu0 0.0
    %3537 = vmatpush1.msra.mxu0 0.0
    %3538 = vmatprep.subr.mxu0 0.0
    %3539 = vmatpush1.msra.mxu0 0.0
    %3540 = vmatprep.subr.mxu0 0.0
    %3541 = vmatpush1.msra.mxu0 0.0
    %3542 = vmatprep.subr.mxu0 0.0
    %3543 = vmatpush1.msra.mxu0 0.0
    %3544 = vmatprep.subr.mxu0 0.0
    %3545 = vmatpush1.msra.mxu0 0.0
    %3546 = vmatprep.subr.mxu0 0.0
    %3547 = vmatpush1.msra.mxu0 0.0
    %3548 = vmatprep.subr.mxu0 0.0
    %3549 = vmatpush1.msra.mxu0 0.0
    %3550 = vmatprep.subr.mxu0 0.0
    %3551 = vmatpush1.msra.mxu0 0.0
    %3552 = vmatprep.subr.mxu0 0.0
    %3553 = vmatpush1.msra.mxu0 0.0
    %3554 = vmatprep.mubr.f32.mxu0 0.0
    %3555 = vmatmul.mubr.f32.gmra.mrb[0].mxu0 %v3487
    %v3556 = vpop.f32.mrb[0].mxu0
    %v3557 = vadd.f32 1e-05, %v3556
    %v3558 = vpop.f32.mrb[0].mxu0
    %3559 = vdwg.mxu0
    %v3560 = vrsqrt.pop %v3557
    %v3561 = vld [vmem:[#allocation19 + $0x1] sm:$0x1]
    %v3562 = vmul.f32 %v3560, %v3561
    %v3563 = vlaneseq
    %v3564 = vshrl.u32 %v3563, 7
    %v3565 = vsub.s32 0, %v3564
    %v3566 = vrot.slane %v3562, %v3565
    %v3567 = vmul.f32 %v3418, %v3566
    %v3568 = vld [vmem:[#allocation19 + $0x2] sm:$0x1]
    %v3569 = vlaneseq
    %v3570 = vshrl.u32 %v3569, 7
    %v3571 = vsub.s32 0, %v3570
    %v3572 = vrot.slane %v3568, %v3571
    %v3573 = vadd.f32 %v3567, %v3572
    %v3574 = vld [vmem:[#allocation21] sm:$0xff]
    %v3575 = vld [vmem:[#allocation21 + $0x8] sm:$0xff]
    %v3576 = vld [vmem:[#allocation21 + $0x10] sm:$0xff]
    %v3577 = vld [vmem:[#allocation21 + $0x18] sm:$0xff]
    %v3578 = vld [vmem:[#allocation21 + $0x20] sm:$0xff]
    %v3579 = vld [vmem:[#allocation21 + $0x28] sm:$0xff]
    %v3580 = vld [vmem:[#allocation21 + $0x30] sm:$0xff]
    %v3581 = vld [vmem:[#allocation21 + $0x38] sm:$0xff]
    %v3582 = vld [vmem:[#allocation21 + $0x40] sm:$0xff]
    %v3583 = vld [vmem:[#allocation21 + $0x48] sm:$0xff]
    %v3584 = vld [vmem:[#allocation21 + $0x50] sm:$0xff]
    %v3585 = vld [vmem:[#allocation21 + $0x58] sm:$0xff]
    %v3586 = vld [vmem:[#allocation21 + $0x60] sm:$0xff]
    %v3587 = vld [vmem:[#allocation21 + $0x68] sm:$0xff]
    %v3588 = vld [vmem:[#allocation21 + $0x70] sm:$0xff]
    %v3589 = vld [vmem:[#allocation21 + $0x78] sm:$0xff]
    %v3590 = vld [vmem:[#allocation21 + $0x80] sm:$0xff]
    %v3591 = vld [vmem:[#allocation21 + $0x88] sm:$0xff]
    %v3592 = vld [vmem:[#allocation21 + $0x90] sm:$0xff]
    %v3593 = vld [vmem:[#allocation21 + $0x98] sm:$0xff]
    %v3594 = vld [vmem:[#allocation21 + $0xa0] sm:$0xff]
    %v3595 = vld [vmem:[#allocation21 + $0xa8] sm:$0xff]
    %v3596 = vld [vmem:[#allocation21 + $0xb0] sm:$0xff]
    %v3597 = vld [vmem:[#allocation21 + $0xb8] sm:$0xff]
    %v3598 = vld [vmem:[#allocation21 + $0xc0] sm:$0xff]
    %v3599 = vld [vmem:[#allocation21 + $0xc8] sm:$0xff]
    %v3600 = vld [vmem:[#allocation21 + $0xd0] sm:$0xff]
    %v3601 = vld [vmem:[#allocation21 + $0xd8] sm:$0xff]
    %v3602 = vld [vmem:[#allocation21 + $0xe0] sm:$0xff]
    %v3603 = vld [vmem:[#allocation21 + $0xe8] sm:$0xff]
    %v3604 = vld [vmem:[#allocation21 + $0xf0] sm:$0xff]
    %v3605 = vld [vmem:[#allocation21 + $0xf8] sm:$0xff]
    %v3606 = vld [vmem:[#allocation21 + $0x100] sm:$0xff]
    %v3607 = vld [vmem:[#allocation21 + $0x108] sm:$0xff]
    %v3608 = vld [vmem:[#allocation21 + $0x110] sm:$0xff]
    %v3609 = vld [vmem:[#allocation21 + $0x118] sm:$0xff]
    %v3610 = vld [vmem:[#allocation21 + $0x120] sm:$0xff]
    %v3611 = vld [vmem:[#allocation21 + $0x128] sm:$0xff]
    %v3612 = vld [vmem:[#allocation21 + $0x130] sm:$0xff]
    %v3613 = vld [vmem:[#allocation21 + $0x138] sm:$0xff]
    %v3614 = vld [vmem:[#allocation21 + $0x140] sm:$0xff]
    %v3615 = vld [vmem:[#allocation21 + $0x148] sm:$0xff]
    %v3616 = vld [vmem:[#allocation21 + $0x150] sm:$0xff]
    %v3617 = vld [vmem:[#allocation21 + $0x158] sm:$0xff]
    %v3618 = vld [vmem:[#allocation21 + $0x160] sm:$0xff]
    %v3619 = vld [vmem:[#allocation21 + $0x168] sm:$0xff]
    %v3620 = vld [vmem:[#allocation21 + $0x170] sm:$0xff]
    %v3621 = vld [vmem:[#allocation21 + $0x178] sm:$0xff]
    %3622 = vmatprep.subr.mxu0 %v3575
    %3623 = vmatpush1.msra.mxu0 %v3574
    %3624 = vmatprep.subr.mxu0 %v3578
    %3625 = vmatpush1.msra.mxu0 %v3577
    %3626 = vmatprep.subr.mxu0 %v3581
    %3627 = vmatpush1.msra.mxu0 %v3580
    %3628 = vmatprep.subr.mxu0 %v3584
    %3629 = vmatpush1.msra.mxu0 %v3583
    %3630 = vmatprep.subr.mxu0 %v3587
    %3631 = vmatpush1.msra.mxu0 %v3586
    %3632 = vmatprep.subr.mxu0 %v3590
    %3633 = vmatpush1.msra.mxu0 %v3589
    %3634 = vmatprep.subr.mxu0 %v3593
    %3635 = vmatpush1.msra.mxu0 %v3592
    %3636 = vmatprep.subr.mxu0 %v3596
    %3637 = vmatpush1.msra.mxu0 %v3595
    %3638 = vmatprep.subr.mxu0 %v3599
    %3639 = vmatpush1.msra.mxu0 %v3598
    %3640 = vmatprep.subr.mxu0 %v3602
    %3641 = vmatpush1.msra.mxu0 %v3601
    %3642 = vmatprep.subr.mxu0 %v3605
    %3643 = vmatpush1.msra.mxu0 %v3604
    %3644 = vmatprep.subr.mxu0 %v3608
    %3645 = vmatpush1.msra.mxu0 %v3607
    %3646 = vmatprep.subr.mxu0 %v3611
    %3647 = vmatpush1.msra.mxu0 %v3610
    %3648 = vmatprep.subr.mxu0 %v3614
    %3649 = vmatpush1.msra.mxu0 %v3613
    %3650 = vmatprep.subr.mxu0 %v3617
    %3651 = vmatpush1.msra.mxu0 %v3616
    %3652 = vmatprep.subr.mxu0 %v3620
    %3653 = vmatpush1.msra.mxu0 %v3619
    %3654 = vmatprep.subr.mxu0 0.0
    %3655 = vmatpush1.msra.mxu0 0.0
    %3656 = vmatprep.subr.mxu0 0.0
    %3657 = vmatpush1.msra.mxu0 0.0
    %3658 = vmatprep.subr.mxu0 0.0
    %3659 = vmatpush1.msra.mxu0 0.0
    %3660 = vmatprep.subr.mxu0 0.0
    %3661 = vmatpush1.msra.mxu0 0.0
    %3662 = vmatprep.subr.mxu0 0.0
    %3663 = vmatpush1.msra.mxu0 0.0
    %3664 = vmatprep.subr.mxu0 0.0
    %3665 = vmatpush1.msra.mxu0 0.0
    %3666 = vmatprep.subr.mxu0 0.0
    %3667 = vmatpush1.msra.mxu0 0.0
    %3668 = vmatprep.subr.mxu0 0.0
    %3669 = vmatpush1.msra.mxu0 0.0
    %3670 = vmatprep.subr.mxu0 0.0
    %3671 = vmatpush1.msra.mxu0 0.0
    %3672 = vmatprep.subr.mxu0 0.0
    %3673 = vmatpush1.msra.mxu0 0.0
    %3674 = vmatprep.subr.mxu0 0.0
    %3675 = vmatpush1.msra.mxu0 0.0
    %3676 = vmatprep.subr.mxu0 0.0
    %3677 = vmatpush1.msra.mxu0 0.0
    %3678 = vmatprep.subr.mxu0 0.0
    %3679 = vmatpush1.msra.mxu0 0.0
    %3680 = vmatprep.subr.mxu0 0.0
    %3681 = vmatpush1.msra.mxu0 0.0
    %3682 = vmatprep.subr.mxu0 0.0
    %3683 = vmatpush1.msra.mxu0 0.0
    %3684 = vmatprep.subr.mxu0 0.0
    %3685 = vmatpush1.msra.mxu0 0.0
    %3686 = vmatprep.mubr.f32.mxu0 0.0
    %3687 = vmatmul.mubr.f32.gmra.mrb[0].mxu0 %v3573
    %v3688 = vpop.f32.mrb[0].mxu0
    %v3689 = vadd.f32 0.0, %v3688
    %v3690 = vpop.f32.mrb[0].mxu0
    %v3691 = vadd.f32 0.0, %v3690
    %3692 = vdwg.mxu0
    %3693 = vmatprep.subr.mxu0 0.0
    %3694 = vmatpush1.msra.mxu0 %v3576
    %3695 = vmatprep.subr.mxu0 0.0
    %3696 = vmatpush1.msra.mxu0 %v3579
    %3697 = vmatprep.subr.mxu0 0.0
    %3698 = vmatpush1.msra.mxu0 %v3582
    %3699 = vmatprep.subr.mxu0 0.0
    %3700 = vmatpush1.msra.mxu0 %v3585
    %3701 = vmatprep.subr.mxu0 0.0
    %3702 = vmatpush1.msra.mxu0 %v3588
    %3703 = vmatprep.subr.mxu0 0.0
    %3704 = vmatpush1.msra.mxu0 %v3591
    %3705 = vmatprep.subr.mxu0 0.0
    %3706 = vmatpush1.msra.mxu0 %v3594
    %3707 = vmatprep.subr.mxu0 0.0
    %3708 = vmatpush1.msra.mxu0 %v3597
    %3709 = vmatprep.subr.mxu0 0.0
    %3710 = vmatpush1.msra.mxu0 %v3600
    %3711 = vmatprep.subr.mxu0 0.0
    %3712 = vmatpush1.msra.mxu0 %v3603
    %3713 = vmatprep.subr.mxu0 0.0
    %3714 = vmatpush1.msra.mxu0 %v3606
    %3715 = vmatprep.subr.mxu0 0.0
    %3716 = vmatpush1.msra.mxu0 %v3609
    %3717 = vmatprep.subr.mxu0 0.0
    %3718 = vmatpush1.msra.mxu0 %v3612
    %3719 = vmatprep.subr.mxu0 0.0
    %3720 = vmatpush1.msra.mxu0 %v3615
    %3721 = vmatprep.subr.mxu0 0.0
    %3722 = vmatpush1.msra.mxu0 %v3618
    %3723 = vmatprep.subr.mxu0 0.0
    %3724 = vmatpush1.msra.mxu0 %v3621
    %3725 = vmatprep.subr.mxu0 0.0
    %3726 = vmatpush1.msra.mxu0 0.0
    %3727 = vmatprep.subr.mxu0 0.0
    %3728 = vmatpush1.msra.mxu0 0.0
    %3729 = vmatprep.subr.mxu0 0.0
    %3730 = vmatpush1.msra.mxu0 0.0
    %3731 = vmatprep.subr.mxu0 0.0
    %3732 = vmatpush1.msra.mxu0 0.0
    %3733 = vmatprep.subr.mxu0 0.0
    %3734 = vmatpush1.msra.mxu0 0.0
    %3735 = vmatprep.subr.mxu0 0.0
    %3736 = vmatpush1.msra.mxu0 0.0
    %3737 = vmatprep.subr.mxu0 0.0
    %3738 = vmatpush1.msra.mxu0 0.0
    %3739 = vmatprep.subr.mxu0 0.0
    %3740 = vmatpush1.msra.mxu0 0.0
    %3741 = vmatprep.subr.mxu0 0.0
    %3742 = vmatpush1.msra.mxu0 0.0
    %3743 = vmatprep.subr.mxu0 0.0
    %3744 = vmatpush1.msra.mxu0 0.0
    %3745 = vmatprep.subr.mxu0 0.0
    %3746 = vmatpush1.msra.mxu0 0.0
    %3747 = vmatprep.subr.mxu0 0.0
    %3748 = vmatpush1.msra.mxu0 0.0
    %3749 = vmatprep.subr.mxu0 0.0
    %3750 = vmatpush1.msra.mxu0 0.0
    %3751 = vmatprep.subr.mxu0 0.0
    %3752 = vmatpush1.msra.mxu0 0.0
    %3753 = vmatprep.subr.mxu0 0.0
    %3754 = vmatpush1.msra.mxu0 0.0
    %3755 = vmatprep.subr.mxu0 0.0
    %3756 = vmatpush1.msra.mxu0 0.0
    %3757 = vmatprep.mubr.f32.mxu0 0.0
    %3758 = vmatmul.mubr.f32.gmra.mrb[0].mxu0 %v3573
    %v3759 = vpop.f32.mrb[0].mxu0
    %v3760 = vadd.f32 0.0, %v3759
    %v3761 = vpop.f32.mrb[0].mxu0
    %3762 = vdwg.mxu0
    %v3763 = vld [vmem:[#allocation22] sm:$0xff]
    %s3764 = scalar_lea.vmem [#allocation22], 8
    %v3765 = vld [vmem:[%s3764] sm:$0xff]
    %v3767 = vsel %vm3271, %v3765, 0
    %3769 = vmatprep.subr.mxu0 0.0
    %3770 = vmatpush1.msra.mxu0 %v3691
    %3771 = vmatprep.subr.mxu0 0.0
    %3772 = vmatpush1.msra.mxu0 0.0
    %3773 = vmatprep.subr.mxu0 0.0
    %3774 = vmatpush1.msra.mxu0 0.0
    %3775 = vmatprep.subr.mxu0 0.0
    %3776 = vmatpush1.msra.mxu0 0.0
    %3777 = vmatprep.subr.mxu0 0.0
    %3778 = vmatpush1.msra.mxu0 0.0
    %3779 = vmatprep.subr.mxu0 0.0
    %3780 = vmatpush1.msra.mxu0 0.0
    %3781 = vmatprep.subr.mxu0 0.0
    %3782 = vmatpush1.msra.mxu0 0.0
    %3783 = vmatprep.subr.mxu0 0.0
    %3784 = vmatpush1.msra.mxu0 0.0
    %3785 = vmatprep.subr.mxu0 0.0
    %3786 = vmatpush1.msra.mxu0 0.0
    %3787 = vmatprep.subr.mxu0 0.0
    %3788 = vmatpush1.msra.mxu0 0.0
    %3789 = vmatprep.subr.mxu0 0.0
    %3790 = vmatpush1.msra.mxu0 0.0
    %3791 = vmatprep.subr.mxu0 0.0
    %3792 = vmatpush1.msra.mxu0 0.0
    %3793 = vmatprep.subr.mxu0 0.0
    %3794 = vmatpush1.msra.mxu0 0.0
    %3795 = vmatprep.subr.mxu0 0.0
    %3796 = vmatpush1.msra.mxu0 0.0
    %3797 = vmatprep.subr.mxu0 0.0
    %3798 = vmatpush1.msra.mxu0 0.0
    %3799 = vmatprep.subr.mxu0 0.0
    %3800 = vmatpush1.msra.mxu0 0.0
    %3801 = vmatprep.subr.mxu0 0.0
    %3802 = vmatpush1.msra.mxu0 0.0
    %3803 = vmatprep.subr.mxu0 0.0
    %3804 = vmatpush1.msra.mxu0 0.0
    %3805 = vmatprep.subr.mxu0 0.0
    %3806 = vmatpush1.msra.mxu0 0.0
    %3807 = vmatprep.subr.mxu0 0.0
    %3808 = vmatpush1.msra.mxu0 0.0
    %3809 = vmatprep.subr.mxu0 0.0
    %3810 = vmatpush1.msra.mxu0 0.0
    %3811 = vmatprep.subr.mxu0 0.0
    %3812 = vmatpush1.msra.mxu0 0.0
    %3813 = vmatprep.subr.mxu0 0.0
    %3814 = vmatpush1.msra.mxu0 0.0
    %3815 = vmatprep.subr.mxu0 0.0
    %3816 = vmatpush1.msra.mxu0 0.0
    %3817 = vmatprep.subr.mxu0 0.0
    %3818 = vmatpush1.msra.mxu0 0.0
    %3819 = vmatprep.subr.mxu0 0.0
    %3820 = vmatpush1.msra.mxu0 0.0
    %3821 = vmatprep.subr.mxu0 0.0
    %3822 = vmatpush1.msra.mxu0 0.0
    %3823 = vmatprep.subr.mxu0 0.0
    %3824 = vmatpush1.msra.mxu0 0.0
    %3825 = vmatprep.subr.mxu0 0.0
    %3826 = vmatpush1.msra.mxu0 0.0
    %3827 = vmatprep.subr.mxu0 0.0
    %3828 = vmatpush1.msra.mxu0 0.0
    %3829 = vmatprep.subr.mxu0 0.0
    %3830 = vmatpush1.msra.mxu0 0.0
    %3831 = vmatprep.subr.mxu0 0.0
    %3832 = vmatpush1.msra.mxu0 0.0
    %3833 = vmatprep.mubr.f32.mxu0 0.0
    %3834 = vmatmul.mubr.f32.gmra.mrb[0].mxu0 %v3767
    %v3835 = vpop.f32.mrb[0].mxu0
    %v3836 = vadd.f32 0.0, %v3835
    %v3837 = vpop.f32.mrb[0].mxu0
    %3838 = vdwg.mxu0
    %v3840 = vsel %vm3271, %v3763, 0
    %3842 = vmatprep.subr.mxu0 0.0
    %3843 = vmatpush1.msra.mxu0 %v3689
    %3844 = vmatprep.subr.mxu0 0.0
    %3845 = vmatpush1.msra.mxu0 0.0
    %3846 = vmatprep.subr.mxu0 0.0
    %3847 = vmatpush1.msra.mxu0 0.0
    %3848 = vmatprep.subr.mxu0 0.0
    %3849 = vmatpush1.msra.mxu0 0.0
    %3850 = vmatprep.subr.mxu0 0.0
    %3851 = vmatpush1.msra.mxu0 0.0
    %3852 = vmatprep.subr.mxu0 0.0
    %3853 = vmatpush1.msra.mxu0 0.0
    %3854 = vmatprep.subr.mxu0 0.0
    %3855 = vmatpush1.msra.mxu0 0.0
    %3856 = vmatprep.subr.mxu0 0.0
    %3857 = vmatpush1.msra.mxu0 0.0
    %3858 = vmatprep.subr.mxu0 0.0
    %3859 = vmatpush1.msra.mxu0 0.0
    %3860 = vmatprep.subr.mxu0 0.0
    %3861 = vmatpush1.msra.mxu0 0.0
    %3862 = vmatprep.subr.mxu0 0.0
    %3863 = vmatpush1.msra.mxu0 0.0
    %3864 = vmatprep.subr.mxu0 0.0
    %3865 = vmatpush1.msra.mxu0 0.0
    %3866 = vmatprep.subr.mxu0 0.0
    %3867 = vmatpush1.msra.mxu0 0.0
    %3868 = vmatprep.subr.mxu0 0.0
    %3869 = vmatpush1.msra.mxu0 0.0
    %3870 = vmatprep.subr.mxu0 0.0
    %3871 = vmatpush1.msra.mxu0 0.0
    %3872 = vmatprep.subr.mxu0 0.0
    %3873 = vmatpush1.msra.mxu0 0.0
    %3874 = vmatprep.subr.mxu0 0.0
    %3875 = vmatpush1.msra.mxu0 0.0
    %3876 = vmatprep.subr.mxu0 0.0
    %3877 = vmatpush1.msra.mxu0 0.0
    %3878 = vmatprep.subr.mxu0 0.0
    %3879 = vmatpush1.msra.mxu0 0.0
    %3880 = vmatprep.subr.mxu0 0.0
    %3881 = vmatpush1.msra.mxu0 0.0
    %3882 = vmatprep.subr.mxu0 0.0
    %3883 = vmatpush1.msra.mxu0 0.0
    %3884 = vmatprep.subr.mxu0 0.0
    %3885 = vmatpush1.msra.mxu0 0.0
    %3886 = vmatprep.subr.mxu0 0.0
    %3887 = vmatpush1.msra.mxu0 0.0
    %3888 = vmatprep.subr.mxu0 0.0
    %3889 = vmatpush1.msra.mxu0 0.0
    %3890 = vmatprep.subr.mxu0 0.0
    %3891 = vmatpush1.msra.mxu0 0.0
    %3892 = vmatprep.subr.mxu0 0.0
    %3893 = vmatpush1.msra.mxu0 0.0
    %3894 = vmatprep.subr.mxu0 0.0
    %3895 = vmatpush1.msra.mxu0 0.0
    %3896 = vmatprep.subr.mxu0 0.0
    %3897 = vmatpush1.msra.mxu0 0.0
    %3898 = vmatprep.subr.mxu0 0.0
    %3899 = vmatpush1.msra.mxu0 0.0
    %3900 = vmatprep.subr.mxu0 0.0
    %3901 = vmatpush1.msra.mxu0 0.0
    %3902 = vmatprep.subr.mxu0 0.0
    %3903 = vmatpush1.msra.mxu0 0.0
    %3904 = vmatprep.subr.mxu0 0.0
    %3905 = vmatpush1.msra.mxu0 0.0
    %3906 = vmatprep.mubr.f32.mxu0 0.0
    %3907 = vmatmul.mubr.f32.gmra.mrb[0].mxu0 %v3840
    %v3908 = vpop.f32.mrb[0].mxu0
    %v3909 = vadd.f32 %v3836, %v3908
    %v3910 = vpop.f32.mrb[0].mxu0
    %3911 = vdwg.mxu0
    %s3912 = scalar_lea.vmem [#allocation22], 16
    %v3913 = vld [vmem:[%s3912] sm:$0xff]
    %v3915 = vsel %vm3271, %v3913, 0
    %3917 = vmatprep.subr.mxu0 0.0
    %3918 = vmatpush1.msra.mxu0 %v3760
    %3919 = vmatprep.subr.mxu0 0.0
    %3920 = vmatpush1.msra.mxu0 0.0
    %3921 = vmatprep.subr.mxu0 0.0
    %3922 = vmatpush1.msra.mxu0 0.0
    %3923 = vmatprep.subr.mxu0 0.0
    %3924 = vmatpush1.msra.mxu0 0.0
    %3925 = vmatprep.subr.mxu0 0.0
    %3926 = vmatpush1.msra.mxu0 0.0
    %3927 = vmatprep.subr.mxu0 0.0
    %3928 = vmatpush1.msra.mxu0 0.0
    %3929 = vmatprep.subr.mxu0 0.0
    %3930 = vmatpush1.msra.mxu0 0.0
    %3931 = vmatprep.subr.mxu0 0.0
    %3932 = vmatpush1.msra.mxu0 0.0
    %3933 = vmatprep.subr.mxu0 0.0
    %3934 = vmatpush1.msra.mxu0 0.0
    %3935 = vmatprep.subr.mxu0 0.0
    %3936 = vmatpush1.msra.mxu0 0.0
    %3937 = vmatprep.subr.mxu0 0.0
    %3938 = vmatpush1.msra.mxu0 0.0
    %3939 = vmatprep.subr.mxu0 0.0
    %3940 = vmatpush1.msra.mxu0 0.0
    %3941 = vmatprep.subr.mxu0 0.0
    %3942 = vmatpush1.msra.mxu0 0.0
    %3943 = vmatprep.subr.mxu0 0.0
    %3944 = vmatpush1.msra.mxu0 0.0
    %3945 = vmatprep.subr.mxu0 0.0
    %3946 = vmatpush1.msra.mxu0 0.0
    %3947 = vmatprep.subr.mxu0 0.0
    %3948 = vmatpush1.msra.mxu0 0.0
    %3949 = vmatprep.subr.mxu0 0.0
    %3950 = vmatpush1.msra.mxu0 0.0
    %3951 = vmatprep.subr.mxu0 0.0
    %3952 = vmatpush1.msra.mxu0 0.0
    %3953 = vmatprep.subr.mxu0 0.0
    %3954 = vmatpush1.msra.mxu0 0.0
    %3955 = vmatprep.subr.mxu0 0.0
    %3956 = vmatpush1.msra.mxu0 0.0
    %3957 = vmatprep.subr.mxu0 0.0
    %3958 = vmatpush1.msra.mxu0 0.0
    %3959 = vmatprep.subr.mxu0 0.0
    %3960 = vmatpush1.msra.mxu0 0.0
    %3961 = vmatprep.subr.mxu0 0.0
    %3962 = vmatpush1.msra.mxu0 0.0
    %3963 = vmatprep.subr.mxu0 0.0
    %3964 = vmatpush1.msra.mxu0 0.0
    %3965 = vmatprep.subr.mxu0 0.0
    %3966 = vmatpush1.msra.mxu0 0.0
    %3967 = vmatprep.subr.mxu0 0.0
    %3968 = vmatpush1.msra.mxu0 0.0
    %3969 = vmatprep.subr.mxu0 0.0
    %3970 = vmatpush1.msra.mxu0 0.0
    %3971 = vmatprep.subr.mxu0 0.0
    %3972 = vmatpush1.msra.mxu0 0.0
    %3973 = vmatprep.subr.mxu0 0.0
    %3974 = vmatpush1.msra.mxu0 0.0
    %3975 = vmatprep.subr.mxu0 0.0
    %3976 = vmatpush1.msra.mxu0 0.0
    %3977 = vmatprep.subr.mxu0 0.0
    %3978 = vmatpush1.msra.mxu0 0.0
    %3979 = vmatprep.subr.mxu0 0.0
    %3980 = vmatpush1.msra.mxu0 0.0
    %3981 = vmatprep.mubr.f32.mxu0 0.0
    %3982 = vmatmul.mubr.f32.gmra.mrb[0].mxu0 %v3915
    %v3983 = vpop.f32.mrb[0].mxu0
    %v3984 = vadd.f32 0.0, %v3983
    %v3985 = vpop.f32.mrb[0].mxu0
    %3986 = vdwg.mxu0
    %v3987 = vadd.f32 %v3909, %v3984
    %v3988 = vld [vmem:[#allocation24] sm:$0x1]
    %v3989 = vlaneseq
    %v3990 = vshrl.u32 %v3989, 7
    %v3991 = vsub.s32 0, %v3990
    %v3992 = vrot.slane %v3988, %v3991
    %v3993 = vadd.f32 %v3987, %v3992
    %v3994 = vmax.f32 %v3993, 0.0
    %v3995 = vld [vmem:[%s41] sm:$0xff]
    %v3996 = vld [vmem:[%s41 + $0x8] sm:$0xff]
    %v3997 = vld [vmem:[%s41 + $0x10] sm:$0xff]
    %v3998 = vld [vmem:[%s41 + $0x18] sm:$0xff]
    %v3999 = vld [vmem:[%s41 + $0x20] sm:$0xff]
    %v4000 = vld [vmem:[%s41 + $0x28] sm:$0xff]
    %v4001 = vld [vmem:[%s41 + $0x30] sm:$0xff]
    %v4002 = vld [vmem:[%s41 + $0x38] sm:$0xff]
    %v4003 = vld [vmem:[%s41 + $0x40] sm:$0xff]
    %v4004 = vld [vmem:[%s41 + $0x48] sm:$0xff]
    %v4005 = vld [vmem:[%s41 + $0x50] sm:$0xff]
    %v4006 = vld [vmem:[%s41 + $0x58] sm:$0xff]
    %v4007 = vld [vmem:[%s41 + $0x60] sm:$0xff]
    %v4008 = vld [vmem:[%s41 + $0x68] sm:$0xff]
    %v4009 = vld [vmem:[%s41 + $0x70] sm:$0xff]
    %v4010 = vld [vmem:[%s41 + $0x78] sm:$0xff]
    %4011 = vmatprep.subr.mxu0 0.0
    %4012 = vmatpush1.msra.mxu0 %v3994
    %4013 = vmatprep.subr.mxu0 0.0
    %4014 = vmatpush1.msra.mxu0 0.0
    %4015 = vmatprep.subr.mxu0 0.0
    %4016 = vmatpush1.msra.mxu0 0.0
    %4017 = vmatprep.subr.mxu0 0.0
    %4018 = vmatpush1.msra.mxu0 0.0
    %4019 = vmatprep.subr.mxu0 0.0
    %4020 = vmatpush1.msra.mxu0 0.0
    %4021 = vmatprep.subr.mxu0 0.0
    %4022 = vmatpush1.msra.mxu0 0.0
    %4023 = vmatprep.subr.mxu0 0.0
    %4024 = vmatpush1.msra.mxu0 0.0
    %4025 = vmatprep.subr.mxu0 0.0
    %4026 = vmatpush1.msra.mxu0 0.0
    %4027 = vmatprep.subr.mxu0 0.0
    %4028 = vmatpush1.msra.mxu0 0.0
    %4029 = vmatprep.subr.mxu0 0.0
    %4030 = vmatpush1.msra.mxu0 0.0
    %4031 = vmatprep.subr.mxu0 0.0
    %4032 = vmatpush1.msra.mxu0 0.0
    %4033 = vmatprep.subr.mxu0 0.0
    %4034 = vmatpush1.msra.mxu0 0.0
    %4035 = vmatprep.subr.mxu0 0.0
    %4036 = vmatpush1.msra.mxu0 0.0
    %4037 = vmatprep.subr.mxu0 0.0
    %4038 = vmatpush1.msra.mxu0 0.0
    %4039 = vmatprep.subr.mxu0 0.0
    %4040 = vmatpush1.msra.mxu0 0.0
    %4041 = vmatprep.subr.mxu0 0.0
    %4042 = vmatpush1.msra.mxu0 0.0
    %4043 = vmatprep.subr.mxu0 0.0
    %4044 = vmatpush1.msra.mxu0 0.0
    %4045 = vmatprep.subr.mxu0 0.0
    %4046 = vmatpush1.msra.mxu0 0.0
    %4047 = vmatprep.subr.mxu0 0.0
    %4048 = vmatpush1.msra.mxu0 0.0
    %4049 = vmatprep.subr.mxu0 0.0
    %4050 = vmatpush1.msra.mxu0 0.0
    %4051 = vmatprep.subr.mxu0 0.0
    %4052 = vmatpush1.msra.mxu0 0.0
    %4053 = vmatprep.subr.mxu0 0.0
    %4054 = vmatpush1.msra.mxu0 0.0
    %4055 = vmatprep.subr.mxu0 0.0
    %4056 = vmatpush1.msra.mxu0 0.0
    %4057 = vmatprep.subr.mxu0 0.0
    %4058 = vmatpush1.msra.mxu0 0.0
    %4059 = vmatprep.subr.mxu0 0.0
    %4060 = vmatpush1.msra.mxu0 0.0
    %4061 = vmatprep.subr.mxu0 0.0
    %4062 = vmatpush1.msra.mxu0 0.0
    %4063 = vmatprep.subr.mxu0 0.0
    %4064 = vmatpush1.msra.mxu0 0.0
    %4065 = vmatprep.subr.mxu0 0.0
    %4066 = vmatpush1.msra.mxu0 0.0
    %4067 = vmatprep.subr.mxu0 0.0
    %4068 = vmatpush1.msra.mxu0 0.0
    %4069 = vmatprep.subr.mxu0 0.0
    %4070 = vmatpush1.msra.mxu0 0.0
    %4071 = vmatprep.subr.mxu0 0.0
    %4072 = vmatpush1.msra.mxu0 0.0
    %4073 = vmatprep.subr.mxu0 0.0
    %4074 = vmatpush1.msra.mxu0 0.0
    %4075 = vmatprep.mubr.f32.mxu0 0.0
    %4076 = vmatmul.mubr.f32.gmra.mrb[0].mxu0 %v3272
    %v4077 = vpop.f32.mrb[0].mxu0
    %v4078 = vadd.f32 0.0, %v4077
    %v4079 = vpop.f32.mrb[0].mxu0
    %4080 = vdwg.mxu0
    %4081 = vmatprep.subr.mxu0 0.0
    %4082 = vmatpush1.msra.mxu0 %v3995
    %4083 = vmatprep.subr.mxu0 0.0
    %4084 = vmatpush1.msra.mxu0 %v3996
    %4085 = vmatprep.subr.mxu0 0.0
    %4086 = vmatpush1.msra.mxu0 %v3997
    %4087 = vmatprep.subr.mxu0 0.0
    %4088 = vmatpush1.msra.mxu0 %v3998
    %4089 = vmatprep.subr.mxu0 0.0
    %4090 = vmatpush1.msra.mxu0 %v3999
    %4091 = vmatprep.subr.mxu0 0.0
    %4092 = vmatpush1.msra.mxu0 %v4000
    %4093 = vmatprep.subr.mxu0 0.0
    %4094 = vmatpush1.msra.mxu0 %v4001
    %4095 = vmatprep.subr.mxu0 0.0
    %4096 = vmatpush1.msra.mxu0 %v4002
    %4097 = vmatprep.subr.mxu0 0.0
    %4098 = vmatpush1.msra.mxu0 %v4003
    %4099 = vmatprep.subr.mxu0 0.0
    %4100 = vmatpush1.msra.mxu0 %v4004
    %4101 = vmatprep.subr.mxu0 0.0
    %4102 = vmatpush1.msra.mxu0 %v4005
    %4103 = vmatprep.subr.mxu0 0.0
    %4104 = vmatpush1.msra.mxu0 %v4006
    %4105 = vmatprep.subr.mxu0 0.0
    %4106 = vmatpush1.msra.mxu0 %v4007
    %4107 = vmatprep.subr.mxu0 0.0
    %4108 = vmatpush1.msra.mxu0 %v4008
    %4109 = vmatprep.subr.mxu0 0.0
    %4110 = vmatpush1.msra.mxu0 %v4009
    %4111 = vmatprep.subr.mxu0 0.0
    %4112 = vmatpush1.msra.mxu0 %v4010
    %4113 = vmatprep.subr.mxu0 0.0
    %4114 = vmatpush1.msra.mxu0 0.0
    %4115 = vmatprep.subr.mxu0 0.0
    %4116 = vmatpush1.msra.mxu0 0.0
    %4117 = vmatprep.subr.mxu0 0.0
    %4118 = vmatpush1.msra.mxu0 0.0
    %4119 = vmatprep.subr.mxu0 0.0
    %4120 = vmatpush1.msra.mxu0 0.0
    %4121 = vmatprep.subr.mxu0 0.0
    %4122 = vmatpush1.msra.mxu0 0.0
    %4123 = vmatprep.subr.mxu0 0.0
    %4124 = vmatpush1.msra.mxu0 0.0
    %4125 = vmatprep.subr.mxu0 0.0
    %4126 = vmatpush1.msra.mxu0 0.0
    %4127 = vmatprep.subr.mxu0 0.0
    %4128 = vmatpush1.msra.mxu0 0.0
    %4129 = vmatprep.subr.mxu0 0.0
    %4130 = vmatpush1.msra.mxu0 0.0
    %4131 = vmatprep.subr.mxu0 0.0
    %4132 = vmatpush1.msra.mxu0 0.0
    %4133 = vmatprep.subr.mxu0 0.0
    %4134 = vmatpush1.msra.mxu0 0.0
    %4135 = vmatprep.subr.mxu0 0.0
    %4136 = vmatpush1.msra.mxu0 0.0
    %4137 = vmatprep.subr.mxu0 0.0
    %4138 = vmatpush1.msra.mxu0 0.0
    %4139 = vmatprep.subr.mxu0 0.0
    %4140 = vmatpush1.msra.mxu0 0.0
    %4141 = vmatprep.subr.mxu0 0.0
    %4142 = vmatpush1.msra.mxu0 0.0
    %4143 = vmatprep.subr.mxu0 0.0
    %4144 = vmatpush1.msra.mxu0 0.0
    %4145 = vmatprep.mubr.f32.mxu0 0.0
    %4146 = vmatmul.mubr.f32.gmra.mrb[0].mxu0 %v4078
    %v4147 = vpop.f32.mrb[0].mxu0
    %v4148 = vadd.f32 0.0, %v4147
    %v4149 = vpop.f32.mrb[0].mxu0
    %4150 = vdwg.mxu0
    %v4151 = vlaneseq
    %v4152 = vshrl.u32 %v4151, 7
    %v4153 = vsub.s32 0, %v4152
    %v4154 = vrot.slane %v4148, %v4153
    %v4155 = vsub.f32 %v3994, %v4154
    %v4156 = vmul.f32 %v4155, %v4155
    %4157 = vmatprep.subr.mxu0 0.0
    %4158 = vmatpush1.msra.mxu0 %v4156
    %4159 = vmatprep.subr.mxu0 0.0
    %4160 = vmatpush1.msra.mxu0 0.0
    %4161 = vmatprep.subr.mxu0 0.0
    %4162 = vmatpush1.msra.mxu0 0.0
    %4163 = vmatprep.subr.mxu0 0.0
    %4164 = vmatpush1.msra.mxu0 0.0
    %4165 = vmatprep.subr.mxu0 0.0
    %4166 = vmatpush1.msra.mxu0 0.0
    %4167 = vmatprep.subr.mxu0 0.0
    %4168 = vmatpush1.msra.mxu0 0.0
    %4169 = vmatprep.subr.mxu0 0.0
    %4170 = vmatpush1.msra.mxu0 0.0
    %4171 = vmatprep.subr.mxu0 0.0
    %4172 = vmatpush1.msra.mxu0 0.0
    %4173 = vmatprep.subr.mxu0 0.0
    %4174 = vmatpush1.msra.mxu0 0.0
    %4175 = vmatprep.subr.mxu0 0.0
    %4176 = vmatpush1.msra.mxu0 0.0
    %4177 = vmatprep.subr.mxu0 0.0
    %4178 = vmatpush1.msra.mxu0 0.0
    %4179 = vmatprep.subr.mxu0 0.0
    %4180 = vmatpush1.msra.mxu0 0.0
    %4181 = vmatprep.subr.mxu0 0.0
    %4182 = vmatpush1.msra.mxu0 0.0
    %4183 = vmatprep.subr.mxu0 0.0
    %4184 = vmatpush1.msra.mxu0 0.0
    %4185 = vmatprep.subr.mxu0 0.0
    %4186 = vmatpush1.msra.mxu0 0.0
    %4187 = vmatprep.subr.mxu0 0.0
    %4188 = vmatpush1.msra.mxu0 0.0
    %4189 = vmatprep.subr.mxu0 0.0
    %4190 = vmatpush1.msra.mxu0 0.0
    %4191 = vmatprep.subr.mxu0 0.0
    %4192 = vmatpush1.msra.mxu0 0.0
    %4193 = vmatprep.subr.mxu0 0.0
    %4194 = vmatpush1.msra.mxu0 0.0
    %4195 = vmatprep.subr.mxu0 0.0
    %4196 = vmatpush1.msra.mxu0 0.0
    %4197 = vmatprep.subr.mxu0 0.0
    %4198 = vmatpush1.msra.mxu0 0.0
    %4199 = vmatprep.subr.mxu0 0.0
    %4200 = vmatpush1.msra.mxu0 0.0
    %4201 = vmatprep.subr.mxu0 0.0
    %4202 = vmatpush1.msra.mxu0 0.0
    %4203 = vmatprep.subr.mxu0 0.0
    %4204 = vmatpush1.msra.mxu0 0.0
    %4205 = vmatprep.subr.mxu0 0.0
    %4206 = vmatpush1.msra.mxu0 0.0
    %4207 = vmatprep.subr.mxu0 0.0
    %4208 = vmatpush1.msra.mxu0 0.0
    %4209 = vmatprep.subr.mxu0 0.0
    %4210 = vmatpush1.msra.mxu0 0.0
    %4211 = vmatprep.subr.mxu0 0.0
    %4212 = vmatpush1.msra.mxu0 0.0
    %4213 = vmatprep.subr.mxu0 0.0
    %4214 = vmatpush1.msra.mxu0 0.0
    %4215 = vmatprep.subr.mxu0 0.0
    %4216 = vmatpush1.msra.mxu0 0.0
    %4217 = vmatprep.subr.mxu0 0.0
    %4218 = vmatpush1.msra.mxu0 0.0
    %4219 = vmatprep.subr.mxu0 0.0
    %4220 = vmatpush1.msra.mxu0 0.0
    %4221 = vmatprep.mubr.f32.mxu0 0.0
    %4222 = vmatmul.mubr.f32.gmra.mrb[0].mxu0 %v3272
    %v4223 = vpop.f32.mrb[0].mxu0
    %v4224 = vadd.f32 0.0, %v4223
    %v4225 = vpop.f32.mrb[0].mxu0
    %4226 = vdwg.mxu0
    %4227 = vmatprep.subr.mxu0 0.0
    %4228 = vmatpush1.msra.mxu0 %v3995
    %4229 = vmatprep.subr.mxu0 0.0
    %4230 = vmatpush1.msra.mxu0 %v3996
    %4231 = vmatprep.subr.mxu0 0.0
    %4232 = vmatpush1.msra.mxu0 %v3997
    %4233 = vmatprep.subr.mxu0 0.0
    %4234 = vmatpush1.msra.mxu0 %v3998
    %4235 = vmatprep.subr.mxu0 0.0
    %4236 = vmatpush1.msra.mxu0 %v3999
    %4237 = vmatprep.subr.mxu0 0.0
    %4238 = vmatpush1.msra.mxu0 %v4000
    %4239 = vmatprep.subr.mxu0 0.0
    %4240 = vmatpush1.msra.mxu0 %v4001
    %4241 = vmatprep.subr.mxu0 0.0
    %4242 = vmatpush1.msra.mxu0 %v4002
    %4243 = vmatprep.subr.mxu0 0.0
    %4244 = vmatpush1.msra.mxu0 %v4003
    %4245 = vmatprep.subr.mxu0 0.0
    %4246 = vmatpush1.msra.mxu0 %v4004
    %4247 = vmatprep.subr.mxu0 0.0
    %4248 = vmatpush1.msra.mxu0 %v4005
    %4249 = vmatprep.subr.mxu0 0.0
    %4250 = vmatpush1.msra.mxu0 %v4006
    %4251 = vmatprep.subr.mxu0 0.0
    %4252 = vmatpush1.msra.mxu0 %v4007
    %4253 = vmatprep.subr.mxu0 0.0
    %4254 = vmatpush1.msra.mxu0 %v4008
    %4255 = vmatprep.subr.mxu0 0.0
    %4256 = vmatpush1.msra.mxu0 %v4009
    %4257 = vmatprep.subr.mxu0 0.0
    %4258 = vmatpush1.msra.mxu0 %v4010
    %4259 = vmatprep.subr.mxu0 0.0
    %4260 = vmatpush1.msra.mxu0 0.0
    %4261 = vmatprep.subr.mxu0 0.0
    %4262 = vmatpush1.msra.mxu0 0.0
    %4263 = vmatprep.subr.mxu0 0.0
    %4264 = vmatpush1.msra.mxu0 0.0
    %4265 = vmatprep.subr.mxu0 0.0
    %4266 = vmatpush1.msra.mxu0 0.0
    %4267 = vmatprep.subr.mxu0 0.0
    %4268 = vmatpush1.msra.mxu0 0.0
    %4269 = vmatprep.subr.mxu0 0.0
    %4270 = vmatpush1.msra.mxu0 0.0
    %4271 = vmatprep.subr.mxu0 0.0
    %4272 = vmatpush1.msra.mxu0 0.0
    %4273 = vmatprep.subr.mxu0 0.0
    %4274 = vmatpush1.msra.mxu0 0.0
    %4275 = vmatprep.subr.mxu0 0.0
    %4276 = vmatpush1.msra.mxu0 0.0
    %4277 = vmatprep.subr.mxu0 0.0
    %4278 = vmatpush1.msra.mxu0 0.0
    %4279 = vmatprep.subr.mxu0 0.0
    %4280 = vmatpush1.msra.mxu0 0.0
    %4281 = vmatprep.subr.mxu0 0.0
    %4282 = vmatpush1.msra.mxu0 0.0
    %4283 = vmatprep.subr.mxu0 0.0
    %4284 = vmatpush1.msra.mxu0 0.0
    %4285 = vmatprep.subr.mxu0 0.0
    %4286 = vmatpush1.msra.mxu0 0.0
    %4287 = vmatprep.subr.mxu0 0.0
    %4288 = vmatpush1.msra.mxu0 0.0
    %4289 = vmatprep.subr.mxu0 0.0
    %4290 = vmatpush1.msra.mxu0 0.0
    %4291 = vmatprep.mubr.f32.mxu0 0.0
    %4292 = vmatmul.mubr.f32.gmra.mrb[0].mxu0 %v4224
    %v4293 = vpop.f32.mrb[0].mxu0
    %v4294 = vadd.f32 1e-05, %v4293
    %v4295 = vpop.f32.mrb[0].mxu0
    %4296 = vdwg.mxu0
    %v4297 = vrsqrt.pop %v4294
    %v4298 = vld [vmem:[#allocation24 + $0x1] sm:$0x1]
    %v4299 = vmul.f32 %v4297, %v4298
    %v4300 = vlaneseq
    %v4301 = vshrl.u32 %v4300, 7
    %v4302 = vsub.s32 0, %v4301
    %v4303 = vrot.slane %v4299, %v4302
    %v4304 = vmul.f32 %v4155, %v4303
    %v4305 = vld [vmem:[#allocation24 + $0x2] sm:$0x1]
    %v4306 = vlaneseq
    %v4307 = vshrl.u32 %v4306, 7
    %v4308 = vsub.s32 0, %v4307
    %v4309 = vrot.slane %v4305, %v4308
    %v4310 = vadd.f32 %v4304, %v4309
    %v4311 = vld [vmem:[#allocation25] sm:$0xff]
    %v4312 = vld [vmem:[#allocation25 + $0x8] sm:$0xff]
    %v4313 = vld [vmem:[#allocation25 + $0x10] sm:$0xff]
    %v4314 = vld [vmem:[#allocation25 + $0x18] sm:$0xff]
    %v4315 = vld [vmem:[#allocation25 + $0x20] sm:$0xff]
    %v4316 = vld [vmem:[#allocation25 + $0x28] sm:$0xff]
    %v4317 = vld [vmem:[#allocation25 + $0x30] sm:$0xff]
    %v4318 = vld [vmem:[#allocation25 + $0x38] sm:$0xff]
    %v4319 = vld [vmem:[#allocation25 + $0x40] sm:$0xff]
    %v4320 = vld [vmem:[#allocation25 + $0x48] sm:$0xff]
    %v4321 = vld [vmem:[#allocation25 + $0x50] sm:$0xff]
    %v4322 = vld [vmem:[#allocation25 + $0x58] sm:$0xff]
    %v4323 = vld [vmem:[#allocation25 + $0x60] sm:$0xff]
    %v4324 = vld [vmem:[#allocation25 + $0x68] sm:$0xff]
    %v4325 = vld [vmem:[#allocation25 + $0x70] sm:$0xff]
    %v4326 = vld [vmem:[#allocation25 + $0x78] sm:$0xff]
    %v4327 = vld [vmem:[#allocation25 + $0x80] sm:$0xff]
    %v4328 = vld [vmem:[#allocation25 + $0x88] sm:$0xff]
    %v4329 = vld [vmem:[#allocation25 + $0x90] sm:$0xff]
    %v4330 = vld [vmem:[#allocation25 + $0x98] sm:$0xff]
    %v4331 = vld [vmem:[#allocation25 + $0xa0] sm:$0xff]
    %v4332 = vld [vmem:[#allocation25 + $0xa8] sm:$0xff]
    %v4333 = vld [vmem:[#allocation25 + $0xb0] sm:$0xff]
    %v4334 = vld [vmem:[#allocation25 + $0xb8] sm:$0xff]
    %v4335 = vld [vmem:[#allocation25 + $0xc0] sm:$0xff]
    %v4336 = vld [vmem:[#allocation25 + $0xc8] sm:$0xff]
    %v4337 = vld [vmem:[#allocation25 + $0xd0] sm:$0xff]
    %v4338 = vld [vmem:[#allocation25 + $0xd8] sm:$0xff]
    %v4339 = vld [vmem:[#allocation25 + $0xe0] sm:$0xff]
    %v4340 = vld [vmem:[#allocation25 + $0xe8] sm:$0xff]
    %v4341 = vld [vmem:[#allocation25 + $0xf0] sm:$0xff]
    %v4342 = vld [vmem:[#allocation25 + $0xf8] sm:$0xff]
    %4343 = vmatprep.subr.mxu0 %v4312
    %4344 = vmatpush1.msra.mxu0 %v4311
    %4345 = vmatprep.subr.mxu0 %v4314
    %4346 = vmatpush1.msra.mxu0 %v4313
    %4347 = vmatprep.subr.mxu0 %v4316
    %4348 = vmatpush1.msra.mxu0 %v4315
    %4349 = vmatprep.subr.mxu0 %v4318
    %4350 = vmatpush1.msra.mxu0 %v4317
    %4351 = vmatprep.subr.mxu0 %v4320
    %4352 = vmatpush1.msra.mxu0 %v4319
    %4353 = vmatprep.subr.mxu0 %v4322
    %4354 = vmatpush1.msra.mxu0 %v4321
    %4355 = vmatprep.subr.mxu0 %v4324
    %4356 = vmatpush1.msra.mxu0 %v4323
    %4357 = vmatprep.subr.mxu0 %v4326
    %4358 = vmatpush1.msra.mxu0 %v4325
    %4359 = vmatprep.subr.mxu0 %v4328
    %4360 = vmatpush1.msra.mxu0 %v4327
    %4361 = vmatprep.subr.mxu0 %v4330
    %4362 = vmatpush1.msra.mxu0 %v4329
    %4363 = vmatprep.subr.mxu0 %v4332
    %4364 = vmatpush1.msra.mxu0 %v4331
    %4365 = vmatprep.subr.mxu0 %v4334
    %4366 = vmatpush1.msra.mxu0 %v4333
    %4367 = vmatprep.subr.mxu0 %v4336
    %4368 = vmatpush1.msra.mxu0 %v4335
    %4369 = vmatprep.subr.mxu0 %v4338
    %4370 = vmatpush1.msra.mxu0 %v4337
    %4371 = vmatprep.subr.mxu0 %v4340
    %4372 = vmatpush1.msra.mxu0 %v4339
    %4373 = vmatprep.subr.mxu0 %v4342
    %4374 = vmatpush1.msra.mxu0 %v4341
    %4375 = vmatprep.subr.mxu0 0.0
    %4376 = vmatpush1.msra.mxu0 0.0
    %4377 = vmatprep.subr.mxu0 0.0
    %4378 = vmatpush1.msra.mxu0 0.0
    %4379 = vmatprep.subr.mxu0 0.0
    %4380 = vmatpush1.msra.mxu0 0.0
    %4381 = vmatprep.subr.mxu0 0.0
    %4382 = vmatpush1.msra.mxu0 0.0
    %4383 = vmatprep.subr.mxu0 0.0
    %4384 = vmatpush1.msra.mxu0 0.0
    %4385 = vmatprep.subr.mxu0 0.0
    %4386 = vmatpush1.msra.mxu0 0.0
    %4387 = vmatprep.subr.mxu0 0.0
    %4388 = vmatpush1.msra.mxu0 0.0
    %4389 = vmatprep.subr.mxu0 0.0
    %4390 = vmatpush1.msra.mxu0 0.0
    %4391 = vmatprep.subr.mxu0 0.0
    %4392 = vmatpush1.msra.mxu0 0.0
    %4393 = vmatprep.subr.mxu0 0.0
    %4394 = vmatpush1.msra.mxu0 0.0
    %4395 = vmatprep.subr.mxu0 0.0
    %4396 = vmatpush1.msra.mxu0 0.0
    %4397 = vmatprep.subr.mxu0 0.0
    %4398 = vmatpush1.msra.mxu0 0.0
    %4399 = vmatprep.subr.mxu0 0.0
    %4400 = vmatpush1.msra.mxu0 0.0
    %4401 = vmatprep.subr.mxu0 0.0
    %4402 = vmatpush1.msra.mxu0 0.0
    %4403 = vmatprep.subr.mxu0 0.0
    %4404 = vmatpush1.msra.mxu0 0.0
    %4405 = vmatprep.subr.mxu0 0.0
    %4406 = vmatpush1.msra.mxu0 0.0
    %4407 = vmatprep.mubr.f32.mxu0 0.0
    %4408 = vmatmul.mubr.f32.gmra.mrb[0].mxu0 %v4310
    %v4409 = vpop.f32.mrb[0].mxu0
    %v4410 = vadd.f32 0.0, %v4409
    %v4411 = vpop.f32.mrb[0].mxu0
    %v4412 = vadd.f32 0.0, %v4411
    %4413 = vdwg.mxu0
    %v4414 = vld [vmem:[#allocation27] sm:$0xff]
    %v4415 = vld [vmem:[#allocation27 + $0x8] sm:$0xff]
    %s4416 = scalar_lea.vmem [#allocation27], 16
    %v4417 = vld [vmem:[%s4416] sm:$0xff]
    %v4418 = vld [vmem:[%s4416 + $0x8] sm:$0xff]
    %v4420 = vsel %vm3271, %v4417, 0
    %v4423 = vsel %vm3271, %v4418, 0
    %4425 = vmatprep.subr.mxu0 0.0
    %4426 = vmatpush1.msra.mxu0 %v4412
    %4427 = vmatprep.subr.mxu0 0.0
    %4428 = vmatpush1.msra.mxu0 0.0
    %4429 = vmatprep.subr.mxu0 0.0
    %4430 = vmatpush1.msra.mxu0 0.0
    %4431 = vmatprep.subr.mxu0 0.0
    %4432 = vmatpush1.msra.mxu0 0.0
    %4433 = vmatprep.subr.mxu0 0.0
    %4434 = vmatpush1.msra.mxu0 0.0
    %4435 = vmatprep.subr.mxu0 0.0
    %4436 = vmatpush1.msra.mxu0 0.0
    %4437 = vmatprep.subr.mxu0 0.0
    %4438 = vmatpush1.msra.mxu0 0.0
    %4439 = vmatprep.subr.mxu0 0.0
    %4440 = vmatpush1.msra.mxu0 0.0
    %4441 = vmatprep.subr.mxu0 0.0
    %4442 = vmatpush1.msra.mxu0 0.0
    %4443 = vmatprep.subr.mxu0 0.0
    %4444 = vmatpush1.msra.mxu0 0.0
    %4445 = vmatprep.subr.mxu0 0.0
    %4446 = vmatpush1.msra.mxu0 0.0
    %4447 = vmatprep.subr.mxu0 0.0
    %4448 = vmatpush1.msra.mxu0 0.0
    %4449 = vmatprep.subr.mxu0 0.0
    %4450 = vmatpush1.msra.mxu0 0.0
    %4451 = vmatprep.subr.mxu0 0.0
    %4452 = vmatpush1.msra.mxu0 0.0
    %4453 = vmatprep.subr.mxu0 0.0
    %4454 = vmatpush1.msra.mxu0 0.0
    %4455 = vmatprep.subr.mxu0 0.0
    %4456 = vmatpush1.msra.mxu0 0.0
    %4457 = vmatprep.subr.mxu0 0.0
    %4458 = vmatpush1.msra.mxu0 0.0
    %4459 = vmatprep.subr.mxu0 0.0
    %4460 = vmatpush1.msra.mxu0 0.0
    %4461 = vmatprep.subr.mxu0 0.0
    %4462 = vmatpush1.msra.mxu0 0.0
    %4463 = vmatprep.subr.mxu0 0.0
    %4464 = vmatpush1.msra.mxu0 0.0
    %4465 = vmatprep.subr.mxu0 0.0
    %4466 = vmatpush1.msra.mxu0 0.0
    %4467 = vmatprep.subr.mxu0 0.0
    %4468 = vmatpush1.msra.mxu0 0.0
    %4469 = vmatprep.subr.mxu0 0.0
    %4470 = vmatpush1.msra.mxu0 0.0
    %4471 = vmatprep.subr.mxu0 0.0
    %4472 = vmatpush1.msra.mxu0 0.0
    %4473 = vmatprep.subr.mxu0 0.0
    %4474 = vmatpush1.msra.mxu0 0.0
    %4475 = vmatprep.subr.mxu0 0.0
    %4476 = vmatpush1.msra.mxu0 0.0
    %4477 = vmatprep.subr.mxu0 0.0
    %4478 = vmatpush1.msra.mxu0 0.0
    %4479 = vmatprep.subr.mxu0 0.0
    %4480 = vmatpush1.msra.mxu0 0.0
    %4481 = vmatprep.subr.mxu0 0.0
    %4482 = vmatpush1.msra.mxu0 0.0
    %4483 = vmatprep.subr.mxu0 0.0
    %4484 = vmatpush1.msra.mxu0 0.0
    %4485 = vmatprep.subr.mxu0 0.0
    %4486 = vmatpush1.msra.mxu0 0.0
    %4487 = vmatprep.subr.mxu0 0.0
    %4488 = vmatpush1.msra.mxu0 0.0
    %4489 = vmatprep.mubr.f32.mxu0 0.0
    %4490 = vmatmul.mubr.f32.gmra.mrb[0].mxu0 %v4420
    %v4491 = vpop.f32.mrb[0].mxu0
    %v4492 = vadd.f32 0.0, %v4491
    %v4493 = vpop.f32.mrb[0].mxu0
    %4494 = vmatprep.mubr.f32.mxu0 0.0
    %4495 = vmatmul.mubr.f32.gmra.mrb[0].mxu0 %v4423
    %v4496 = vpop.f32.mrb[0].mxu0
    %v4497 = vadd.f32 0.0, %v4496
    %v4498 = vpop.f32.mrb[0].mxu0
    %4499 = vdwg.mxu0
    %v4501 = vsel %vm3271, %v4414, 0
    %v4504 = vsel %vm3271, %v4415, 0
    %4506 = vmatprep.subr.mxu0 0.0
    %4507 = vmatpush1.msra.mxu0 %v4410
    %4508 = vmatprep.subr.mxu0 0.0
    %4509 = vmatpush1.msra.mxu0 0.0
    %4510 = vmatprep.subr.mxu0 0.0
    %4511 = vmatpush1.msra.mxu0 0.0
    %4512 = vmatprep.subr.mxu0 0.0
    %4513 = vmatpush1.msra.mxu0 0.0
    %4514 = vmatprep.subr.mxu0 0.0
    %4515 = vmatpush1.msra.mxu0 0.0
    %4516 = vmatprep.subr.mxu0 0.0
    %4517 = vmatpush1.msra.mxu0 0.0
    %4518 = vmatprep.subr.mxu0 0.0
    %4519 = vmatpush1.msra.mxu0 0.0
    %4520 = vmatprep.subr.mxu0 0.0
    %4521 = vmatpush1.msra.mxu0 0.0
    %4522 = vmatprep.subr.mxu0 0.0
    %4523 = vmatpush1.msra.mxu0 0.0
    %4524 = vmatprep.subr.mxu0 0.0
    %4525 = vmatpush1.msra.mxu0 0.0
    %4526 = vmatprep.subr.mxu0 0.0
    %4527 = vmatpush1.msra.mxu0 0.0
    %4528 = vmatprep.subr.mxu0 0.0
    %4529 = vmatpush1.msra.mxu0 0.0
    %4530 = vmatprep.subr.mxu0 0.0
    %4531 = vmatpush1.msra.mxu0 0.0
    %4532 = vmatprep.subr.mxu0 0.0
    %4533 = vmatpush1.msra.mxu0 0.0
    %4534 = vmatprep.subr.mxu0 0.0
    %4535 = vmatpush1.msra.mxu0 0.0
    %4536 = vmatprep.subr.mxu0 0.0
    %4537 = vmatpush1.msra.mxu0 0.0
    %4538 = vmatprep.subr.mxu0 0.0
    %4539 = vmatpush1.msra.mxu0 0.0
    %4540 = vmatprep.subr.mxu0 0.0
    %4541 = vmatpush1.msra.mxu0 0.0
    %4542 = vmatprep.subr.mxu0 0.0
    %4543 = vmatpush1.msra.mxu0 0.0
    %4544 = vmatprep.subr.mxu0 0.0
    %4545 = vmatpush1.msra.mxu0 0.0
    %4546 = vmatprep.subr.mxu0 0.0
    %4547 = vmatpush1.msra.mxu0 0.0
    %4548 = vmatprep.subr.mxu0 0.0
    %4549 = vmatpush1.msra.mxu0 0.0
    %4550 = vmatprep.subr.mxu0 0.0
    %4551 = vmatpush1.msra.mxu0 0.0
    %4552 = vmatprep.subr.mxu0 0.0
    %4553 = vmatpush1.msra.mxu0 0.0
    %4554 = vmatprep.subr.mxu0 0.0
    %4555 = vmatpush1.msra.mxu0 0.0
    %4556 = vmatprep.subr.mxu0 0.0
    %4557 = vmatpush1.msra.mxu0 0.0
    %4558 = vmatprep.subr.mxu0 0.0
    %4559 = vmatpush1.msra.mxu0 0.0
    %4560 = vmatprep.subr.mxu0 0.0
    %4561 = vmatpush1.msra.mxu0 0.0
    %4562 = vmatprep.subr.mxu0 0.0
    %4563 = vmatpush1.msra.mxu0 0.0
    %4564 = vmatprep.subr.mxu0 0.0
    %4565 = vmatpush1.msra.mxu0 0.0
    %4566 = vmatprep.subr.mxu0 0.0
    %4567 = vmatpush1.msra.mxu0 0.0
    %4568 = vmatprep.subr.mxu0 0.0
    %4569 = vmatpush1.msra.mxu0 0.0
    %4570 = vmatprep.mubr.f32.mxu0 0.0
    %4571 = vmatmul.mubr.f32.gmra.mrb[0].mxu0 %v4501
    %v4572 = vpop.f32.mrb[0].mxu0
    %v4573 = vadd.f32 %v4492, %v4572
    %v4574 = vpop.f32.mrb[0].mxu0
    %4575 = vmatprep.mubr.f32.mxu0 0.0
    %4576 = vmatmul.mubr.f32.gmra.mrb[0].mxu0 %v4504
    %v4577 = vpop.f32.mrb[0].mxu0
    %v4578 = vadd.f32 %v4497, %v4577
    %v4579 = vpop.f32.mrb[0].mxu0
    %4580 = vdwg.mxu0
    %v4581 = vld [vmem:[#allocation28] sm:$0x1]
    %v4583 = vlaneseq
    %v4584 = vshrl.u32 %v4583, 7
    %v4585 = vsub.s32 0, %v4584
    %v4586 = vrot.slane %v4581, %v4585
    %v4588 = vadd.f32 %v4573, %v4586
    %v4589 = vadd.f32 %v4578, %v4586
    %v4590 = vld [vmem:[#allocation30] sm:$0xff]
    %v4591 = vld [vmem:[#allocation30 + $0x8] sm:$0xff]
    %v4592 = vld [vmem:[#allocation30 + $0x10] sm:$0xff]
    %v4593 = vld [vmem:[#allocation30 + $0x18] sm:$0xff]
    %v4594 = vld [vmem:[#allocation30 + $0x20] sm:$0xff]
    %v4595 = vld [vmem:[#allocation30 + $0x28] sm:$0xff]
    %v4596 = vld [vmem:[#allocation30 + $0x30] sm:$0xff]
    %v4597 = vld [vmem:[#allocation30 + $0x38] sm:$0xff]
    %v4598 = vld [vmem:[#allocation30 + $0x40] sm:$0xff]
    %v4599 = vld [vmem:[#allocation30 + $0x48] sm:$0xff]
    %v4600 = vld [vmem:[#allocation30 + $0x50] sm:$0xff]
    %v4601 = vld [vmem:[#allocation30 + $0x58] sm:$0xff]
    %v4602 = vld [vmem:[#allocation30 + $0x60] sm:$0xff]
    %v4603 = vld [vmem:[#allocation30 + $0x68] sm:$0xff]
    %v4604 = vld [vmem:[#allocation30 + $0x70] sm:$0xff]
    %v4605 = vld [vmem:[#allocation30 + $0x78] sm:$0xff]
    %v4606 = vld [vmem:[#allocation30 + $0x80] sm:$0xff]
    %v4607 = vld [vmem:[#allocation30 + $0x88] sm:$0xff]
    %v4608 = vld [vmem:[#allocation30 + $0x90] sm:$0xff]
    %v4609 = vld [vmem:[#allocation30 + $0x98] sm:$0xff]
    %v4610 = vld [vmem:[#allocation30 + $0xa0] sm:$0xff]
    %v4611 = vld [vmem:[#allocation30 + $0xa8] sm:$0xff]
    %v4612 = vld [vmem:[#allocation30 + $0xb0] sm:$0xff]
    %v4613 = vld [vmem:[#allocation30 + $0xb8] sm:$0xff]
    %v4614 = vld [vmem:[#allocation30 + $0xc0] sm:$0xff]
    %v4615 = vld [vmem:[#allocation30 + $0xc8] sm:$0xff]
    %v4616 = vld [vmem:[#allocation30 + $0xd0] sm:$0xff]
    %v4617 = vld [vmem:[#allocation30 + $0xd8] sm:$0xff]
    %v4618 = vld [vmem:[#allocation30 + $0xe0] sm:$0xff]
    %v4619 = vld [vmem:[#allocation30 + $0xe8] sm:$0xff]
    %v4620 = vld [vmem:[#allocation30 + $0xf0] sm:$0xff]
    %v4621 = vld [vmem:[#allocation30 + $0xf8] sm:$0xff]
    %v4622 = vld [vmem:[#allocation30 + $0x100] sm:$0xff]
    %v4623 = vld [vmem:[#allocation30 + $0x108] sm:$0xff]
    %v4624 = vld [vmem:[#allocation30 + $0x110] sm:$0xff]
    %v4625 = vld [vmem:[#allocation30 + $0x118] sm:$0xff]
    %v4626 = vld [vmem:[#allocation30 + $0x120] sm:$0xff]
    %v4627 = vld [vmem:[#allocation30 + $0x128] sm:$0xff]
    %v4628 = vld [vmem:[#allocation30 + $0x130] sm:$0xff]
    %v4629 = vld [vmem:[#allocation30 + $0x138] sm:$0xff]
    %v4630 = vld [vmem:[#allocation30 + $0x140] sm:$0xff]
    %v4631 = vld [vmem:[#allocation30 + $0x148] sm:$0xff]
    %v4632 = vld [vmem:[#allocation30 + $0x150] sm:$0xff]
    %v4633 = vld [vmem:[#allocation30 + $0x158] sm:$0xff]
    %v4634 = vld [vmem:[#allocation30 + $0x160] sm:$0xff]
    %v4635 = vld [vmem:[#allocation30 + $0x168] sm:$0xff]
    %v4636 = vld [vmem:[#allocation30 + $0x170] sm:$0xff]
    %v4637 = vld [vmem:[#allocation30 + $0x178] sm:$0xff]
    %v4638 = vld [vmem:[#allocation30 + $0x180] sm:$0xff]
    %v4639 = vld [vmem:[#allocation30 + $0x188] sm:$0xff]
    %v4640 = vld [vmem:[#allocation30 + $0x190] sm:$0xff]
    %v4641 = vld [vmem:[#allocation30 + $0x198] sm:$0xff]
    %v4642 = vld [vmem:[#allocation30 + $0x1a0] sm:$0xff]
    %v4643 = vld [vmem:[#allocation30 + $0x1a8] sm:$0xff]
    %v4644 = vld [vmem:[#allocation30 + $0x1b0] sm:$0xff]
    %v4645 = vld [vmem:[#allocation30 + $0x1b8] sm:$0xff]
    %v4646 = vld [vmem:[#allocation30 + $0x1c0] sm:$0xff]
    %v4647 = vld [vmem:[#allocation30 + $0x1c8] sm:$0xff]
    %v4648 = vld [vmem:[#allocation30 + $0x1d0] sm:$0xff]
    %v4649 = vld [vmem:[#allocation30 + $0x1d8] sm:$0xff]
    %v4650 = vld [vmem:[#allocation30 + $0x1e0] sm:$0xff]
    %v4651 = vld [vmem:[#allocation30 + $0x1e8] sm:$0xff]
    %v4652 = vld [vmem:[#allocation30 + $0x1f0] sm:$0xff]
    %v4653 = vld [vmem:[#allocation30 + $0x1f8] sm:$0xff]
    %v4654 = vld [vmem:[#allocation30 + $0x200] sm:$0xff]
    %v4655 = vld [vmem:[#allocation30 + $0x208] sm:$0xff]
    %v4656 = vld [vmem:[#allocation30 + $0x210] sm:$0xff]
    %v4657 = vld [vmem:[#allocation30 + $0x218] sm:$0xff]
    %v4658 = vld [vmem:[#allocation30 + $0x220] sm:$0xff]
    %v4659 = vld [vmem:[#allocation30 + $0x228] sm:$0xff]
    %v4660 = vld [vmem:[#allocation30 + $0x230] sm:$0xff]
    %v4661 = vld [vmem:[#allocation30 + $0x238] sm:$0xff]
    %v4662 = vld [vmem:[#allocation30 + $0x240] sm:$0xff]
    %v4663 = vld [vmem:[#allocation30 + $0x248] sm:$0xff]
    %v4664 = vld [vmem:[#allocation30 + $0x250] sm:$0xff]
    %v4665 = vld [vmem:[#allocation30 + $0x258] sm:$0xff]
    %v4666 = vld [vmem:[#allocation30 + $0x260] sm:$0xff]
    %v4667 = vld [vmem:[#allocation30 + $0x268] sm:$0xff]
    %v4668 = vld [vmem:[#allocation30 + $0x270] sm:$0xff]
    %v4669 = vld [vmem:[#allocation30 + $0x278] sm:$0xff]
    %v4670 = vld [vmem:[#allocation30 + $0x280] sm:$0xff]
    %v4671 = vld [vmem:[#allocation30 + $0x288] sm:$0xff]
    %v4672 = vld [vmem:[#allocation30 + $0x290] sm:$0xff]
    %v4673 = vld [vmem:[#allocation30 + $0x298] sm:$0xff]
    %v4674 = vld [vmem:[#allocation30 + $0x2a0] sm:$0xff]
    %v4675 = vld [vmem:[#allocation30 + $0x2a8] sm:$0xff]
    %v4676 = vld [vmem:[#allocation30 + $0x2b0] sm:$0xff]
    %v4677 = vld [vmem:[#allocation30 + $0x2b8] sm:$0xff]
    %v4678 = vld [vmem:[#allocation30 + $0x2c0] sm:$0xff]
    %v4679 = vld [vmem:[#allocation30 + $0x2c8] sm:$0xff]
    %v4680 = vld [vmem:[#allocation30 + $0x2d0] sm:$0xff]
    %v4681 = vld [vmem:[#allocation30 + $0x2d8] sm:$0xff]
    %v4682 = vld [vmem:[#allocation30 + $0x2e0] sm:$0xff]
    %v4683 = vld [vmem:[#allocation30 + $0x2e8] sm:$0xff]
    %v4684 = vld [vmem:[#allocation30 + $0x2f0] sm:$0xff]
    %v4685 = vld [vmem:[#allocation30 + $0x2f8] sm:$0xff]
    %4686 = vmatprep.subr.mxu0 %v4639
    %4687 = vmatpush1.msra.mxu0 %v4638
    %4688 = vmatprep.subr.mxu0 %v4642
    %4689 = vmatpush1.msra.mxu0 %v4641
    %4690 = vmatprep.subr.mxu0 %v4645
    %4691 = vmatpush1.msra.mxu0 %v4644
    %4692 = vmatprep.subr.mxu0 %v4648
    %4693 = vmatpush1.msra.mxu0 %v4647
    %4694 = vmatprep.subr.mxu0 %v4651
    %4695 = vmatpush1.msra.mxu0 %v4650
    %4696 = vmatprep.subr.mxu0 %v4654
    %4697 = vmatpush1.msra.mxu0 %v4653
    %4698 = vmatprep.subr.mxu0 %v4657
    %4699 = vmatpush1.msra.mxu0 %v4656
    %4700 = vmatprep.subr.mxu0 %v4660
    %4701 = vmatpush1.msra.mxu0 %v4659
    %4702 = vmatprep.subr.mxu0 %v4663
    %4703 = vmatpush1.msra.mxu0 %v4662
    %4704 = vmatprep.subr.mxu0 %v4666
    %4705 = vmatpush1.msra.mxu0 %v4665
    %4706 = vmatprep.subr.mxu0 %v4669
    %4707 = vmatpush1.msra.mxu0 %v4668
    %4708 = vmatprep.subr.mxu0 %v4672
    %4709 = vmatpush1.msra.mxu0 %v4671
    %4710 = vmatprep.subr.mxu0 %v4675
    %4711 = vmatpush1.msra.mxu0 %v4674
    %4712 = vmatprep.subr.mxu0 %v4678
    %4713 = vmatpush1.msra.mxu0 %v4677
    %4714 = vmatprep.subr.mxu0 %v4681
    %4715 = vmatpush1.msra.mxu0 %v4680
    %4716 = vmatprep.subr.mxu0 %v4684
    %4717 = vmatpush1.msra.mxu0 %v4683
    %4718 = vmatprep.subr.mxu0 0.0
    %4719 = vmatpush1.msra.mxu0 0.0
    %4720 = vmatprep.subr.mxu0 0.0
    %4721 = vmatpush1.msra.mxu0 0.0
    %4722 = vmatprep.subr.mxu0 0.0
    %4723 = vmatpush1.msra.mxu0 0.0
    %4724 = vmatprep.subr.mxu0 0.0
    %4725 = vmatpush1.msra.mxu0 0.0
    %4726 = vmatprep.subr.mxu0 0.0
    %4727 = vmatpush1.msra.mxu0 0.0
    %4728 = vmatprep.subr.mxu0 0.0
    %4729 = vmatpush1.msra.mxu0 0.0
    %4730 = vmatprep.subr.mxu0 0.0
    %4731 = vmatpush1.msra.mxu0 0.0
    %4732 = vmatprep.subr.mxu0 0.0
    %4733 = vmatpush1.msra.mxu0 0.0
    %4734 = vmatprep.subr.mxu0 0.0
    %4735 = vmatpush1.msra.mxu0 0.0
    %4736 = vmatprep.subr.mxu0 0.0
    %4737 = vmatpush1.msra.mxu0 0.0
    %4738 = vmatprep.subr.mxu0 0.0
    %4739 = vmatpush1.msra.mxu0 0.0
    %4740 = vmatprep.subr.mxu0 0.0
    %4741 = vmatpush1.msra.mxu0 0.0
    %4742 = vmatprep.subr.mxu0 0.0
    %4743 = vmatpush1.msra.mxu0 0.0
    %4744 = vmatprep.subr.mxu0 0.0
    %4745 = vmatpush1.msra.mxu0 0.0
    %4746 = vmatprep.subr.mxu0 0.0
    %4747 = vmatpush1.msra.mxu0 0.0
    %4748 = vmatprep.subr.mxu0 0.0
    %4749 = vmatpush1.msra.mxu0 0.0
    %4750 = vmatprep.mubr.f32.mxu0 0.0
    %4751 = vmatmul.mubr.f32.gmra.mrb[0].mxu0 %v4588
    %v4752 = vpop.f32.mrb[0].mxu0
    %v4753 = vadd.f32 0.0, %v4752
    %v4754 = vpop.f32.mrb[0].mxu0
    %v4755 = vadd.f32 0.0, %v4754
    %4756 = vmatprep.mubr.f32.mxu0 0.0
    %4757 = vmatmul.mubr.f32.gmra.mrb[0].mxu0 %v4589
    %v4758 = vpop.f32.mrb[0].mxu0
    %v4759 = vadd.f32 0.0, %v4758
    %v4760 = vpop.f32.mrb[0].mxu0
    %v4761 = vadd.f32 0.0, %v4760
    %4762 = vdwg.mxu0
    %4763 = vmatprep.subr.mxu0 0.0
    %4764 = vmatpush1.msra.mxu0 %v4640
    %4765 = vmatprep.subr.mxu0 0.0
    %4766 = vmatpush1.msra.mxu0 %v4643
    %4767 = vmatprep.subr.mxu0 0.0
    %4768 = vmatpush1.msra.mxu0 %v4646
    %4769 = vmatprep.subr.mxu0 0.0
    %4770 = vmatpush1.msra.mxu0 %v4649
    %4771 = vmatprep.subr.mxu0 0.0
    %4772 = vmatpush1.msra.mxu0 %v4652
    %4773 = vmatprep.subr.mxu0 0.0
    %4774 = vmatpush1.msra.mxu0 %v4655
    %4775 = vmatprep.subr.mxu0 0.0
    %4776 = vmatpush1.msra.mxu0 %v4658
    %4777 = vmatprep.subr.mxu0 0.0
    %4778 = vmatpush1.msra.mxu0 %v4661
    %4779 = vmatprep.subr.mxu0 0.0
    %4780 = vmatpush1.msra.mxu0 %v4664
    %4781 = vmatprep.subr.mxu0 0.0
    %4782 = vmatpush1.msra.mxu0 %v4667
    %4783 = vmatprep.subr.mxu0 0.0
    %4784 = vmatpush1.msra.mxu0 %v4670
    %4785 = vmatprep.subr.mxu0 0.0
    %4786 = vmatpush1.msra.mxu0 %v4673
    %4787 = vmatprep.subr.mxu0 0.0
    %4788 = vmatpush1.msra.mxu0 %v4676
    %4789 = vmatprep.subr.mxu0 0.0
    %4790 = vmatpush1.msra.mxu0 %v4679
    %4791 = vmatprep.subr.mxu0 0.0
    %4792 = vmatpush1.msra.mxu0 %v4682
    %4793 = vmatprep.subr.mxu0 0.0
    %4794 = vmatpush1.msra.mxu0 %v4685
    %4795 = vmatprep.subr.mxu0 0.0
    %4796 = vmatpush1.msra.mxu0 0.0
    %4797 = vmatprep.subr.mxu0 0.0
    %4798 = vmatpush1.msra.mxu0 0.0
    %4799 = vmatprep.subr.mxu0 0.0
    %4800 = vmatpush1.msra.mxu0 0.0
    %4801 = vmatprep.subr.mxu0 0.0
    %4802 = vmatpush1.msra.mxu0 0.0
    %4803 = vmatprep.subr.mxu0 0.0
    %4804 = vmatpush1.msra.mxu0 0.0
    %4805 = vmatprep.subr.mxu0 0.0
    %4806 = vmatpush1.msra.mxu0 0.0
    %4807 = vmatprep.subr.mxu0 0.0
    %4808 = vmatpush1.msra.mxu0 0.0
    %4809 = vmatprep.subr.mxu0 0.0
    %4810 = vmatpush1.msra.mxu0 0.0
    %4811 = vmatprep.subr.mxu0 0.0
    %4812 = vmatpush1.msra.mxu0 0.0
    %4813 = vmatprep.subr.mxu0 0.0
    %4814 = vmatpush1.msra.mxu0 0.0
    %4815 = vmatprep.subr.mxu0 0.0
    %4816 = vmatpush1.msra.mxu0 0.0
    %4817 = vmatprep.subr.mxu0 0.0
    %4818 = vmatpush1.msra.mxu0 0.0
    %4819 = vmatprep.subr.mxu0 0.0
    %4820 = vmatpush1.msra.mxu0 0.0
    %4821 = vmatprep.subr.mxu0 0.0
    %4822 = vmatpush1.msra.mxu0 0.0
    %4823 = vmatprep.subr.mxu0 0.0
    %4824 = vmatpush1.msra.mxu0 0.0
    %4825 = vmatprep.subr.mxu0 0.0
    %4826 = vmatpush1.msra.mxu0 0.0
    %4827 = vmatprep.mubr.f32.mxu0 0.0
    %4828 = vmatmul.mubr.f32.gmra.mrb[0].mxu0 %v4588
    %v4829 = vpop.f32.mrb[0].mxu0
    %v4830 = vadd.f32 0.0, %v4829
    %v4831 = vpop.f32.mrb[0].mxu0
    %4832 = vmatprep.mubr.f32.mxu0 0.0
    %4833 = vmatmul.mubr.f32.gmra.mrb[0].mxu0 %v4589
    %v4834 = vpop.f32.mrb[0].mxu0
    %v4835 = vadd.f32 0.0, %v4834
    %v4836 = vpop.f32.mrb[0].mxu0
    %4837 = vdwg.mxu0
    %4838 = vmatprep.subr.mxu0 %v4591
    %4839 = vmatpush1.msra.mxu0 %v4590
    %4840 = vmatprep.subr.mxu0 %v4594
    %4841 = vmatpush1.msra.mxu0 %v4593
    %4842 = vmatprep.subr.mxu0 %v4597
    %4843 = vmatpush1.msra.mxu0 %v4596
    %4844 = vmatprep.subr.mxu0 %v4600
    %4845 = vmatpush1.msra.mxu0 %v4599
    %4846 = vmatprep.subr.mxu0 %v4603
    %4847 = vmatpush1.msra.mxu0 %v4602
    %4848 = vmatprep.subr.mxu0 %v4606
    %4849 = vmatpush1.msra.mxu0 %v4605
    %4850 = vmatprep.subr.mxu0 %v4609
    %4851 = vmatpush1.msra.mxu0 %v4608
    %4852 = vmatprep.subr.mxu0 %v4612
    %4853 = vmatpush1.msra.mxu0 %v4611
    %4854 = vmatprep.subr.mxu0 %v4615
    %4855 = vmatpush1.msra.mxu0 %v4614
    %4856 = vmatprep.subr.mxu0 %v4618
    %4857 = vmatpush1.msra.mxu0 %v4617
    %4858 = vmatprep.subr.mxu0 %v4621
    %4859 = vmatpush1.msra.mxu0 %v4620
    %4860 = vmatprep.subr.mxu0 %v4624
    %4861 = vmatpush1.msra.mxu0 %v4623
    %4862 = vmatprep.subr.mxu0 %v4627
    %4863 = vmatpush1.msra.mxu0 %v4626
    %4864 = vmatprep.subr.mxu0 %v4630
    %4865 = vmatpush1.msra.mxu0 %v4629
    %4866 = vmatprep.subr.mxu0 %v4633
    %4867 = vmatpush1.msra.mxu0 %v4632
    %4868 = vmatprep.subr.mxu0 %v4636
    %4869 = vmatpush1.msra.mxu0 %v4635
    %4870 = vmatprep.subr.mxu0 0.0
    %4871 = vmatpush1.msra.mxu0 0.0
    %4872 = vmatprep.subr.mxu0 0.0
    %4873 = vmatpush1.msra.mxu0 0.0
    %4874 = vmatprep.subr.mxu0 0.0
    %4875 = vmatpush1.msra.mxu0 0.0
    %4876 = vmatprep.subr.mxu0 0.0
    %4877 = vmatpush1.msra.mxu0 0.0
    %4878 = vmatprep.subr.mxu0 0.0
    %4879 = vmatpush1.msra.mxu0 0.0
    %4880 = vmatprep.subr.mxu0 0.0
    %4881 = vmatpush1.msra.mxu0 0.0
    %4882 = vmatprep.subr.mxu0 0.0
    %4883 = vmatpush1.msra.mxu0 0.0
    %4884 = vmatprep.subr.mxu0 0.0
    %4885 = vmatpush1.msra.mxu0 0.0
    %4886 = vmatprep.subr.mxu0 0.0
    %4887 = vmatpush1.msra.mxu0 0.0
    %4888 = vmatprep.subr.mxu0 0.0
    %4889 = vmatpush1.msra.mxu0 0.0
    %4890 = vmatprep.subr.mxu0 0.0
    %4891 = vmatpush1.msra.mxu0 0.0
    %4892 = vmatprep.subr.mxu0 0.0
    %4893 = vmatpush1.msra.mxu0 0.0
    %4894 = vmatprep.subr.mxu0 0.0
    %4895 = vmatpush1.msra.mxu0 0.0
    %4896 = vmatprep.subr.mxu0 0.0
    %4897 = vmatpush1.msra.mxu0 0.0
    %4898 = vmatprep.subr.mxu0 0.0
    %4899 = vmatpush1.msra.mxu0 0.0
    %4900 = vmatprep.subr.mxu0 0.0
    %4901 = vmatpush1.msra.mxu0 0.0
    %4902 = vmatprep.mubr.f32.mxu0 0.0
    %4903 = vmatmul.mubr.f32.gmra.mrb[0].mxu0 %v2821
    %v4904 = vpop.f32.mrb[0].mxu0
    %v4905 = vadd.f32 %v4753, %v4904
    %v4906 = vpop.f32.mrb[0].mxu0
    %v4907 = vadd.f32 %v4755, %v4906
    %4908 = vmatprep.mubr.f32.mxu0 0.0
    %4909 = vmatmul.mubr.f32.gmra.mrb[0].mxu0 %v2822
    %v4910 = vpop.f32.mrb[0].mxu0
    %v4911 = vadd.f32 %v4759, %v4910
    %v4912 = vpop.f32.mrb[0].mxu0
    %v4913 = vadd.f32 %v4761, %v4912
    %4914 = vdwg.mxu0
    %4915 = vmatprep.subr.mxu0 0.0
    %4916 = vmatpush1.msra.mxu0 %v4592
    %4917 = vmatprep.subr.mxu0 0.0
    %4918 = vmatpush1.msra.mxu0 %v4595
    %4919 = vmatprep.subr.mxu0 0.0
    %4920 = vmatpush1.msra.mxu0 %v4598
    %4921 = vmatprep.subr.mxu0 0.0
    %4922 = vmatpush1.msra.mxu0 %v4601
    %4923 = vmatprep.subr.mxu0 0.0
    %4924 = vmatpush1.msra.mxu0 %v4604
    %4925 = vmatprep.subr.mxu0 0.0
    %4926 = vmatpush1.msra.mxu0 %v4607
    %4927 = vmatprep.subr.mxu0 0.0
    %4928 = vmatpush1.msra.mxu0 %v4610
    %4929 = vmatprep.subr.mxu0 0.0
    %4930 = vmatpush1.msra.mxu0 %v4613
    %4931 = vmatprep.subr.mxu0 0.0
    %4932 = vmatpush1.msra.mxu0 %v4616
    %4933 = vmatprep.subr.mxu0 0.0
    %4934 = vmatpush1.msra.mxu0 %v4619
    %4935 = vmatprep.subr.mxu0 0.0
    %4936 = vmatpush1.msra.mxu0 %v4622
    %4937 = vmatprep.subr.mxu0 0.0
    %4938 = vmatpush1.msra.mxu0 %v4625
    %4939 = vmatprep.subr.mxu0 0.0
    %4940 = vmatpush1.msra.mxu0 %v4628
    %4941 = vmatprep.subr.mxu0 0.0
    %4942 = vmatpush1.msra.mxu0 %v4631
    %4943 = vmatprep.subr.mxu0 0.0
    %4944 = vmatpush1.msra.mxu0 %v4634
    %4945 = vmatprep.subr.mxu0 0.0
    %4946 = vmatpush1.msra.mxu0 %v4637
    %4947 = vmatprep.subr.mxu0 0.0
    %4948 = vmatpush1.msra.mxu0 0.0
    %4949 = vmatprep.subr.mxu0 0.0
    %4950 = vmatpush1.msra.mxu0 0.0
    %4951 = vmatprep.subr.mxu0 0.0
    %4952 = vmatpush1.msra.mxu0 0.0
    %4953 = vmatprep.subr.mxu0 0.0
    %4954 = vmatpush1.msra.mxu0 0.0
    %4955 = vmatprep.subr.mxu0 0.0
    %4956 = vmatpush1.msra.mxu0 0.0
    %4957 = vmatprep.subr.mxu0 0.0
    %4958 = vmatpush1.msra.mxu0 0.0
    %4959 = vmatprep.subr.mxu0 0.0
    %4960 = vmatpush1.msra.mxu0 0.0
    %4961 = vmatprep.subr.mxu0 0.0
    %4962 = vmatpush1.msra.mxu0 0.0
    %4963 = vmatprep.subr.mxu0 0.0
    %4964 = vmatpush1.msra.mxu0 0.0
    %4965 = vmatprep.subr.mxu0 0.0
    %4966 = vmatpush1.msra.mxu0 0.0
    %4967 = vmatprep.subr.mxu0 0.0
    %4968 = vmatpush1.msra.mxu0 0.0
    %4969 = vmatprep.subr.mxu0 0.0
    %4970 = vmatpush1.msra.mxu0 0.0
    %4971 = vmatprep.subr.mxu0 0.0
    %4972 = vmatpush1.msra.mxu0 0.0
    %4973 = vmatprep.subr.mxu0 0.0
    %4974 = vmatpush1.msra.mxu0 0.0
    %4975 = vmatprep.subr.mxu0 0.0
    %4976 = vmatpush1.msra.mxu0 0.0
    %4977 = vmatprep.subr.mxu0 0.0
    %4978 = vmatpush1.msra.mxu0 0.0
    %4979 = vmatprep.mubr.f32.mxu0 0.0
    %4980 = vmatmul.mubr.f32.gmra.mrb[0].mxu0 %v2821
    %v4981 = vpop.f32.mrb[0].mxu0
    %v4982 = vadd.f32 %v4830, %v4981
    %v4983 = vpop.f32.mrb[0].mxu0
    %4984 = vmatprep.mubr.f32.mxu0 0.0
    %4985 = vmatmul.mubr.f32.gmra.mrb[0].mxu0 %v2822
    %v4986 = vpop.f32.mrb[0].mxu0
    %v4987 = vadd.f32 %v4835, %v4986
    %v4988 = vpop.f32.mrb[0].mxu0
    %4989 = vdwg.mxu0
    %v4990 = vld [vmem:[%s51] sm:$0xff]
    %v4991 = vld [vmem:[%s51 + $0x8] sm:$0xff]
    %s4992 = scalar_lea.vmem %s51, 16
    %v4993 = vld [vmem:[%s4992] sm:$0xff]
    %v4994 = vld [vmem:[%s4992 + $0x8] sm:$0xff]
    %v4996 = vsel %vm1746, %v4993, 0
    %v4999 = vsel %vm1746, %v4994, 0
    %5001 = vmatprep.subr.mxu0 0.0
    %5002 = vmatpush1.msra.mxu0 %v4907
    %5003 = vmatprep.subr.mxu0 0.0
    %5004 = vmatpush1.msra.mxu0 %v4913
    %5005 = vmatprep.subr.mxu0 0.0
    %5006 = vmatpush1.msra.mxu0 0.0
    %5007 = vmatprep.subr.mxu0 0.0
    %5008 = vmatpush1.msra.mxu0 0.0
    %5009 = vmatprep.subr.mxu0 0.0
    %5010 = vmatpush1.msra.mxu0 0.0
    %5011 = vmatprep.subr.mxu0 0.0
    %5012 = vmatpush1.msra.mxu0 0.0
    %5013 = vmatprep.subr.mxu0 0.0
    %5014 = vmatpush1.msra.mxu0 0.0
    %5015 = vmatprep.subr.mxu0 0.0
    %5016 = vmatpush1.msra.mxu0 0.0
    %5017 = vmatprep.subr.mxu0 0.0
    %5018 = vmatpush1.msra.mxu0 0.0
    %5019 = vmatprep.subr.mxu0 0.0
    %5020 = vmatpush1.msra.mxu0 0.0
    %5021 = vmatprep.subr.mxu0 0.0
    %5022 = vmatpush1.msra.mxu0 0.0
    %5023 = vmatprep.subr.mxu0 0.0
    %5024 = vmatpush1.msra.mxu0 0.0
    %5025 = vmatprep.subr.mxu0 0.0
    %5026 = vmatpush1.msra.mxu0 0.0
    %5027 = vmatprep.subr.mxu0 0.0
    %5028 = vmatpush1.msra.mxu0 0.0
    %5029 = vmatprep.subr.mxu0 0.0
    %5030 = vmatpush1.msra.mxu0 0.0
    %5031 = vmatprep.subr.mxu0 0.0
    %5032 = vmatpush1.msra.mxu0 0.0
    %5033 = vmatprep.subr.mxu0 0.0
    %5034 = vmatpush1.msra.mxu0 0.0
    %5035 = vmatprep.subr.mxu0 0.0
    %5036 = vmatpush1.msra.mxu0 0.0
    %5037 = vmatprep.subr.mxu0 0.0
    %5038 = vmatpush1.msra.mxu0 0.0
    %5039 = vmatprep.subr.mxu0 0.0
    %5040 = vmatpush1.msra.mxu0 0.0
    %5041 = vmatprep.subr.mxu0 0.0
    %5042 = vmatpush1.msra.mxu0 0.0
    %5043 = vmatprep.subr.mxu0 0.0
    %5044 = vmatpush1.msra.mxu0 0.0
    %5045 = vmatprep.subr.mxu0 0.0
    %5046 = vmatpush1.msra.mxu0 0.0
    %5047 = vmatprep.subr.mxu0 0.0
    %5048 = vmatpush1.msra.mxu0 0.0
    %5049 = vmatprep.subr.mxu0 0.0
    %5050 = vmatpush1.msra.mxu0 0.0
    %5051 = vmatprep.subr.mxu0 0.0
    %5052 = vmatpush1.msra.mxu0 0.0
    %5053 = vmatprep.subr.mxu0 0.0
    %5054 = vmatpush1.msra.mxu0 0.0
    %5055 = vmatprep.subr.mxu0 0.0
    %5056 = vmatpush1.msra.mxu0 0.0
    %5057 = vmatprep.subr.mxu0 0.0
    %5058 = vmatpush1.msra.mxu0 0.0
    %5059 = vmatprep.subr.mxu0 0.0
    %5060 = vmatpush1.msra.mxu0 0.0
    %5061 = vmatprep.subr.mxu0 0.0
    %5062 = vmatpush1.msra.mxu0 0.0
    %5063 = vmatprep.subr.mxu0 0.0
    %5064 = vmatpush1.msra.mxu0 0.0
    %5065 = vmatprep.mubr.f32.mxu0 0.0
    %5066 = vmatmul.mubr.f32.gmra.mrb[0].mxu0 %v4996
    %v5067 = vpop.f32.mrb[0].mxu0
    %v5068 = vadd.f32 0.0, %v5067
    %v5069 = vpop.f32.mrb[0].mxu0
    %5070 = vmatprep.mubr.f32.mxu0 0.0
    %5071 = vmatmul.mubr.f32.gmra.mrb[0].mxu0 %v4999
    %v5072 = vpop.f32.mrb[0].mxu0
    %v5073 = vadd.f32 0.0, %v5072
    %v5074 = vpop.f32.mrb[0].mxu0
    %5075 = vdwg.mxu0
    %v5077 = vsel %vm1746, %v4990, 0
    %v5080 = vsel %vm1746, %v4991, 0
    %5082 = vmatprep.subr.mxu0 0.0
    %5083 = vmatpush1.msra.mxu0 %v4905
    %5084 = vmatprep.subr.mxu0 0.0
    %5085 = vmatpush1.msra.mxu0 %v4911
    %5086 = vmatprep.subr.mxu0 0.0
    %5087 = vmatpush1.msra.mxu0 0.0
    %5088 = vmatprep.subr.mxu0 0.0
    %5089 = vmatpush1.msra.mxu0 0.0
    %5090 = vmatprep.subr.mxu0 0.0
    %5091 = vmatpush1.msra.mxu0 0.0
    %5092 = vmatprep.subr.mxu0 0.0
    %5093 = vmatpush1.msra.mxu0 0.0
    %5094 = vmatprep.subr.mxu0 0.0
    %5095 = vmatpush1.msra.mxu0 0.0
    %5096 = vmatprep.subr.mxu0 0.0
    %5097 = vmatpush1.msra.mxu0 0.0
    %5098 = vmatprep.subr.mxu0 0.0
    %5099 = vmatpush1.msra.mxu0 0.0
    %5100 = vmatprep.subr.mxu0 0.0
    %5101 = vmatpush1.msra.mxu0 0.0
    %5102 = vmatprep.subr.mxu0 0.0
    %5103 = vmatpush1.msra.mxu0 0.0
    %5104 = vmatprep.subr.mxu0 0.0
    %5105 = vmatpush1.msra.mxu0 0.0
    %5106 = vmatprep.subr.mxu0 0.0
    %5107 = vmatpush1.msra.mxu0 0.0
    %5108 = vmatprep.subr.mxu0 0.0
    %5109 = vmatpush1.msra.mxu0 0.0
    %5110 = vmatprep.subr.mxu0 0.0
    %5111 = vmatpush1.msra.mxu0 0.0
    %5112 = vmatprep.subr.mxu0 0.0
    %5113 = vmatpush1.msra.mxu0 0.0
    %5114 = vmatprep.subr.mxu0 0.0
    %5115 = vmatpush1.msra.mxu0 0.0
    %5116 = vmatprep.subr.mxu0 0.0
    %5117 = vmatpush1.msra.mxu0 0.0
    %5118 = vmatprep.subr.mxu0 0.0
    %5119 = vmatpush1.msra.mxu0 0.0
    %5120 = vmatprep.subr.mxu0 0.0
    %5121 = vmatpush1.msra.mxu0 0.0
    %5122 = vmatprep.subr.mxu0 0.0
    %5123 = vmatpush1.msra.mxu0 0.0
    %5124 = vmatprep.subr.mxu0 0.0
    %5125 = vmatpush1.msra.mxu0 0.0
    %5126 = vmatprep.subr.mxu0 0.0
    %5127 = vmatpush1.msra.mxu0 0.0
    %5128 = vmatprep.subr.mxu0 0.0
    %5129 = vmatpush1.msra.mxu0 0.0
    %5130 = vmatprep.subr.mxu0 0.0
    %5131 = vmatpush1.msra.mxu0 0.0
    %5132 = vmatprep.subr.mxu0 0.0
    %5133 = vmatpush1.msra.mxu0 0.0
    %5134 = vmatprep.subr.mxu0 0.0
    %5135 = vmatpush1.msra.mxu0 0.0
    %5136 = vmatprep.subr.mxu0 0.0
    %5137 = vmatpush1.msra.mxu0 0.0
    %5138 = vmatprep.subr.mxu0 0.0
    %5139 = vmatpush1.msra.mxu0 0.0
    %5140 = vmatprep.subr.mxu0 0.0
    %5141 = vmatpush1.msra.mxu0 0.0
    %5142 = vmatprep.subr.mxu0 0.0
    %5143 = vmatpush1.msra.mxu0 0.0
    %5144 = vmatprep.subr.mxu0 0.0
    %5145 = vmatpush1.msra.mxu0 0.0
    %5146 = vmatprep.mubr.f32.mxu0 0.0
    %5147 = vmatmul.mubr.f32.gmra.mrb[0].mxu0 %v5077
    %v5148 = vpop.f32.mrb[0].mxu0
    %v5149 = vadd.f32 %v5068, %v5148
    %v5150 = vpop.f32.mrb[0].mxu0
    %5151 = vmatprep.mubr.f32.mxu0 0.0
    %5152 = vmatmul.mubr.f32.gmra.mrb[0].mxu0 %v5080
    %v5153 = vpop.f32.mrb[0].mxu0
    %v5154 = vadd.f32 %v5073, %v5153
    %v5155 = vpop.f32.mrb[0].mxu0
    %5156 = vdwg.mxu0
    %s5157 = scalar_lea.vmem %s51, 32
    %v5158 = vld [vmem:[%s5157] sm:$0xff]
    %v5159 = vld [vmem:[%s5157 + $0x8] sm:$0xff]
    %v5161 = vsel %vm1746, %v5158, 0
    %v5164 = vsel %vm1746, %v5159, 0
    %5166 = vmatprep.subr.mxu0 0.0
    %5167 = vmatpush1.msra.mxu0 %v4982
    %5168 = vmatprep.subr.mxu0 0.0
    %5169 = vmatpush1.msra.mxu0 %v4987
    %5170 = vmatprep.subr.mxu0 0.0
    %5171 = vmatpush1.msra.mxu0 0.0
    %5172 = vmatprep.subr.mxu0 0.0
    %5173 = vmatpush1.msra.mxu0 0.0
    %5174 = vmatprep.subr.mxu0 0.0
    %5175 = vmatpush1.msra.mxu0 0.0
    %5176 = vmatprep.subr.mxu0 0.0
    %5177 = vmatpush1.msra.mxu0 0.0
    %5178 = vmatprep.subr.mxu0 0.0
    %5179 = vmatpush1.msra.mxu0 0.0
    %5180 = vmatprep.subr.mxu0 0.0
    %5181 = vmatpush1.msra.mxu0 0.0
    %5182 = vmatprep.subr.mxu0 0.0
    %5183 = vmatpush1.msra.mxu0 0.0
    %5184 = vmatprep.subr.mxu0 0.0
    %5185 = vmatpush1.msra.mxu0 0.0
    %5186 = vmatprep.subr.mxu0 0.0
    %5187 = vmatpush1.msra.mxu0 0.0
    %5188 = vmatprep.subr.mxu0 0.0
    %5189 = vmatpush1.msra.mxu0 0.0
    %5190 = vmatprep.subr.mxu0 0.0
    %5191 = vmatpush1.msra.mxu0 0.0
    %5192 = vmatprep.subr.mxu0 0.0
    %5193 = vmatpush1.msra.mxu0 0.0
    %5194 = vmatprep.subr.mxu0 0.0
    %5195 = vmatpush1.msra.mxu0 0.0
    %5196 = vmatprep.subr.mxu0 0.0
    %5197 = vmatpush1.msra.mxu0 0.0
    %5198 = vmatprep.subr.mxu0 0.0
    %5199 = vmatpush1.msra.mxu0 0.0
    %5200 = vmatprep.subr.mxu0 0.0
    %5201 = vmatpush1.msra.mxu0 0.0
    %5202 = vmatprep.subr.mxu0 0.0
    %5203 = vmatpush1.msra.mxu0 0.0
    %5204 = vmatprep.subr.mxu0 0.0
    %5205 = vmatpush1.msra.mxu0 0.0
    %5206 = vmatprep.subr.mxu0 0.0
    %5207 = vmatpush1.msra.mxu0 0.0
    %5208 = vmatprep.subr.mxu0 0.0
    %5209 = vmatpush1.msra.mxu0 0.0
    %5210 = vmatprep.subr.mxu0 0.0
    %5211 = vmatpush1.msra.mxu0 0.0
    %5212 = vmatprep.subr.mxu0 0.0
    %5213 = vmatpush1.msra.mxu0 0.0
    %5214 = vmatprep.subr.mxu0 0.0
    %5215 = vmatpush1.msra.mxu0 0.0
    %5216 = vmatprep.subr.mxu0 0.0
    %5217 = vmatpush1.msra.mxu0 0.0
    %5218 = vmatprep.subr.mxu0 0.0
    %5219 = vmatpush1.msra.mxu0 0.0
    %5220 = vmatprep.subr.mxu0 0.0
    %5221 = vmatpush1.msra.mxu0 0.0
    %5222 = vmatprep.subr.mxu0 0.0
    %5223 = vmatpush1.msra.mxu0 0.0
    %5224 = vmatprep.subr.mxu0 0.0
    %5225 = vmatpush1.msra.mxu0 0.0
    %5226 = vmatprep.subr.mxu0 0.0
    %5227 = vmatpush1.msra.mxu0 0.0
    %5228 = vmatprep.subr.mxu0 0.0
    %5229 = vmatpush1.msra.mxu0 0.0
    %5230 = vmatprep.mubr.f32.mxu0 0.0
    %5231 = vmatmul.mubr.f32.gmra.mrb[0].mxu0 %v5161
    %v5232 = vpop.f32.mrb[0].mxu0
    %v5233 = vadd.f32 0.0, %v5232
    %v5234 = vpop.f32.mrb[0].mxu0
    %5235 = vmatprep.mubr.f32.mxu0 0.0
    %5236 = vmatmul.mubr.f32.gmra.mrb[0].mxu0 %v5164
    %v5237 = vpop.f32.mrb[0].mxu0
    %v5238 = vadd.f32 0.0, %v5237
    %v5239 = vpop.f32.mrb[0].mxu0
    %5240 = vdwg.mxu0
    %v5241 = vadd.f32 %v5149, %v5233
    %v5242 = vadd.f32 %v5154, %v5238
    %v5243 = vld [vmem:[#allocation31] sm:$0x1]
    %v5244 = vlaneseq
    %v5245 = vshrl.u32 %v5244, 7
    %v5246 = vsub.s32 0, %v5245
    %v5247 = vrot.slane %v5243, %v5246
    %v5248 = vadd.f32 %v5241, %v5247
    %v5249 = vadd.f32 %v5242, %v5247
    %v5250 = vmax.f32 %v5248, 0.0
    %v5251 = vmax.f32 %v5249, 0.0
    %v5252 = vld [vmem:[%s55] sm:$0xff]
    %v5253 = vld [vmem:[%s55 + $0x8] sm:$0xff]
    %v5254 = vld [vmem:[%s55 + $0x10] sm:$0xff]
    %v5255 = vld [vmem:[%s55 + $0x18] sm:$0xff]
    %v5256 = vld [vmem:[%s55 + $0x20] sm:$0xff]
    %v5257 = vld [vmem:[%s55 + $0x28] sm:$0xff]
    %v5258 = vld [vmem:[%s55 + $0x30] sm:$0xff]
    %v5259 = vld [vmem:[%s55 + $0x38] sm:$0xff]
    %v5260 = vld [vmem:[%s55 + $0x40] sm:$0xff]
    %v5261 = vld [vmem:[%s55 + $0x48] sm:$0xff]
    %v5262 = vld [vmem:[%s55 + $0x50] sm:$0xff]
    %v5263 = vld [vmem:[%s55 + $0x58] sm:$0xff]
    %v5264 = vld [vmem:[%s55 + $0x60] sm:$0xff]
    %v5265 = vld [vmem:[%s55 + $0x68] sm:$0xff]
    %v5266 = vld [vmem:[%s55 + $0x70] sm:$0xff]
    %v5267 = vld [vmem:[%s55 + $0x78] sm:$0xff]
    %5268 = vmatprep.subr.mxu0 0.0
    %5269 = vmatpush1.msra.mxu0 %v5250
    %5270 = vmatprep.subr.mxu0 0.0
    %5271 = vmatpush1.msra.mxu0 %v5251
    %5272 = vmatprep.subr.mxu0 0.0
    %5273 = vmatpush1.msra.mxu0 0.0
    %5274 = vmatprep.subr.mxu0 0.0
    %5275 = vmatpush1.msra.mxu0 0.0
    %5276 = vmatprep.subr.mxu0 0.0
    %5277 = vmatpush1.msra.mxu0 0.0
    %5278 = vmatprep.subr.mxu0 0.0
    %5279 = vmatpush1.msra.mxu0 0.0
    %5280 = vmatprep.subr.mxu0 0.0
    %5281 = vmatpush1.msra.mxu0 0.0
    %5282 = vmatprep.subr.mxu0 0.0
    %5283 = vmatpush1.msra.mxu0 0.0
    %5284 = vmatprep.subr.mxu0 0.0
    %5285 = vmatpush1.msra.mxu0 0.0
    %5286 = vmatprep.subr.mxu0 0.0
    %5287 = vmatpush1.msra.mxu0 0.0
    %5288 = vmatprep.subr.mxu0 0.0
    %5289 = vmatpush1.msra.mxu0 0.0
    %5290 = vmatprep.subr.mxu0 0.0
    %5291 = vmatpush1.msra.mxu0 0.0
    %5292 = vmatprep.subr.mxu0 0.0
    %5293 = vmatpush1.msra.mxu0 0.0
    %5294 = vmatprep.subr.mxu0 0.0
    %5295 = vmatpush1.msra.mxu0 0.0
    %5296 = vmatprep.subr.mxu0 0.0
    %5297 = vmatpush1.msra.mxu0 0.0
    %5298 = vmatprep.subr.mxu0 0.0
    %5299 = vmatpush1.msra.mxu0 0.0
    %5300 = vmatprep.subr.mxu0 0.0
    %5301 = vmatpush1.msra.mxu0 0.0
    %5302 = vmatprep.subr.mxu0 0.0
    %5303 = vmatpush1.msra.mxu0 0.0
    %5304 = vmatprep.subr.mxu0 0.0
    %5305 = vmatpush1.msra.mxu0 0.0
    %5306 = vmatprep.subr.mxu0 0.0
    %5307 = vmatpush1.msra.mxu0 0.0
    %5308 = vmatprep.subr.mxu0 0.0
    %5309 = vmatpush1.msra.mxu0 0.0
    %5310 = vmatprep.subr.mxu0 0.0
    %5311 = vmatpush1.msra.mxu0 0.0
    %5312 = vmatprep.subr.mxu0 0.0
    %5313 = vmatpush1.msra.mxu0 0.0
    %5314 = vmatprep.subr.mxu0 0.0
    %5315 = vmatpush1.msra.mxu0 0.0
    %5316 = vmatprep.subr.mxu0 0.0
    %5317 = vmatpush1.msra.mxu0 0.0
    %5318 = vmatprep.subr.mxu0 0.0
    %5319 = vmatpush1.msra.mxu0 0.0
    %5320 = vmatprep.subr.mxu0 0.0
    %5321 = vmatpush1.msra.mxu0 0.0
    %5322 = vmatprep.subr.mxu0 0.0
    %5323 = vmatpush1.msra.mxu0 0.0
    %5324 = vmatprep.subr.mxu0 0.0
    %5325 = vmatpush1.msra.mxu0 0.0
    %5326 = vmatprep.subr.mxu0 0.0
    %5327 = vmatpush1.msra.mxu0 0.0
    %5328 = vmatprep.subr.mxu0 0.0
    %5329 = vmatpush1.msra.mxu0 0.0
    %5330 = vmatprep.subr.mxu0 0.0
    %5331 = vmatpush1.msra.mxu0 0.0
    %5332 = vmatprep.mubr.f32.mxu0 0.0
    %5333 = vmatmul.mubr.f32.gmra.mrb[0].mxu0 %v1747
    %v5334 = vpop.f32.mrb[0].mxu0
    %v5335 = vadd.f32 0.0, %v5334
    %v5336 = vpop.f32.mrb[0].mxu0
    %5337 = vdwg.mxu0
    %5338 = vmatprep.subr.mxu0 0.0
    %5339 = vmatpush1.msra.mxu0 %v5252
    %5340 = vmatprep.subr.mxu0 0.0
    %5341 = vmatpush1.msra.mxu0 %v5253
    %5342 = vmatprep.subr.mxu0 0.0
    %5343 = vmatpush1.msra.mxu0 %v5254
    %5344 = vmatprep.subr.mxu0 0.0
    %5345 = vmatpush1.msra.mxu0 %v5255
    %5346 = vmatprep.subr.mxu0 0.0
    %5347 = vmatpush1.msra.mxu0 %v5256
    %5348 = vmatprep.subr.mxu0 0.0
    %5349 = vmatpush1.msra.mxu0 %v5257
    %5350 = vmatprep.subr.mxu0 0.0
    %5351 = vmatpush1.msra.mxu0 %v5258
    %5352 = vmatprep.subr.mxu0 0.0
    %5353 = vmatpush1.msra.mxu0 %v5259
    %5354 = vmatprep.subr.mxu0 0.0
    %5355 = vmatpush1.msra.mxu0 %v5260
    %5356 = vmatprep.subr.mxu0 0.0
    %5357 = vmatpush1.msra.mxu0 %v5261
    %5358 = vmatprep.subr.mxu0 0.0
    %5359 = vmatpush1.msra.mxu0 %v5262
    %5360 = vmatprep.subr.mxu0 0.0
    %5361 = vmatpush1.msra.mxu0 %v5263
    %5362 = vmatprep.subr.mxu0 0.0
    %5363 = vmatpush1.msra.mxu0 %v5264
    %5364 = vmatprep.subr.mxu0 0.0
    %5365 = vmatpush1.msra.mxu0 %v5265
    %5366 = vmatprep.subr.mxu0 0.0
    %5367 = vmatpush1.msra.mxu0 %v5266
    %5368 = vmatprep.subr.mxu0 0.0
    %5369 = vmatpush1.msra.mxu0 %v5267
    %5370 = vmatprep.subr.mxu0 0.0
    %5371 = vmatpush1.msra.mxu0 0.0
    %5372 = vmatprep.subr.mxu0 0.0
    %5373 = vmatpush1.msra.mxu0 0.0
    %5374 = vmatprep.subr.mxu0 0.0
    %5375 = vmatpush1.msra.mxu0 0.0
    %5376 = vmatprep.subr.mxu0 0.0
    %5377 = vmatpush1.msra.mxu0 0.0
    %5378 = vmatprep.subr.mxu0 0.0
    %5379 = vmatpush1.msra.mxu0 0.0
    %5380 = vmatprep.subr.mxu0 0.0
    %5381 = vmatpush1.msra.mxu0 0.0
    %5382 = vmatprep.subr.mxu0 0.0
    %5383 = vmatpush1.msra.mxu0 0.0
    %5384 = vmatprep.subr.mxu0 0.0
    %5385 = vmatpush1.msra.mxu0 0.0
    %5386 = vmatprep.subr.mxu0 0.0
    %5387 = vmatpush1.msra.mxu0 0.0
    %5388 = vmatprep.subr.mxu0 0.0
    %5389 = vmatpush1.msra.mxu0 0.0
    %5390 = vmatprep.subr.mxu0 0.0
    %5391 = vmatpush1.msra.mxu0 0.0
    %5392 = vmatprep.subr.mxu0 0.0
    %5393 = vmatpush1.msra.mxu0 0.0
    %5394 = vmatprep.subr.mxu0 0.0
    %5395 = vmatpush1.msra.mxu0 0.0
    %5396 = vmatprep.subr.mxu0 0.0
    %5397 = vmatpush1.msra.mxu0 0.0
    %5398 = vmatprep.subr.mxu0 0.0
    %5399 = vmatpush1.msra.mxu0 0.0
    %5400 = vmatprep.subr.mxu0 0.0
    %5401 = vmatpush1.msra.mxu0 0.0
    %5402 = vmatprep.mubr.f32.mxu0 0.0
    %5403 = vmatmul.mubr.f32.gmra.mrb[0].mxu0 %v5335
    %v5404 = vpop.f32.mrb[0].mxu0
    %v5405 = vadd.f32 0.0, %v5404
    %v5406 = vpop.f32.mrb[0].mxu0
    %5407 = vdwg.mxu0
    %v5408 = vlaneseq
    %v5409 = vshrl.u32 %v5408, 7
    %v5410 = vsub.s32 0, %v5409
    %v5411 = vrot.slane %v5405, %v5410
    %v5412 = vsub.f32 %v5250, %v5411
    %v5413 = vsub.f32 %v5251, %v5411
    %v5414 = vmul.f32 %v5412, %v5412
    %v5415 = vmul.f32 %v5413, %v5413
    %5416 = vmatprep.subr.mxu0 0.0
    %5417 = vmatpush1.msra.mxu0 %v5414
    %5418 = vmatprep.subr.mxu0 0.0
    %5419 = vmatpush1.msra.mxu0 %v5415
    %5420 = vmatprep.subr.mxu0 0.0
    %5421 = vmatpush1.msra.mxu0 0.0
    %5422 = vmatprep.subr.mxu0 0.0
    %5423 = vmatpush1.msra.mxu0 0.0
    %5424 = vmatprep.subr.mxu0 0.0
    %5425 = vmatpush1.msra.mxu0 0.0
    %5426 = vmatprep.subr.mxu0 0.0
    %5427 = vmatpush1.msra.mxu0 0.0
    %5428 = vmatprep.subr.mxu0 0.0
    %5429 = vmatpush1.msra.mxu0 0.0
    %5430 = vmatprep.subr.mxu0 0.0
    %5431 = vmatpush1.msra.mxu0 0.0
    %5432 = vmatprep.subr.mxu0 0.0
    %5433 = vmatpush1.msra.mxu0 0.0
    %5434 = vmatprep.subr.mxu0 0.0
    %5435 = vmatpush1.msra.mxu0 0.0
    %5436 = vmatprep.subr.mxu0 0.0
    %5437 = vmatpush1.msra.mxu0 0.0
    %5438 = vmatprep.subr.mxu0 0.0
    %5439 = vmatpush1.msra.mxu0 0.0
    %5440 = vmatprep.subr.mxu0 0.0
    %5441 = vmatpush1.msra.mxu0 0.0
    %5442 = vmatprep.subr.mxu0 0.0
    %5443 = vmatpush1.msra.mxu0 0.0
    %5444 = vmatprep.subr.mxu0 0.0
    %5445 = vmatpush1.msra.mxu0 0.0
    %5446 = vmatprep.subr.mxu0 0.0
    %5447 = vmatpush1.msra.mxu0 0.0
    %5448 = vmatprep.subr.mxu0 0.0
    %5449 = vmatpush1.msra.mxu0 0.0
    %5450 = vmatprep.subr.mxu0 0.0
    %5451 = vmatpush1.msra.mxu0 0.0
    %5452 = vmatprep.subr.mxu0 0.0
    %5453 = vmatpush1.msra.mxu0 0.0
    %5454 = vmatprep.subr.mxu0 0.0
    %5455 = vmatpush1.msra.mxu0 0.0
    %5456 = vmatprep.subr.mxu0 0.0
    %5457 = vmatpush1.msra.mxu0 0.0
    %5458 = vmatprep.subr.mxu0 0.0
    %5459 = vmatpush1.msra.mxu0 0.0
    %5460 = vmatprep.subr.mxu0 0.0
    %5461 = vmatpush1.msra.mxu0 0.0
    %5462 = vmatprep.subr.mxu0 0.0
    %5463 = vmatpush1.msra.mxu0 0.0
    %5464 = vmatprep.subr.mxu0 0.0
    %5465 = vmatpush1.msra.mxu0 0.0
    %5466 = vmatprep.subr.mxu0 0.0
    %5467 = vmatpush1.msra.mxu0 0.0
    %5468 = vmatprep.subr.mxu0 0.0
    %5469 = vmatpush1.msra.mxu0 0.0
    %5470 = vmatprep.subr.mxu0 0.0
    %5471 = vmatpush1.msra.mxu0 0.0
    %5472 = vmatprep.subr.mxu0 0.0
    %5473 = vmatpush1.msra.mxu0 0.0
    %5474 = vmatprep.subr.mxu0 0.0
    %5475 = vmatpush1.msra.mxu0 0.0
    %5476 = vmatprep.subr.mxu0 0.0
    %5477 = vmatpush1.msra.mxu0 0.0
    %5478 = vmatprep.subr.mxu0 0.0
    %5479 = vmatpush1.msra.mxu0 0.0
    %5480 = vmatprep.mubr.f32.mxu0 0.0
    %5481 = vmatmul.mubr.f32.gmra.mrb[0].mxu0 %v1747
    %v5482 = vpop.f32.mrb[0].mxu0
    %v5483 = vadd.f32 0.0, %v5482
    %v5484 = vpop.f32.mrb[0].mxu0
    %5485 = vdwg.mxu0
    %5486 = vmatprep.subr.mxu0 0.0
    %5487 = vmatpush1.msra.mxu0 %v5252
    %5488 = vmatprep.subr.mxu0 0.0
    %5489 = vmatpush1.msra.mxu0 %v5253
    %5490 = vmatprep.subr.mxu0 0.0
    %5491 = vmatpush1.msra.mxu0 %v5254
    %5492 = vmatprep.subr.mxu0 0.0
    %5493 = vmatpush1.msra.mxu0 %v5255
    %5494 = vmatprep.subr.mxu0 0.0
    %5495 = vmatpush1.msra.mxu0 %v5256
    %5496 = vmatprep.subr.mxu0 0.0
    %5497 = vmatpush1.msra.mxu0 %v5257
    %5498 = vmatprep.subr.mxu0 0.0
    %5499 = vmatpush1.msra.mxu0 %v5258
    %5500 = vmatprep.subr.mxu0 0.0
    %5501 = vmatpush1.msra.mxu0 %v5259
    %5502 = vmatprep.subr.mxu0 0.0
    %5503 = vmatpush1.msra.mxu0 %v5260
    %5504 = vmatprep.subr.mxu0 0.0
    %5505 = vmatpush1.msra.mxu0 %v5261
    %5506 = vmatprep.subr.mxu0 0.0
    %5507 = vmatpush1.msra.mxu0 %v5262
    %5508 = vmatprep.subr.mxu0 0.0
    %5509 = vmatpush1.msra.mxu0 %v5263
    %5510 = vmatprep.subr.mxu0 0.0
    %5511 = vmatpush1.msra.mxu0 %v5264
    %5512 = vmatprep.subr.mxu0 0.0
    %5513 = vmatpush1.msra.mxu0 %v5265
    %5514 = vmatprep.subr.mxu0 0.0
    %5515 = vmatpush1.msra.mxu0 %v5266
    %5516 = vmatprep.subr.mxu0 0.0
    %5517 = vmatpush1.msra.mxu0 %v5267
    %5518 = vmatprep.subr.mxu0 0.0
    %5519 = vmatpush1.msra.mxu0 0.0
    %5520 = vmatprep.subr.mxu0 0.0
    %5521 = vmatpush1.msra.mxu0 0.0
    %5522 = vmatprep.subr.mxu0 0.0
    %5523 = vmatpush1.msra.mxu0 0.0
    %5524 = vmatprep.subr.mxu0 0.0
    %5525 = vmatpush1.msra.mxu0 0.0
    %5526 = vmatprep.subr.mxu0 0.0
    %5527 = vmatpush1.msra.mxu0 0.0
    %5528 = vmatprep.subr.mxu0 0.0
    %5529 = vmatpush1.msra.mxu0 0.0
    %5530 = vmatprep.subr.mxu0 0.0
    %5531 = vmatpush1.msra.mxu0 0.0
    %5532 = vmatprep.subr.mxu0 0.0
    %5533 = vmatpush1.msra.mxu0 0.0
    %5534 = vmatprep.subr.mxu0 0.0
    %5535 = vmatpush1.msra.mxu0 0.0
    %5536 = vmatprep.subr.mxu0 0.0
    %5537 = vmatpush1.msra.mxu0 0.0
    %5538 = vmatprep.subr.mxu0 0.0
    %5539 = vmatpush1.msra.mxu0 0.0
    %5540 = vmatprep.subr.mxu0 0.0
    %5541 = vmatpush1.msra.mxu0 0.0
    %5542 = vmatprep.subr.mxu0 0.0
    %5543 = vmatpush1.msra.mxu0 0.0
    %5544 = vmatprep.subr.mxu0 0.0
    %5545 = vmatpush1.msra.mxu0 0.0
    %5546 = vmatprep.subr.mxu0 0.0
    %5547 = vmatpush1.msra.mxu0 0.0
    %5548 = vmatprep.subr.mxu0 0.0
    %5549 = vmatpush1.msra.mxu0 0.0
    %5550 = vmatprep.mubr.f32.mxu0 0.0
    %5551 = vmatmul.mubr.f32.gmra.mrb[0].mxu0 %v5483
    %v5552 = vpop.f32.mrb[0].mxu0
    %v5553 = vadd.f32 1e-05, %v5552
    %v5554 = vpop.f32.mrb[0].mxu0
    %5555 = vdwg.mxu0
    %v5556 = vrsqrt.pop %v5553
    %v5557 = vld [vmem:[#allocation31 + $0x1] sm:$0x1]
    %v5558 = vmul.f32 %v5556, %v5557
    %v5559 = vlaneseq
    %v5560 = vshrl.u32 %v5559, 7
    %v5561 = vsub.s32 0, %v5560
    %v5562 = vrot.slane %v5558, %v5561
    %v5563 = vmul.f32 %v5412, %v5562
    %v5564 = vmul.f32 %v5413, %v5562
    %v5565 = vld [vmem:[#allocation31 + $0x2] sm:$0x1]
    %v5566 = vlaneseq
    %v5567 = vshrl.u32 %v5566, 7
    %v5568 = vsub.s32 0, %v5567
    %v5569 = vrot.slane %v5565, %v5568
    %v5570 = vadd.f32 %v5563, %v5569
    %v5571 = vadd.f32 %v5564, %v5569
    %v5572 = vld [vmem:[#allocation33] sm:$0xff]
    %v5573 = vld [vmem:[#allocation33 + $0x8] sm:$0xff]
    %v5574 = vld [vmem:[#allocation33 + $0x10] sm:$0xff]
    %v5575 = vld [vmem:[#allocation33 + $0x18] sm:$0xff]
    %v5576 = vld [vmem:[#allocation33 + $0x20] sm:$0xff]
    %v5577 = vld [vmem:[#allocation33 + $0x28] sm:$0xff]
    %v5578 = vld [vmem:[#allocation33 + $0x30] sm:$0xff]
    %v5579 = vld [vmem:[#allocation33 + $0x38] sm:$0xff]
    %v5580 = vld [vmem:[#allocation33 + $0x40] sm:$0xff]
    %v5581 = vld [vmem:[#allocation33 + $0x48] sm:$0xff]
    %v5582 = vld [vmem:[#allocation33 + $0x50] sm:$0xff]
    %v5583 = vld [vmem:[#allocation33 + $0x58] sm:$0xff]
    %v5584 = vld [vmem:[#allocation33 + $0x60] sm:$0xff]
    %v5585 = vld [vmem:[#allocation33 + $0x68] sm:$0xff]
    %v5586 = vld [vmem:[#allocation33 + $0x70] sm:$0xff]
    %v5587 = vld [vmem:[#allocation33 + $0x78] sm:$0xff]
    %5588 = vmatprep.subr.mxu0 0.0
    %5589 = vmatpush1.msra.mxu0 %v5572
    %5590 = vmatprep.subr.mxu0 0.0
    %5591 = vmatpush1.msra.mxu0 %v5573
    %5592 = vmatprep.subr.mxu0 0.0
    %5593 = vmatpush1.msra.mxu0 %v5574
    %5594 = vmatprep.subr.mxu0 0.0
    %5595 = vmatpush1.msra.mxu0 %v5575
    %5596 = vmatprep.subr.mxu0 0.0
    %5597 = vmatpush1.msra.mxu0 %v5576
    %5598 = vmatprep.subr.mxu0 0.0
    %5599 = vmatpush1.msra.mxu0 %v5577
    %5600 = vmatprep.subr.mxu0 0.0
    %5601 = vmatpush1.msra.mxu0 %v5578
    %5602 = vmatprep.subr.mxu0 0.0
    %5603 = vmatpush1.msra.mxu0 %v5579
    %5604 = vmatprep.subr.mxu0 0.0
    %5605 = vmatpush1.msra.mxu0 %v5580
    %5606 = vmatprep.subr.mxu0 0.0
    %5607 = vmatpush1.msra.mxu0 %v5581
    %5608 = vmatprep.subr.mxu0 0.0
    %5609 = vmatpush1.msra.mxu0 %v5582
    %5610 = vmatprep.subr.mxu0 0.0
    %5611 = vmatpush1.msra.mxu0 %v5583
    %5612 = vmatprep.subr.mxu0 0.0
    %5613 = vmatpush1.msra.mxu0 %v5584
    %5614 = vmatprep.subr.mxu0 0.0
    %5615 = vmatpush1.msra.mxu0 %v5585
    %5616 = vmatprep.subr.mxu0 0.0
    %5617 = vmatpush1.msra.mxu0 %v5586
    %5618 = vmatprep.subr.mxu0 0.0
    %5619 = vmatpush1.msra.mxu0 %v5587
    %5620 = vmatprep.subr.mxu0 0.0
    %5621 = vmatpush1.msra.mxu0 0.0
    %5622 = vmatprep.subr.mxu0 0.0
    %5623 = vmatpush1.msra.mxu0 0.0
    %5624 = vmatprep.subr.mxu0 0.0
    %5625 = vmatpush1.msra.mxu0 0.0
    %5626 = vmatprep.subr.mxu0 0.0
    %5627 = vmatpush1.msra.mxu0 0.0
    %5628 = vmatprep.subr.mxu0 0.0
    %5629 = vmatpush1.msra.mxu0 0.0
    %5630 = vmatprep.subr.mxu0 0.0
    %5631 = vmatpush1.msra.mxu0 0.0
    %5632 = vmatprep.subr.mxu0 0.0
    %5633 = vmatpush1.msra.mxu0 0.0
    %5634 = vmatprep.subr.mxu0 0.0
    %5635 = vmatpush1.msra.mxu0 0.0
    %5636 = vmatprep.subr.mxu0 0.0
    %5637 = vmatpush1.msra.mxu0 0.0
    %5638 = vmatprep.subr.mxu0 0.0
    %5639 = vmatpush1.msra.mxu0 0.0
    %5640 = vmatprep.subr.mxu0 0.0
    %5641 = vmatpush1.msra.mxu0 0.0
    %5642 = vmatprep.subr.mxu0 0.0
    %5643 = vmatpush1.msra.mxu0 0.0
    %5644 = vmatprep.subr.mxu0 0.0
    %5645 = vmatpush1.msra.mxu0 0.0
    %5646 = vmatprep.subr.mxu0 0.0
    %5647 = vmatpush1.msra.mxu0 0.0
    %5648 = vmatprep.subr.mxu0 0.0
    %5649 = vmatpush1.msra.mxu0 0.0
    %5650 = vmatprep.subr.mxu0 0.0
    %5651 = vmatpush1.msra.mxu0 0.0
    %5652 = vmatprep.mubr.f32.mxu0 0.0
    %5653 = vmatmul.mubr.f32.gmra.mrb[0].mxu0 %v5570
    %v5654 = vpop.f32.mrb[0].mxu0
    %v5655 = vadd.f32 0.0, %v5654
    %v5656 = vpop.f32.mrb[0].mxu0
    %5657 = vmatprep.mubr.f32.mxu0 0.0
    %5658 = vmatmul.mubr.f32.gmra.mrb[0].mxu0 %v5571
    %v5659 = vpop.f32.mrb[0].mxu0
    %v5660 = vadd.f32 0.0, %v5659
    %v5661 = vpop.f32.mrb[0].mxu0
    %5662 = vdwg.mxu0
    %v5663 = vld [vmem:[#allocation34] sm:$0xff]
    %v5664 = vld [vmem:[#allocation34 + $0x8] sm:$0xff]
    %s5665 = scalar_lea.vmem [#allocation34], 16
    %v5666 = vld [vmem:[%s5665] sm:$0xff]
    %v5667 = vld [vmem:[%s5665 + $0x8] sm:$0xff]
    %5670 = vrot.lane.b32.xlu0 %v5655, 64
    %v5671 = vpop.permute.xlu0 %5670
    %5672 = vrot.lane.b32.xlu0 %v5660, 64
    %v5673 = vpop.permute.xlu0 %5672
    %v5677 = vsel %vm1746, %v5666, 0
    %v5680 = vsel %vm1746, %v5667, 0
    %5682 = vmatprep.subr.mxu0 0.0
    %5683 = vmatpush1.msra.mxu0 %v5671
    %5684 = vmatprep.subr.mxu0 0.0
    %5685 = vmatpush1.msra.mxu0 %v5673
    %5686 = vmatprep.subr.mxu0 0.0
    %5687 = vmatpush1.msra.mxu0 0.0
    %5688 = vmatprep.subr.mxu0 0.0
    %5689 = vmatpush1.msra.mxu0 0.0
    %5690 = vmatprep.subr.mxu0 0.0
    %5691 = vmatpush1.msra.mxu0 0.0
    %5692 = vmatprep.subr.mxu0 0.0
    %5693 = vmatpush1.msra.mxu0 0.0
    %5694 = vmatprep.subr.mxu0 0.0
    %5695 = vmatpush1.msra.mxu0 0.0
    %5696 = vmatprep.subr.mxu0 0.0
    %5697 = vmatpush1.msra.mxu0 0.0
    %5698 = vmatprep.subr.mxu0 0.0
    %5699 = vmatpush1.msra.mxu0 0.0
    %5700 = vmatprep.subr.mxu0 0.0
    %5701 = vmatpush1.msra.mxu0 0.0
    %5702 = vmatprep.subr.mxu0 0.0
    %5703 = vmatpush1.msra.mxu0 0.0
    %5704 = vmatprep.subr.mxu0 0.0
    %5705 = vmatpush1.msra.mxu0 0.0
    %5706 = vmatprep.subr.mxu0 0.0
    %5707 = vmatpush1.msra.mxu0 0.0
    %5708 = vmatprep.subr.mxu0 0.0
    %5709 = vmatpush1.msra.mxu0 0.0
    %5710 = vmatprep.subr.mxu0 0.0
    %5711 = vmatpush1.msra.mxu0 0.0
    %5712 = vmatprep.subr.mxu0 0.0
    %5713 = vmatpush1.msra.mxu0 0.0
    %5714 = vmatprep.subr.mxu0 0.0
    %5715 = vmatpush1.msra.mxu0 0.0
    %5716 = vmatprep.subr.mxu0 0.0
    %5717 = vmatpush1.msra.mxu0 0.0
    %5718 = vmatprep.subr.mxu0 0.0
    %5719 = vmatpush1.msra.mxu0 0.0
    %5720 = vmatprep.subr.mxu0 0.0
    %5721 = vmatpush1.msra.mxu0 0.0
    %5722 = vmatprep.subr.mxu0 0.0
    %5723 = vmatpush1.msra.mxu0 0.0
    %5724 = vmatprep.subr.mxu0 0.0
    %5725 = vmatpush1.msra.mxu0 0.0
    %5726 = vmatprep.subr.mxu0 0.0
    %5727 = vmatpush1.msra.mxu0 0.0
    %5728 = vmatprep.subr.mxu0 0.0
    %5729 = vmatpush1.msra.mxu0 0.0
    %5730 = vmatprep.subr.mxu0 0.0
    %5731 = vmatpush1.msra.mxu0 0.0
    %5732 = vmatprep.subr.mxu0 0.0
    %5733 = vmatpush1.msra.mxu0 0.0
    %5734 = vmatprep.subr.mxu0 0.0
    %5735 = vmatpush1.msra.mxu0 0.0
    %5736 = vmatprep.subr.mxu0 0.0
    %5737 = vmatpush1.msra.mxu0 0.0
    %5738 = vmatprep.subr.mxu0 0.0
    %5739 = vmatpush1.msra.mxu0 0.0
    %5740 = vmatprep.subr.mxu0 0.0
    %5741 = vmatpush1.msra.mxu0 0.0
    %5742 = vmatprep.subr.mxu0 0.0
    %5743 = vmatpush1.msra.mxu0 0.0
    %5744 = vmatprep.subr.mxu0 0.0
    %5745 = vmatpush1.msra.mxu0 0.0
    %5746 = vmatprep.mubr.f32.mxu0 0.0
    %5747 = vmatmul.mubr.f32.gmra.mrb[0].mxu0 %v5677
    %v5748 = vpop.f32.mrb[0].mxu0
    %v5749 = vadd.f32 0.0, %v5748
    %v5750 = vpop.f32.mrb[0].mxu0
    %5751 = vmatprep.mubr.f32.mxu0 0.0
    %5752 = vmatmul.mubr.f32.gmra.mrb[0].mxu0 %v5680
    %v5753 = vpop.f32.mrb[0].mxu0
    %v5754 = vadd.f32 0.0, %v5753
    %v5755 = vpop.f32.mrb[0].mxu0
    %5756 = vdwg.mxu0
    %v5758 = vsel %vm1746, %v5663, 0
    %v5761 = vsel %vm1746, %v5664, 0
    %5763 = vmatprep.subr.mxu0 0.0
    %5764 = vmatpush1.msra.mxu0 %v5655
    %5765 = vmatprep.subr.mxu0 0.0
    %5766 = vmatpush1.msra.mxu0 %v5660
    %5767 = vmatprep.subr.mxu0 0.0
    %5768 = vmatpush1.msra.mxu0 0.0
    %5769 = vmatprep.subr.mxu0 0.0
    %5770 = vmatpush1.msra.mxu0 0.0
    %5771 = vmatprep.subr.mxu0 0.0
    %5772 = vmatpush1.msra.mxu0 0.0
    %5773 = vmatprep.subr.mxu0 0.0
    %5774 = vmatpush1.msra.mxu0 0.0
    %5775 = vmatprep.subr.mxu0 0.0
    %5776 = vmatpush1.msra.mxu0 0.0
    %5777 = vmatprep.subr.mxu0 0.0
    %5778 = vmatpush1.msra.mxu0 0.0
    %5779 = vmatprep.subr.mxu0 0.0
    %5780 = vmatpush1.msra.mxu0 0.0
    %5781 = vmatprep.subr.mxu0 0.0
    %5782 = vmatpush1.msra.mxu0 0.0
    %5783 = vmatprep.subr.mxu0 0.0
    %5784 = vmatpush1.msra.mxu0 0.0
    %5785 = vmatprep.subr.mxu0 0.0
    %5786 = vmatpush1.msra.mxu0 0.0
    %5787 = vmatprep.subr.mxu0 0.0
    %5788 = vmatpush1.msra.mxu0 0.0
    %5789 = vmatprep.subr.mxu0 0.0
    %5790 = vmatpush1.msra.mxu0 0.0
    %5791 = vmatprep.subr.mxu0 0.0
    %5792 = vmatpush1.msra.mxu0 0.0
    %5793 = vmatprep.subr.mxu0 0.0
    %5794 = vmatpush1.msra.mxu0 0.0
    %5795 = vmatprep.subr.mxu0 0.0
    %5796 = vmatpush1.msra.mxu0 0.0
    %5797 = vmatprep.subr.mxu0 0.0
    %5798 = vmatpush1.msra.mxu0 0.0
    %5799 = vmatprep.subr.mxu0 0.0
    %5800 = vmatpush1.msra.mxu0 0.0
    %5801 = vmatprep.subr.mxu0 0.0
    %5802 = vmatpush1.msra.mxu0 0.0
    %5803 = vmatprep.subr.mxu0 0.0
    %5804 = vmatpush1.msra.mxu0 0.0
    %5805 = vmatprep.subr.mxu0 0.0
    %5806 = vmatpush1.msra.mxu0 0.0
    %5807 = vmatprep.subr.mxu0 0.0
    %5808 = vmatpush1.msra.mxu0 0.0
    %5809 = vmatprep.subr.mxu0 0.0
    %5810 = vmatpush1.msra.mxu0 0.0
    %5811 = vmatprep.subr.mxu0 0.0
    %5812 = vmatpush1.msra.mxu0 0.0
    %5813 = vmatprep.subr.mxu0 0.0
    %5814 = vmatpush1.msra.mxu0 0.0
    %5815 = vmatprep.subr.mxu0 0.0
    %5816 = vmatpush1.msra.mxu0 0.0
    %5817 = vmatprep.subr.mxu0 0.0
    %5818 = vmatpush1.msra.mxu0 0.0
    %5819 = vmatprep.subr.mxu0 0.0
    %5820 = vmatpush1.msra.mxu0 0.0
    %5821 = vmatprep.subr.mxu0 0.0
    %5822 = vmatpush1.msra.mxu0 0.0
    %5823 = vmatprep.subr.mxu0 0.0
    %5824 = vmatpush1.msra.mxu0 0.0
    %5825 = vmatprep.subr.mxu0 0.0
    %5826 = vmatpush1.msra.mxu0 0.0
    %5827 = vmatprep.mubr.f32.mxu0 0.0
    %5828 = vmatmul.mubr.f32.gmra.mrb[0].mxu0 %v5758
    %v5829 = vpop.f32.mrb[0].mxu0
    %v5830 = vadd.f32 %v5749, %v5829
    %v5831 = vpop.f32.mrb[0].mxu0
    %5832 = vmatprep.mubr.f32.mxu0 0.0
    %5833 = vmatmul.mubr.f32.gmra.mrb[0].mxu0 %v5761
    %v5834 = vpop.f32.mrb[0].mxu0
    %v5835 = vadd.f32 %v5754, %v5834
    %v5836 = vpop.f32.mrb[0].mxu0
    %5837 = vdwg.mxu0
    %v5838 = vld [vmem:[#allocation36] sm:$0x1]
    %v5840 = vlaneseq
    %v5841 = vshrl.u32 %v5840, 7
    %v5842 = vsub.s32 0, %v5841
    %v5843 = vrot.slane %v5838, %v5842
    %v5845 = vadd.f32 %v5830, %v5843
    %v5846 = vadd.f32 %v5835, %v5843
    %v5847 = vld [vmem:[#allocation37] sm:$0xff]
    %v5848 = vld [vmem:[#allocation37 + $0x8] sm:$0xff]
    %v5849 = vld [vmem:[#allocation37 + $0x10] sm:$0xff]
    %v5850 = vld [vmem:[#allocation37 + $0x18] sm:$0xff]
    %v5851 = vld [vmem:[#allocation37 + $0x20] sm:$0xff]
    %v5852 = vld [vmem:[#allocation37 + $0x28] sm:$0xff]
    %v5853 = vld [vmem:[#allocation37 + $0x30] sm:$0xff]
    %v5854 = vld [vmem:[#allocation37 + $0x38] sm:$0xff]
    %v5855 = vld [vmem:[#allocation37 + $0x40] sm:$0xff]
    %v5856 = vld [vmem:[#allocation37 + $0x48] sm:$0xff]
    %v5857 = vld [vmem:[#allocation37 + $0x50] sm:$0xff]
    %v5858 = vld [vmem:[#allocation37 + $0x58] sm:$0xff]
    %v5859 = vld [vmem:[#allocation37 + $0x60] sm:$0xff]
    %v5860 = vld [vmem:[#allocation37 + $0x68] sm:$0xff]
    %v5861 = vld [vmem:[#allocation37 + $0x70] sm:$0xff]
    %v5862 = vld [vmem:[#allocation37 + $0x78] sm:$0xff]
    %v5863 = vld [vmem:[#allocation37 + $0x80] sm:$0xff]
    %v5864 = vld [vmem:[#allocation37 + $0x88] sm:$0xff]
    %v5865 = vld [vmem:[#allocation37 + $0x90] sm:$0xff]
    %v5866 = vld [vmem:[#allocation37 + $0x98] sm:$0xff]
    %v5867 = vld [vmem:[#allocation37 + $0xa0] sm:$0xff]
    %v5868 = vld [vmem:[#allocation37 + $0xa8] sm:$0xff]
    %v5869 = vld [vmem:[#allocation37 + $0xb0] sm:$0xff]
    %v5870 = vld [vmem:[#allocation37 + $0xb8] sm:$0xff]
    %v5871 = vld [vmem:[#allocation37 + $0xc0] sm:$0xff]
    %v5872 = vld [vmem:[#allocation37 + $0xc8] sm:$0xff]
    %v5873 = vld [vmem:[#allocation37 + $0xd0] sm:$0xff]
    %v5874 = vld [vmem:[#allocation37 + $0xd8] sm:$0xff]
    %v5875 = vld [vmem:[#allocation37 + $0xe0] sm:$0xff]
    %v5876 = vld [vmem:[#allocation37 + $0xe8] sm:$0xff]
    %v5877 = vld [vmem:[#allocation37 + $0xf0] sm:$0xff]
    %v5878 = vld [vmem:[#allocation37 + $0xf8] sm:$0xff]
    %v5880 = vsel %vm1094, %v5845, 0
    %v5883 = vsel %vm1094, %v5846, 0
    %5885 = vmatprep.subr.mxu0 %v5864
    %5886 = vmatpush1.msra.mxu0 %v5863
    %5887 = vmatprep.subr.mxu0 %v5866
    %5888 = vmatpush1.msra.mxu0 %v5865
    %5889 = vmatprep.subr.mxu0 %v5868
    %5890 = vmatpush1.msra.mxu0 %v5867
    %5891 = vmatprep.subr.mxu0 %v5870
    %5892 = vmatpush1.msra.mxu0 %v5869
    %5893 = vmatprep.subr.mxu0 %v5872
    %5894 = vmatpush1.msra.mxu0 %v5871
    %5895 = vmatprep.subr.mxu0 %v5874
    %5896 = vmatpush1.msra.mxu0 %v5873
    %5897 = vmatprep.subr.mxu0 %v5876
    %5898 = vmatpush1.msra.mxu0 %v5875
    %5899 = vmatprep.subr.mxu0 %v5878
    %5900 = vmatpush1.msra.mxu0 %v5877
    %5901 = vmatprep.subr.mxu0 0.0
    %5902 = vmatpush1.msra.mxu0 0.0
    %5903 = vmatprep.subr.mxu0 0.0
    %5904 = vmatpush1.msra.mxu0 0.0
    %5905 = vmatprep.subr.mxu0 0.0
    %5906 = vmatpush1.msra.mxu0 0.0
    %5907 = vmatprep.subr.mxu0 0.0
    %5908 = vmatpush1.msra.mxu0 0.0
    %5909 = vmatprep.subr.mxu0 0.0
    %5910 = vmatpush1.msra.mxu0 0.0
    %5911 = vmatprep.subr.mxu0 0.0
    %5912 = vmatpush1.msra.mxu0 0.0
    %5913 = vmatprep.subr.mxu0 0.0
    %5914 = vmatpush1.msra.mxu0 0.0
    %5915 = vmatprep.subr.mxu0 0.0
    %5916 = vmatpush1.msra.mxu0 0.0
    %5917 = vmatprep.subr.mxu0 0.0
    %5918 = vmatpush1.msra.mxu0 0.0
    %5919 = vmatprep.subr.mxu0 0.0
    %5920 = vmatpush1.msra.mxu0 0.0
    %5921 = vmatprep.subr.mxu0 0.0
    %5922 = vmatpush1.msra.mxu0 0.0
    %5923 = vmatprep.subr.mxu0 0.0
    %5924 = vmatpush1.msra.mxu0 0.0
    %5925 = vmatprep.subr.mxu0 0.0
    %5926 = vmatpush1.msra.mxu0 0.0
    %5927 = vmatprep.subr.mxu0 0.0
    %5928 = vmatpush1.msra.mxu0 0.0
    %5929 = vmatprep.subr.mxu0 0.0
    %5930 = vmatpush1.msra.mxu0 0.0
    %5931 = vmatprep.subr.mxu0 0.0
    %5932 = vmatpush1.msra.mxu0 0.0
    %5933 = vmatprep.subr.mxu0 0.0
    %5934 = vmatpush1.msra.mxu0 0.0
    %5935 = vmatprep.subr.mxu0 0.0
    %5936 = vmatpush1.msra.mxu0 0.0
    %5937 = vmatprep.subr.mxu0 0.0
    %5938 = vmatpush1.msra.mxu0 0.0
    %5939 = vmatprep.subr.mxu0 0.0
    %5940 = vmatpush1.msra.mxu0 0.0
    %5941 = vmatprep.subr.mxu0 0.0
    %5942 = vmatpush1.msra.mxu0 0.0
    %5943 = vmatprep.subr.mxu0 0.0
    %5944 = vmatpush1.msra.mxu0 0.0
    %5945 = vmatprep.subr.mxu0 0.0
    %5946 = vmatpush1.msra.mxu0 0.0
    %5947 = vmatprep.subr.mxu0 0.0
    %5948 = vmatpush1.msra.mxu0 0.0
    %5949 = vmatprep.mubr.f32.mxu0 0.0
    %5950 = vmatmul.mubr.f32.gmra.mrb[0].mxu0 %v5880
    %v5951 = vpop.f32.mrb[0].mxu0
    %v5952 = vadd.f32 0.0, %v5951
    %v5953 = vpop.f32.mrb[0].mxu0
    %v5954 = vadd.f32 0.0, %v5953
    %5955 = vmatprep.mubr.f32.mxu0 0.0
    %5956 = vmatmul.mubr.f32.gmra.mrb[0].mxu0 %v5883
    %v5957 = vpop.f32.mrb[0].mxu0
    %v5958 = vadd.f32 0.0, %v5957
    %v5959 = vpop.f32.mrb[0].mxu0
    %v5960 = vadd.f32 0.0, %v5959
    %5961 = vdwg.mxu0
    %5962 = vmatprep.subr.mxu0 %v5848
    %5963 = vmatpush1.msra.mxu0 %v5847
    %5964 = vmatprep.subr.mxu0 %v5850
    %5965 = vmatpush1.msra.mxu0 %v5849
    %5966 = vmatprep.subr.mxu0 %v5852
    %5967 = vmatpush1.msra.mxu0 %v5851
    %5968 = vmatprep.subr.mxu0 %v5854
    %5969 = vmatpush1.msra.mxu0 %v5853
    %5970 = vmatprep.subr.mxu0 %v5856
    %5971 = vmatpush1.msra.mxu0 %v5855
    %5972 = vmatprep.subr.mxu0 %v5858
    %5973 = vmatpush1.msra.mxu0 %v5857
    %5974 = vmatprep.subr.mxu0 %v5860
    %5975 = vmatpush1.msra.mxu0 %v5859
    %5976 = vmatprep.subr.mxu0 %v5862
    %5977 = vmatpush1.msra.mxu0 %v5861
    %5978 = vmatprep.subr.mxu0 0.0
    %5979 = vmatpush1.msra.mxu0 0.0
    %5980 = vmatprep.subr.mxu0 0.0
    %5981 = vmatpush1.msra.mxu0 0.0
    %5982 = vmatprep.subr.mxu0 0.0
    %5983 = vmatpush1.msra.mxu0 0.0
    %5984 = vmatprep.subr.mxu0 0.0
    %5985 = vmatpush1.msra.mxu0 0.0
    %5986 = vmatprep.subr.mxu0 0.0
    %5987 = vmatpush1.msra.mxu0 0.0
    %5988 = vmatprep.subr.mxu0 0.0
    %5989 = vmatpush1.msra.mxu0 0.0
    %5990 = vmatprep.subr.mxu0 0.0
    %5991 = vmatpush1.msra.mxu0 0.0
    %5992 = vmatprep.subr.mxu0 0.0
    %5993 = vmatpush1.msra.mxu0 0.0
    %5994 = vmatprep.subr.mxu0 0.0
    %5995 = vmatpush1.msra.mxu0 0.0
    %5996 = vmatprep.subr.mxu0 0.0
    %5997 = vmatpush1.msra.mxu0 0.0
    %5998 = vmatprep.subr.mxu0 0.0
    %5999 = vmatpush1.msra.mxu0 0.0
    %6000 = vmatprep.subr.mxu0 0.0
    %6001 = vmatpush1.msra.mxu0 0.0
    %6002 = vmatprep.subr.mxu0 0.0
    %6003 = vmatpush1.msra.mxu0 0.0
    %6004 = vmatprep.subr.mxu0 0.0
    %6005 = vmatpush1.msra.mxu0 0.0
    %6006 = vmatprep.subr.mxu0 0.0
    %6007 = vmatpush1.msra.mxu0 0.0
    %6008 = vmatprep.subr.mxu0 0.0
    %6009 = vmatpush1.msra.mxu0 0.0
    %6010 = vmatprep.subr.mxu0 0.0
    %6011 = vmatpush1.msra.mxu0 0.0
    %6012 = vmatprep.subr.mxu0 0.0
    %6013 = vmatpush1.msra.mxu0 0.0
    %6014 = vmatprep.subr.mxu0 0.0
    %6015 = vmatpush1.msra.mxu0 0.0
    %6016 = vmatprep.subr.mxu0 0.0
    %6017 = vmatpush1.msra.mxu0 0.0
    %6018 = vmatprep.subr.mxu0 0.0
    %6019 = vmatpush1.msra.mxu0 0.0
    %6020 = vmatprep.subr.mxu0 0.0
    %6021 = vmatpush1.msra.mxu0 0.0
    %6022 = vmatprep.subr.mxu0 0.0
    %6023 = vmatpush1.msra.mxu0 0.0
    %6024 = vmatprep.subr.mxu0 0.0
    %6025 = vmatpush1.msra.mxu0 0.0
    %6026 = vmatprep.mubr.f32.mxu0 0.0
    %6027 = vmatmul.mubr.f32.gmra.mrb[0].mxu0 %v2084
    %v6028 = vpop.f32.mrb[0].mxu0
    %v6029 = vadd.f32 %v5952, %v6028
    %v6030 = vpop.f32.mrb[0].mxu0
    %v6031 = vadd.f32 %v5954, %v6030
    %6032 = vmatprep.mubr.f32.mxu0 0.0
    %6033 = vmatmul.mubr.f32.gmra.mrb[0].mxu0 %v2087
    %v6034 = vpop.f32.mrb[0].mxu0
    %v6035 = vadd.f32 %v5958, %v6034
    %v6036 = vpop.f32.mrb[0].mxu0
    %v6037 = vadd.f32 %v5960, %v6036
    %6038 = vdwg.mxu0
    %v6039 = vld [vmem:[%s65] sm:$0xff]
    %v6040 = vld [vmem:[%s65 + $0x8] sm:$0xff]
    %s6041 = scalar_lea.vmem %s65, 16
    %v6042 = vld [vmem:[%s6041] sm:$0xff]
    %v6043 = vld [vmem:[%s6041 + $0x8] sm:$0xff]
    %6046 = vrot.lane.b32.xlu0 %v6029, 64
    %v6047 = vpop.permute.xlu0 %6046
    %6048 = vrot.lane.b32.xlu0 %v6035, 64
    %v6049 = vpop.permute.xlu0 %6048
    %v6053 = vsel %vm1746, %v6042, 0
    %v6056 = vsel %vm1746, %v6043, 0
    %6058 = vmatprep.subr.mxu0 0.0
    %6059 = vmatpush1.msra.mxu0 %v6047
    %6060 = vmatprep.subr.mxu0 0.0
    %6061 = vmatpush1.msra.mxu0 %v6049
    %6062 = vmatprep.subr.mxu0 0.0
    %6063 = vmatpush1.msra.mxu0 0.0
    %6064 = vmatprep.subr.mxu0 0.0
    %6065 = vmatpush1.msra.mxu0 0.0
    %6066 = vmatprep.subr.mxu0 0.0
    %6067 = vmatpush1.msra.mxu0 0.0
    %6068 = vmatprep.subr.mxu0 0.0
    %6069 = vmatpush1.msra.mxu0 0.0
    %6070 = vmatprep.subr.mxu0 0.0
    %6071 = vmatpush1.msra.mxu0 0.0
    %6072 = vmatprep.subr.mxu0 0.0
    %6073 = vmatpush1.msra.mxu0 0.0
    %6074 = vmatprep.subr.mxu0 0.0
    %6075 = vmatpush1.msra.mxu0 0.0
    %6076 = vmatprep.subr.mxu0 0.0
    %6077 = vmatpush1.msra.mxu0 0.0
    %6078 = vmatprep.subr.mxu0 0.0
    %6079 = vmatpush1.msra.mxu0 0.0
    %6080 = vmatprep.subr.mxu0 0.0
    %6081 = vmatpush1.msra.mxu0 0.0
    %6082 = vmatprep.subr.mxu0 0.0
    %6083 = vmatpush1.msra.mxu0 0.0
    %6084 = vmatprep.subr.mxu0 0.0
    %6085 = vmatpush1.msra.mxu0 0.0
    %6086 = vmatprep.subr.mxu0 0.0
    %6087 = vmatpush1.msra.mxu0 0.0
    %6088 = vmatprep.subr.mxu0 0.0
    %6089 = vmatpush1.msra.mxu0 0.0
    %6090 = vmatprep.subr.mxu0 0.0
    %6091 = vmatpush1.msra.mxu0 0.0
    %6092 = vmatprep.subr.mxu0 0.0
    %6093 = vmatpush1.msra.mxu0 0.0
    %6094 = vmatprep.subr.mxu0 0.0
    %6095 = vmatpush1.msra.mxu0 0.0
    %6096 = vmatprep.subr.mxu0 0.0
    %6097 = vmatpush1.msra.mxu0 0.0
    %6098 = vmatprep.subr.mxu0 0.0
    %6099 = vmatpush1.msra.mxu0 0.0
    %6100 = vmatprep.subr.mxu0 0.0
    %6101 = vmatpush1.msra.mxu0 0.0
    %6102 = vmatprep.subr.mxu0 0.0
    %6103 = vmatpush1.msra.mxu0 0.0
    %6104 = vmatprep.subr.mxu0 0.0
    %6105 = vmatpush1.msra.mxu0 0.0
    %6106 = vmatprep.subr.mxu0 0.0
    %6107 = vmatpush1.msra.mxu0 0.0
    %6108 = vmatprep.subr.mxu0 0.0
    %6109 = vmatpush1.msra.mxu0 0.0
    %6110 = vmatprep.subr.mxu0 0.0
    %6111 = vmatpush1.msra.mxu0 0.0
    %6112 = vmatprep.subr.mxu0 0.0
    %6113 = vmatpush1.msra.mxu0 0.0
    %6114 = vmatprep.subr.mxu0 0.0
    %6115 = vmatpush1.msra.mxu0 0.0
    %6116 = vmatprep.subr.mxu0 0.0
    %6117 = vmatpush1.msra.mxu0 0.0
    %6118 = vmatprep.subr.mxu0 0.0
    %6119 = vmatpush1.msra.mxu0 0.0
    %6120 = vmatprep.subr.mxu0 0.0
    %6121 = vmatpush1.msra.mxu0 0.0
    %6122 = vmatprep.mubr.f32.mxu0 0.0
    %6123 = vmatmul.mubr.f32.gmra.mrb[0].mxu0 %v6053
    %v6124 = vpop.f32.mrb[0].mxu0
    %v6125 = vadd.f32 0.0, %v6124
    %v6126 = vpop.f32.mrb[0].mxu0
    %6127 = vmatprep.mubr.f32.mxu0 0.0
    %6128 = vmatmul.mubr.f32.gmra.mrb[0].mxu0 %v6056
    %v6129 = vpop.f32.mrb[0].mxu0
    %v6130 = vadd.f32 0.0, %v6129
    %v6131 = vpop.f32.mrb[0].mxu0
    %6132 = vdwg.mxu0
    %v6134 = vsel %vm1746, %v6039, 0
    %v6137 = vsel %vm1746, %v6040, 0
    %6139 = vmatprep.subr.mxu0 0.0
    %6140 = vmatpush1.msra.mxu0 %v6029
    %6141 = vmatprep.subr.mxu0 0.0
    %6142 = vmatpush1.msra.mxu0 %v6035
    %6143 = vmatprep.subr.mxu0 0.0
    %6144 = vmatpush1.msra.mxu0 0.0
    %6145 = vmatprep.subr.mxu0 0.0
    %6146 = vmatpush1.msra.mxu0 0.0
    %6147 = vmatprep.subr.mxu0 0.0
    %6148 = vmatpush1.msra.mxu0 0.0
    %6149 = vmatprep.subr.mxu0 0.0
    %6150 = vmatpush1.msra.mxu0 0.0
    %6151 = vmatprep.subr.mxu0 0.0
    %6152 = vmatpush1.msra.mxu0 0.0
    %6153 = vmatprep.subr.mxu0 0.0
    %6154 = vmatpush1.msra.mxu0 0.0
    %6155 = vmatprep.subr.mxu0 0.0
    %6156 = vmatpush1.msra.mxu0 0.0
    %6157 = vmatprep.subr.mxu0 0.0
    %6158 = vmatpush1.msra.mxu0 0.0
    %6159 = vmatprep.subr.mxu0 0.0
    %6160 = vmatpush1.msra.mxu0 0.0
    %6161 = vmatprep.subr.mxu0 0.0
    %6162 = vmatpush1.msra.mxu0 0.0
    %6163 = vmatprep.subr.mxu0 0.0
    %6164 = vmatpush1.msra.mxu0 0.0
    %6165 = vmatprep.subr.mxu0 0.0
    %6166 = vmatpush1.msra.mxu0 0.0
    %6167 = vmatprep.subr.mxu0 0.0
    %6168 = vmatpush1.msra.mxu0 0.0
    %6169 = vmatprep.subr.mxu0 0.0
    %6170 = vmatpush1.msra.mxu0 0.0
    %6171 = vmatprep.subr.mxu0 0.0
    %6172 = vmatpush1.msra.mxu0 0.0
    %6173 = vmatprep.subr.mxu0 0.0
    %6174 = vmatpush1.msra.mxu0 0.0
    %6175 = vmatprep.subr.mxu0 0.0
    %6176 = vmatpush1.msra.mxu0 0.0
    %6177 = vmatprep.subr.mxu0 0.0
    %6178 = vmatpush1.msra.mxu0 0.0
    %6179 = vmatprep.subr.mxu0 0.0
    %6180 = vmatpush1.msra.mxu0 0.0
    %6181 = vmatprep.subr.mxu0 0.0
    %6182 = vmatpush1.msra.mxu0 0.0
    %6183 = vmatprep.subr.mxu0 0.0
    %6184 = vmatpush1.msra.mxu0 0.0
    %6185 = vmatprep.subr.mxu0 0.0
    %6186 = vmatpush1.msra.mxu0 0.0
    %6187 = vmatprep.subr.mxu0 0.0
    %6188 = vmatpush1.msra.mxu0 0.0
    %6189 = vmatprep.subr.mxu0 0.0
    %6190 = vmatpush1.msra.mxu0 0.0
    %6191 = vmatprep.subr.mxu0 0.0
    %6192 = vmatpush1.msra.mxu0 0.0
    %6193 = vmatprep.subr.mxu0 0.0
    %6194 = vmatpush1.msra.mxu0 0.0
    %6195 = vmatprep.subr.mxu0 0.0
    %6196 = vmatpush1.msra.mxu0 0.0
    %6197 = vmatprep.subr.mxu0 0.0
    %6198 = vmatpush1.msra.mxu0 0.0
    %6199 = vmatprep.subr.mxu0 0.0
    %6200 = vmatpush1.msra.mxu0 0.0
    %6201 = vmatprep.subr.mxu0 0.0
    %6202 = vmatpush1.msra.mxu0 0.0
    %6203 = vmatprep.mubr.f32.mxu0 0.0
    %6204 = vmatmul.mubr.f32.gmra.mrb[0].mxu0 %v6134
    %v6205 = vpop.f32.mrb[0].mxu0
    %v6206 = vadd.f32 %v6125, %v6205
    %v6207 = vpop.f32.mrb[0].mxu0
    %6208 = vmatprep.mubr.f32.mxu0 0.0
    %6209 = vmatmul.mubr.f32.gmra.mrb[0].mxu0 %v6137
    %v6210 = vpop.f32.mrb[0].mxu0
    %v6211 = vadd.f32 %v6130, %v6210
    %v6212 = vpop.f32.mrb[0].mxu0
    %6213 = vdwg.mxu0
    %s6214 = scalar_lea.vmem %s65, 32
    %v6215 = vld [vmem:[%s6214] sm:$0xff]
    %v6216 = vld [vmem:[%s6214 + $0x8] sm:$0xff]
    %v6218 = vsel %vm1746, %v6215, 0
    %v6221 = vsel %vm1746, %v6216, 0
    %6223 = vmatprep.subr.mxu0 0.0
    %6224 = vmatpush1.msra.mxu0 %v6031
    %6225 = vmatprep.subr.mxu0 0.0
    %6226 = vmatpush1.msra.mxu0 %v6037
    %6227 = vmatprep.subr.mxu0 0.0
    %6228 = vmatpush1.msra.mxu0 0.0
    %6229 = vmatprep.subr.mxu0 0.0
    %6230 = vmatpush1.msra.mxu0 0.0
    %6231 = vmatprep.subr.mxu0 0.0
    %6232 = vmatpush1.msra.mxu0 0.0
    %6233 = vmatprep.subr.mxu0 0.0
    %6234 = vmatpush1.msra.mxu0 0.0
    %6235 = vmatprep.subr.mxu0 0.0
    %6236 = vmatpush1.msra.mxu0 0.0
    %6237 = vmatprep.subr.mxu0 0.0
    %6238 = vmatpush1.msra.mxu0 0.0
    %6239 = vmatprep.subr.mxu0 0.0
    %6240 = vmatpush1.msra.mxu0 0.0
    %6241 = vmatprep.subr.mxu0 0.0
    %6242 = vmatpush1.msra.mxu0 0.0
    %6243 = vmatprep.subr.mxu0 0.0
    %6244 = vmatpush1.msra.mxu0 0.0
    %6245 = vmatprep.subr.mxu0 0.0
    %6246 = vmatpush1.msra.mxu0 0.0
    %6247 = vmatprep.subr.mxu0 0.0
    %6248 = vmatpush1.msra.mxu0 0.0
    %6249 = vmatprep.subr.mxu0 0.0
    %6250 = vmatpush1.msra.mxu0 0.0
    %6251 = vmatprep.subr.mxu0 0.0
    %6252 = vmatpush1.msra.mxu0 0.0
    %6253 = vmatprep.subr.mxu0 0.0
    %6254 = vmatpush1.msra.mxu0 0.0
    %6255 = vmatprep.subr.mxu0 0.0
    %6256 = vmatpush1.msra.mxu0 0.0
    %6257 = vmatprep.subr.mxu0 0.0
    %6258 = vmatpush1.msra.mxu0 0.0
    %6259 = vmatprep.subr.mxu0 0.0
    %6260 = vmatpush1.msra.mxu0 0.0
    %6261 = vmatprep.subr.mxu0 0.0
    %6262 = vmatpush1.msra.mxu0 0.0
    %6263 = vmatprep.subr.mxu0 0.0
    %6264 = vmatpush1.msra.mxu0 0.0
    %6265 = vmatprep.subr.mxu0 0.0
    %6266 = vmatpush1.msra.mxu0 0.0
    %6267 = vmatprep.subr.mxu0 0.0
    %6268 = vmatpush1.msra.mxu0 0.0
    %6269 = vmatprep.subr.mxu0 0.0
    %6270 = vmatpush1.msra.mxu0 0.0
    %6271 = vmatprep.subr.mxu0 0.0
    %6272 = vmatpush1.msra.mxu0 0.0
    %6273 = vmatprep.subr.mxu0 0.0
    %6274 = vmatpush1.msra.mxu0 0.0
    %6275 = vmatprep.subr.mxu0 0.0
    %6276 = vmatpush1.msra.mxu0 0.0
    %6277 = vmatprep.subr.mxu0 0.0
    %6278 = vmatpush1.msra.mxu0 0.0
    %6279 = vmatprep.subr.mxu0 0.0
    %6280 = vmatpush1.msra.mxu0 0.0
    %6281 = vmatprep.subr.mxu0 0.0
    %6282 = vmatpush1.msra.mxu0 0.0
    %6283 = vmatprep.subr.mxu0 0.0
    %6284 = vmatpush1.msra.mxu0 0.0
    %6285 = vmatprep.subr.mxu0 0.0
    %6286 = vmatpush1.msra.mxu0 0.0
    %6287 = vmatprep.mubr.f32.mxu0 0.0
    %6288 = vmatmul.mubr.f32.gmra.mrb[0].mxu0 %v6218
    %v6289 = vpop.f32.mrb[0].mxu0
    %v6290 = vadd.f32 0.0, %v6289
    %v6291 = vpop.f32.mrb[0].mxu0
    %6292 = vmatprep.mubr.f32.mxu0 0.0
    %6293 = vmatmul.mubr.f32.gmra.mrb[0].mxu0 %v6221
    %v6294 = vpop.f32.mrb[0].mxu0
    %v6295 = vadd.f32 0.0, %v6294
    %v6296 = vpop.f32.mrb[0].mxu0
    %6297 = vdwg.mxu0
    %v6298 = vadd.f32 %v6206, %v6290
    %v6299 = vadd.f32 %v6211, %v6295
    %v6300 = vld [vmem:[#allocation39] sm:$0x1]
    %v6301 = vlaneseq
    %v6302 = vshrl.u32 %v6301, 7
    %v6303 = vsub.s32 0, %v6302
    %v6304 = vrot.slane %v6300, %v6303
    %v6305 = vadd.f32 %v6298, %v6304
    %v6306 = vadd.f32 %v6299, %v6304
    %v6307 = vmax.f32 %v6305, 0.0
    %v6308 = vmax.f32 %v6306, 0.0
    %v6309 = vld [vmem:[%s69] sm:$0xff]
    %v6310 = vld [vmem:[%s69 + $0x8] sm:$0xff]
    %v6311 = vld [vmem:[%s69 + $0x10] sm:$0xff]
    %v6312 = vld [vmem:[%s69 + $0x18] sm:$0xff]
    %v6313 = vld [vmem:[%s69 + $0x20] sm:$0xff]
    %v6314 = vld [vmem:[%s69 + $0x28] sm:$0xff]
    %v6315 = vld [vmem:[%s69 + $0x30] sm:$0xff]
    %v6316 = vld [vmem:[%s69 + $0x38] sm:$0xff]
    %6317 = vmatprep.subr.mxu0 0.0
    %6318 = vmatpush1.msra.mxu0 %v6307
    %6319 = vmatprep.subr.mxu0 0.0
    %6320 = vmatpush1.msra.mxu0 %v6308
    %6321 = vmatprep.subr.mxu0 0.0
    %6322 = vmatpush1.msra.mxu0 0.0
    %6323 = vmatprep.subr.mxu0 0.0
    %6324 = vmatpush1.msra.mxu0 0.0
    %6325 = vmatprep.subr.mxu0 0.0
    %6326 = vmatpush1.msra.mxu0 0.0
    %6327 = vmatprep.subr.mxu0 0.0
    %6328 = vmatpush1.msra.mxu0 0.0
    %6329 = vmatprep.subr.mxu0 0.0
    %6330 = vmatpush1.msra.mxu0 0.0
    %6331 = vmatprep.subr.mxu0 0.0
    %6332 = vmatpush1.msra.mxu0 0.0
    %6333 = vmatprep.subr.mxu0 0.0
    %6334 = vmatpush1.msra.mxu0 0.0
    %6335 = vmatprep.subr.mxu0 0.0
    %6336 = vmatpush1.msra.mxu0 0.0
    %6337 = vmatprep.subr.mxu0 0.0
    %6338 = vmatpush1.msra.mxu0 0.0
    %6339 = vmatprep.subr.mxu0 0.0
    %6340 = vmatpush1.msra.mxu0 0.0
    %6341 = vmatprep.subr.mxu0 0.0
    %6342 = vmatpush1.msra.mxu0 0.0
    %6343 = vmatprep.subr.mxu0 0.0
    %6344 = vmatpush1.msra.mxu0 0.0
    %6345 = vmatprep.subr.mxu0 0.0
    %6346 = vmatpush1.msra.mxu0 0.0
    %6347 = vmatprep.subr.mxu0 0.0
    %6348 = vmatpush1.msra.mxu0 0.0
    %6349 = vmatprep.subr.mxu0 0.0
    %6350 = vmatpush1.msra.mxu0 0.0
    %6351 = vmatprep.subr.mxu0 0.0
    %6352 = vmatpush1.msra.mxu0 0.0
    %6353 = vmatprep.subr.mxu0 0.0
    %6354 = vmatpush1.msra.mxu0 0.0
    %6355 = vmatprep.subr.mxu0 0.0
    %6356 = vmatpush1.msra.mxu0 0.0
    %6357 = vmatprep.subr.mxu0 0.0
    %6358 = vmatpush1.msra.mxu0 0.0
    %6359 = vmatprep.subr.mxu0 0.0
    %6360 = vmatpush1.msra.mxu0 0.0
    %6361 = vmatprep.subr.mxu0 0.0
    %6362 = vmatpush1.msra.mxu0 0.0
    %6363 = vmatprep.subr.mxu0 0.0
    %6364 = vmatpush1.msra.mxu0 0.0
    %6365 = vmatprep.subr.mxu0 0.0
    %6366 = vmatpush1.msra.mxu0 0.0
    %6367 = vmatprep.subr.mxu0 0.0
    %6368 = vmatpush1.msra.mxu0 0.0
    %6369 = vmatprep.subr.mxu0 0.0
    %6370 = vmatpush1.msra.mxu0 0.0
    %6371 = vmatprep.subr.mxu0 0.0
    %6372 = vmatpush1.msra.mxu0 0.0
    %6373 = vmatprep.subr.mxu0 0.0
    %6374 = vmatpush1.msra.mxu0 0.0
    %6375 = vmatprep.subr.mxu0 0.0
    %6376 = vmatpush1.msra.mxu0 0.0
    %6377 = vmatprep.subr.mxu0 0.0
    %6378 = vmatpush1.msra.mxu0 0.0
    %6379 = vmatprep.subr.mxu0 0.0
    %6380 = vmatpush1.msra.mxu0 0.0
    %6381 = vmatprep.mubr.f32.mxu0 0.0
    %6382 = vmatmul.mubr.f32.gmra.mrb[0].mxu0 %v1747
    %v6383 = vpop.f32.mrb[0].mxu0
    %v6384 = vadd.f32 0.0, %v6383
    %v6385 = vpop.f32.mrb[0].mxu0
    %6386 = vdwg.mxu0
    %v6388 = vsel %vm1094, %v6384, 0
    %6390 = vmatprep.subr.mxu0 0.0
    %6391 = vmatpush1.msra.mxu0 %v6309
    %6392 = vmatprep.subr.mxu0 0.0
    %6393 = vmatpush1.msra.mxu0 %v6310
    %6394 = vmatprep.subr.mxu0 0.0
    %6395 = vmatpush1.msra.mxu0 %v6311
    %6396 = vmatprep.subr.mxu0 0.0
    %6397 = vmatpush1.msra.mxu0 %v6312
    %6398 = vmatprep.subr.mxu0 0.0
    %6399 = vmatpush1.msra.mxu0 %v6313
    %6400 = vmatprep.subr.mxu0 0.0
    %6401 = vmatpush1.msra.mxu0 %v6314
    %6402 = vmatprep.subr.mxu0 0.0
    %6403 = vmatpush1.msra.mxu0 %v6315
    %6404 = vmatprep.subr.mxu0 0.0
    %6405 = vmatpush1.msra.mxu0 %v6316
    %6406 = vmatprep.subr.mxu0 0.0
    %6407 = vmatpush1.msra.mxu0 0.0
    %6408 = vmatprep.subr.mxu0 0.0
    %6409 = vmatpush1.msra.mxu0 0.0
    %6410 = vmatprep.subr.mxu0 0.0
    %6411 = vmatpush1.msra.mxu0 0.0
    %6412 = vmatprep.subr.mxu0 0.0
    %6413 = vmatpush1.msra.mxu0 0.0
    %6414 = vmatprep.subr.mxu0 0.0
    %6415 = vmatpush1.msra.mxu0 0.0
    %6416 = vmatprep.subr.mxu0 0.0
    %6417 = vmatpush1.msra.mxu0 0.0
    %6418 = vmatprep.subr.mxu0 0.0
    %6419 = vmatpush1.msra.mxu0 0.0
    %6420 = vmatprep.subr.mxu0 0.0
    %6421 = vmatpush1.msra.mxu0 0.0
    %6422 = vmatprep.subr.mxu0 0.0
    %6423 = vmatpush1.msra.mxu0 0.0
    %6424 = vmatprep.subr.mxu0 0.0
    %6425 = vmatpush1.msra.mxu0 0.0
    %6426 = vmatprep.subr.mxu0 0.0
    %6427 = vmatpush1.msra.mxu0 0.0
    %6428 = vmatprep.subr.mxu0 0.0
    %6429 = vmatpush1.msra.mxu0 0.0
    %6430 = vmatprep.subr.mxu0 0.0
    %6431 = vmatpush1.msra.mxu0 0.0
    %6432 = vmatprep.subr.mxu0 0.0
    %6433 = vmatpush1.msra.mxu0 0.0
    %6434 = vmatprep.subr.mxu0 0.0
    %6435 = vmatpush1.msra.mxu0 0.0
    %6436 = vmatprep.subr.mxu0 0.0
    %6437 = vmatpush1.msra.mxu0 0.0
    %6438 = vmatprep.subr.mxu0 0.0
    %6439 = vmatpush1.msra.mxu0 0.0
    %6440 = vmatprep.subr.mxu0 0.0
    %6441 = vmatpush1.msra.mxu0 0.0
    %6442 = vmatprep.subr.mxu0 0.0
    %6443 = vmatpush1.msra.mxu0 0.0
    %6444 = vmatprep.subr.mxu0 0.0
    %6445 = vmatpush1.msra.mxu0 0.0
    %6446 = vmatprep.subr.mxu0 0.0
    %6447 = vmatpush1.msra.mxu0 0.0
    %6448 = vmatprep.subr.mxu0 0.0
    %6449 = vmatpush1.msra.mxu0 0.0
    %6450 = vmatprep.subr.mxu0 0.0
    %6451 = vmatpush1.msra.mxu0 0.0
    %6452 = vmatprep.subr.mxu0 0.0
    %6453 = vmatpush1.msra.mxu0 0.0
    %6454 = vmatprep.mubr.f32.mxu0 0.0
    %6455 = vmatmul.mubr.f32.gmra.mrb[0].mxu0 %v6388
    %v6456 = vpop.f32.mrb[0].mxu0
    %v6457 = vadd.f32 0.0, %v6456
    %v6458 = vpop.f32.mrb[0].mxu0
    %6459 = vdwg.mxu0
    %v6460 = vlaneseq
    %v6461 = vshrl.u32 %v6460, 7
    %v6462 = vsub.s32 0, %v6461
    %v6463 = vrot.slane %v6457, %v6462
    %v6464 = vsub.f32 %v6307, %v6463
    %v6465 = vsub.f32 %v6308, %v6463
    %v6466 = vmul.f32 %v6464, %v6464
    %v6467 = vmul.f32 %v6465, %v6465
    %6468 = vmatprep.subr.mxu0 0.0
    %6469 = vmatpush1.msra.mxu0 %v6466
    %6470 = vmatprep.subr.mxu0 0.0
    %6471 = vmatpush1.msra.mxu0 %v6467
    %6472 = vmatprep.subr.mxu0 0.0
    %6473 = vmatpush1.msra.mxu0 0.0
    %6474 = vmatprep.subr.mxu0 0.0
    %6475 = vmatpush1.msra.mxu0 0.0
    %6476 = vmatprep.subr.mxu0 0.0
    %6477 = vmatpush1.msra.mxu0 0.0
    %6478 = vmatprep.subr.mxu0 0.0
    %6479 = vmatpush1.msra.mxu0 0.0
    %6480 = vmatprep.subr.mxu0 0.0
    %6481 = vmatpush1.msra.mxu0 0.0
    %6482 = vmatprep.subr.mxu0 0.0
    %6483 = vmatpush1.msra.mxu0 0.0
    %6484 = vmatprep.subr.mxu0 0.0
    %6485 = vmatpush1.msra.mxu0 0.0
    %6486 = vmatprep.subr.mxu0 0.0
    %6487 = vmatpush1.msra.mxu0 0.0
    %6488 = vmatprep.subr.mxu0 0.0
    %6489 = vmatpush1.msra.mxu0 0.0
    %6490 = vmatprep.subr.mxu0 0.0
    %6491 = vmatpush1.msra.mxu0 0.0
    %6492 = vmatprep.subr.mxu0 0.0
    %6493 = vmatpush1.msra.mxu0 0.0
    %6494 = vmatprep.subr.mxu0 0.0
    %6495 = vmatpush1.msra.mxu0 0.0
    %6496 = vmatprep.subr.mxu0 0.0
    %6497 = vmatpush1.msra.mxu0 0.0
    %6498 = vmatprep.subr.mxu0 0.0
    %6499 = vmatpush1.msra.mxu0 0.0
    %6500 = vmatprep.subr.mxu0 0.0
    %6501 = vmatpush1.msra.mxu0 0.0
    %6502 = vmatprep.subr.mxu0 0.0
    %6503 = vmatpush1.msra.mxu0 0.0
    %6504 = vmatprep.subr.mxu0 0.0
    %6505 = vmatpush1.msra.mxu0 0.0
    %6506 = vmatprep.subr.mxu0 0.0
    %6507 = vmatpush1.msra.mxu0 0.0
    %6508 = vmatprep.subr.mxu0 0.0
    %6509 = vmatpush1.msra.mxu0 0.0
    %6510 = vmatprep.subr.mxu0 0.0
    %6511 = vmatpush1.msra.mxu0 0.0
    %6512 = vmatprep.subr.mxu0 0.0
    %6513 = vmatpush1.msra.mxu0 0.0
    %6514 = vmatprep.subr.mxu0 0.0
    %6515 = vmatpush1.msra.mxu0 0.0
    %6516 = vmatprep.subr.mxu0 0.0
    %6517 = vmatpush1.msra.mxu0 0.0
    %6518 = vmatprep.subr.mxu0 0.0
    %6519 = vmatpush1.msra.mxu0 0.0
    %6520 = vmatprep.subr.mxu0 0.0
    %6521 = vmatpush1.msra.mxu0 0.0
    %6522 = vmatprep.subr.mxu0 0.0
    %6523 = vmatpush1.msra.mxu0 0.0
    %6524 = vmatprep.subr.mxu0 0.0
    %6525 = vmatpush1.msra.mxu0 0.0
    %6526 = vmatprep.subr.mxu0 0.0
    %6527 = vmatpush1.msra.mxu0 0.0
    %6528 = vmatprep.subr.mxu0 0.0
    %6529 = vmatpush1.msra.mxu0 0.0
    %6530 = vmatprep.subr.mxu0 0.0
    %6531 = vmatpush1.msra.mxu0 0.0
    %6532 = vmatprep.mubr.f32.mxu0 0.0
    %6533 = vmatmul.mubr.f32.gmra.mrb[0].mxu0 %v1747
    %v6534 = vpop.f32.mrb[0].mxu0
    %v6535 = vadd.f32 0.0, %v6534
    %v6536 = vpop.f32.mrb[0].mxu0
    %6537 = vdwg.mxu0
    %v6539 = vsel %vm1094, %v6535, 0
    %6541 = vmatprep.subr.mxu0 0.0
    %6542 = vmatpush1.msra.mxu0 %v6309
    %6543 = vmatprep.subr.mxu0 0.0
    %6544 = vmatpush1.msra.mxu0 %v6310
    %6545 = vmatprep.subr.mxu0 0.0
    %6546 = vmatpush1.msra.mxu0 %v6311
    %6547 = vmatprep.subr.mxu0 0.0
    %6548 = vmatpush1.msra.mxu0 %v6312
    %6549 = vmatprep.subr.mxu0 0.0
    %6550 = vmatpush1.msra.mxu0 %v6313
    %6551 = vmatprep.subr.mxu0 0.0
    %6552 = vmatpush1.msra.mxu0 %v6314
    %6553 = vmatprep.subr.mxu0 0.0
    %6554 = vmatpush1.msra.mxu0 %v6315
    %6555 = vmatprep.subr.mxu0 0.0
    %6556 = vmatpush1.msra.mxu0 %v6316
    %6557 = vmatprep.subr.mxu0 0.0
    %6558 = vmatpush1.msra.mxu0 0.0
    %6559 = vmatprep.subr.mxu0 0.0
    %6560 = vmatpush1.msra.mxu0 0.0
    %6561 = vmatprep.subr.mxu0 0.0
    %6562 = vmatpush1.msra.mxu0 0.0
    %6563 = vmatprep.subr.mxu0 0.0
    %6564 = vmatpush1.msra.mxu0 0.0
    %6565 = vmatprep.subr.mxu0 0.0
    %6566 = vmatpush1.msra.mxu0 0.0
    %6567 = vmatprep.subr.mxu0 0.0
    %6568 = vmatpush1.msra.mxu0 0.0
    %6569 = vmatprep.subr.mxu0 0.0
    %6570 = vmatpush1.msra.mxu0 0.0
    %6571 = vmatprep.subr.mxu0 0.0
    %6572 = vmatpush1.msra.mxu0 0.0
    %6573 = vmatprep.subr.mxu0 0.0
    %6574 = vmatpush1.msra.mxu0 0.0
    %6575 = vmatprep.subr.mxu0 0.0
    %6576 = vmatpush1.msra.mxu0 0.0
    %6577 = vmatprep.subr.mxu0 0.0
    %6578 = vmatpush1.msra.mxu0 0.0
    %6579 = vmatprep.subr.mxu0 0.0
    %6580 = vmatpush1.msra.mxu0 0.0
    %6581 = vmatprep.subr.mxu0 0.0
    %6582 = vmatpush1.msra.mxu0 0.0
    %6583 = vmatprep.subr.mxu0 0.0
    %6584 = vmatpush1.msra.mxu0 0.0
    %6585 = vmatprep.subr.mxu0 0.0
    %6586 = vmatpush1.msra.mxu0 0.0
    %6587 = vmatprep.subr.mxu0 0.0
    %6588 = vmatpush1.msra.mxu0 0.0
    %6589 = vmatprep.subr.mxu0 0.0
    %6590 = vmatpush1.msra.mxu0 0.0
    %6591 = vmatprep.subr.mxu0 0.0
    %6592 = vmatpush1.msra.mxu0 0.0
    %6593 = vmatprep.subr.mxu0 0.0
    %6594 = vmatpush1.msra.mxu0 0.0
    %6595 = vmatprep.subr.mxu0 0.0
    %6596 = vmatpush1.msra.mxu0 0.0
    %6597 = vmatprep.subr.mxu0 0.0
    %6598 = vmatpush1.msra.mxu0 0.0
    %6599 = vmatprep.subr.mxu0 0.0
    %6600 = vmatpush1.msra.mxu0 0.0
    %6601 = vmatprep.subr.mxu0 0.0
    %6602 = vmatpush1.msra.mxu0 0.0
    %6603 = vmatprep.subr.mxu0 0.0
    %6604 = vmatpush1.msra.mxu0 0.0
    %6605 = vmatprep.mubr.f32.mxu0 0.0
    %6606 = vmatmul.mubr.f32.gmra.mrb[0].mxu0 %v6539
    %v6607 = vpop.f32.mrb[0].mxu0
    %v6608 = vadd.f32 1e-05, %v6607
    %v6609 = vpop.f32.mrb[0].mxu0
    %6610 = vdwg.mxu0
    %v6611 = vrsqrt.pop %v6608
    %v6612 = vld [vmem:[#allocation39 + $0x1] sm:$0x1]
    %v6613 = vmul.f32 %v6611, %v6612
    %v6614 = vlaneseq
    %v6615 = vshrl.u32 %v6614, 7
    %v6616 = vsub.s32 0, %v6615
    %v6617 = vrot.slane %v6613, %v6616
    %v6618 = vmul.f32 %v6464, %v6617
    %v6619 = vmul.f32 %v6465, %v6617
    %v6620 = vld [vmem:[#allocation39 + $0x2] sm:$0x1]
    %v6621 = vlaneseq
    %v6622 = vshrl.u32 %v6621, 7
    %v6623 = vsub.s32 0, %v6622
    %v6624 = vrot.slane %v6620, %v6623
    %v6625 = vadd.f32 %v6618, %v6624
    %v6626 = vadd.f32 %v6619, %v6624
    %v6627 = vld [vmem:[#allocation40] sm:$0xff]
    %v6628 = vld [vmem:[#allocation40 + $0x8] sm:$0xff]
    %v6629 = vld [vmem:[#allocation40 + $0x10] sm:$0xff]
    %v6630 = vld [vmem:[#allocation40 + $0x18] sm:$0xff]
    %v6631 = vld [vmem:[#allocation40 + $0x20] sm:$0xff]
    %v6632 = vld [vmem:[#allocation40 + $0x28] sm:$0xff]
    %v6633 = vld [vmem:[#allocation40 + $0x30] sm:$0xff]
    %v6634 = vld [vmem:[#allocation40 + $0x38] sm:$0xff]
    %v6636 = vsel %vm1094, %v6625, 0
    %v6639 = vsel %vm1094, %v6626, 0
    %6641 = vmatprep.subr.mxu0 0.0
    %6642 = vmatpush1.msra.mxu0 %v6627
    %6643 = vmatprep.subr.mxu0 0.0
    %6644 = vmatpush1.msra.mxu0 %v6628
    %6645 = vmatprep.subr.mxu0 0.0
    %6646 = vmatpush1.msra.mxu0 %v6629
    %6647 = vmatprep.subr.mxu0 0.0
    %6648 = vmatpush1.msra.mxu0 %v6630
    %6649 = vmatprep.subr.mxu0 0.0
    %6650 = vmatpush1.msra.mxu0 %v6631
    %6651 = vmatprep.subr.mxu0 0.0
    %6652 = vmatpush1.msra.mxu0 %v6632
    %6653 = vmatprep.subr.mxu0 0.0
    %6654 = vmatpush1.msra.mxu0 %v6633
    %6655 = vmatprep.subr.mxu0 0.0
    %6656 = vmatpush1.msra.mxu0 %v6634
    %6657 = vmatprep.subr.mxu0 0.0
    %6658 = vmatpush1.msra.mxu0 0.0
    %6659 = vmatprep.subr.mxu0 0.0
    %6660 = vmatpush1.msra.mxu0 0.0
    %6661 = vmatprep.subr.mxu0 0.0
    %6662 = vmatpush1.msra.mxu0 0.0
    %6663 = vmatprep.subr.mxu0 0.0
    %6664 = vmatpush1.msra.mxu0 0.0
    %6665 = vmatprep.subr.mxu0 0.0
    %6666 = vmatpush1.msra.mxu0 0.0
    %6667 = vmatprep.subr.mxu0 0.0
    %6668 = vmatpush1.msra.mxu0 0.0
    %6669 = vmatprep.subr.mxu0 0.0
    %6670 = vmatpush1.msra.mxu0 0.0
    %6671 = vmatprep.subr.mxu0 0.0
    %6672 = vmatpush1.msra.mxu0 0.0
    %6673 = vmatprep.subr.mxu0 0.0
    %6674 = vmatpush1.msra.mxu0 0.0
    %6675 = vmatprep.subr.mxu0 0.0
    %6676 = vmatpush1.msra.mxu0 0.0
    %6677 = vmatprep.subr.mxu0 0.0
    %6678 = vmatpush1.msra.mxu0 0.0
    %6679 = vmatprep.subr.mxu0 0.0
    %6680 = vmatpush1.msra.mxu0 0.0
    %6681 = vmatprep.subr.mxu0 0.0
    %6682 = vmatpush1.msra.mxu0 0.0
    %6683 = vmatprep.subr.mxu0 0.0
    %6684 = vmatpush1.msra.mxu0 0.0
    %6685 = vmatprep.subr.mxu0 0.0
    %6686 = vmatpush1.msra.mxu0 0.0
    %6687 = vmatprep.subr.mxu0 0.0
    %6688 = vmatpush1.msra.mxu0 0.0
    %6689 = vmatprep.subr.mxu0 0.0
    %6690 = vmatpush1.msra.mxu0 0.0
    %6691 = vmatprep.subr.mxu0 0.0
    %6692 = vmatpush1.msra.mxu0 0.0
    %6693 = vmatprep.subr.mxu0 0.0
    %6694 = vmatpush1.msra.mxu0 0.0
    %6695 = vmatprep.subr.mxu0 0.0
    %6696 = vmatpush1.msra.mxu0 0.0
    %6697 = vmatprep.subr.mxu0 0.0
    %6698 = vmatpush1.msra.mxu0 0.0
    %6699 = vmatprep.subr.mxu0 0.0
    %6700 = vmatpush1.msra.mxu0 0.0
    %6701 = vmatprep.subr.mxu0 0.0
    %6702 = vmatpush1.msra.mxu0 0.0
    %6703 = vmatprep.subr.mxu0 0.0
    %6704 = vmatpush1.msra.mxu0 0.0
    %6705 = vmatprep.mubr.f32.mxu0 0.0
    %6706 = vmatmul.mubr.f32.gmra.mrb[0].mxu0 %v6636
    %v6707 = vpop.f32.mrb[0].mxu0
    %v6708 = vadd.f32 0.0, %v6707
    %v6709 = vpop.f32.mrb[0].mxu0
    %6710 = vmatprep.mubr.f32.mxu0 0.0
    %6711 = vmatmul.mubr.f32.gmra.mrb[0].mxu0 %v6639
    %v6712 = vpop.f32.mrb[0].mxu0
    %v6713 = vadd.f32 0.0, %v6712
    %v6714 = vpop.f32.mrb[0].mxu0
    %6715 = vdwg.mxu0
    %v6716 = vld [vmem:[%s73] sm:$0xff]
    %v6717 = vld [vmem:[%s73 + $0x8] sm:$0xff]
    %v6718 = vld [vmem:[%s73 + $0x10] sm:$0xff]
    %v6719 = vld [vmem:[%s73 + $0x18] sm:$0xff]
    %s6720 = scalar_lea.vmem %s73, 32
    %v6721 = vld [vmem:[%s6720] sm:$0xff]
    %v6722 = vld [vmem:[%s6720 + $0x8] sm:$0xff]
    %v6723 = vld [vmem:[%s6720 + $0x10] sm:$0xff]
    %v6724 = vld [vmem:[%s6720 + $0x18] sm:$0xff]
    %6727 = vrot.lane.b32.xlu0 %v6708, 64
    %v6728 = vpop.permute.xlu0 %6727
    %6729 = vrot.lane.b32.xlu0 %v6713, 64
    %v6730 = vpop.permute.xlu0 %6729
    %v6734 = vsel %vm1746, %v6721, 0
    %v6737 = vsel %vm1746, %v6722, 0
    %v6740 = vsel %vm1746, %v6723, 0
    %v6743 = vsel %vm1746, %v6724, 0
    %6745 = vmatprep.subr.mxu0 0.0
    %6746 = vmatpush1.msra.mxu0 %v6728
    %6747 = vmatprep.subr.mxu0 0.0
    %6748 = vmatpush1.msra.mxu0 %v6730
    %6749 = vmatprep.subr.mxu0 0.0
    %6750 = vmatpush1.msra.mxu0 0.0
    %6751 = vmatprep.subr.mxu0 0.0
    %6752 = vmatpush1.msra.mxu0 0.0
    %6753 = vmatprep.subr.mxu0 0.0
    %6754 = vmatpush1.msra.mxu0 0.0
    %6755 = vmatprep.subr.mxu0 0.0
    %6756 = vmatpush1.msra.mxu0 0.0
    %6757 = vmatprep.subr.mxu0 0.0
    %6758 = vmatpush1.msra.mxu0 0.0
    %6759 = vmatprep.subr.mxu0 0.0
    %6760 = vmatpush1.msra.mxu0 0.0
    %6761 = vmatprep.subr.mxu0 0.0
    %6762 = vmatpush1.msra.mxu0 0.0
    %6763 = vmatprep.subr.mxu0 0.0
    %6764 = vmatpush1.msra.mxu0 0.0
    %6765 = vmatprep.subr.mxu0 0.0
    %6766 = vmatpush1.msra.mxu0 0.0
    %6767 = vmatprep.subr.mxu0 0.0
    %6768 = vmatpush1.msra.mxu0 0.0
    %6769 = vmatprep.subr.mxu0 0.0
    %6770 = vmatpush1.msra.mxu0 0.0
    %6771 = vmatprep.subr.mxu0 0.0
    %6772 = vmatpush1.msra.mxu0 0.0
    %6773 = vmatprep.subr.mxu0 0.0
    %6774 = vmatpush1.msra.mxu0 0.0
    %6775 = vmatprep.subr.mxu0 0.0
    %6776 = vmatpush1.msra.mxu0 0.0
    %6777 = vmatprep.subr.mxu0 0.0
    %6778 = vmatpush1.msra.mxu0 0.0
    %6779 = vmatprep.subr.mxu0 0.0
    %6780 = vmatpush1.msra.mxu0 0.0
    %6781 = vmatprep.subr.mxu0 0.0
    %6782 = vmatpush1.msra.mxu0 0.0
    %6783 = vmatprep.subr.mxu0 0.0
    %6784 = vmatpush1.msra.mxu0 0.0
    %6785 = vmatprep.subr.mxu0 0.0
    %6786 = vmatpush1.msra.mxu0 0.0
    %6787 = vmatprep.subr.mxu0 0.0
    %6788 = vmatpush1.msra.mxu0 0.0
    %6789 = vmatprep.subr.mxu0 0.0
    %6790 = vmatpush1.msra.mxu0 0.0
    %6791 = vmatprep.subr.mxu0 0.0
    %6792 = vmatpush1.msra.mxu0 0.0
    %6793 = vmatprep.subr.mxu0 0.0
    %6794 = vmatpush1.msra.mxu0 0.0
    %6795 = vmatprep.subr.mxu0 0.0
    %6796 = vmatpush1.msra.mxu0 0.0
    %6797 = vmatprep.subr.mxu0 0.0
    %6798 = vmatpush1.msra.mxu0 0.0
    %6799 = vmatprep.subr.mxu0 0.0
    %6800 = vmatpush1.msra.mxu0 0.0
    %6801 = vmatprep.subr.mxu0 0.0
    %6802 = vmatpush1.msra.mxu0 0.0
    %6803 = vmatprep.subr.mxu0 0.0
    %6804 = vmatpush1.msra.mxu0 0.0
    %6805 = vmatprep.subr.mxu0 0.0
    %6806 = vmatpush1.msra.mxu0 0.0
    %6807 = vmatprep.subr.mxu0 0.0
    %6808 = vmatpush1.msra.mxu0 0.0
    %6809 = vmatprep.mubr.f32.mxu0 0.0
    %6810 = vmatmul.mubr.f32.gmra.mrb[0].mxu0 %v6734
    %v6811 = vpop.f32.mrb[0].mxu0
    %v6812 = vadd.f32 0.0, %v6811
    %v6813 = vpop.f32.mrb[0].mxu0
    %6814 = vmatprep.mubr.f32.mxu0 0.0
    %6815 = vmatmul.mubr.f32.gmra.mrb[0].mxu0 %v6737
    %v6816 = vpop.f32.mrb[0].mxu0
    %v6817 = vadd.f32 0.0, %v6816
    %v6818 = vpop.f32.mrb[0].mxu0
    %6819 = vmatprep.mubr.f32.mxu0 0.0
    %6820 = vmatmul.mubr.f32.gmra.mrb[0].mxu0 %v6740
    %v6821 = vpop.f32.mrb[0].mxu0
    %v6822 = vadd.f32 0.0, %v6821
    %v6823 = vpop.f32.mrb[0].mxu0
    %6824 = vmatprep.mubr.f32.mxu0 0.0
    %6825 = vmatmul.mubr.f32.gmra.mrb[0].mxu0 %v6743
    %v6826 = vpop.f32.mrb[0].mxu0
    %v6827 = vadd.f32 0.0, %v6826
    %v6828 = vpop.f32.mrb[0].mxu0
    %6829 = vdwg.mxu0
    %v6831 = vsel %vm1746, %v6716, 0
    %v6834 = vsel %vm1746, %v6717, 0
    %v6837 = vsel %vm1746, %v6718, 0
    %v6840 = vsel %vm1746, %v6719, 0
    %6842 = vmatprep.subr.mxu0 0.0
    %6843 = vmatpush1.msra.mxu0 %v6708
    %6844 = vmatprep.subr.mxu0 0.0
    %6845 = vmatpush1.msra.mxu0 %v6713
    %6846 = vmatprep.subr.mxu0 0.0
    %6847 = vmatpush1.msra.mxu0 0.0
    %6848 = vmatprep.subr.mxu0 0.0
    %6849 = vmatpush1.msra.mxu0 0.0
    %6850 = vmatprep.subr.mxu0 0.0
    %6851 = vmatpush1.msra.mxu0 0.0
    %6852 = vmatprep.subr.mxu0 0.0
    %6853 = vmatpush1.msra.mxu0 0.0
    %6854 = vmatprep.subr.mxu0 0.0
    %6855 = vmatpush1.msra.mxu0 0.0
    %6856 = vmatprep.subr.mxu0 0.0
    %6857 = vmatpush1.msra.mxu0 0.0
    %6858 = vmatprep.subr.mxu0 0.0
    %6859 = vmatpush1.msra.mxu0 0.0
    %6860 = vmatprep.subr.mxu0 0.0
    %6861 = vmatpush1.msra.mxu0 0.0
    %6862 = vmatprep.subr.mxu0 0.0
    %6863 = vmatpush1.msra.mxu0 0.0
    %6864 = vmatprep.subr.mxu0 0.0
    %6865 = vmatpush1.msra.mxu0 0.0
    %6866 = vmatprep.subr.mxu0 0.0
    %6867 = vmatpush1.msra.mxu0 0.0
    %6868 = vmatprep.subr.mxu0 0.0
    %6869 = vmatpush1.msra.mxu0 0.0
    %6870 = vmatprep.subr.mxu0 0.0
    %6871 = vmatpush1.msra.mxu0 0.0
    %6872 = vmatprep.subr.mxu0 0.0
    %6873 = vmatpush1.msra.mxu0 0.0
    %6874 = vmatprep.subr.mxu0 0.0
    %6875 = vmatpush1.msra.mxu0 0.0
    %6876 = vmatprep.subr.mxu0 0.0
    %6877 = vmatpush1.msra.mxu0 0.0
    %6878 = vmatprep.subr.mxu0 0.0
    %6879 = vmatpush1.msra.mxu0 0.0
    %6880 = vmatprep.subr.mxu0 0.0
    %6881 = vmatpush1.msra.mxu0 0.0
    %6882 = vmatprep.subr.mxu0 0.0
    %6883 = vmatpush1.msra.mxu0 0.0
    %6884 = vmatprep.subr.mxu0 0.0
    %6885 = vmatpush1.msra.mxu0 0.0
    %6886 = vmatprep.subr.mxu0 0.0
    %6887 = vmatpush1.msra.mxu0 0.0
    %6888 = vmatprep.subr.mxu0 0.0
    %6889 = vmatpush1.msra.mxu0 0.0
    %6890 = vmatprep.subr.mxu0 0.0
    %6891 = vmatpush1.msra.mxu0 0.0
    %6892 = vmatprep.subr.mxu0 0.0
    %6893 = vmatpush1.msra.mxu0 0.0
    %6894 = vmatprep.subr.mxu0 0.0
    %6895 = vmatpush1.msra.mxu0 0.0
    %6896 = vmatprep.subr.mxu0 0.0
    %6897 = vmatpush1.msra.mxu0 0.0
    %6898 = vmatprep.subr.mxu0 0.0
    %6899 = vmatpush1.msra.mxu0 0.0
    %6900 = vmatprep.subr.mxu0 0.0
    %6901 = vmatpush1.msra.mxu0 0.0
    %6902 = vmatprep.subr.mxu0 0.0
    %6903 = vmatpush1.msra.mxu0 0.0
    %6904 = vmatprep.subr.mxu0 0.0
    %6905 = vmatpush1.msra.mxu0 0.0
    %6906 = vmatprep.mubr.f32.mxu0 0.0
    %6907 = vmatmul.mubr.f32.gmra.mrb[0].mxu0 %v6831
    %v6908 = vpop.f32.mrb[0].mxu0
    %v6909 = vadd.f32 %v6812, %v6908
    %v6910 = vpop.f32.mrb[0].mxu0
    %6911 = vmatprep.mubr.f32.mxu0 0.0
    %6912 = vmatmul.mubr.f32.gmra.mrb[0].mxu0 %v6834
    %v6913 = vpop.f32.mrb[0].mxu0
    %v6914 = vadd.f32 %v6817, %v6913
    %v6915 = vpop.f32.mrb[0].mxu0
    %6916 = vmatprep.mubr.f32.mxu0 0.0
    %6917 = vmatmul.mubr.f32.gmra.mrb[0].mxu0 %v6837
    %v6918 = vpop.f32.mrb[0].mxu0
    %v6919 = vadd.f32 %v6822, %v6918
    %v6920 = vpop.f32.mrb[0].mxu0
    %6921 = vmatprep.mubr.f32.mxu0 0.0
    %6922 = vmatmul.mubr.f32.gmra.mrb[0].mxu0 %v6840
    %v6923 = vpop.f32.mrb[0].mxu0
    %v6924 = vadd.f32 %v6827, %v6923
    %v6925 = vpop.f32.mrb[0].mxu0
    %6926 = vdwg.mxu0
    %v6927 = vld [vmem:[%s75] sm:$0x1]
    %v6929 = vlaneseq
    %v6930 = vshrl.u32 %v6929, 7
    %v6931 = vsub.s32 0, %v6930
    %v6932 = vrot.slane %v6927, %v6931
    %v6934 = vadd.f32 %v6909, %v6932
    %v6935 = vadd.f32 %v6914, %v6932
    %v6936 = vadd.f32 %v6919, %v6932
    %v6937 = vadd.f32 %v6924, %v6932
    %v6938 = vld [vmem:[#allocation42] sm:$0xff]
    %v6939 = vld [vmem:[#allocation42 + $0x8] sm:$0xff]
    %v6940 = vld [vmem:[#allocation42 + $0x10] sm:$0xff]
    %v6941 = vld [vmem:[#allocation42 + $0x18] sm:$0xff]
    %v6942 = vld [vmem:[#allocation42 + $0x20] sm:$0xff]
    %v6943 = vld [vmem:[#allocation42 + $0x28] sm:$0xff]
    %v6944 = vld [vmem:[#allocation42 + $0x30] sm:$0xff]
    %v6945 = vld [vmem:[#allocation42 + $0x38] sm:$0xff]
    %v6946 = vld [vmem:[#allocation42 + $0x40] sm:$0xff]
    %v6947 = vld [vmem:[#allocation42 + $0x48] sm:$0xff]
    %v6948 = vld [vmem:[#allocation42 + $0x50] sm:$0xff]
    %v6949 = vld [vmem:[#allocation42 + $0x58] sm:$0xff]
    %v6950 = vld [vmem:[#allocation42 + $0x60] sm:$0xff]
    %v6951 = vld [vmem:[#allocation42 + $0x68] sm:$0xff]
    %v6952 = vld [vmem:[#allocation42 + $0x70] sm:$0xff]
    %v6953 = vld [vmem:[#allocation42 + $0x78] sm:$0xff]
    %v6954 = vld [vmem:[#allocation42 + $0x80] sm:$0xff]
    %v6955 = vld [vmem:[#allocation42 + $0x88] sm:$0xff]
    %v6956 = vld [vmem:[#allocation42 + $0x90] sm:$0xff]
    %v6957 = vld [vmem:[#allocation42 + $0x98] sm:$0xff]
    %v6958 = vld [vmem:[#allocation42 + $0xa0] sm:$0xff]
    %v6959 = vld [vmem:[#allocation42 + $0xa8] sm:$0xff]
    %v6960 = vld [vmem:[#allocation42 + $0xb0] sm:$0xff]
    %v6961 = vld [vmem:[#allocation42 + $0xb8] sm:$0xff]
    %v6962 = vld [vmem:[#allocation42 + $0xc0] sm:$0xff]
    %v6963 = vld [vmem:[#allocation42 + $0xc8] sm:$0xff]
    %v6964 = vld [vmem:[#allocation42 + $0xd0] sm:$0xff]
    %v6965 = vld [vmem:[#allocation42 + $0xd8] sm:$0xff]
    %v6966 = vld [vmem:[#allocation42 + $0xe0] sm:$0xff]
    %v6967 = vld [vmem:[#allocation42 + $0xe8] sm:$0xff]
    %v6968 = vld [vmem:[#allocation42 + $0xf0] sm:$0xff]
    %v6969 = vld [vmem:[#allocation42 + $0xf8] sm:$0xff]
    %v6971 = vsel %vm1094, %v6934, 0
    %v6974 = vsel %vm1094, %v6935, 0
    %v6977 = vsel %vm1094, %v6936, 0
    %v6980 = vsel %vm1094, %v6937, 0
    %6982 = vmatprep.subr.mxu0 %v6955
    %6983 = vmatpush1.msra.mxu0 %v6954
    %6984 = vmatprep.subr.mxu0 %v6957
    %6985 = vmatpush1.msra.mxu0 %v6956
    %6986 = vmatprep.subr.mxu0 %v6959
    %6987 = vmatpush1.msra.mxu0 %v6958
    %6988 = vmatprep.subr.mxu0 %v6961
    %6989 = vmatpush1.msra.mxu0 %v6960
    %6990 = vmatprep.subr.mxu0 %v6963
    %6991 = vmatpush1.msra.mxu0 %v6962
    %6992 = vmatprep.subr.mxu0 %v6965
    %6993 = vmatpush1.msra.mxu0 %v6964
    %6994 = vmatprep.subr.mxu0 %v6967
    %6995 = vmatpush1.msra.mxu0 %v6966
    %6996 = vmatprep.subr.mxu0 %v6969
    %6997 = vmatpush1.msra.mxu0 %v6968
    %6998 = vmatprep.subr.mxu0 0.0
    %6999 = vmatpush1.msra.mxu0 0.0
    %7000 = vmatprep.subr.mxu0 0.0
    %7001 = vmatpush1.msra.mxu0 0.0
    %7002 = vmatprep.subr.mxu0 0.0
    %7003 = vmatpush1.msra.mxu0 0.0
    %7004 = vmatprep.subr.mxu0 0.0
    %7005 = vmatpush1.msra.mxu0 0.0
    %7006 = vmatprep.subr.mxu0 0.0
    %7007 = vmatpush1.msra.mxu0 0.0
    %7008 = vmatprep.subr.mxu0 0.0
    %7009 = vmatpush1.msra.mxu0 0.0
    %7010 = vmatprep.subr.mxu0 0.0
    %7011 = vmatpush1.msra.mxu0 0.0
    %7012 = vmatprep.subr.mxu0 0.0
    %7013 = vmatpush1.msra.mxu0 0.0
    %7014 = vmatprep.subr.mxu0 0.0
    %7015 = vmatpush1.msra.mxu0 0.0
    %7016 = vmatprep.subr.mxu0 0.0
    %7017 = vmatpush1.msra.mxu0 0.0
    %7018 = vmatprep.subr.mxu0 0.0
    %7019 = vmatpush1.msra.mxu0 0.0
    %7020 = vmatprep.subr.mxu0 0.0
    %7021 = vmatpush1.msra.mxu0 0.0
    %7022 = vmatprep.subr.mxu0 0.0
    %7023 = vmatpush1.msra.mxu0 0.0
    %7024 = vmatprep.subr.mxu0 0.0
    %7025 = vmatpush1.msra.mxu0 0.0
    %7026 = vmatprep.subr.mxu0 0.0
    %7027 = vmatpush1.msra.mxu0 0.0
    %7028 = vmatprep.subr.mxu0 0.0
    %7029 = vmatpush1.msra.mxu0 0.0
    %7030 = vmatprep.subr.mxu0 0.0
    %7031 = vmatpush1.msra.mxu0 0.0
    %7032 = vmatprep.subr.mxu0 0.0
    %7033 = vmatpush1.msra.mxu0 0.0
    %7034 = vmatprep.subr.mxu0 0.0
    %7035 = vmatpush1.msra.mxu0 0.0
    %7036 = vmatprep.subr.mxu0 0.0
    %7037 = vmatpush1.msra.mxu0 0.0
    %7038 = vmatprep.subr.mxu0 0.0
    %7039 = vmatpush1.msra.mxu0 0.0
    %7040 = vmatprep.subr.mxu0 0.0
    %7041 = vmatpush1.msra.mxu0 0.0
    %7042 = vmatprep.subr.mxu0 0.0
    %7043 = vmatpush1.msra.mxu0 0.0
    %7044 = vmatprep.subr.mxu0 0.0
    %7045 = vmatpush1.msra.mxu0 0.0
    %7046 = vmatprep.mubr.f32.mxu0 0.0
    %7047 = vmatmul.mubr.f32.gmra.mrb[0].mxu0 %v6971
    %v7048 = vpop.f32.mrb[0].mxu0
    %v7049 = vadd.f32 0.0, %v7048
    %v7050 = vpop.f32.mrb[0].mxu0
    %v7051 = vadd.f32 0.0, %v7050
    %7052 = vmatprep.mubr.f32.mxu0 0.0
    %7053 = vmatmul.mubr.f32.gmra.mrb[0].mxu0 %v6974
    %v7054 = vpop.f32.mrb[0].mxu0
    %v7055 = vadd.f32 0.0, %v7054
    %v7056 = vpop.f32.mrb[0].mxu0
    %v7057 = vadd.f32 0.0, %v7056
    %7058 = vmatprep.mubr.f32.mxu0 0.0
    %7059 = vmatmul.mubr.f32.gmra.mrb[0].mxu0 %v6977
    %v7060 = vpop.f32.mrb[0].mxu0
    %v7061 = vadd.f32 0.0, %v7060
    %v7062 = vpop.f32.mrb[0].mxu0
    %v7063 = vadd.f32 0.0, %v7062
    %7064 = vmatprep.mubr.f32.mxu0 0.0
    %7065 = vmatmul.mubr.f32.gmra.mrb[0].mxu0 %v6980
    %v7066 = vpop.f32.mrb[0].mxu0
    %v7067 = vadd.f32 0.0, %v7066
    %v7068 = vpop.f32.mrb[0].mxu0
    %v7069 = vadd.f32 0.0, %v7068
    %7070 = vdwg.mxu0
    %7071 = vmatprep.subr.mxu0 %v6939
    %7072 = vmatpush1.msra.mxu0 %v6938
    %7073 = vmatprep.subr.mxu0 %v6941
    %7074 = vmatpush1.msra.mxu0 %v6940
    %7075 = vmatprep.subr.mxu0 %v6943
    %7076 = vmatpush1.msra.mxu0 %v6942
    %7077 = vmatprep.subr.mxu0 %v6945
    %7078 = vmatpush1.msra.mxu0 %v6944
    %7079 = vmatprep.subr.mxu0 %v6947
    %7080 = vmatpush1.msra.mxu0 %v6946
    %7081 = vmatprep.subr.mxu0 %v6949
    %7082 = vmatpush1.msra.mxu0 %v6948
    %7083 = vmatprep.subr.mxu0 %v6951
    %7084 = vmatpush1.msra.mxu0 %v6950
    %7085 = vmatprep.subr.mxu0 %v6953
    %7086 = vmatpush1.msra.mxu0 %v6952
    %7087 = vmatprep.subr.mxu0 0.0
    %7088 = vmatpush1.msra.mxu0 0.0
    %7089 = vmatprep.subr.mxu0 0.0
    %7090 = vmatpush1.msra.mxu0 0.0
    %7091 = vmatprep.subr.mxu0 0.0
    %7092 = vmatpush1.msra.mxu0 0.0
    %7093 = vmatprep.subr.mxu0 0.0
    %7094 = vmatpush1.msra.mxu0 0.0
    %7095 = vmatprep.subr.mxu0 0.0
    %7096 = vmatpush1.msra.mxu0 0.0
    %7097 = vmatprep.subr.mxu0 0.0
    %7098 = vmatpush1.msra.mxu0 0.0
    %7099 = vmatprep.subr.mxu0 0.0
    %7100 = vmatpush1.msra.mxu0 0.0
    %7101 = vmatprep.subr.mxu0 0.0
    %7102 = vmatpush1.msra.mxu0 0.0
    %7103 = vmatprep.subr.mxu0 0.0
    %7104 = vmatpush1.msra.mxu0 0.0
    %7105 = vmatprep.subr.mxu0 0.0
    %7106 = vmatpush1.msra.mxu0 0.0
    %7107 = vmatprep.subr.mxu0 0.0
    %7108 = vmatpush1.msra.mxu0 0.0
    %7109 = vmatprep.subr.mxu0 0.0
    %7110 = vmatpush1.msra.mxu0 0.0
    %7111 = vmatprep.subr.mxu0 0.0
    %7112 = vmatpush1.msra.mxu0 0.0
    %7113 = vmatprep.subr.mxu0 0.0
    %7114 = vmatpush1.msra.mxu0 0.0
    %7115 = vmatprep.subr.mxu0 0.0
    %7116 = vmatpush1.msra.mxu0 0.0
    %7117 = vmatprep.subr.mxu0 0.0
    %7118 = vmatpush1.msra.mxu0 0.0
    %7119 = vmatprep.subr.mxu0 0.0
    %7120 = vmatpush1.msra.mxu0 0.0
    %7121 = vmatprep.subr.mxu0 0.0
    %7122 = vmatpush1.msra.mxu0 0.0
    %7123 = vmatprep.subr.mxu0 0.0
    %7124 = vmatpush1.msra.mxu0 0.0
    %7125 = vmatprep.subr.mxu0 0.0
    %7126 = vmatpush1.msra.mxu0 0.0
    %7127 = vmatprep.subr.mxu0 0.0
    %7128 = vmatpush1.msra.mxu0 0.0
    %7129 = vmatprep.subr.mxu0 0.0
    %7130 = vmatpush1.msra.mxu0 0.0
    %7131 = vmatprep.subr.mxu0 0.0
    %7132 = vmatpush1.msra.mxu0 0.0
    %7133 = vmatprep.subr.mxu0 0.0
    %7134 = vmatpush1.msra.mxu0 0.0
    %7135 = vmatprep.mubr.f32.mxu0 0.0
    %7136 = vmatmul.mubr.f32.gmra.mrb[0].mxu0 %v1360
    %v7137 = vpop.f32.mrb[0].mxu0
    %v7138 = vadd.f32 %v7049, %v7137
    %v7139 = vpop.f32.mrb[0].mxu0
    %v7140 = vadd.f32 %v7051, %v7139
    %7141 = vmatprep.mubr.f32.mxu0 0.0
    %7142 = vmatmul.mubr.f32.gmra.mrb[0].mxu0 %v1363
    %v7143 = vpop.f32.mrb[0].mxu0
    %v7144 = vadd.f32 %v7055, %v7143
    %v7145 = vpop.f32.mrb[0].mxu0
    %v7146 = vadd.f32 %v7057, %v7145
    %7147 = vmatprep.mubr.f32.mxu0 0.0
    %7148 = vmatmul.mubr.f32.gmra.mrb[0].mxu0 %v1366
    %v7149 = vpop.f32.mrb[0].mxu0
    %v7150 = vadd.f32 %v7061, %v7149
    %v7151 = vpop.f32.mrb[0].mxu0
    %v7152 = vadd.f32 %v7063, %v7151
    %7153 = vmatprep.mubr.f32.mxu0 0.0
    %7154 = vmatmul.mubr.f32.gmra.mrb[0].mxu0 %v1369
    %v7155 = vpop.f32.mrb[0].mxu0
    %v7156 = vadd.f32 %v7067, %v7155
    %v7157 = vpop.f32.mrb[0].mxu0
    %v7158 = vadd.f32 %v7069, %v7157
    %7159 = vdwg.mxu0
    %v7160 = vld [vmem:[#allocation43] sm:$0xff]
    %v7161 = vld [vmem:[#allocation43 + $0x8] sm:$0xff]
    %v7162 = vld [vmem:[#allocation43 + $0x10] sm:$0xff]
    %v7163 = vld [vmem:[#allocation43 + $0x18] sm:$0xff]
    %s7164 = scalar_lea.vmem [#allocation43], 32
    %v7165 = vld [vmem:[%s7164] sm:$0xff]
    %v7166 = vld [vmem:[%s7164 + $0x8] sm:$0xff]
    %v7167 = vld [vmem:[%s7164 + $0x10] sm:$0xff]
    %v7168 = vld [vmem:[%s7164 + $0x18] sm:$0xff]
    %7173 = vrot.lane.b32.xlu0 %v7138, 64
    %v7174 = vpop.permute.xlu0 %7173
    %7175 = vrot.lane.b32.xlu0 %v7144, 64
    %v7176 = vpop.permute.xlu0 %7175
    %7177 = vrot.lane.b32.xlu0 %v7150, 64
    %v7178 = vpop.permute.xlu0 %7177
    %7179 = vrot.lane.b32.xlu0 %v7156, 64
    %v7180 = vpop.permute.xlu0 %7179
    %v7186 = vsel %vm699, %v7165, 0
    %v7189 = vsel %vm699, %v7166, 0
    %v7192 = vsel %vm699, %v7167, 0
    %v7195 = vsel %vm699, %v7168, 0
    %7197 = vmatprep.subr.mxu0 0.0
    %7198 = vmatpush1.msra.mxu0 %v7174
    %7199 = vmatprep.subr.mxu0 0.0
    %7200 = vmatpush1.msra.mxu0 %v7176
    %7201 = vmatprep.subr.mxu0 0.0
    %7202 = vmatpush1.msra.mxu0 %v7178
    %7203 = vmatprep.subr.mxu0 0.0
    %7204 = vmatpush1.msra.mxu0 %v7180
    %7205 = vmatprep.subr.mxu0 0.0
    %7206 = vmatpush1.msra.mxu0 0.0
    %7207 = vmatprep.subr.mxu0 0.0
    %7208 = vmatpush1.msra.mxu0 0.0
    %7209 = vmatprep.subr.mxu0 0.0
    %7210 = vmatpush1.msra.mxu0 0.0
    %7211 = vmatprep.subr.mxu0 0.0
    %7212 = vmatpush1.msra.mxu0 0.0
    %7213 = vmatprep.subr.mxu0 0.0
    %7214 = vmatpush1.msra.mxu0 0.0
    %7215 = vmatprep.subr.mxu0 0.0
    %7216 = vmatpush1.msra.mxu0 0.0
    %7217 = vmatprep.subr.mxu0 0.0
    %7218 = vmatpush1.msra.mxu0 0.0
    %7219 = vmatprep.subr.mxu0 0.0
    %7220 = vmatpush1.msra.mxu0 0.0
    %7221 = vmatprep.subr.mxu0 0.0
    %7222 = vmatpush1.msra.mxu0 0.0
    %7223 = vmatprep.subr.mxu0 0.0
    %7224 = vmatpush1.msra.mxu0 0.0
    %7225 = vmatprep.subr.mxu0 0.0
    %7226 = vmatpush1.msra.mxu0 0.0
    %7227 = vmatprep.subr.mxu0 0.0
    %7228 = vmatpush1.msra.mxu0 0.0
    %7229 = vmatprep.subr.mxu0 0.0
    %7230 = vmatpush1.msra.mxu0 0.0
    %7231 = vmatprep.subr.mxu0 0.0
    %7232 = vmatpush1.msra.mxu0 0.0
    %7233 = vmatprep.subr.mxu0 0.0
    %7234 = vmatpush1.msra.mxu0 0.0
    %7235 = vmatprep.subr.mxu0 0.0
    %7236 = vmatpush1.msra.mxu0 0.0
    %7237 = vmatprep.subr.mxu0 0.0
    %7238 = vmatpush1.msra.mxu0 0.0
    %7239 = vmatprep.subr.mxu0 0.0
    %7240 = vmatpush1.msra.mxu0 0.0
    %7241 = vmatprep.subr.mxu0 0.0
    %7242 = vmatpush1.msra.mxu0 0.0
    %7243 = vmatprep.subr.mxu0 0.0
    %7244 = vmatpush1.msra.mxu0 0.0
    %7245 = vmatprep.subr.mxu0 0.0
    %7246 = vmatpush1.msra.mxu0 0.0
    %7247 = vmatprep.subr.mxu0 0.0
    %7248 = vmatpush1.msra.mxu0 0.0
    %7249 = vmatprep.subr.mxu0 0.0
    %7250 = vmatpush1.msra.mxu0 0.0
    %7251 = vmatprep.subr.mxu0 0.0
    %7252 = vmatpush1.msra.mxu0 0.0
    %7253 = vmatprep.subr.mxu0 0.0
    %7254 = vmatpush1.msra.mxu0 0.0
    %7255 = vmatprep.subr.mxu0 0.0
    %7256 = vmatpush1.msra.mxu0 0.0
    %7257 = vmatprep.subr.mxu0 0.0
    %7258 = vmatpush1.msra.mxu0 0.0
    %7259 = vmatprep.subr.mxu0 0.0
    %7260 = vmatpush1.msra.mxu0 0.0
    %7261 = vmatprep.mubr.f32.mxu0 0.0
    %7262 = vmatmul.mubr.f32.gmra.mrb[0].mxu0 %v7186
    %v7263 = vpop.f32.mrb[0].mxu0
    %v7264 = vadd.f32 0.0, %v7263
    %v7265 = vpop.f32.mrb[0].mxu0
    %7266 = vmatprep.mubr.f32.mxu0 0.0
    %7267 = vmatmul.mubr.f32.gmra.mrb[0].mxu0 %v7189
    %v7268 = vpop.f32.mrb[0].mxu0
    %v7269 = vadd.f32 0.0, %v7268
    %v7270 = vpop.f32.mrb[0].mxu0
    %7271 = vmatprep.mubr.f32.mxu0 0.0
    %7272 = vmatmul.mubr.f32.gmra.mrb[0].mxu0 %v7192
    %v7273 = vpop.f32.mrb[0].mxu0
    %v7274 = vadd.f32 0.0, %v7273
    %v7275 = vpop.f32.mrb[0].mxu0
    %7276 = vmatprep.mubr.f32.mxu0 0.0
    %7277 = vmatmul.mubr.f32.gmra.mrb[0].mxu0 %v7195
    %v7278 = vpop.f32.mrb[0].mxu0
    %v7279 = vadd.f32 0.0, %v7278
    %v7280 = vpop.f32.mrb[0].mxu0
    %7281 = vdwg.mxu0
    %v7283 = vsel %vm699, %v7160, 0
    %v7286 = vsel %vm699, %v7161, 0
    %v7289 = vsel %vm699, %v7162, 0
    %v7292 = vsel %vm699, %v7163, 0
    %7294 = vmatprep.subr.mxu0 0.0
    %7295 = vmatpush1.msra.mxu0 %v7138
    %7296 = vmatprep.subr.mxu0 0.0
    %7297 = vmatpush1.msra.mxu0 %v7144
    %7298 = vmatprep.subr.mxu0 0.0
    %7299 = vmatpush1.msra.mxu0 %v7150
    %7300 = vmatprep.subr.mxu0 0.0
    %7301 = vmatpush1.msra.mxu0 %v7156
    %7302 = vmatprep.subr.mxu0 0.0
    %7303 = vmatpush1.msra.mxu0 0.0
    %7304 = vmatprep.subr.mxu0 0.0
    %7305 = vmatpush1.msra.mxu0 0.0
    %7306 = vmatprep.subr.mxu0 0.0
    %7307 = vmatpush1.msra.mxu0 0.0
    %7308 = vmatprep.subr.mxu0 0.0
    %7309 = vmatpush1.msra.mxu0 0.0
    %7310 = vmatprep.subr.mxu0 0.0
    %7311 = vmatpush1.msra.mxu0 0.0
    %7312 = vmatprep.subr.mxu0 0.0
    %7313 = vmatpush1.msra.mxu0 0.0
    %7314 = vmatprep.subr.mxu0 0.0
    %7315 = vmatpush1.msra.mxu0 0.0
    %7316 = vmatprep.subr.mxu0 0.0
    %7317 = vmatpush1.msra.mxu0 0.0
    %7318 = vmatprep.subr.mxu0 0.0
    %7319 = vmatpush1.msra.mxu0 0.0
    %7320 = vmatprep.subr.mxu0 0.0
    %7321 = vmatpush1.msra.mxu0 0.0
    %7322 = vmatprep.subr.mxu0 0.0
    %7323 = vmatpush1.msra.mxu0 0.0
    %7324 = vmatprep.subr.mxu0 0.0
    %7325 = vmatpush1.msra.mxu0 0.0
    %7326 = vmatprep.subr.mxu0 0.0
    %7327 = vmatpush1.msra.mxu0 0.0
    %7328 = vmatprep.subr.mxu0 0.0
    %7329 = vmatpush1.msra.mxu0 0.0
    %7330 = vmatprep.subr.mxu0 0.0
    %7331 = vmatpush1.msra.mxu0 0.0
    %7332 = vmatprep.subr.mxu0 0.0
    %7333 = vmatpush1.msra.mxu0 0.0
    %7334 = vmatprep.subr.mxu0 0.0
    %7335 = vmatpush1.msra.mxu0 0.0
    %7336 = vmatprep.subr.mxu0 0.0
    %7337 = vmatpush1.msra.mxu0 0.0
    %7338 = vmatprep.subr.mxu0 0.0
    %7339 = vmatpush1.msra.mxu0 0.0
    %7340 = vmatprep.subr.mxu0 0.0
    %7341 = vmatpush1.msra.mxu0 0.0
    %7342 = vmatprep.subr.mxu0 0.0
    %7343 = vmatpush1.msra.mxu0 0.0
    %7344 = vmatprep.subr.mxu0 0.0
    %7345 = vmatpush1.msra.mxu0 0.0
    %7346 = vmatprep.subr.mxu0 0.0
    %7347 = vmatpush1.msra.mxu0 0.0
    %7348 = vmatprep.subr.mxu0 0.0
    %7349 = vmatpush1.msra.mxu0 0.0
    %7350 = vmatprep.subr.mxu0 0.0
    %7351 = vmatpush1.msra.mxu0 0.0
    %7352 = vmatprep.subr.mxu0 0.0
    %7353 = vmatpush1.msra.mxu0 0.0
    %7354 = vmatprep.subr.mxu0 0.0
    %7355 = vmatpush1.msra.mxu0 0.0
    %7356 = vmatprep.subr.mxu0 0.0
    %7357 = vmatpush1.msra.mxu0 0.0
    %7358 = vmatprep.mubr.f32.mxu0 0.0
    %7359 = vmatmul.mubr.f32.gmra.mrb[0].mxu0 %v7283
    %v7360 = vpop.f32.mrb[0].mxu0
    %v7361 = vadd.f32 %v7264, %v7360
    %v7362 = vpop.f32.mrb[0].mxu0
    %7363 = vmatprep.mubr.f32.mxu0 0.0
    %7364 = vmatmul.mubr.f32.gmra.mrb[0].mxu0 %v7286
    %v7365 = vpop.f32.mrb[0].mxu0
    %v7366 = vadd.f32 %v7269, %v7365
    %v7367 = vpop.f32.mrb[0].mxu0
    %7368 = vmatprep.mubr.f32.mxu0 0.0
    %7369 = vmatmul.mubr.f32.gmra.mrb[0].mxu0 %v7289
    %v7370 = vpop.f32.mrb[0].mxu0
    %v7371 = vadd.f32 %v7274, %v7370
    %v7372 = vpop.f32.mrb[0].mxu0
    %7373 = vmatprep.mubr.f32.mxu0 0.0
    %7374 = vmatmul.mubr.f32.gmra.mrb[0].mxu0 %v7292
    %v7375 = vpop.f32.mrb[0].mxu0
    %v7376 = vadd.f32 %v7279, %v7375
    %v7377 = vpop.f32.mrb[0].mxu0
    %7378 = vdwg.mxu0
    %s7379 = scalar_lea.vmem [#allocation43], 64
    %v7380 = vld [vmem:[%s7379] sm:$0xff]
    %v7381 = vld [vmem:[%s7379 + $0x8] sm:$0xff]
    %v7382 = vld [vmem:[%s7379 + $0x10] sm:$0xff]
    %v7383 = vld [vmem:[%s7379 + $0x18] sm:$0xff]
    %v7385 = vsel %vm699, %v7380, 0
    %v7388 = vsel %vm699, %v7381, 0
    %v7391 = vsel %vm699, %v7382, 0
    %v7394 = vsel %vm699, %v7383, 0
    %7396 = vmatprep.subr.mxu0 0.0
    %7397 = vmatpush1.msra.mxu0 %v7140
    %7398 = vmatprep.subr.mxu0 0.0
    %7399 = vmatpush1.msra.mxu0 %v7146
    %7400 = vmatprep.subr.mxu0 0.0
    %7401 = vmatpush1.msra.mxu0 %v7152
    %7402 = vmatprep.subr.mxu0 0.0
    %7403 = vmatpush1.msra.mxu0 %v7158
    %7404 = vmatprep.subr.mxu0 0.0
    %7405 = vmatpush1.msra.mxu0 0.0
    %7406 = vmatprep.subr.mxu0 0.0
    %7407 = vmatpush1.msra.mxu0 0.0
    %7408 = vmatprep.subr.mxu0 0.0
    %7409 = vmatpush1.msra.mxu0 0.0
    %7410 = vmatprep.subr.mxu0 0.0
    %7411 = vmatpush1.msra.mxu0 0.0
    %7412 = vmatprep.subr.mxu0 0.0
    %7413 = vmatpush1.msra.mxu0 0.0
    %7414 = vmatprep.subr.mxu0 0.0
    %7415 = vmatpush1.msra.mxu0 0.0
    %7416 = vmatprep.subr.mxu0 0.0
    %7417 = vmatpush1.msra.mxu0 0.0
    %7418 = vmatprep.subr.mxu0 0.0
    %7419 = vmatpush1.msra.mxu0 0.0
    %7420 = vmatprep.subr.mxu0 0.0
    %7421 = vmatpush1.msra.mxu0 0.0
    %7422 = vmatprep.subr.mxu0 0.0
    %7423 = vmatpush1.msra.mxu0 0.0
    %7424 = vmatprep.subr.mxu0 0.0
    %7425 = vmatpush1.msra.mxu0 0.0
    %7426 = vmatprep.subr.mxu0 0.0
    %7427 = vmatpush1.msra.mxu0 0.0
    %7428 = vmatprep.subr.mxu0 0.0
    %7429 = vmatpush1.msra.mxu0 0.0
    %7430 = vmatprep.subr.mxu0 0.0
    %7431 = vmatpush1.msra.mxu0 0.0
    %7432 = vmatprep.subr.mxu0 0.0
    %7433 = vmatpush1.msra.mxu0 0.0
    %7434 = vmatprep.subr.mxu0 0.0
    %7435 = vmatpush1.msra.mxu0 0.0
    %7436 = vmatprep.subr.mxu0 0.0
    %7437 = vmatpush1.msra.mxu0 0.0
    %7438 = vmatprep.subr.mxu0 0.0
    %7439 = vmatpush1.msra.mxu0 0.0
    %7440 = vmatprep.subr.mxu0 0.0
    %7441 = vmatpush1.msra.mxu0 0.0
    %7442 = vmatprep.subr.mxu0 0.0
    %7443 = vmatpush1.msra.mxu0 0.0
    %7444 = vmatprep.subr.mxu0 0.0
    %7445 = vmatpush1.msra.mxu0 0.0
    %7446 = vmatprep.subr.mxu0 0.0
    %7447 = vmatpush1.msra.mxu0 0.0
    %7448 = vmatprep.subr.mxu0 0.0
    %7449 = vmatpush1.msra.mxu0 0.0
    %7450 = vmatprep.subr.mxu0 0.0
    %7451 = vmatpush1.msra.mxu0 0.0
    %7452 = vmatprep.subr.mxu0 0.0
    %7453 = vmatpush1.msra.mxu0 0.0
    %7454 = vmatprep.subr.mxu0 0.0
    %7455 = vmatpush1.msra.mxu0 0.0
    %7456 = vmatprep.subr.mxu0 0.0
    %7457 = vmatpush1.msra.mxu0 0.0
    %7458 = vmatprep.subr.mxu0 0.0
    %7459 = vmatpush1.msra.mxu0 0.0
    %7460 = vmatprep.mubr.f32.mxu0 0.0
    %7461 = vmatmul.mubr.f32.gmra.mrb[0].mxu0 %v7385
    %v7462 = vpop.f32.mrb[0].mxu0
    %v7463 = vadd.f32 0.0, %v7462
    %v7464 = vpop.f32.mrb[0].mxu0
    %7465 = vmatprep.mubr.f32.mxu0 0.0
    %7466 = vmatmul.mubr.f32.gmra.mrb[0].mxu0 %v7388
    %v7467 = vpop.f32.mrb[0].mxu0
    %v7468 = vadd.f32 0.0, %v7467
    %v7469 = vpop.f32.mrb[0].mxu0
    %7470 = vmatprep.mubr.f32.mxu0 0.0
    %7471 = vmatmul.mubr.f32.gmra.mrb[0].mxu0 %v7391
    %v7472 = vpop.f32.mrb[0].mxu0
    %v7473 = vadd.f32 0.0, %v7472
    %v7474 = vpop.f32.mrb[0].mxu0
    %7475 = vmatprep.mubr.f32.mxu0 0.0
    %7476 = vmatmul.mubr.f32.gmra.mrb[0].mxu0 %v7394
    %v7477 = vpop.f32.mrb[0].mxu0
    %v7478 = vadd.f32 0.0, %v7477
    %v7479 = vpop.f32.mrb[0].mxu0
    %7480 = vdwg.mxu0
    %v7481 = vadd.f32 %v7361, %v7463
    %v7482 = vadd.f32 %v7366, %v7468
    %v7483 = vadd.f32 %v7371, %v7473
    %v7484 = vadd.f32 %v7376, %v7478
    %v7485 = vld [vmem:[%s81] sm:$0x1]
    %v7486 = vlaneseq
    %v7487 = vshrl.u32 %v7486, 7
    %v7488 = vsub.s32 0, %v7487
    %v7489 = vrot.slane %v7485, %v7488
    %v7490 = vadd.f32 %v7481, %v7489
    %v7491 = vadd.f32 %v7482, %v7489
    %v7492 = vadd.f32 %v7483, %v7489
    %v7493 = vadd.f32 %v7484, %v7489
    %v7494 = vmax.f32 %v7490, 0.0
    %v7495 = vmax.f32 %v7491, 0.0
    %v7496 = vmax.f32 %v7492, 0.0
    %v7497 = vmax.f32 %v7493, 0.0
    %v7498 = vld [vmem:[#allocation45] sm:$0xff]
    %v7499 = vld [vmem:[#allocation45 + $0x8] sm:$0xff]
    %v7500 = vld [vmem:[#allocation45 + $0x10] sm:$0xff]
    %v7501 = vld [vmem:[#allocation45 + $0x18] sm:$0xff]
    %v7502 = vld [vmem:[#allocation45 + $0x20] sm:$0xff]
    %v7503 = vld [vmem:[#allocation45 + $0x28] sm:$0xff]
    %v7504 = vld [vmem:[#allocation45 + $0x30] sm:$0xff]
    %v7505 = vld [vmem:[#allocation45 + $0x38] sm:$0xff]
    %7506 = vmatprep.subr.mxu0 0.0
    %7507 = vmatpush1.msra.mxu0 %v7494
    %7508 = vmatprep.subr.mxu0 0.0
    %7509 = vmatpush1.msra.mxu0 %v7495
    %7510 = vmatprep.subr.mxu0 0.0
    %7511 = vmatpush1.msra.mxu0 %v7496
    %7512 = vmatprep.subr.mxu0 0.0
    %7513 = vmatpush1.msra.mxu0 %v7497
    %7514 = vmatprep.subr.mxu0 0.0
    %7515 = vmatpush1.msra.mxu0 0.0
    %7516 = vmatprep.subr.mxu0 0.0
    %7517 = vmatpush1.msra.mxu0 0.0
    %7518 = vmatprep.subr.mxu0 0.0
    %7519 = vmatpush1.msra.mxu0 0.0
    %7520 = vmatprep.subr.mxu0 0.0
    %7521 = vmatpush1.msra.mxu0 0.0
    %7522 = vmatprep.subr.mxu0 0.0
    %7523 = vmatpush1.msra.mxu0 0.0
    %7524 = vmatprep.subr.mxu0 0.0
    %7525 = vmatpush1.msra.mxu0 0.0
    %7526 = vmatprep.subr.mxu0 0.0
    %7527 = vmatpush1.msra.mxu0 0.0
    %7528 = vmatprep.subr.mxu0 0.0
    %7529 = vmatpush1.msra.mxu0 0.0
    %7530 = vmatprep.subr.mxu0 0.0
    %7531 = vmatpush1.msra.mxu0 0.0
    %7532 = vmatprep.subr.mxu0 0.0
    %7533 = vmatpush1.msra.mxu0 0.0
    %7534 = vmatprep.subr.mxu0 0.0
    %7535 = vmatpush1.msra.mxu0 0.0
    %7536 = vmatprep.subr.mxu0 0.0
    %7537 = vmatpush1.msra.mxu0 0.0
    %7538 = vmatprep.subr.mxu0 0.0
    %7539 = vmatpush1.msra.mxu0 0.0
    %7540 = vmatprep.subr.mxu0 0.0
    %7541 = vmatpush1.msra.mxu0 0.0
    %7542 = vmatprep.subr.mxu0 0.0
    %7543 = vmatpush1.msra.mxu0 0.0
    %7544 = vmatprep.subr.mxu0 0.0
    %7545 = vmatpush1.msra.mxu0 0.0
    %7546 = vmatprep.subr.mxu0 0.0
    %7547 = vmatpush1.msra.mxu0 0.0
    %7548 = vmatprep.subr.mxu0 0.0
    %7549 = vmatpush1.msra.mxu0 0.0
    %7550 = vmatprep.subr.mxu0 0.0
    %7551 = vmatpush1.msra.mxu0 0.0
    %7552 = vmatprep.subr.mxu0 0.0
    %7553 = vmatpush1.msra.mxu0 0.0
    %7554 = vmatprep.subr.mxu0 0.0
    %7555 = vmatpush1.msra.mxu0 0.0
    %7556 = vmatprep.subr.mxu0 0.0
    %7557 = vmatpush1.msra.mxu0 0.0
    %7558 = vmatprep.subr.mxu0 0.0
    %7559 = vmatpush1.msra.mxu0 0.0
    %7560 = vmatprep.subr.mxu0 0.0
    %7561 = vmatpush1.msra.mxu0 0.0
    %7562 = vmatprep.subr.mxu0 0.0
    %7563 = vmatpush1.msra.mxu0 0.0
    %7564 = vmatprep.subr.mxu0 0.0
    %7565 = vmatpush1.msra.mxu0 0.0
    %7566 = vmatprep.subr.mxu0 0.0
    %7567 = vmatpush1.msra.mxu0 0.0
    %7568 = vmatprep.subr.mxu0 0.0
    %7569 = vmatpush1.msra.mxu0 0.0
    %7570 = vmatprep.mubr.f32.mxu0 0.0
    %7571 = vmatmul.mubr.f32.gmra.mrb[0].mxu0 %v1022
    %v7572 = vpop.f32.mrb[0].mxu0
    %v7573 = vadd.f32 0.0, %v7572
    %v7574 = vpop.f32.mrb[0].mxu0
    %7575 = vdwg.mxu0
    %v7577 = vsel %vm1094, %v7573, 0
    %7579 = vmatprep.subr.mxu0 0.0
    %7580 = vmatpush1.msra.mxu0 %v7498
    %7581 = vmatprep.subr.mxu0 0.0
    %7582 = vmatpush1.msra.mxu0 %v7499
    %7583 = vmatprep.subr.mxu0 0.0
    %7584 = vmatpush1.msra.mxu0 %v7500
    %7585 = vmatprep.subr.mxu0 0.0
    %7586 = vmatpush1.msra.mxu0 %v7501
    %7587 = vmatprep.subr.mxu0 0.0
    %7588 = vmatpush1.msra.mxu0 %v7502
    %7589 = vmatprep.subr.mxu0 0.0
    %7590 = vmatpush1.msra.mxu0 %v7503
    %7591 = vmatprep.subr.mxu0 0.0
    %7592 = vmatpush1.msra.mxu0 %v7504
    %7593 = vmatprep.subr.mxu0 0.0
    %7594 = vmatpush1.msra.mxu0 %v7505
    %7595 = vmatprep.subr.mxu0 0.0
    %7596 = vmatpush1.msra.mxu0 0.0
    %7597 = vmatprep.subr.mxu0 0.0
    %7598 = vmatpush1.msra.mxu0 0.0
    %7599 = vmatprep.subr.mxu0 0.0
    %7600 = vmatpush1.msra.mxu0 0.0
    %7601 = vmatprep.subr.mxu0 0.0
    %7602 = vmatpush1.msra.mxu0 0.0
    %7603 = vmatprep.subr.mxu0 0.0
    %7604 = vmatpush1.msra.mxu0 0.0
    %7605 = vmatprep.subr.mxu0 0.0
    %7606 = vmatpush1.msra.mxu0 0.0
    %7607 = vmatprep.subr.mxu0 0.0
    %7608 = vmatpush1.msra.mxu0 0.0
    %7609 = vmatprep.subr.mxu0 0.0
    %7610 = vmatpush1.msra.mxu0 0.0
    %7611 = vmatprep.subr.mxu0 0.0
    %7612 = vmatpush1.msra.mxu0 0.0
    %7613 = vmatprep.subr.mxu0 0.0
    %7614 = vmatpush1.msra.mxu0 0.0
    %7615 = vmatprep.subr.mxu0 0.0
    %7616 = vmatpush1.msra.mxu0 0.0
    %7617 = vmatprep.subr.mxu0 0.0
    %7618 = vmatpush1.msra.mxu0 0.0
    %7619 = vmatprep.subr.mxu0 0.0
    %7620 = vmatpush1.msra.mxu0 0.0
    %7621 = vmatprep.subr.mxu0 0.0
    %7622 = vmatpush1.msra.mxu0 0.0
    %7623 = vmatprep.subr.mxu0 0.0
    %7624 = vmatpush1.msra.mxu0 0.0
    %7625 = vmatprep.subr.mxu0 0.0
    %7626 = vmatpush1.msra.mxu0 0.0
    %7627 = vmatprep.subr.mxu0 0.0
    %7628 = vmatpush1.msra.mxu0 0.0
    %7629 = vmatprep.subr.mxu0 0.0
    %7630 = vmatpush1.msra.mxu0 0.0
    %7631 = vmatprep.subr.mxu0 0.0
    %7632 = vmatpush1.msra.mxu0 0.0
    %7633 = vmatprep.subr.mxu0 0.0
    %7634 = vmatpush1.msra.mxu0 0.0
    %7635 = vmatprep.subr.mxu0 0.0
    %7636 = vmatpush1.msra.mxu0 0.0
    %7637 = vmatprep.subr.mxu0 0.0
    %7638 = vmatpush1.msra.mxu0 0.0
    %7639 = vmatprep.subr.mxu0 0.0
    %7640 = vmatpush1.msra.mxu0 0.0
    %7641 = vmatprep.subr.mxu0 0.0
    %7642 = vmatpush1.msra.mxu0 0.0
    %7643 = vmatprep.mubr.f32.mxu0 0.0
    %7644 = vmatmul.mubr.f32.gmra.mrb[0].mxu0 %v7577
    %v7645 = vpop.f32.mrb[0].mxu0
    %v7646 = vadd.f32 0.0, %v7645
    %v7647 = vpop.f32.mrb[0].mxu0
    %7648 = vdwg.mxu0
    %v7649 = vlaneseq
    %v7650 = vshrl.u32 %v7649, 7
    %v7651 = vsub.s32 0, %v7650
    %v7652 = vrot.slane %v7646, %v7651
    %v7653 = vsub.f32 %v7494, %v7652
    %v7654 = vsub.f32 %v7495, %v7652
    %v7655 = vsub.f32 %v7496, %v7652
    %v7656 = vsub.f32 %v7497, %v7652
    %v7657 = vmul.f32 %v7653, %v7653
    %v7658 = vmul.f32 %v7654, %v7654
    %v7659 = vmul.f32 %v7655, %v7655
    %v7660 = vmul.f32 %v7656, %v7656
    %7661 = vmatprep.subr.mxu0 0.0
    %7662 = vmatpush1.msra.mxu0 %v7657
    %7663 = vmatprep.subr.mxu0 0.0
    %7664 = vmatpush1.msra.mxu0 %v7658
    %7665 = vmatprep.subr.mxu0 0.0
    %7666 = vmatpush1.msra.mxu0 %v7659
    %7667 = vmatprep.subr.mxu0 0.0
    %7668 = vmatpush1.msra.mxu0 %v7660
    %7669 = vmatprep.subr.mxu0 0.0
    %7670 = vmatpush1.msra.mxu0 0.0
    %7671 = vmatprep.subr.mxu0 0.0
    %7672 = vmatpush1.msra.mxu0 0.0
    %7673 = vmatprep.subr.mxu0 0.0
    %7674 = vmatpush1.msra.mxu0 0.0
    %7675 = vmatprep.subr.mxu0 0.0
    %7676 = vmatpush1.msra.mxu0 0.0
    %7677 = vmatprep.subr.mxu0 0.0
    %7678 = vmatpush1.msra.mxu0 0.0
    %7679 = vmatprep.subr.mxu0 0.0
    %7680 = vmatpush1.msra.mxu0 0.0
    %7681 = vmatprep.subr.mxu0 0.0
    %7682 = vmatpush1.msra.mxu0 0.0
    %7683 = vmatprep.subr.mxu0 0.0
    %7684 = vmatpush1.msra.mxu0 0.0
    %7685 = vmatprep.subr.mxu0 0.0
    %7686 = vmatpush1.msra.mxu0 0.0
    %7687 = vmatprep.subr.mxu0 0.0
    %7688 = vmatpush1.msra.mxu0 0.0
    %7689 = vmatprep.subr.mxu0 0.0
    %7690 = vmatpush1.msra.mxu0 0.0
    %7691 = vmatprep.subr.mxu0 0.0
    %7692 = vmatpush1.msra.mxu0 0.0
    %7693 = vmatprep.subr.mxu0 0.0
    %7694 = vmatpush1.msra.mxu0 0.0
    %7695 = vmatprep.subr.mxu0 0.0
    %7696 = vmatpush1.msra.mxu0 0.0
    %7697 = vmatprep.subr.mxu0 0.0
    %7698 = vmatpush1.msra.mxu0 0.0
    %7699 = vmatprep.subr.mxu0 0.0
    %7700 = vmatpush1.msra.mxu0 0.0
    %7701 = vmatprep.subr.mxu0 0.0
    %7702 = vmatpush1.msra.mxu0 0.0
    %7703 = vmatprep.subr.mxu0 0.0
    %7704 = vmatpush1.msra.mxu0 0.0
    %7705 = vmatprep.subr.mxu0 0.0
    %7706 = vmatpush1.msra.mxu0 0.0
    %7707 = vmatprep.subr.mxu0 0.0
    %7708 = vmatpush1.msra.mxu0 0.0
    %7709 = vmatprep.subr.mxu0 0.0
    %7710 = vmatpush1.msra.mxu0 0.0
    %7711 = vmatprep.subr.mxu0 0.0
    %7712 = vmatpush1.msra.mxu0 0.0
    %7713 = vmatprep.subr.mxu0 0.0
    %7714 = vmatpush1.msra.mxu0 0.0
    %7715 = vmatprep.subr.mxu0 0.0
    %7716 = vmatpush1.msra.mxu0 0.0
    %7717 = vmatprep.subr.mxu0 0.0
    %7718 = vmatpush1.msra.mxu0 0.0
    %7719 = vmatprep.subr.mxu0 0.0
    %7720 = vmatpush1.msra.mxu0 0.0
    %7721 = vmatprep.subr.mxu0 0.0
    %7722 = vmatpush1.msra.mxu0 0.0
    %7723 = vmatprep.subr.mxu0 0.0
    %7724 = vmatpush1.msra.mxu0 0.0
    %7725 = vmatprep.mubr.f32.mxu0 0.0
    %7726 = vmatmul.mubr.f32.gmra.mrb[0].mxu0 %v1022
    %v7727 = vpop.f32.mrb[0].mxu0
    %v7728 = vadd.f32 0.0, %v7727
    %v7729 = vpop.f32.mrb[0].mxu0
    %7730 = vdwg.mxu0
    %v7732 = vsel %vm1094, %v7728, 0
    %7734 = vmatprep.subr.mxu0 0.0
    %7735 = vmatpush1.msra.mxu0 %v7498
    %7736 = vmatprep.subr.mxu0 0.0
    %7737 = vmatpush1.msra.mxu0 %v7499
    %7738 = vmatprep.subr.mxu0 0.0
    %7739 = vmatpush1.msra.mxu0 %v7500
    %7740 = vmatprep.subr.mxu0 0.0
    %7741 = vmatpush1.msra.mxu0 %v7501
    %7742 = vmatprep.subr.mxu0 0.0
    %7743 = vmatpush1.msra.mxu0 %v7502
    %7744 = vmatprep.subr.mxu0 0.0
    %7745 = vmatpush1.msra.mxu0 %v7503
    %7746 = vmatprep.subr.mxu0 0.0
    %7747 = vmatpush1.msra.mxu0 %v7504
    %7748 = vmatprep.subr.mxu0 0.0
    %7749 = vmatpush1.msra.mxu0 %v7505
    %7750 = vmatprep.subr.mxu0 0.0
    %7751 = vmatpush1.msra.mxu0 0.0
    %7752 = vmatprep.subr.mxu0 0.0
    %7753 = vmatpush1.msra.mxu0 0.0
    %7754 = vmatprep.subr.mxu0 0.0
    %7755 = vmatpush1.msra.mxu0 0.0
    %7756 = vmatprep.subr.mxu0 0.0
    %7757 = vmatpush1.msra.mxu0 0.0
    %7758 = vmatprep.subr.mxu0 0.0
    %7759 = vmatpush1.msra.mxu0 0.0
    %7760 = vmatprep.subr.mxu0 0.0
    %7761 = vmatpush1.msra.mxu0 0.0
    %7762 = vmatprep.subr.mxu0 0.0
    %7763 = vmatpush1.msra.mxu0 0.0
    %7764 = vmatprep.subr.mxu0 0.0
    %7765 = vmatpush1.msra.mxu0 0.0
    %7766 = vmatprep.subr.mxu0 0.0
    %7767 = vmatpush1.msra.mxu0 0.0
    %7768 = vmatprep.subr.mxu0 0.0
    %7769 = vmatpush1.msra.mxu0 0.0
    %7770 = vmatprep.subr.mxu0 0.0
    %7771 = vmatpush1.msra.mxu0 0.0
    %7772 = vmatprep.subr.mxu0 0.0
    %7773 = vmatpush1.msra.mxu0 0.0
    %7774 = vmatprep.subr.mxu0 0.0
    %7775 = vmatpush1.msra.mxu0 0.0
    %7776 = vmatprep.subr.mxu0 0.0
    %7777 = vmatpush1.msra.mxu0 0.0
    %7778 = vmatprep.subr.mxu0 0.0
    %7779 = vmatpush1.msra.mxu0 0.0
    %7780 = vmatprep.subr.mxu0 0.0
    %7781 = vmatpush1.msra.mxu0 0.0
    %7782 = vmatprep.subr.mxu0 0.0
    %7783 = vmatpush1.msra.mxu0 0.0
    %7784 = vmatprep.subr.mxu0 0.0
    %7785 = vmatpush1.msra.mxu0 0.0
    %7786 = vmatprep.subr.mxu0 0.0
    %7787 = vmatpush1.msra.mxu0 0.0
    %7788 = vmatprep.subr.mxu0 0.0
    %7789 = vmatpush1.msra.mxu0 0.0
    %7790 = vmatprep.subr.mxu0 0.0
    %7791 = vmatpush1.msra.mxu0 0.0
    %7792 = vmatprep.subr.mxu0 0.0
    %7793 = vmatpush1.msra.mxu0 0.0
    %7794 = vmatprep.subr.mxu0 0.0
    %7795 = vmatpush1.msra.mxu0 0.0
    %7796 = vmatprep.subr.mxu0 0.0
    %7797 = vmatpush1.msra.mxu0 0.0
    %7798 = vmatprep.mubr.f32.mxu0 0.0
    %7799 = vmatmul.mubr.f32.gmra.mrb[0].mxu0 %v7732
    %v7800 = vpop.f32.mrb[0].mxu0
    %v7801 = vadd.f32 1e-05, %v7800
    %v7802 = vpop.f32.mrb[0].mxu0
    %7803 = vdwg.mxu0
    %v7804 = vrsqrt.pop %v7801
    %v7805 = vld [vmem:[%s81 + $0x1] sm:$0x1]
    %v7806 = vmul.f32 %v7804, %v7805
    %v7807 = vlaneseq
    %v7808 = vshrl.u32 %v7807, 7
    %v7809 = vsub.s32 0, %v7808
    %v7810 = vrot.slane %v7806, %v7809
    %v7811 = vmul.f32 %v7653, %v7810
    %v7812 = vmul.f32 %v7654, %v7810
    %v7813 = vmul.f32 %v7655, %v7810
    %v7814 = vmul.f32 %v7656, %v7810
    %v7815 = vld [vmem:[%s81 + $0x2] sm:$0x1]
    %v7816 = vlaneseq
    %v7817 = vshrl.u32 %v7816, 7
    %v7818 = vsub.s32 0, %v7817
    %v7819 = vrot.slane %v7815, %v7818
    %v7820 = vadd.f32 %v7811, %v7819
    %v7821 = vadd.f32 %v7812, %v7819
    %v7822 = vadd.f32 %v7813, %v7819
    %v7823 = vadd.f32 %v7814, %v7819
    %v7824 = vld [vmem:[%s85] sm:$0xff]
    %v7825 = vld [vmem:[%s85 + $0x8] sm:$0xff]
    %v7826 = vld [vmem:[%s85 + $0x10] sm:$0xff]
    %v7827 = vld [vmem:[%s85 + $0x18] sm:$0xff]
    %v7828 = vld [vmem:[%s85 + $0x20] sm:$0xff]
    %v7829 = vld [vmem:[%s85 + $0x28] sm:$0xff]
    %v7830 = vld [vmem:[%s85 + $0x30] sm:$0xff]
    %v7831 = vld [vmem:[%s85 + $0x38] sm:$0xff]
    %v7832 = vld [vmem:[%s87] sm:$0x1]
    %v7834 = vlaneseq
    %v7835 = vshrl.u32 %v7834, 7
    %v7836 = vsub.s32 0, %v7835
    %v7837 = vrot.slane %v7832, %v7836
    %v7840 = vsel %vm1094, %v7820, 0
    %v7843 = vsel %vm1094, %v7821, 0
    %v7846 = vsel %vm1094, %v7822, 0
    %v7849 = vsel %vm1094, %v7823, 0
    %7851 = vmatprep.subr.mxu0 0.0
    %7852 = vmatpush1.msra.mxu0 %v7824
    %7853 = vmatprep.subr.mxu0 0.0
    %7854 = vmatpush1.msra.mxu0 %v7825
    %7855 = vmatprep.subr.mxu0 0.0
    %7856 = vmatpush1.msra.mxu0 %v7826
    %7857 = vmatprep.subr.mxu0 0.0
    %7858 = vmatpush1.msra.mxu0 %v7827
    %7859 = vmatprep.subr.mxu0 0.0
    %7860 = vmatpush1.msra.mxu0 %v7828
    %7861 = vmatprep.subr.mxu0 0.0
    %7862 = vmatpush1.msra.mxu0 %v7829
    %7863 = vmatprep.subr.mxu0 0.0
    %7864 = vmatpush1.msra.mxu0 %v7830
    %7865 = vmatprep.subr.mxu0 0.0
    %7866 = vmatpush1.msra.mxu0 %v7831
    %7867 = vmatprep.subr.mxu0 0.0
    %7868 = vmatpush1.msra.mxu0 0.0
    %7869 = vmatprep.subr.mxu0 0.0
    %7870 = vmatpush1.msra.mxu0 0.0
    %7871 = vmatprep.subr.mxu0 0.0
    %7872 = vmatpush1.msra.mxu0 0.0
    %7873 = vmatprep.subr.mxu0 0.0
    %7874 = vmatpush1.msra.mxu0 0.0
    %7875 = vmatprep.subr.mxu0 0.0
    %7876 = vmatpush1.msra.mxu0 0.0
    %7877 = vmatprep.subr.mxu0 0.0
    %7878 = vmatpush1.msra.mxu0 0.0
    %7879 = vmatprep.subr.mxu0 0.0
    %7880 = vmatpush1.msra.mxu0 0.0
    %7881 = vmatprep.subr.mxu0 0.0
    %7882 = vmatpush1.msra.mxu0 0.0
    %7883 = vmatprep.subr.mxu0 0.0
    %7884 = vmatpush1.msra.mxu0 0.0
    %7885 = vmatprep.subr.mxu0 0.0
    %7886 = vmatpush1.msra.mxu0 0.0
    %7887 = vmatprep.subr.mxu0 0.0
    %7888 = vmatpush1.msra.mxu0 0.0
    %7889 = vmatprep.subr.mxu0 0.0
    %7890 = vmatpush1.msra.mxu0 0.0
    %7891 = vmatprep.subr.mxu0 0.0
    %7892 = vmatpush1.msra.mxu0 0.0
    %7893 = vmatprep.subr.mxu0 0.0
    %7894 = vmatpush1.msra.mxu0 0.0
    %7895 = vmatprep.subr.mxu0 0.0
    %7896 = vmatpush1.msra.mxu0 0.0
    %7897 = vmatprep.subr.mxu0 0.0
    %7898 = vmatpush1.msra.mxu0 0.0
    %7899 = vmatprep.subr.mxu0 0.0
    %7900 = vmatpush1.msra.mxu0 0.0
    %7901 = vmatprep.subr.mxu0 0.0
    %7902 = vmatpush1.msra.mxu0 0.0
    %7903 = vmatprep.subr.mxu0 0.0
    %7904 = vmatpush1.msra.mxu0 0.0
    %7905 = vmatprep.subr.mxu0 0.0
    %7906 = vmatpush1.msra.mxu0 0.0
    %7907 = vmatprep.subr.mxu0 0.0
    %7908 = vmatpush1.msra.mxu0 0.0
    %7909 = vmatprep.subr.mxu0 0.0
    %7910 = vmatpush1.msra.mxu0 0.0
    %7911 = vmatprep.subr.mxu0 0.0
    %7912 = vmatpush1.msra.mxu0 0.0
    %7913 = vmatprep.subr.mxu0 0.0
    %7914 = vmatpush1.msra.mxu0 0.0
    %7915 = vmatprep.mubr.f32.mxu0 0.0
    %7916 = vmatmul.mubr.f32.gmra.mrb[0].mxu0 %v7840
    %v7917 = vpop.f32.mrb[0].mxu0
    %v7918 = vadd.f32 %v7837, %v7917
    %v7919 = vpop.f32.mrb[0].mxu0
    %7920 = vmatprep.mubr.f32.mxu0 0.0
    %7921 = vmatmul.mubr.f32.gmra.mrb[0].mxu0 %v7843
    %v7922 = vpop.f32.mrb[0].mxu0
    %v7923 = vadd.f32 %v7837, %v7922
    %v7924 = vpop.f32.mrb[0].mxu0
    %7925 = vmatprep.mubr.f32.mxu0 0.0
    %7926 = vmatmul.mubr.f32.gmra.mrb[0].mxu0 %v7846
    %v7927 = vpop.f32.mrb[0].mxu0
    %v7928 = vadd.f32 %v7837, %v7927
    %v7929 = vpop.f32.mrb[0].mxu0
    %7930 = vmatprep.mubr.f32.mxu0 0.0
    %7931 = vmatmul.mubr.f32.gmra.mrb[0].mxu0 %v7849
    %v7932 = vpop.f32.mrb[0].mxu0
    %v7933 = vadd.f32 %v7837, %v7932
    %v7934 = vpop.f32.mrb[0].mxu0
    %7935 = vdwg.mxu0
    %7936 = vst.msk [vmem:[%s89] sm:$0xff] %vm572, %v7918
    %7937 = vst.msk [vmem:[%s89 + $0x8] sm:$0xff] %vm572, %v7923
    %7938 = vst.msk [vmem:[%s89 + $0x10] sm:$0xff] %vm572, %v7928
    %7939 = vst.msk [vmem:[%s89 + $0x18] sm:$0xff] %vm572, %v7933
    // Predicated region
    $region294: #{_lambda_.1} parent=1 // pred_check
      _
    $region295: #{_lambda_.1} parent=1 // pred_check_branch
      %7941 = sbr.rel (0) target = $region297
    $region296: #{_lambda_.1} parent=1 // pred_region
      _
    $region297: #{_lambda_.1} parent=1 // pred_fallthru
      _
    // Predicated region
    $region298: #{_lambda_.1} parent=1 // pred_check
      _
    $region299: #{_lambda_.1} parent=1 // pred_check_branch
      %7943 = sbr.rel (0) target = $region301
    $region300: #{_lambda_.1} parent=1 // pred_region
      _
    $region301: #{_lambda_.1} parent=1 // pred_fallthru
      _
    %7944 = vsyncpa [#allocation3], 1
    %7945 = vsyncpa [#allocation5], 1
    %7946 = vsyncpa [#allocation8], 1
    %7947 = vsyncpa [#allocation11], 1
    %7948 = vsyncpa [#allocation14], 1
    %7949 = vsyncpa [#allocation17], 1
    %7950 = vsyncpa [#allocation20], 1
    %7951 = vsyncpa [#allocation23], 1
    %7952 = vsyncpa [#allocation26], 1
    %7953 = vsyncpa [#allocation29], 1
    %7954 = vsyncpa [#allocation32], 1
    %7955 = vsyncpa [#allocation35], 1
    %7956 = vsyncpa [#allocation38], 1
    %7957 = vsyncpa [#allocation41], 1
    %7958 = vsyncpa [#allocation44], 1

</llo_original>
